<compile_context>
chip_gen: v7x
topology: tpu7x:2x2x1
jax: 0.10.0
libtpu: 0.0.40
codegen_flags: <defaults>
</compile_context>

<pallas_src>
import functools

import jax
import jax.numpy as jnp
from jax.experimental import pallas as pl
from jax.experimental.pallas import tpu as pltpu

# ----------------------------- small synthetic config -----------------------------
BATCH = 2
AUDIO_LEN = 160
CONV_DIMS = [32, 32, 32]        # real model: [512] * 7
CONV_KERNELS = [10, 3, 2]       # real model: [10, 3, 3, 3, 3, 2, 2]
CONV_STRIDES = [5, 2, 2]        # real model: [5, 2, 2, 2, 2, 2, 2]
HOP_SIZE = 20                   # product of conv strides (real model: 320)
HIDDEN = 32                     # real model: 1024
NUM_HEADS = 4
HEAD_DIM = HIDDEN // NUM_HEADS
INTERMEDIATE = 64
NUM_LAYERS = 3                  # real model: 24
FEATURE_LAYER = 2               # real module default: 7; scaled down with the depth
POS_KERNEL = 4                  # real model: 128
POS_GROUPS = 2                  # real model: 16
LN_EPS = 1e-5

MXU_DTYPE = jnp.bfloat16        # matmul operand dtype (accumulation stays f32)
ACT_DTYPE = jnp.bfloat16        # inter-kernel (HBM) activation dtype


@functools.lru_cache(maxsize=None)
def _vmem_limit_bytes():
    # Per-generation scoped-VMEM ceiling: half of physical VMEM, capped at 64 MiB.
    cap = 128 * 1024 * 1024
    try:
        cap = int(pltpu.get_tpu_info().vmem_capacity_bytes)
    except Exception:
        pass
    return max(16 * 1024 * 1024, min(cap // 2, 64 * 1024 * 1024))


def _compiler_params(semantics=("parallel",)):
    return pltpu.CompilerParams(dimension_semantics=tuple(semantics),
                                vmem_limit_bytes=_vmem_limit_bytes())


def _cost(flops, transcendentals, bytes_accessed):
    return pl.CostEstimate(flops=int(flops), transcendentals=int(transcendentals),
                           bytes_accessed=int(bytes_accessed))


# ------------------------------- in-kernel helpers ---------------------------------
def _gelu(x):
    # TODO(synk): HF wav2vec2 uses erf-GELU; tanh approximation kept (numerically close,
    # avoids relying on an erf lowering inside the kernel).  Keep this math in f32 (v5e).
    return 0.5 * x * (1.0 + jnp.tanh(0.7978845608028654 * (x + 0.044715 * x * x * x)))


def _layernorm(x, g, b, eps):
    mean = jnp.mean(x, axis=-1, keepdims=True)
    var = jnp.mean(jnp.square(x - mean), axis=-1, keepdims=True)
    return (x - mean) * jax.lax.rsqrt(var + eps) * g + b


def _mm(x, w):
    # bf16 operands into the MXU, f32 accumulation; VPU math stays f32.
    return jnp.dot(x.astype(MXU_DTYPE), w.astype(MXU_DTYPE),
                   preferred_element_type=jnp.float32)


# --------------------------------- Pallas kernels ----------------------------------
def _conv_ln_gelu_kernel(x_ref, w_ref, b_ref, g_ref, beta_ref, o_ref, *, lout, taps, eps):
    # Fused conv-block layer (conv + bias + LayerNorm(channels) + GELU).
    # Stride-folded in-kernel im2col: input rows are (stride*Cin) lanes; each super-tap q is
    # a contiguous sublane-shifted slab matmul'd against a folded (stride*Cin, Cout) weight.
    x = x_ref[...].astype(MXU_DTYPE)                       # (lout + taps - 1, stride*Cin)
    acc = jnp.zeros((lout, w_ref.shape[2]), jnp.float32)
    for q in range(taps):                                  # taps = ceil(K/stride) <= 2 here
        acc = acc + jnp.dot(x[q:q + lout, :], w_ref[q],
                            preferred_element_type=jnp.float32)
    y = _layernorm(acc + b_ref[...], g_ref[...], beta_ref[...], eps)
    o_ref[...] = _gelu(y).astype(o_ref.dtype)


def _ln_linear_kernel(x_ref, g_ref, beta_ref, w_ref, b_ref, o_ref, *, eps):
    # Fused feature projection: LayerNorm + Linear (batch folded into rows by the wrapper).
    x = _layernorm(x_ref[...].astype(jnp.float32), g_ref[...], beta_ref[...], eps)
    o_ref[...] = (_mm(x, w_ref[...]) + b_ref[...]).astype(o_ref.dtype)


def _posconv_gelu_res_kernel(xp_ref, w_ref, b_ref, h_ref, o_ref, *, t, kernel, groups, cg):
    # Fused positional conv + GELU + residual.  No HBM patch expansion and no block-diagonal
    # zero FLOPs: dense per-group matmuls accumulated over K contiguous shifted slabs.
    xp = xp_ref[...].astype(MXU_DTYPE)                     # (T + 2*pad, H), "same" padded
    outs = []
    for g in range(groups):
        xg = xp[:, g * cg:(g + 1) * cg]
        acc = jnp.zeros((t, cg), jnp.float32)
        for k in range(kernel):                            # stride-1 taps: shifted slices
            acc = acc + jnp.dot(xg[k:k + t, :], w_ref[k * groups + g],
                                preferred_element_type=jnp.float32)
        outs.append(acc)
    y = _gelu(jnp.concatenate(outs, axis=-1) + b_ref[...])
    o_ref[...] = (h_ref[...].astype(jnp.float32) + y).astype(o_ref.dtype)


def _encoder_layer_kernel(h_ref, ln1g_ref, ln1b_ref, wqkv_ref, bqkv_ref,
                          wo_ref, bo_ref, ln2g_ref, ln2b_ref,
                          w1_ref, b1_ref, w2_ref, b2_ref, o_ref,
                          *, num_heads, head_dim, eps):
    # One full Wav2Vec2EncoderLayerStableLayerNorm per grid step (pre-norm, eval mode:
    # dropout = identity).  Everything stays in VMEM for the whole layer.
    h = h_ref[...].astype(jnp.float32)                     # (T, H)
    t = h.shape[0]
    hidden = num_heads * head_dim
    scale = head_dim ** -0.5

    # --- self attention (pre-LN), fused (H, 3H) QKV projection ---
    x = _layernorm(h, ln1g_ref[...], ln1b_ref[...], eps)
    qkv = _mm(x, wqkv_ref[...]) + bqkv_ref[...]            # (T, 3H) f32
    # Batched-head layout (head on a leading axis): no per-head lane slicing, no per-head
    # o_proj.  Score einsum uses the standard TPU form (contraction dims last on both).
    q = (qkv[:, :hidden] * scale).reshape(t, num_heads, head_dim).astype(MXU_DTYPE)
    k = qkv[:, hidden:2 * hidden].reshape(t, num_heads, head_dim).astype(MXU_DTYPE)
    v = qkv[:, 2 * hidden:].reshape(t, num_heads, head_dim).astype(MXU_DTYPE)
    # TODO(synk): at real sequence lengths switch to a flash-style (q_tile, kv_tile) grid
    # axis with online-softmax scratch; at T=8 the full (NH, T, T) score block fits in VMEM.
    s = jnp.einsum("qnd,knd->nqk", q, k, preferred_element_type=jnp.float32)
    s = s - jnp.max(s, axis=-1, keepdims=True)
    p = jnp.exp(s)
    p = p * pl.reciprocal(jnp.sum(p, axis=-1, keepdims=True), approx=True)
    ctx = jnp.einsum("nqk,knd->qnd", p.astype(MXU_DTYPE), v,
                     preferred_element_type=jnp.float32)
    attn = ctx.reshape(t, hidden)                          # head-major concat, (T, H)
    h = h + _mm(attn, wo_ref[...]) + bo_ref[...]           # single (T,H)x(H,H) o_proj

    # --- feed forward (pre-LN), residual fused ---
    x = _layernorm(h, ln2g_ref[...], ln2b_ref[...], eps)
    x = _gelu(_mm(x, w1_ref[...]) + b1_ref[...])
    x = _mm(x, w2_ref[...]) + b2_ref[...]
    o_ref[...] = (h + x).astype(o_ref.dtype)


# ------------------------------ kernel call wrappers --------------------------------
def conv_ln_gelu(x, p, kernel_size, stride):
    # x: (B, L, Cin) channel-last.  Glue does only a free contiguous reshape
    # (B, L, Cin) -> (B, L/stride, stride*Cin); the kernel forms the conv via
    # ceil(K/stride) shifted slab matmuls (no K-fold HBM im2col expansion).
    B, L, cin = x.shape
    taps, scin, cout = p["w_fold"].shape                   # scin = stride * cin
    lout = (L - kernel_size) // stride + 1
    rows = lout + taps - 1
    lp = rows * stride
    if lp <= L:
        xr = x[:, :lp, :]
    else:
        xr = jnp.pad(x, ((0, 0), (0, lp - L), (0, 0)))
    xr = xr.reshape(B, rows, scin)
    flops = 2 * B * lout * taps * scin * cout
    byts = 2 * (B * rows * scin + B * lout * cout + taps * scin * cout) + 4 * 3 * cout
    return pl.pallas_call(
        functools.partial(_conv_ln_gelu_kernel, lout=lout, taps=taps, eps=LN_EPS),
        out_shape=jax.ShapeDtypeStruct((B, lout, cout), ACT_DTYPE),
        grid=(B,),
        in_specs=[
            pl.BlockSpec((None, rows, scin), lambda b: (b, 0, 0)),
            pl.BlockSpec((taps, scin, cout), lambda b: (0, 0, 0)),
            pl.BlockSpec((1, cout), lambda b: (0, 0)),
            pl.BlockSpec((1, cout), lambda b: (0, 0)),
            pl.BlockSpec((1, cout), lambda b: (0, 0)),
        ],
        out_specs=pl.BlockSpec((None, lout, cout), lambda b: (b, 0, 0)),
        compiler_params=_compiler_params(),
        cost_estimate=_cost(flops, B * lout * cout, byts),
    )(xr, p["w_fold"], p["b"], p["ln_g"], p["ln_b"])


def feature_projection(feats, p):
    # feats: (B, T', C).  Purely row-wise -> fold batch into rows (one call, one grid step).
    B, T, C = feats.shape
    x = feats.reshape(B * T, C)
    flops = 2 * B * T * C * HIDDEN
    byts = 2 * (B * T * C + B * T * HIDDEN + C * HIDDEN) + 4 * (2 * C + HIDDEN)
    out = pl.pallas_call(
        functools.partial(_ln_linear_kernel, eps=LN_EPS),
        out_shape=jax.ShapeDtypeStruct((B * T, HIDDEN), ACT_DTYPE),
        grid=(1,),
        in_specs=[
            pl.BlockSpec((B * T, C), lambda i: (0, 0)),
            pl.BlockSpec((1, C), lambda i: (0, 0)),
            pl.BlockSpec((1, C), lambda i: (0, 0)),
            pl.BlockSpec((C, HIDDEN), lambda i: (0, 0)),
            pl.BlockSpec((1, HIDDEN), lambda i: (0, 0)),
        ],
        out_specs=pl.BlockSpec((B * T, HIDDEN), lambda i: (0, 0)),
        compiler_params=_compiler_params(("arbitrary",)),
        cost_estimate=_cost(flops, 0, byts),
    )(x, p["ln_g"], p["ln_b"], p["w"], p["b"])
    return out.reshape(B, T, HIDDEN)


def pos_conv_embed_add(h, p):
    # Grouped "same"-padded positional conv + GELU + residual in ONE Pallas call.  Only the
    # small zero padding is added in glue; all patch formation happens in VMEM.  The
    # SamePadLayer "drop last step for even kernels" is handled by producing exactly T rows.
    B, T, H = h.shape
    pad = POS_KERNEL // 2
    cg = H // POS_GROUPS
    xp = jnp.pad(h, ((0, 0), (pad, pad), (0, 0)))
    flops = 2 * B * T * POS_KERNEL * cg * H
    byts = 2 * (B * (T + 2 * pad) * H + 2 * B * T * H + POS_KERNEL * POS_GROUPS * cg * cg) + 4 * H
    return pl.pallas_call(
        functools.partial(_posconv_gelu_res_kernel, t=T, kernel=POS_KERNEL,
                          groups=POS_GROUPS, cg=cg),
        out_shape=jax.ShapeDtypeStruct((B, T, H), ACT_DTYPE),
        grid=(B,),
        in_specs=[
            pl.BlockSpec((None, T + 2 * pad, H), lambda b: (b, 0, 0)),
            pl.BlockSpec((POS_KERNEL * POS_GROUPS, cg, cg), lambda b: (0, 0, 0)),
            pl.BlockSpec((1, H), lambda b: (0, 0)),
            pl.BlockSpec((None, T, H), lambda b: (b, 0, 0)),
        ],
        out_specs=pl.BlockSpec((None, T, H), lambda b: (b, 0, 0)),
        compiler_params=_compiler_params(),
        cost_estimate=_cost(flops, B * T * H, byts),
    )(xp, p["w"], p["b"], h)


def encoder_layer(h, p, out_dtype):
    # One pallas_call per transformer layer (ln1 + QKV + attention + o_proj + residual +
    # ln2 + FFN + residual), grid over batch.
    # TODO(synk): at real scale add a "parallel" sequence-tile grid axis and mark the
    # constant-index weight BlockSpecs pipeline_mode=pl.Buffered(1) to fit v7x's 64 MiB VMEM.
    B, T, H = h.shape
    flops = (2 * B * T * H * (3 * H + H + 2 * INTERMEDIATE)
             + 4 * B * NUM_HEADS * T * T * HEAD_DIM)
    trans = B * NUM_HEADS * T * T + B * T * INTERMEDIATE
    byts = 2 * (2 * B * T * H + 4 * H * H + 2 * H * INTERMEDIATE)
    vec = lambda n: pl.BlockSpec((1, n), lambda b: (0, 0))
    return pl.pallas_call(
        functools.partial(_encoder_layer_kernel, num_heads=NUM_HEADS,
                          head_dim=HEAD_DIM, eps=LN_EPS),
        out_shape=jax.ShapeDtypeStruct((B, T, H), out_dtype),
        grid=(B,),
        in_specs=[
            pl.BlockSpec((None, T, H), lambda b: (b, 0, 0)),
            vec(H), vec(H),                                           # ln1 gamma/beta
            pl.BlockSpec((H, 3 * H), lambda b: (0, 0)), vec(3 * H),   # fused QKV
            pl.BlockSpec((H, H), lambda b: (0, 0)), vec(H),           # o_proj
            vec(H), vec(H),                                           # ln2 gamma/beta
            pl.BlockSpec((H, INTERMEDIATE), lambda b: (0, 0)), vec(INTERMEDIATE),
            pl.BlockSpec((INTERMEDIATE, H), lambda b: (0, 0)), vec(H),
        ],
        out_specs=pl.BlockSpec((None, T, H), lambda b: (b, 0, 0)),
        compiler_params=_compiler_params(),
        cost_estimate=_cost(flops, trans, byts),
    )(h, p["ln1_g"], p["ln1_b"], p["wqkv"], p["bqkv"], p["wo"], p["bo"],
      p["ln2_g"], p["ln2_b"], p["w1"], p["b1"], p["w2"], p["b2"])


# --------------------------------- model pieces -------------------------------------
def feature_extractor(audio_padded, params):
    # Channel-last ("NLC") end-to-end: each layer is a single fused Pallas call
    # (conv + LayerNorm + GELU); no NCW<->NLC transposes and no HBM im2col copies.
    h = audio_padded[:, :, None]                           # (B, L, 1)
    for p, ksz, st in zip(params["conv"], CONV_KERNELS, CONV_STRIDES):
        h = conv_ln_gelu(h, p, ksz, st)
    return h                                               # (B, T', C) bf16


def wav2vec2_forward(audios, params):
    # 1) pad with hop_size//2 zeros on both sides (exactly as the PyTorch module does)
    B = audios.shape[0]
    zpad = jnp.zeros((B, HOP_SIZE // 2), audios.dtype)
    x = jnp.concatenate([zpad, audios, zpad], axis=1)
    # 2) conv feature extractor -> (B, T', C), already channel-last
    feats = feature_extractor(x, params)
    # 3) feature projection to hidden size (fused LN + Linear, batch folded into rows)
    h = feature_projection(feats, params["proj"])
    # 4) positional conv embedding + residual (this is hidden_states[0])
    h = pos_conv_embed_add(h, params["pos"])
    # 5) first FEATURE_LAYER transformer layers -> hidden_states[FEATURE_LAYER]
    #    (FEATURE_LAYER < NUM_LAYERS, so the encoder's final LayerNorm is not applied)
    for li in range(FEATURE_LAYER):
        out_dtype = jnp.float32 if li == FEATURE_LAYER - 1 else ACT_DTYPE
        h = encoder_layer(h, params["layers"][li], out_dtype)
    # 6) permute(0, 2, 1) -> (B, HIDDEN, T').  At real scale (T >= 128) this permute would
    #    be folded into the last layer's out_spec; at T=8 a transposed store is masked.
    return h.transpose(0, 2, 1)


# ------------------------------- deterministic init ---------------------------------
class _KeyGen:
    def __init__(self, key):
        self.key = key

    def __call__(self):
        self.key, sub = jax.random.split(self.key)
        return sub


def init_params(key):
    # torch-layout synthetic parameters (conv: (Cout, Cin, K); linear: (in, out))
    kg = _KeyGen(key)
    nrm = lambda shape, scale=0.02: scale * jax.random.normal(kg(), shape, jnp.float32)
    ones = lambda n: jnp.ones((n,), jnp.float32)
    zeros = lambda n: jnp.zeros((n,), jnp.float32)

    conv = []
    in_dims = [1] + CONV_DIMS[:-1]
    for cin, cout, k in zip(in_dims, CONV_DIMS, CONV_KERNELS):
        conv.append(dict(w=nrm((cout, cin, k), 0.1), b=nrm((cout,), 0.02),
                         ln_g=ones(cout), ln_b=zeros(cout)))

    proj = dict(ln_g=ones(CONV_DIMS[-1]), ln_b=zeros(CONV_DIMS[-1]),
                w=nrm((CONV_DIMS[-1], HIDDEN)), b=nrm((HIDDEN,)))

    # TODO(synk): torch weight_norm reparam (g * v / ||v||) must be folded here when loading
    # the real checkpoint; the synthetic dense weight is used directly.
    pos = dict(w=nrm((HIDDEN, HIDDEN // POS_GROUPS, POS_KERNEL), 0.1), b=nrm((HIDDEN,), 0.02))

    layers = []
    for _ in range(NUM_LAYERS):
        layers.append(dict(
            ln1_g=ones(HIDDEN), ln1_b=zeros(HIDDEN),
            q_w=nrm((HIDDEN, HIDDEN)), q_b=nrm((HIDDEN,)),
            k_w=nrm((HIDDEN, HIDDEN)), k_b=nrm((HIDDEN,)),
            v_w=nrm((HIDDEN, HIDDEN)), v_b=nrm((HIDDEN,)),
            o_w=nrm((HIDDEN, HIDDEN)), o_b=nrm((HIDDEN,)),
            ln2_g=ones(HIDDEN), ln2_b=zeros(HIDDEN),
            ff1_w=nrm((HIDDEN, INTERMEDIATE)), ff1_b=nrm((INTERMEDIATE,)),
            ff2_w=nrm((INTERMEDIATE, HIDDEN)), ff2_b=nrm((HIDDEN,)),
        ))
    return dict(conv=conv, proj=proj, pos=pos, layers=layers)


def _fold_conv_weight(w, stride):
    # torch conv weight (Cout, Cin, K) -> stride-folded super-taps (Q, stride*Cin, Cout)
    # with Q = ceil(K/stride): tap k = q*stride + r lands at lanes [r*Cin, (r+1)*Cin) of W_q.
    cout, cin, k = w.shape
    taps = (k - 1) // stride + 1
    wf = jnp.zeros((taps, stride * cin, cout), jnp.float32)
    for kk in range(k):
        q, r = divmod(kk, stride)
        wf = wf.at[q, r * cin:(r + 1) * cin, :].set(w[:, :, kk].T)
    return wf


def _grouped_pos_weight(w, groups):
    # grouped conv weight (Cout, Cin/G, K) -> (K*G, Cg_in, Cg_out) dense per-group blocks.
    cout, cg_in, k = w.shape
    cg_out = cout // groups
    wr = w.reshape(groups, cg_out, cg_in, k).transpose(3, 0, 2, 1)   # (k, g, ci, co)
    return wr.reshape(k * groups, cg_in, cg_out)


def prepare_params(raw):
    # One-time fold of torch-layout weights into kernel-friendly layouts:
    #  * conv weights -> stride-folded (Q, stride*Cin, Cout) super-tap matrices
    #  * grouped positional conv -> dense (K*G, Cg, Cg) per-group blocks
    #  * q/k/v -> one fused (H, 3H) weight; o_proj kept as a single (H, H) matrix
    #  * biases / LayerNorm params -> (1, N) f32 rows; all MXU operands in bf16
    mxu = lambda a: a.astype(MXU_DTYPE)
    row = lambda v: v.reshape(1, -1).astype(jnp.float32)

    conv = []
    for p, st in zip(raw["conv"], CONV_STRIDES):
        conv.append(dict(w_fold=mxu(_fold_conv_weight(p["w"], st)), b=row(p["b"]),
                         ln_g=row(p["ln_g"]), ln_b=row(p["ln_b"])))

    proj = dict(ln_g=row(raw["proj"]["ln_g"]), ln_b=row(raw["proj"]["ln_b"]),
                w=mxu(raw["proj"]["w"]), b=row(raw["proj"]["b"]))

    pos = dict(w=mxu(_grouped_pos_weight(raw["pos"]["w"], POS_GROUPS)),
               b=row(raw["pos"]["b"]))

    layers = []
    for p in raw["layers"]:
        wqkv = jnp.concatenate([p["q_w"], p["k_w"], p["v_w"]], axis=1)   # (H, 3H)
        bqkv = jnp.concatenate([p["q_b"], p["k_b"], p["v_b"]], axis=0)   # (3H,)
        layers.append(dict(
            ln1_g=row(p["ln1_g"]), ln1_b=row(p["ln1_b"]),
            wqkv=mxu(wqkv), bqkv=row(bqkv),
            wo=mxu(p["o_w"]), bo=row(p["o_b"]),
            ln2_g=row(p["ln2_g"]), ln2_b=row(p["ln2_b"]),
            w1=mxu(p["ff1_w"]), b1=row(p["ff1_b"]),
            w2=mxu(p["ff2_w"]), b2=row(p["ff2_b"]),
        ))
    return dict(conv=conv, proj=proj, pos=pos, layers=layers)


# --------------------------------------- main ---------------------------------------
if __name__ == "__main__":
    root = jax.random.PRNGKey(0)
    pkey, akey = jax.random.split(root)
    params = prepare_params(init_params(pkey))
    audios = jax.random.normal(akey, (BATCH, AUDIO_LEN), dtype=jnp.float32)

    fwd = jax.jit(wav2vec2_forward)
    out = fwd(audios, params)
    jax.block_until_ready(out)

    # expected output: (B, HIDDEN, T') with T' = 8 for AUDIO_LEN=160, HOP_SIZE=20
    assert out.shape == (BATCH, HIDDEN, 8), out.shape
    assert out.dtype == jnp.float32, out.dtype
    assert bool(jnp.all(jnp.isfinite(out)))
    print("KERNEL_OK")
</pallas_src>

<mosaic_0001>
module attributes {stable_mosaic.version = 11 : i64} {
  func.func @_conv_ln_gelu_kernel(%arg0: i32, %arg1: memref<1x36x5xf32, #tpu.memory_space<vmem>>, %arg2: memref<2x5x32xbf16, #tpu.memory_space<vmem>>, %arg3: memref<1x32xf32, #tpu.memory_space<vmem>>, %arg4: memref<1x32xf32, #tpu.memory_space<vmem>>, %arg5: memref<1x32xf32, #tpu.memory_space<vmem>>, %arg6: memref<1x35x32xbf16, #tpu.memory_space<vmem>>) attributes {dimension_semantics = [#tpu.dimension_semantics<parallel>], iteration_bounds = array<i64: 2>, scalar_prefetch = 0 : i64, scratch_operands = 0 : i64, tpu.core_type = #tpu.core_type<tc>, window_params = [{transform_indices = @transform_0, window_bounds = array<i64: 1, 36, 5>}, {pipeline_mode = #tpu.pipeline_mode<synchronous>, transform_indices = @transform_1, window_bounds = array<i64: 2, 5, 32>}, {pipeline_mode = #tpu.pipeline_mode<synchronous>, transform_indices = @transform_2, window_bounds = array<i64: 1, 32>}, {pipeline_mode = #tpu.pipeline_mode<synchronous>, transform_indices = @transform_3, window_bounds = array<i64: 1, 32>}, {pipeline_mode = #tpu.pipeline_mode<synchronous>, transform_indices = @transform_4, window_bounds = array<i64: 1, 32>}, {transform_indices = @transform_5, window_bounds = array<i64: 1, 35, 32>}]} {
    %c0 = arith.constant 0 : index
    %c0_0 = arith.constant 0 : index
    %c0_1 = arith.constant 0 : index
    %0 = vector.load %arg1[%c0, %c0_0, %c0_1] : memref<1x36x5xf32, #tpu.memory_space<vmem>>, vector<1x36x5xf32>
    %1 = vector.shape_cast %0 : vector<1x36x5xf32> to vector<36x5xf32>
    %2 = arith.truncf %1 : vector<36x5xf32> to vector<36x5xbf16>
    %cst = arith.constant 0.000000e+00 : f32
    %3 = vector.broadcast %cst : f32 to vector<35x32xf32>
    %4 = vector.extract_strided_slice %2 {offsets = [0, 0], sizes = [35, 5], strides = [1, 1]} : vector<36x5xbf16> to vector<35x5xbf16>
    %c0_2 = arith.constant 0 : index
    %c0_3 = arith.constant 0 : index
    %c0_4 = arith.constant 0 : index
    %5 = vector.load %arg2[%c0_2, %c0_3, %c0_4] : memref<2x5x32xbf16, #tpu.memory_space<vmem>>, vector<1x5x32xbf16>
    %6 = vector.shape_cast %5 : vector<1x5x32xbf16> to vector<5x32xbf16>
    %cst_5 = arith.constant dense<0.000000e+00> : vector<35x32xf32>
    %7 = tpu.matmul %4, %6, %cst_5 {dimension_numbers = #tpu.dot_dimension_numbers<[1], [0], [0], [1], [0, 0, 1, 1], [], []>} : vector<35x5xbf16>, vector<5x32xbf16>, vector<35x32xf32> -> vector<35x32xf32>
    %8 = arith.addf %3, %7 : vector<35x32xf32>
    %9 = vector.extract_strided_slice %2 {offsets = [1, 0], sizes = [35, 5], strides = [1, 1]} : vector<36x5xbf16> to vector<35x5xbf16>
    %c1 = arith.constant 1 : index
    %c0_6 = arith.constant 0 : index
    %c0_7 = arith.constant 0 : index
    %10 = vector.load %arg2[%c1, %c0_6, %c0_7] : memref<2x5x32xbf16, #tpu.memory_space<vmem>>, vector<1x5x32xbf16>
    %11 = vector.shape_cast %10 : vector<1x5x32xbf16> to vector<5x32xbf16>
    %cst_8 = arith.constant dense<0.000000e+00> : vector<35x32xf32>
    %12 = tpu.matmul %9, %11, %cst_8 {dimension_numbers = #tpu.dot_dimension_numbers<[1], [0], [0], [1], [0, 0, 1, 1], [], []>} : vector<35x5xbf16>, vector<5x32xbf16>, vector<35x32xf32> -> vector<35x32xf32>
    %13 = arith.addf %8, %12 : vector<35x32xf32>
    %c0_9 = arith.constant 0 : index
    %c0_10 = arith.constant 0 : index
    %14 = vector.load %arg3[%c0_9, %c0_10] : memref<1x32xf32, #tpu.memory_space<vmem>>, vector<1x32xf32>
    %15 = vector.broadcast %14 : vector<1x32xf32> to vector<35x32xf32>
    %16 = arith.addf %13, %15 : vector<35x32xf32>
    %c0_11 = arith.constant 0 : index
    %c0_12 = arith.constant 0 : index
    %17 = vector.load %arg4[%c0_11, %c0_12] : memref<1x32xf32, #tpu.memory_space<vmem>>, vector<1x32xf32>
    %c0_13 = arith.constant 0 : index
    %c0_14 = arith.constant 0 : index
    %18 = vector.load %arg5[%c0_13, %c0_14] : memref<1x32xf32, #tpu.memory_space<vmem>>, vector<1x32xf32>
    %cst_15 = arith.constant dense<0.000000e+00> : vector<35xf32>
    %19 = vector.multi_reduction <add>, %16, %cst_15 [1] : vector<35x32xf32> to vector<35xf32>
    %20 = vector.shape_cast %19 : vector<35xf32> to vector<35x1xf32>
    %cst_16 = arith.constant 3.200000e+01 : f32
    %21 = vector.broadcast %cst_16 : f32 to vector<35x1xf32>
    %22 = arith.divf %20, %21 : vector<35x1xf32>
    %23 = vector.broadcast %22 : vector<35x1xf32> to vector<35x32xf32>
    %24 = arith.subf %16, %23 : vector<35x32xf32>
    %25 = arith.mulf %24, %24 : vector<35x32xf32>
    %cst_17 = arith.constant dense<0.000000e+00> : vector<35xf32>
    %26 = vector.multi_reduction <add>, %25, %cst_17 [1] : vector<35x32xf32> to vector<35xf32>
    %27 = vector.shape_cast %26 : vector<35xf32> to vector<35x1xf32>
    %cst_18 = arith.constant 3.200000e+01 : f32
    %28 = vector.broadcast %cst_18 : f32 to vector<35x1xf32>
    %29 = arith.divf %27, %28 : vector<35x1xf32>
    %30 = vector.broadcast %22 : vector<35x1xf32> to vector<35x32xf32>
    %31 = arith.subf %16, %30 : vector<35x32xf32>
    %cst_19 = arith.constant 9.99999974E-6 : f32
    %32 = vector.broadcast %cst_19 : f32 to vector<35x1xf32>
    %33 = arith.addf %29, %32 : vector<35x1xf32>
    %34 = math.rsqrt %33 : vector<35x1xf32>
    %35 = vector.broadcast %34 : vector<35x1xf32> to vector<35x32xf32>
    %36 = arith.mulf %31, %35 : vector<35x32xf32>
    %37 = vector.broadcast %17 : vector<1x32xf32> to vector<35x32xf32>
    %38 = arith.mulf %36, %37 : vector<35x32xf32>
    %39 = vector.broadcast %18 : vector<1x32xf32> to vector<35x32xf32>
    %40 = arith.addf %38, %39 : vector<35x32xf32>
    %cst_20 = arith.constant 5.000000e-01 : f32
    %41 = vector.broadcast %cst_20 : f32 to vector<35x32xf32>
    %42 = arith.mulf %41, %40 : vector<35x32xf32>
    %cst_21 = arith.constant 4.471500e-02 : f32
    %43 = vector.broadcast %cst_21 : f32 to vector<35x32xf32>
    %44 = arith.mulf %43, %40 : vector<35x32xf32>
    %45 = arith.mulf %44, %40 : vector<35x32xf32>
    %46 = arith.mulf %45, %40 : vector<35x32xf32>
    %47 = arith.addf %40, %46 : vector<35x32xf32>
    %cst_22 = arith.constant 0.797884583 : f32
    %48 = vector.broadcast %cst_22 : f32 to vector<35x32xf32>
    %49 = arith.mulf %48, %47 : vector<35x32xf32>
    %50 = math.tanh %49 : vector<35x32xf32>
    %cst_23 = arith.constant 1.000000e+00 : f32
    %51 = vector.broadcast %cst_23 : f32 to vector<35x32xf32>
    %52 = arith.addf %51, %50 : vector<35x32xf32>
    %53 = arith.mulf %42, %52 : vector<35x32xf32>
    %54 = arith.truncf %53 : vector<35x32xf32> to vector<35x32xbf16>
    %c0_24 = arith.constant 0 : index
    %c0_25 = arith.constant 0 : index
    %c0_26 = arith.constant 0 : index
    %55 = vector.load %arg6[%c0_24, %c0_25, %c0_26] : memref<1x35x32xbf16, #tpu.memory_space<vmem>>, vector<1x35x32xbf16>
    %56 = vector.shape_cast %55 : vector<1x35x32xbf16> to vector<35x32xbf16>
    %57 = vector.shape_cast %54 : vector<35x32xbf16> to vector<1x35x32xbf16>
    tpu.vector_store %arg6[%c0_24, %c0_25, %c0_26], %57 {strides = array<i32>} : memref<1x35x32xbf16, #tpu.memory_space<vmem>>, vector<1x35x32xbf16>,
    return
  }
  func.func @transform_0(%arg0: i32) -> (i32, i32, i32) {
    %c0_i32 = arith.constant 0 : i32
    %c0_i32_0 = arith.constant 0 : i32
    %c0_i32_1 = arith.constant 0 : i32
    return %arg0, %c0_i32, %c0_i32_0 : i32, i32, i32
  }
  func.func @transform_1(%arg0: i32) -> (i32, i32, i32) {
    %c0_i32 = arith.constant 0 : i32
    %c0_i32_0 = arith.constant 0 : i32
    %c0_i32_1 = arith.constant 0 : i32
    %c0_i32_2 = arith.constant 0 : i32
    return %c0_i32, %c0_i32_0, %c0_i32_1 : i32, i32, i32
  }
  func.func @transform_2(%arg0: i32) -> (i32, i32) {
    %c0_i32 = arith.constant 0 : i32
    %c0_i32_0 = arith.constant 0 : i32
    %c0_i32_1 = arith.constant 0 : i32
    return %c0_i32, %c0_i32_0 : i32, i32
  }
  func.func @transform_3(%arg0: i32) -> (i32, i32) {
    %c0_i32 = arith.constant 0 : i32
    %c0_i32_0 = arith.constant 0 : i32
    %c0_i32_1 = arith.constant 0 : i32
    return %c0_i32, %c0_i32_0 : i32, i32
  }
  func.func @transform_4(%arg0: i32) -> (i32, i32) {
    %c0_i32 = arith.constant 0 : i32
    %c0_i32_0 = arith.constant 0 : i32
    %c0_i32_1 = arith.constant 0 : i32
    return %c0_i32, %c0_i32_0 : i32, i32
  }
  func.func @transform_5(%arg0: i32) -> (i32, i32, i32) {
    %c0_i32 = arith.constant 0 : i32
    %c0_i32_0 = arith.constant 0 : i32
    %c0_i32_1 = arith.constant 0 : i32
    return %arg0, %c0_i32, %c0_i32_0 : i32, i32, i32
  }
}

module attributes {stable_mosaic.version = 11 : i64} {
  func.func @_conv_ln_gelu_kernel(%arg0: i32, %arg1: memref<1x18x64xbf16, #tpu.memory_space<vmem>>, %arg2: memref<2x64x32xbf16, #tpu.memory_space<vmem>>, %arg3: memref<1x32xf32, #tpu.memory_space<vmem>>, %arg4: memref<1x32xf32, #tpu.memory_space<vmem>>, %arg5: memref<1x32xf32, #tpu.memory_space<vmem>>, %arg6: memref<1x17x32xbf16, #tpu.memory_space<vmem>>) attributes {dimension_semantics = [#tpu.dimension_semantics<parallel>], iteration_bounds = array<i64: 2>, scalar_prefetch = 0 : i64, scratch_operands = 0 : i64, tpu.core_type = #tpu.core_type<tc>, window_params = [{transform_indices = @transform_0, window_bounds = array<i64: 1, 18, 64>}, {pipeline_mode = #tpu.pipeline_mode<synchronous>, transform_indices = @transform_1, window_bounds = array<i64: 2, 64, 32>}, {pipeline_mode = #tpu.pipeline_mode<synchronous>, transform_indices = @transform_2, window_bounds = array<i64: 1, 32>}, {pipeline_mode = #tpu.pipeline_mode<synchronous>, transform_indices = @transform_3, window_bounds = array<i64: 1, 32>}, {pipeline_mode = #tpu.pipeline_mode<synchronous>, transform_indices = @transform_4, window_bounds = array<i64: 1, 32>}, {transform_indices = @transform_5, window_bounds = array<i64: 1, 17, 32>}]} {
    %c0 = arith.constant 0 : index
    %c0_0 = arith.constant 0 : index
    %c0_1 = arith.constant 0 : index
    %0 = vector.load %arg1[%c0, %c0_0, %c0_1] : memref<1x18x64xbf16, #tpu.memory_space<vmem>>, vector<1x18x64xbf16>
    %1 = vector.shape_cast %0 : vector<1x18x64xbf16> to vector<18x64xbf16>
    %cst = arith.constant 0.000000e+00 : f32
    %2 = vector.broadcast %cst : f32 to vector<17x32xf32>
    %3 = vector.extract_strided_slice %1 {offsets = [0, 0], sizes = [17, 64], strides = [1, 1]} : vector<18x64xbf16> to vector<17x64xbf16>
    %c0_2 = arith.constant 0 : index
    %c0_3 = arith.constant 0 : index
    %c0_4 = arith.constant 0 : index
    %4 = vector.load %arg2[%c0_2, %c0_3, %c0_4] : memref<2x64x32xbf16, #tpu.memory_space<vmem>>, vector<1x64x32xbf16>
    %5 = vector.shape_cast %4 : vector<1x64x32xbf16> to vector<64x32xbf16>
    %cst_5 = arith.constant dense<0.000000e+00> : vector<17x32xf32>
    %6 = tpu.matmul %3, %5, %cst_5 {dimension_numbers = #tpu.dot_dimension_numbers<[1], [0], [0], [1], [0, 0, 1, 1], [], []>} : vector<17x64xbf16>, vector<64x32xbf16>, vector<17x32xf32> -> vector<17x32xf32>
    %7 = arith.addf %2, %6 : vector<17x32xf32>
    %8 = vector.extract_strided_slice %1 {offsets = [1, 0], sizes = [17, 64], strides = [1, 1]} : vector<18x64xbf16> to vector<17x64xbf16>
    %c1 = arith.constant 1 : index
    %c0_6 = arith.constant 0 : index
    %c0_7 = arith.constant 0 : index
    %9 = vector.load %arg2[%c1, %c0_6, %c0_7] : memref<2x64x32xbf16, #tpu.memory_space<vmem>>, vector<1x64x32xbf16>
    %10 = vector.shape_cast %9 : vector<1x64x32xbf16> to vector<64x32xbf16>
    %cst_8 = arith.constant dense<0.000000e+00> : vector<17x32xf32>
    %11 = tpu.matmul %8, %10, %cst_8 {dimension_numbers = #tpu.dot_dimension_numbers<[1], [0], [0], [1], [0, 0, 1, 1], [], []>} : vector<17x64xbf16>, vector<64x32xbf16>, vector<17x32xf32> -> vector<17x32xf32>
    %12 = arith.addf %7, %11 : vector<17x32xf32>
    %c0_9 = arith.constant 0 : index
    %c0_10 = arith.constant 0 : index
    %13 = vector.load %arg3[%c0_9, %c0_10] : memref<1x32xf32, #tpu.memory_space<vmem>>, vector<1x32xf32>
    %14 = vector.broadcast %13 : vector<1x32xf32> to vector<17x32xf32>
    %15 = arith.addf %12, %14 : vector<17x32xf32>
    %c0_11 = arith.constant 0 : index
    %c0_12 = arith.constant 0 : index
    %16 = vector.load %arg4[%c0_11, %c0_12] : memref<1x32xf32, #tpu.memory_space<vmem>>, vector<1x32xf32>
    %c0_13 = arith.constant 0 : index
    %c0_14 = arith.constant 0 : index
    %17 = vector.load %arg5[%c0_13, %c0_14] : memref<1x32xf32, #tpu.memory_space<vmem>>, vector<1x32xf32>
    %cst_15 = arith.constant dense<0.000000e+00> : vector<17xf32>
    %18 = vector.multi_reduction <add>, %15, %cst_15 [1] : vector<17x32xf32> to vector<17xf32>
    %19 = vector.shape_cast %18 : vector<17xf32> to vector<17x1xf32>
    %cst_16 = arith.constant 3.200000e+01 : f32
    %20 = vector.broadcast %cst_16 : f32 to vector<17x1xf32>
    %21 = arith.divf %19, %20 : vector<17x1xf32>
    %22 = vector.broadcast %21 : vector<17x1xf32> to vector<17x32xf32>
    %23 = arith.subf %15, %22 : vector<17x32xf32>
    %24 = arith.mulf %23, %23 : vector<17x32xf32>
    %cst_17 = arith.constant dense<0.000000e+00> : vector<17xf32>
    %25 = vector.multi_reduction <add>, %24, %cst_17 [1] : vector<17x32xf32> to vector<17xf32>
    %26 = vector.shape_cast %25 : vector<17xf32> to vector<17x1xf32>
    %cst_18 = arith.constant 3.200000e+01 : f32
    %27 = vector.broadcast %cst_18 : f32 to vector<17x1xf32>
    %28 = arith.divf %26, %27 : vector<17x1xf32>
    %29 = vector.broadcast %21 : vector<17x1xf32> to vector<17x32xf32>
    %30 = arith.subf %15, %29 : vector<17x32xf32>
    %cst_19 = arith.constant 9.99999974E-6 : f32
    %31 = vector.broadcast %cst_19 : f32 to vector<17x1xf32>
    %32 = arith.addf %28, %31 : vector<17x1xf32>
    %33 = math.rsqrt %32 : vector<17x1xf32>
    %34 = vector.broadcast %33 : vector<17x1xf32> to vector<17x32xf32>
    %35 = arith.mulf %30, %34 : vector<17x32xf32>
    %36 = vector.broadcast %16 : vector<1x32xf32> to vector<17x32xf32>
    %37 = arith.mulf %35, %36 : vector<17x32xf32>
    %38 = vector.broadcast %17 : vector<1x32xf32> to vector<17x32xf32>
    %39 = arith.addf %37, %38 : vector<17x32xf32>
    %cst_20 = arith.constant 5.000000e-01 : f32
    %40 = vector.broadcast %cst_20 : f32 to vector<17x32xf32>
    %41 = arith.mulf %40, %39 : vector<17x32xf32>
    %cst_21 = arith.constant 4.471500e-02 : f32
    %42 = vector.broadcast %cst_21 : f32 to vector<17x32xf32>
    %43 = arith.mulf %42, %39 : vector<17x32xf32>
    %44 = arith.mulf %43, %39 : vector<17x32xf32>
    %45 = arith.mulf %44, %39 : vector<17x32xf32>
    %46 = arith.addf %39, %45 : vector<17x32xf32>
    %cst_22 = arith.constant 0.797884583 : f32
    %47 = vector.broadcast %cst_22 : f32 to vector<17x32xf32>
    %48 = arith.mulf %47, %46 : vector<17x32xf32>
    %49 = math.tanh %48 : vector<17x32xf32>
    %cst_23 = arith.constant 1.000000e+00 : f32
    %50 = vector.broadcast %cst_23 : f32 to vector<17x32xf32>
    %51 = arith.addf %50, %49 : vector<17x32xf32>
    %52 = arith.mulf %41, %51 : vector<17x32xf32>
    %53 = arith.truncf %52 : vector<17x32xf32> to vector<17x32xbf16>
    %c0_24 = arith.constant 0 : index
    %c0_25 = arith.constant 0 : index
    %c0_26 = arith.constant 0 : index
    %54 = vector.load %arg6[%c0_24, %c0_25, %c0_26] : memref<1x17x32xbf16, #tpu.memory_space<vmem>>, vector<1x17x32xbf16>
    %55 = vector.shape_cast %54 : vector<1x17x32xbf16> to vector<17x32xbf16>
    %56 = vector.shape_cast %53 : vector<17x32xbf16> to vector<1x17x32xbf16>
    tpu.vector_store %arg6[%c0_24, %c0_25, %c0_26], %56 {strides = array<i32>} : memref<1x17x32xbf16, #tpu.memory_space<vmem>>, vector<1x17x32xbf16>,
    return
  }
  func.func @transform_0(%arg0: i32) -> (i32, i32, i32) {
    %c0_i32 = arith.constant 0 : i32
    %c0_i32_0 = arith.constant 0 : i32
    %c0_i32_1 = arith.constant 0 : i32
    return %arg0, %c0_i32, %c0_i32_0 : i32, i32, i32
  }
  func.func @transform_1(%arg0: i32) -> (i32, i32, i32) {
    %c0_i32 = arith.constant 0 : i32
    %c0_i32_0 = arith.constant 0 : i32
    %c0_i32_1 = arith.constant 0 : i32
    %c0_i32_2 = arith.constant 0 : i32
    return %c0_i32, %c0_i32_0, %c0_i32_1 : i32, i32, i32
  }
  func.func @transform_2(%arg0: i32) -> (i32, i32) {
    %c0_i32 = arith.constant 0 : i32
    %c0_i32_0 = arith.constant 0 : i32
    %c0_i32_1 = arith.constant 0 : i32
    return %c0_i32, %c0_i32_0 : i32, i32
  }
  func.func @transform_3(%arg0: i32) -> (i32, i32) {
    %c0_i32 = arith.constant 0 : i32
    %c0_i32_0 = arith.constant 0 : i32
    %c0_i32_1 = arith.constant 0 : i32
    return %c0_i32, %c0_i32_0 : i32, i32
  }
  func.func @transform_4(%arg0: i32) -> (i32, i32) {
    %c0_i32 = arith.constant 0 : i32
    %c0_i32_0 = arith.constant 0 : i32
    %c0_i32_1 = arith.constant 0 : i32
    return %c0_i32, %c0_i32_0 : i32, i32
  }
  func.func @transform_5(%arg0: i32) -> (i32, i32, i32) {
    %c0_i32 = arith.constant 0 : i32
    %c0_i32_0 = arith.constant 0 : i32
    %c0_i32_1 = arith.constant 0 : i32
    return %arg0, %c0_i32, %c0_i32_0 : i32, i32, i32
  }
}

module attributes {stable_mosaic.version = 11 : i64} {
  func.func @_conv_ln_gelu_kernel(%arg0: i32, %arg1: memref<1x8x64xbf16, #tpu.memory_space<vmem>>, %arg2: memref<1x64x32xbf16, #tpu.memory_space<vmem>>, %arg3: memref<1x32xf32, #tpu.memory_space<vmem>>, %arg4: memref<1x32xf32, #tpu.memory_space<vmem>>, %arg5: memref<1x32xf32, #tpu.memory_space<vmem>>, %arg6: memref<1x8x32xbf16, #tpu.memory_space<vmem>>) attributes {dimension_semantics = [#tpu.dimension_semantics<parallel>], iteration_bounds = array<i64: 2>, scalar_prefetch = 0 : i64, scratch_operands = 0 : i64, tpu.core_type = #tpu.core_type<tc>, window_params = [{transform_indices = @transform_0, window_bounds = array<i64: 1, 8, 64>}, {pipeline_mode = #tpu.pipeline_mode<synchronous>, transform_indices = @transform_1, window_bounds = array<i64: 1, 64, 32>}, {pipeline_mode = #tpu.pipeline_mode<synchronous>, transform_indices = @transform_2, window_bounds = array<i64: 1, 32>}, {pipeline_mode = #tpu.pipeline_mode<synchronous>, transform_indices = @transform_3, window_bounds = array<i64: 1, 32>}, {pipeline_mode = #tpu.pipeline_mode<synchronous>, transform_indices = @transform_4, window_bounds = array<i64: 1, 32>}, {transform_indices = @transform_5, window_bounds = array<i64: 1, 8, 32>}]} {
    %c0 = arith.constant 0 : index
    %c0_0 = arith.constant 0 : index
    %c0_1 = arith.constant 0 : index
    %0 = vector.load %arg1[%c0, %c0_0, %c0_1] : memref<1x8x64xbf16, #tpu.memory_space<vmem>>, vector<1x8x64xbf16>
    %1 = vector.shape_cast %0 : vector<1x8x64xbf16> to vector<8x64xbf16>
    %cst = arith.constant 0.000000e+00 : f32
    %2 = vector.broadcast %cst : f32 to vector<8x32xf32>
    %c0_2 = arith.constant 0 : index
    %c0_3 = arith.constant 0 : index
    %c0_4 = arith.constant 0 : index
    %3 = vector.load %arg2[%c0_2, %c0_3, %c0_4] : memref<1x64x32xbf16, #tpu.memory_space<vmem>>, vector<1x64x32xbf16>
    %4 = vector.shape_cast %3 : vector<1x64x32xbf16> to vector<64x32xbf16>
    %cst_5 = arith.constant dense<0.000000e+00> : vector<8x32xf32>
    %5 = tpu.matmul %1, %4, %cst_5 {dimension_numbers = #tpu.dot_dimension_numbers<[1], [0], [0], [1], [0, 0, 1, 1], [], []>} : vector<8x64xbf16>, vector<64x32xbf16>, vector<8x32xf32> -> vector<8x32xf32>
    %6 = arith.addf %2, %5 : vector<8x32xf32>
    %c0_6 = arith.constant 0 : index
    %c0_7 = arith.constant 0 : index
    %7 = vector.load %arg3[%c0_6, %c0_7] : memref<1x32xf32, #tpu.memory_space<vmem>>, vector<1x32xf32>
    %8 = vector.broadcast %7 : vector<1x32xf32> to vector<8x32xf32>
    %9 = arith.addf %6, %8 : vector<8x32xf32>
    %c0_8 = arith.constant 0 : index
    %c0_9 = arith.constant 0 : index
    %10 = vector.load %arg4[%c0_8, %c0_9] : memref<1x32xf32, #tpu.memory_space<vmem>>, vector<1x32xf32>
    %c0_10 = arith.constant 0 : index
    %c0_11 = arith.constant 0 : index
    %11 = vector.load %arg5[%c0_10, %c0_11] : memref<1x32xf32, #tpu.memory_space<vmem>>, vector<1x32xf32>
    %cst_12 = arith.constant dense<0.000000e+00> : vector<8xf32>
    %12 = vector.multi_reduction <add>, %9, %cst_12 [1] : vector<8x32xf32> to vector<8xf32>
    %13 = vector.shape_cast %12 : vector<8xf32> to vector<8x1xf32>
    %cst_13 = arith.constant 3.200000e+01 : f32
    %14 = vector.broadcast %cst_13 : f32 to vector<8x1xf32>
    %15 = arith.divf %13, %14 : vector<8x1xf32>
    %16 = vector.broadcast %15 : vector<8x1xf32> to vector<8x32xf32>
    %17 = arith.subf %9, %16 : vector<8x32xf32>
    %18 = arith.mulf %17, %17 : vector<8x32xf32>
    %cst_14 = arith.constant dense<0.000000e+00> : vector<8xf32>
    %19 = vector.multi_reduction <add>, %18, %cst_14 [1] : vector<8x32xf32> to vector<8xf32>
    %20 = vector.shape_cast %19 : vector<8xf32> to vector<8x1xf32>
    %cst_15 = arith.constant 3.200000e+01 : f32
    %21 = vector.broadcast %cst_15 : f32 to vector<8x1xf32>
    %22 = arith.divf %20, %21 : vector<8x1xf32>
    %23 = vector.broadcast %15 : vector<8x1xf32> to vector<8x32xf32>
    %24 = arith.subf %9, %23 : vector<8x32xf32>
    %cst_16 = arith.constant 9.99999974E-6 : f32
    %25 = vector.broadcast %cst_16 : f32 to vector<8x1xf32>
    %26 = arith.addf %22, %25 : vector<8x1xf32>
    %27 = math.rsqrt %26 : vector<8x1xf32>
    %28 = vector.broadcast %27 : vector<8x1xf32> to vector<8x32xf32>
    %29 = arith.mulf %24, %28 : vector<8x32xf32>
    %30 = vector.broadcast %10 : vector<1x32xf32> to vector<8x32xf32>
    %31 = arith.mulf %29, %30 : vector<8x32xf32>
    %32 = vector.broadcast %11 : vector<1x32xf32> to vector<8x32xf32>
    %33 = arith.addf %31, %32 : vector<8x32xf32>
    %cst_17 = arith.constant 5.000000e-01 : f32
    %34 = vector.broadcast %cst_17 : f32 to vector<8x32xf32>
    %35 = arith.mulf %34, %33 : vector<8x32xf32>
    %cst_18 = arith.constant 4.471500e-02 : f32
    %36 = vector.broadcast %cst_18 : f32 to vector<8x32xf32>
    %37 = arith.mulf %36, %33 : vector<8x32xf32>
    %38 = arith.mulf %37, %33 : vector<8x32xf32>
    %39 = arith.mulf %38, %33 : vector<8x32xf32>
    %40 = arith.addf %33, %39 : vector<8x32xf32>
    %cst_19 = arith.constant 0.797884583 : f32
    %41 = vector.broadcast %cst_19 : f32 to vector<8x32xf32>
    %42 = arith.mulf %41, %40 : vector<8x32xf32>
    %43 = math.tanh %42 : vector<8x32xf32>
    %cst_20 = arith.constant 1.000000e+00 : f32
    %44 = vector.broadcast %cst_20 : f32 to vector<8x32xf32>
    %45 = arith.addf %44, %43 : vector<8x32xf32>
    %46 = arith.mulf %35, %45 : vector<8x32xf32>
    %47 = arith.truncf %46 : vector<8x32xf32> to vector<8x32xbf16>
    %c0_21 = arith.constant 0 : index
    %c0_22 = arith.constant 0 : index
    %c0_23 = arith.constant 0 : index
    %48 = vector.load %arg6[%c0_21, %c0_22, %c0_23] : memref<1x8x32xbf16, #tpu.memory_space<vmem>>, vector<1x8x32xbf16>
    %49 = vector.shape_cast %48 : vector<1x8x32xbf16> to vector<8x32xbf16>
    %50 = vector.shape_cast %47 : vector<8x32xbf16> to vector<1x8x32xbf16>
    tpu.vector_store %arg6[%c0_21, %c0_22, %c0_23], %50 {strides = array<i32>} : memref<1x8x32xbf16, #tpu.memory_space<vmem>>, vector<1x8x32xbf16>,
    return
  }
  func.func @transform_0(%arg0: i32) -> (i32, i32, i32) {
    %c0_i32 = arith.constant 0 : i32
    %c0_i32_0 = arith.constant 0 : i32
    %c0_i32_1 = arith.constant 0 : i32
    return %arg0, %c0_i32, %c0_i32_0 : i32, i32, i32
  }
  func.func @transform_1(%arg0: i32) -> (i32, i32, i32) {
    %c0_i32 = arith.constant 0 : i32
    %c0_i32_0 = arith.constant 0 : i32
    %c0_i32_1 = arith.constant 0 : i32
    %c0_i32_2 = arith.constant 0 : i32
    return %c0_i32, %c0_i32_0, %c0_i32_1 : i32, i32, i32
  }
  func.func @transform_2(%arg0: i32) -> (i32, i32) {
    %c0_i32 = arith.constant 0 : i32
    %c0_i32_0 = arith.constant 0 : i32
    %c0_i32_1 = arith.constant 0 : i32
    return %c0_i32, %c0_i32_0 : i32, i32
  }
  func.func @transform_3(%arg0: i32) -> (i32, i32) {
    %c0_i32 = arith.constant 0 : i32
    %c0_i32_0 = arith.constant 0 : i32
    %c0_i32_1 = arith.constant 0 : i32
    return %c0_i32, %c0_i32_0 : i32, i32
  }
  func.func @transform_4(%arg0: i32) -> (i32, i32) {
    %c0_i32 = arith.constant 0 : i32
    %c0_i32_0 = arith.constant 0 : i32
    %c0_i32_1 = arith.constant 0 : i32
    return %c0_i32, %c0_i32_0 : i32, i32
  }
  func.func @transform_5(%arg0: i32) -> (i32, i32, i32) {
    %c0_i32 = arith.constant 0 : i32
    %c0_i32_0 = arith.constant 0 : i32
    %c0_i32_1 = arith.constant 0 : i32
    return %arg0, %c0_i32, %c0_i32_0 : i32, i32, i32
  }
}

module attributes {stable_mosaic.version = 11 : i64} {
  func.func @_ln_linear_kernel(%arg0: i32, %arg1: memref<16x32xbf16, #tpu.memory_space<vmem>>, %arg2: memref<1x32xf32, #tpu.memory_space<vmem>>, %arg3: memref<1x32xf32, #tpu.memory_space<vmem>>, %arg4: memref<32x32xbf16, #tpu.memory_space<vmem>>, %arg5: memref<1x32xf32, #tpu.memory_space<vmem>>, %arg6: memref<16x32xbf16, #tpu.memory_space<vmem>>) attributes {dimension_semantics = [#tpu.dimension_semantics<arbitrary>], iteration_bounds = array<i64: 1>, scalar_prefetch = 0 : i64, scratch_operands = 0 : i64, tpu.core_type = #tpu.core_type<tc>, window_params = [{pipeline_mode = #tpu.pipeline_mode<synchronous>, transform_indices = @transform_0, window_bounds = array<i64: 16, 32>}, {pipeline_mode = #tpu.pipeline_mode<synchronous>, transform_indices = @transform_1, window_bounds = array<i64: 1, 32>}, {pipeline_mode = #tpu.pipeline_mode<synchronous>, transform_indices = @transform_2, window_bounds = array<i64: 1, 32>}, {pipeline_mode = #tpu.pipeline_mode<synchronous>, transform_indices = @transform_3, window_bounds = array<i64: 32, 32>}, {pipeline_mode = #tpu.pipeline_mode<synchronous>, transform_indices = @transform_4, window_bounds = array<i64: 1, 32>}, {pipeline_mode = #tpu.pipeline_mode<synchronous>, transform_indices = @transform_5, window_bounds = array<i64: 16, 32>}]} {
    %c0 = arith.constant 0 : index
    %c0_0 = arith.constant 0 : index
    %0 = vector.load %arg1[%c0, %c0_0] : memref<16x32xbf16, #tpu.memory_space<vmem>>, vector<16x32xbf16>
    %1 = arith.extf %0 : vector<16x32xbf16> to vector<16x32xf32>
    %c0_1 = arith.constant 0 : index
    %c0_2 = arith.constant 0 : index
    %2 = vector.load %arg2[%c0_1, %c0_2] : memref<1x32xf32, #tpu.memory_space<vmem>>, vector<1x32xf32>
    %c0_3 = arith.constant 0 : index
    %c0_4 = arith.constant 0 : index
    %3 = vector.load %arg3[%c0_3, %c0_4] : memref<1x32xf32, #tpu.memory_space<vmem>>, vector<1x32xf32>
    %cst = arith.constant dense<0.000000e+00> : vector<16xf32>
    %4 = vector.multi_reduction <add>, %1, %cst [1] : vector<16x32xf32> to vector<16xf32>
    %5 = vector.shape_cast %4 : vector<16xf32> to vector<16x1xf32>
    %cst_5 = arith.constant 3.200000e+01 : f32
    %6 = vector.broadcast %cst_5 : f32 to vector<16x1xf32>
    %7 = arith.divf %5, %6 : vector<16x1xf32>
    %8 = vector.broadcast %7 : vector<16x1xf32> to vector<16x32xf32>
    %9 = arith.subf %1, %8 : vector<16x32xf32>
    %10 = arith.mulf %9, %9 : vector<16x32xf32>
    %cst_6 = arith.constant dense<0.000000e+00> : vector<16xf32>
    %11 = vector.multi_reduction <add>, %10, %cst_6 [1] : vector<16x32xf32> to vector<16xf32>
    %12 = vector.shape_cast %11 : vector<16xf32> to vector<16x1xf32>
    %cst_7 = arith.constant 3.200000e+01 : f32
    %13 = vector.broadcast %cst_7 : f32 to vector<16x1xf32>
    %14 = arith.divf %12, %13 : vector<16x1xf32>
    %15 = vector.broadcast %7 : vector<16x1xf32> to vector<16x32xf32>
    %16 = arith.subf %1, %15 : vector<16x32xf32>
    %cst_8 = arith.constant 9.99999974E-6 : f32
    %17 = vector.broadcast %cst_8 : f32 to vector<16x1xf32>
    %18 = arith.addf %14, %17 : vector<16x1xf32>
    %19 = math.rsqrt %18 : vector<16x1xf32>
    %20 = vector.broadcast %19 : vector<16x1xf32> to vector<16x32xf32>
    %21 = arith.mulf %16, %20 : vector<16x32xf32>
    %22 = vector.broadcast %2 : vector<1x32xf32> to vector<16x32xf32>
    %23 = arith.mulf %21, %22 : vector<16x32xf32>
    %24 = vector.broadcast %3 : vector<1x32xf32> to vector<16x32xf32>
    %25 = arith.addf %23, %24 : vector<16x32xf32>
    %c0_9 = arith.constant 0 : index
    %c0_10 = arith.constant 0 : index
    %26 = vector.load %arg4[%c0_9, %c0_10] : memref<32x32xbf16, #tpu.memory_space<vmem>>, vector<32x32xbf16>
    %27 = arith.truncf %25 : vector<16x32xf32> to vector<16x32xbf16>
    %cst_11 = arith.constant dense<0.000000e+00> : vector<16x32xf32>
    %28 = tpu.matmul %27, %26, %cst_11 {dimension_numbers = #tpu.dot_dimension_numbers<[1], [0], [0], [1], [0, 0, 1, 1], [], []>} : vector<16x32xbf16>, vector<32x32xbf16>, vector<16x32xf32> -> vector<16x32xf32>
    %c0_12 = arith.constant 0 : index
    %c0_13 = arith.constant 0 : index
    %29 = vector.load %arg5[%c0_12, %c0_13] : memref<1x32xf32, #tpu.memory_space<vmem>>, vector<1x32xf32>
    %30 = vector.broadcast %29 : vector<1x32xf32> to vector<16x32xf32>
    %31 = arith.addf %28, %30 : vector<16x32xf32>
    %32 = arith.truncf %31 : vector<16x32xf32> to vector<16x32xbf16>
    %c0_14 = arith.constant 0 : index
    %c0_15 = arith.constant 0 : index
    %33 = vector.load %arg6[%c0_14, %c0_15] : memref<16x32xbf16, #tpu.memory_space<vmem>>, vector<16x32xbf16>
    tpu.vector_store %arg6[%c0_14, %c0_15], %32 {strides = array<i32>} : memref<16x32xbf16, #tpu.memory_space<vmem>>, vector<16x32xbf16>,
    return
  }
  func.func @transform_0(%arg0: i32) -> (i32, i32) {
    %c0_i32 = arith.constant 0 : i32
    %c0_i32_0 = arith.constant 0 : i32
    %c0_i32_1 = arith.constant 0 : i32
    return %c0_i32, %c0_i32_0 : i32, i32
  }
  func.func @transform_1(%arg0: i32) -> (i32, i32) {
    %c0_i32 = arith.constant 0 : i32
    %c0_i32_0 = arith.constant 0 : i32
    %c0_i32_1 = arith.constant 0 : i32
    return %c0_i32, %c0_i32_0 : i32, i32
  }
  func.func @transform_2(%arg0: i32) -> (i32, i32) {
    %c0_i32 = arith.constant 0 : i32
    %c0_i32_0 = arith.constant 0 : i32
    %c0_i32_1 = arith.constant 0 : i32
    return %c0_i32, %c0_i32_0 : i32, i32
  }
  func.func @transform_3(%arg0: i32) -> (i32, i32) {
    %c0_i32 = arith.constant 0 : i32
    %c0_i32_0 = arith.constant 0 : i32
    %c0_i32_1 = arith.constant 0 : i32
    return %c0_i32, %c0_i32_0 : i32, i32
  }
  func.func @transform_4(%arg0: i32) -> (i32, i32) {
    %c0_i32 = arith.constant 0 : i32
    %c0_i32_0 = arith.constant 0 : i32
    %c0_i32_1 = arith.constant 0 : i32
    return %c0_i32, %c0_i32_0 : i32, i32
  }
  func.func @transform_5(%arg0: i32) -> (i32, i32) {
    %c0_i32 = arith.constant 0 : i32
    %c0_i32_0 = arith.constant 0 : i32
    %c0_i32_1 = arith.constant 0 : i32
    return %c0_i32, %c0_i32_0 : i32, i32
  }
}

module attributes {stable_mosaic.version = 11 : i64} {
  func.func @_posconv_gelu_res_kernel(%arg0: i32, %arg1: memref<1x12x32xbf16, #tpu.memory_space<vmem>>, %arg2: memref<8x16x16xbf16, #tpu.memory_space<vmem>>, %arg3: memref<1x32xf32, #tpu.memory_space<vmem>>, %arg4: memref<1x8x32xbf16, #tpu.memory_space<vmem>>, %arg5: memref<1x8x32xbf16, #tpu.memory_space<vmem>>) attributes {dimension_semantics = [#tpu.dimension_semantics<parallel>], iteration_bounds = array<i64: 2>, scalar_prefetch = 0 : i64, scratch_operands = 0 : i64, tpu.core_type = #tpu.core_type<tc>, window_params = [{transform_indices = @transform_0, window_bounds = array<i64: 1, 12, 32>}, {pipeline_mode = #tpu.pipeline_mode<synchronous>, transform_indices = @transform_1, window_bounds = array<i64: 8, 16, 16>}, {pipeline_mode = #tpu.pipeline_mode<synchronous>, transform_indices = @transform_2, window_bounds = array<i64: 1, 32>}, {transform_indices = @transform_3, window_bounds = array<i64: 1, 8, 32>}, {transform_indices = @transform_4, window_bounds = array<i64: 1, 8, 32>}]} {
    %c0 = arith.constant 0 : index
    %c0_0 = arith.constant 0 : index
    %c0_1 = arith.constant 0 : index
    %0 = vector.load %arg1[%c0, %c0_0, %c0_1] : memref<1x12x32xbf16, #tpu.memory_space<vmem>>, vector<1x12x32xbf16>
    %1 = vector.shape_cast %0 : vector<1x12x32xbf16> to vector<12x32xbf16>
    %2 = vector.extract_strided_slice %1 {offsets = [0, 0], sizes = [12, 16], strides = [1, 1]} : vector<12x32xbf16> to vector<12x16xbf16>
    %cst = arith.constant 0.000000e+00 : f32
    %3 = vector.broadcast %cst : f32 to vector<8x16xf32>
    %4 = vector.extract_strided_slice %2 {offsets = [0, 0], sizes = [8, 16], strides = [1, 1]} : vector<12x16xbf16> to vector<8x16xbf16>
    %c0_2 = arith.constant 0 : index
    %c0_3 = arith.constant 0 : index
    %c0_4 = arith.constant 0 : index
    %5 = vector.load %arg2[%c0_2, %c0_3, %c0_4] : memref<8x16x16xbf16, #tpu.memory_space<vmem>>, vector<1x16x16xbf16>
    %6 = vector.shape_cast %5 : vector<1x16x16xbf16> to vector<16x16xbf16>
    %cst_5 = arith.constant dense<0.000000e+00> : vector<8x16xf32>
    %7 = tpu.matmul %4, %6, %cst_5 {dimension_numbers = #tpu.dot_dimension_numbers<[1], [0], [0], [1], [0, 0, 1, 1], [], []>} : vector<8x16xbf16>, vector<16x16xbf16>, vector<8x16xf32> -> vector<8x16xf32>
    %8 = arith.addf %3, %7 : vector<8x16xf32>
    %9 = vector.extract_strided_slice %2 {offsets = [1, 0], sizes = [8, 16], strides = [1, 1]} : vector<12x16xbf16> to vector<8x16xbf16>
    %c2 = arith.constant 2 : index
    %c0_6 = arith.constant 0 : index
    %c0_7 = arith.constant 0 : index
    %10 = vector.load %arg2[%c2, %c0_6, %c0_7] : memref<8x16x16xbf16, #tpu.memory_space<vmem>>, vector<1x16x16xbf16>
    %11 = vector.shape_cast %10 : vector<1x16x16xbf16> to vector<16x16xbf16>
    %cst_8 = arith.constant dense<0.000000e+00> : vector<8x16xf32>
    %12 = tpu.matmul %9, %11, %cst_8 {dimension_numbers = #tpu.dot_dimension_numbers<[1], [0], [0], [1], [0, 0, 1, 1], [], []>} : vector<8x16xbf16>, vector<16x16xbf16>, vector<8x16xf32> -> vector<8x16xf32>
    %13 = arith.addf %8, %12 : vector<8x16xf32>
    %14 = vector.extract_strided_slice %2 {offsets = [2, 0], sizes = [8, 16], strides = [1, 1]} : vector<12x16xbf16> to vector<8x16xbf16>
    %c4 = arith.constant 4 : index
    %c0_9 = arith.constant 0 : index
    %c0_10 = arith.constant 0 : index
    %15 = vector.load %arg2[%c4, %c0_9, %c0_10] : memref<8x16x16xbf16, #tpu.memory_space<vmem>>, vector<1x16x16xbf16>
    %16 = vector.shape_cast %15 : vector<1x16x16xbf16> to vector<16x16xbf16>
    %cst_11 = arith.constant dense<0.000000e+00> : vector<8x16xf32>
    %17 = tpu.matmul %14, %16, %cst_11 {dimension_numbers = #tpu.dot_dimension_numbers<[1], [0], [0], [1], [0, 0, 1, 1], [], []>} : vector<8x16xbf16>, vector<16x16xbf16>, vector<8x16xf32> -> vector<8x16xf32>
    %18 = arith.addf %13, %17 : vector<8x16xf32>
    %19 = vector.extract_strided_slice %2 {offsets = [3, 0], sizes = [8, 16], strides = [1, 1]} : vector<12x16xbf16> to vector<8x16xbf16>
    %c6 = arith.constant 6 : index
    %c0_12 = arith.constant 0 : index
    %c0_13 = arith.constant 0 : index
    %20 = vector.load %arg2[%c6, %c0_12, %c0_13] : memref<8x16x16xbf16, #tpu.memory_space<vmem>>, vector<1x16x16xbf16>
    %21 = vector.shape_cast %20 : vector<1x16x16xbf16> to vector<16x16xbf16>
    %cst_14 = arith.constant dense<0.000000e+00> : vector<8x16xf32>
    %22 = tpu.matmul %19, %21, %cst_14 {dimension_numbers = #tpu.dot_dimension_numbers<[1], [0], [0], [1], [0, 0, 1, 1], [], []>} : vector<8x16xbf16>, vector<16x16xbf16>, vector<8x16xf32> -> vector<8x16xf32>
    %23 = arith.addf %18, %22 : vector<8x16xf32>
    %24 = vector.extract_strided_slice %1 {offsets = [0, 16], sizes = [12, 16], strides = [1, 1]} : vector<12x32xbf16> to vector<12x16xbf16>
    %cst_15 = arith.constant 0.000000e+00 : f32
    %25 = vector.broadcast %cst_15 : f32 to vector<8x16xf32>
    %26 = vector.extract_strided_slice %24 {offsets = [0, 0], sizes = [8, 16], strides = [1, 1]} : vector<12x16xbf16> to vector<8x16xbf16>
    %c1 = arith.constant 1 : index
    %c0_16 = arith.constant 0 : index
    %c0_17 = arith.constant 0 : index
    %27 = vector.load %arg2[%c1, %c0_16, %c0_17] : memref<8x16x16xbf16, #tpu.memory_space<vmem>>, vector<1x16x16xbf16>
    %28 = vector.shape_cast %27 : vector<1x16x16xbf16> to vector<16x16xbf16>
    %cst_18 = arith.constant dense<0.000000e+00> : vector<8x16xf32>
    %29 = tpu.matmul %26, %28, %cst_18 {dimension_numbers = #tpu.dot_dimension_numbers<[1], [0], [0], [1], [0, 0, 1, 1], [], []>} : vector<8x16xbf16>, vector<16x16xbf16>, vector<8x16xf32> -> vector<8x16xf32>
    %30 = arith.addf %25, %29 : vector<8x16xf32>
    %31 = vector.extract_strided_slice %24 {offsets = [1, 0], sizes = [8, 16], strides = [1, 1]} : vector<12x16xbf16> to vector<8x16xbf16>
    %c3 = arith.constant 3 : index
    %c0_19 = arith.constant 0 : index
    %c0_20 = arith.constant 0 : index
    %32 = vector.load %arg2[%c3, %c0_19, %c0_20] : memref<8x16x16xbf16, #tpu.memory_space<vmem>>, vector<1x16x16xbf16>
    %33 = vector.shape_cast %32 : vector<1x16x16xbf16> to vector<16x16xbf16>
    %cst_21 = arith.constant dense<0.000000e+00> : vector<8x16xf32>
    %34 = tpu.matmul %31, %33, %cst_21 {dimension_numbers = #tpu.dot_dimension_numbers<[1], [0], [0], [1], [0, 0, 1, 1], [], []>} : vector<8x16xbf16>, vector<16x16xbf16>, vector<8x16xf32> -> vector<8x16xf32>
    %35 = arith.addf %30, %34 : vector<8x16xf32>
    %36 = vector.extract_strided_slice %24 {offsets = [2, 0], sizes = [8, 16], strides = [1, 1]} : vector<12x16xbf16> to vector<8x16xbf16>
    %c5 = arith.constant 5 : index
    %c0_22 = arith.constant 0 : index
    %c0_23 = arith.constant 0 : index
    %37 = vector.load %arg2[%c5, %c0_22, %c0_23] : memref<8x16x16xbf16, #tpu.memory_space<vmem>>, vector<1x16x16xbf16>
    %38 = vector.shape_cast %37 : vector<1x16x16xbf16> to vector<16x16xbf16>
    %cst_24 = arith.constant dense<0.000000e+00> : vector<8x16xf32>
    %39 = tpu.matmul %36, %38, %cst_24 {dimension_numbers = #tpu.dot_dimension_numbers<[1], [0], [0], [1], [0, 0, 1, 1], [], []>} : vector<8x16xbf16>, vector<16x16xbf16>, vector<8x16xf32> -> vector<8x16xf32>
    %40 = arith.addf %35, %39 : vector<8x16xf32>
    %41 = vector.extract_strided_slice %24 {offsets = [3, 0], sizes = [8, 16], strides = [1, 1]} : vector<12x16xbf16> to vector<8x16xbf16>
    %c7 = arith.constant 7 : index
    %c0_25 = arith.constant 0 : index
    %c0_26 = arith.constant 0 : index
    %42 = vector.load %arg2[%c7, %c0_25, %c0_26] : memref<8x16x16xbf16, #tpu.memory_space<vmem>>, vector<1x16x16xbf16>
    %43 = vector.shape_cast %42 : vector<1x16x16xbf16> to vector<16x16xbf16>
    %cst_27 = arith.constant dense<0.000000e+00> : vector<8x16xf32>
    %44 = tpu.matmul %41, %43, %cst_27 {dimension_numbers = #tpu.dot_dimension_numbers<[1], [0], [0], [1], [0, 0, 1, 1], [], []>} : vector<8x16xbf16>, vector<16x16xbf16>, vector<8x16xf32> -> vector<8x16xf32>
    %45 = arith.addf %40, %44 : vector<8x16xf32>
    %46 = tpu.concatenate %23, %45 in 1 : vector<8x16xf32>, vector<8x16xf32> -> vector<8x32xf32>
    %c0_28 = arith.constant 0 : index
    %c0_29 = arith.constant 0 : index
    %47 = vector.load %arg3[%c0_28, %c0_29] : memref<1x32xf32, #tpu.memory_space<vmem>>, vector<1x32xf32>
    %48 = vector.broadcast %47 : vector<1x32xf32> to vector<8x32xf32>
    %49 = arith.addf %46, %48 : vector<8x32xf32>
    %cst_30 = arith.constant 5.000000e-01 : f32
    %50 = vector.broadcast %cst_30 : f32 to vector<8x32xf32>
    %51 = arith.mulf %50, %49 : vector<8x32xf32>
    %cst_31 = arith.constant 4.471500e-02 : f32
    %52 = vector.broadcast %cst_31 : f32 to vector<8x32xf32>
    %53 = arith.mulf %52, %49 : vector<8x32xf32>
    %54 = arith.mulf %53, %49 : vector<8x32xf32>
    %55 = arith.mulf %54, %49 : vector<8x32xf32>
    %56 = arith.addf %49, %55 : vector<8x32xf32>
    %cst_32 = arith.constant 0.797884583 : f32
    %57 = vector.broadcast %cst_32 : f32 to vector<8x32xf32>
    %58 = arith.mulf %57, %56 : vector<8x32xf32>
    %59 = math.tanh %58 : vector<8x32xf32>
    %cst_33 = arith.constant 1.000000e+00 : f32
    %60 = vector.broadcast %cst_33 : f32 to vector<8x32xf32>
    %61 = arith.addf %60, %59 : vector<8x32xf32>
    %62 = arith.mulf %51, %61 : vector<8x32xf32>
    %c0_34 = arith.constant 0 : index
    %c0_35 = arith.constant 0 : index
    %c0_36 = arith.constant 0 : index
    %63 = vector.load %arg4[%c0_34, %c0_35, %c0_36] : memref<1x8x32xbf16, #tpu.memory_space<vmem>>, vector<1x8x32xbf16>
    %64 = vector.shape_cast %63 : vector<1x8x32xbf16> to vector<8x32xbf16>
    %65 = arith.extf %64 : vector<8x32xbf16> to vector<8x32xf32>
    %66 = arith.addf %65, %62 : vector<8x32xf32>
    %67 = arith.truncf %66 : vector<8x32xf32> to vector<8x32xbf16>
    %c0_37 = arith.constant 0 : index
    %c0_38 = arith.constant 0 : index
    %c0_39 = arith.constant 0 : index
    %68 = vector.load %arg5[%c0_37, %c0_38, %c0_39] : memref<1x8x32xbf16, #tpu.memory_space<vmem>>, vector<1x8x32xbf16>
    %69 = vector.shape_cast %68 : vector<1x8x32xbf16> to vector<8x32xbf16>
    %70 = vector.shape_cast %67 : vector<8x32xbf16> to vector<1x8x32xbf16>
    tpu.vector_store %arg5[%c0_37, %c0_38, %c0_39], %70 {strides = array<i32>} : memref<1x8x32xbf16, #tpu.memory_space<vmem>>, vector<1x8x32xbf16>,
    return
  }
  func.func @transform_0(%arg0: i32) -> (i32, i32, i32) {
    %c0_i32 = arith.constant 0 : i32
    %c0_i32_0 = arith.constant 0 : i32
    %c0_i32_1 = arith.constant 0 : i32
    return %arg0, %c0_i32, %c0_i32_0 : i32, i32, i32
  }
  func.func @transform_1(%arg0: i32) -> (i32, i32, i32) {
    %c0_i32 = arith.constant 0 : i32
    %c0_i32_0 = arith.constant 0 : i32
    %c0_i32_1 = arith.constant 0 : i32
    %c0_i32_2 = arith.constant 0 : i32
    return %c0_i32, %c0_i32_0, %c0_i32_1 : i32, i32, i32
  }
  func.func @transform_2(%arg0: i32) -> (i32, i32) {
    %c0_i32 = arith.constant 0 : i32
    %c0_i32_0 = arith.constant 0 : i32
    %c0_i32_1 = arith.constant 0 : i32
    return %c0_i32, %c0_i32_0 : i32, i32
  }
  func.func @transform_3(%arg0: i32) -> (i32, i32, i32) {
    %c0_i32 = arith.constant 0 : i32
    %c0_i32_0 = arith.constant 0 : i32
    %c0_i32_1 = arith.constant 0 : i32
    return %arg0, %c0_i32, %c0_i32_0 : i32, i32, i32
  }
  func.func @transform_4(%arg0: i32) -> (i32, i32, i32) {
    %c0_i32 = arith.constant 0 : i32
    %c0_i32_0 = arith.constant 0 : i32
    %c0_i32_1 = arith.constant 0 : i32
    return %arg0, %c0_i32, %c0_i32_0 : i32, i32, i32
  }
}

module attributes {stable_mosaic.version = 11 : i64} {
  func.func @_encoder_layer_kernel(%arg0: i32, %arg1: memref<1x8x32xbf16, #tpu.memory_space<vmem>>, %arg2: memref<1x32xf32, #tpu.memory_space<vmem>>, %arg3: memref<1x32xf32, #tpu.memory_space<vmem>>, %arg4: memref<32x96xbf16, #tpu.memory_space<vmem>>, %arg5: memref<1x96xf32, #tpu.memory_space<vmem>>, %arg6: memref<32x32xbf16, #tpu.memory_space<vmem>>, %arg7: memref<1x32xf32, #tpu.memory_space<vmem>>, %arg8: memref<1x32xf32, #tpu.memory_space<vmem>>, %arg9: memref<1x32xf32, #tpu.memory_space<vmem>>, %arg10: memref<32x64xbf16, #tpu.memory_space<vmem>>, %arg11: memref<1x64xf32, #tpu.memory_space<vmem>>, %arg12: memref<64x32xbf16, #tpu.memory_space<vmem>>, %arg13: memref<1x32xf32, #tpu.memory_space<vmem>>, %arg14: memref<1x8x32xbf16, #tpu.memory_space<vmem>>) attributes {dimension_semantics = [#tpu.dimension_semantics<parallel>], iteration_bounds = array<i64: 2>, scalar_prefetch = 0 : i64, scratch_operands = 0 : i64, tpu.core_type = #tpu.core_type<tc>, window_params = [{transform_indices = @transform_0, window_bounds = array<i64: 1, 8, 32>}, {pipeline_mode = #tpu.pipeline_mode<synchronous>, transform_indices = @transform_1, window_bounds = array<i64: 1, 32>}, {pipeline_mode = #tpu.pipeline_mode<synchronous>, transform_indices = @transform_2, window_bounds = array<i64: 1, 32>}, {pipeline_mode = #tpu.pipeline_mode<synchronous>, transform_indices = @transform_3, window_bounds = array<i64: 32, 96>}, {pipeline_mode = #tpu.pipeline_mode<synchronous>, transform_indices = @transform_4, window_bounds = array<i64: 1, 96>}, {pipeline_mode = #tpu.pipeline_mode<synchronous>, transform_indices = @transform_5, window_bounds = array<i64: 32, 32>}, {pipeline_mode = #tpu.pipeline_mode<synchronous>, transform_indices = @transform_6, window_bounds = array<i64: 1, 32>}, {pipeline_mode = #tpu.pipeline_mode<synchronous>, transform_indices = @transform_7, window_bounds = array<i64: 1, 32>}, {pipeline_mode = #tpu.pipeline_mode<synchronous>, transform_indices = @transform_8, window_bounds = array<i64: 1, 32>}, {pipeline_mode = #tpu.pipeline_mode<synchronous>, transform_indices = @transform_9, window_bounds = array<i64: 32, 64>}, {pipeline_mode = #tpu.pipeline_mode<synchronous>, transform_indices = @transform_10, window_bounds = array<i64: 1, 64>}, {pipeline_mode = #tpu.pipeline_mode<synchronous>, transform_indices = @transform_11, window_bounds = array<i64: 64, 32>}, {pipeline_mode = #tpu.pipeline_mode<synchronous>, transform_indices = @transform_12, window_bounds = array<i64: 1, 32>}, {transform_indices = @transform_13, window_bounds = array<i64: 1, 8, 32>}]} {
    %c0 = arith.constant 0 : index
    %c0_0 = arith.constant 0 : index
    %c0_1 = arith.constant 0 : index
    %0 = vector.load %arg1[%c0, %c0_0, %c0_1] : memref<1x8x32xbf16, #tpu.memory_space<vmem>>, vector<1x8x32xbf16>
    %1 = vector.shape_cast %0 : vector<1x8x32xbf16> to vector<8x32xbf16>
    %2 = arith.extf %1 : vector<8x32xbf16> to vector<8x32xf32>
    %c0_2 = arith.constant 0 : index
    %c0_3 = arith.constant 0 : index
    %3 = vector.load %arg2[%c0_2, %c0_3] : memref<1x32xf32, #tpu.memory_space<vmem>>, vector<1x32xf32>
    %c0_4 = arith.constant 0 : index
    %c0_5 = arith.constant 0 : index
    %4 = vector.load %arg3[%c0_4, %c0_5] : memref<1x32xf32, #tpu.memory_space<vmem>>, vector<1x32xf32>
    %cst = arith.constant dense<0.000000e+00> : vector<8xf32>
    %5 = vector.multi_reduction <add>, %2, %cst [1] : vector<8x32xf32> to vector<8xf32>
    %6 = vector.shape_cast %5 : vector<8xf32> to vector<8x1xf32>
    %cst_6 = arith.constant 3.200000e+01 : f32
    %7 = vector.broadcast %cst_6 : f32 to vector<8x1xf32>
    %8 = arith.divf %6, %7 : vector<8x1xf32>
    %9 = vector.broadcast %8 : vector<8x1xf32> to vector<8x32xf32>
    %10 = arith.subf %2, %9 : vector<8x32xf32>
    %11 = arith.mulf %10, %10 : vector<8x32xf32>
    %cst_7 = arith.constant dense<0.000000e+00> : vector<8xf32>
    %12 = vector.multi_reduction <add>, %11, %cst_7 [1] : vector<8x32xf32> to vector<8xf32>
    %13 = vector.shape_cast %12 : vector<8xf32> to vector<8x1xf32>
    %cst_8 = arith.constant 3.200000e+01 : f32
    %14 = vector.broadcast %cst_8 : f32 to vector<8x1xf32>
    %15 = arith.divf %13, %14 : vector<8x1xf32>
    %16 = vector.broadcast %8 : vector<8x1xf32> to vector<8x32xf32>
    %17 = arith.subf %2, %16 : vector<8x32xf32>
    %cst_9 = arith.constant 9.99999974E-6 : f32
    %18 = vector.broadcast %cst_9 : f32 to vector<8x1xf32>
    %19 = arith.addf %15, %18 : vector<8x1xf32>
    %20 = math.rsqrt %19 : vector<8x1xf32>
    %21 = vector.broadcast %20 : vector<8x1xf32> to vector<8x32xf32>
    %22 = arith.mulf %17, %21 : vector<8x32xf32>
    %23 = vector.broadcast %3 : vector<1x32xf32> to vector<8x32xf32>
    %24 = arith.mulf %22, %23 : vector<8x32xf32>
    %25 = vector.broadcast %4 : vector<1x32xf32> to vector<8x32xf32>
    %26 = arith.addf %24, %25 : vector<8x32xf32>
    %c0_10 = arith.constant 0 : index
    %c0_11 = arith.constant 0 : index
    %27 = vector.load %arg4[%c0_10, %c0_11] : memref<32x96xbf16, #tpu.memory_space<vmem>>, vector<32x96xbf16>
    %28 = arith.truncf %26 : vector<8x32xf32> to vector<8x32xbf16>
    %cst_12 = arith.constant dense<0.000000e+00> : vector<8x96xf32>
    %29 = tpu.matmul %28, %27, %cst_12 {dimension_numbers = #tpu.dot_dimension_numbers<[1], [0], [0], [1], [0, 0, 1, 1], [], []>} : vector<8x32xbf16>, vector<32x96xbf16>, vector<8x96xf32> -> vector<8x96xf32>
    %c0_13 = arith.constant 0 : index
    %c0_14 = arith.constant 0 : index
    %30 = vector.load %arg5[%c0_13, %c0_14] : memref<1x96xf32, #tpu.memory_space<vmem>>, vector<1x96xf32>
    %31 = vector.broadcast %30 : vector<1x96xf32> to vector<8x96xf32>
    %32 = arith.addf %29, %31 : vector<8x96xf32>
    %33 = vector.extract_strided_slice %32 {offsets = [0, 0], sizes = [8, 32], strides = [1, 1]} : vector<8x96xf32> to vector<8x32xf32>
    %cst_15 = arith.constant 0.353553385 : f32
    %34 = vector.broadcast %cst_15 : f32 to vector<8x32xf32>
    %35 = arith.mulf %33, %34 : vector<8x32xf32>
    %36 = vector.shape_cast %35 : vector<8x32xf32> to vector<8x4x8xf32>
    %37 = arith.truncf %36 : vector<8x4x8xf32> to vector<8x4x8xbf16>
    %38 = vector.extract_strided_slice %32 {offsets = [0, 32], sizes = [8, 32], strides = [1, 1]} : vector<8x96xf32> to vector<8x32xf32>
    %39 = vector.shape_cast %38 : vector<8x32xf32> to vector<8x4x8xf32>
    %40 = arith.truncf %39 : vector<8x4x8xf32> to vector<8x4x8xbf16>
    %41 = vector.extract_strided_slice %32 {offsets = [0, 64], sizes = [8, 32], strides = [1, 1]} : vector<8x96xf32> to vector<8x32xf32>
    %42 = vector.shape_cast %41 : vector<8x32xf32> to vector<8x4x8xf32>
    %43 = arith.truncf %42 : vector<8x4x8xf32> to vector<8x4x8xbf16>
    "tpu.trace_start"() <{level = 10 : i32, message = "qnd,knd->nqk"}> : () -> ()
    %cst_16 = arith.constant dense<0.000000e+00> : vector<4x8x8xf32>
    %44 = tpu.matmul %37, %40, %cst_16 {dimension_numbers = #tpu.dot_dimension_numbers<[2], [2], [0], [0], [0, 1, 0, 0, 1, 0], [1], [1]>} : vector<8x4x8xbf16>, vector<8x4x8xbf16>, vector<4x8x8xf32> -> vector<4x8x8xf32>
    "tpu.trace_stop"() : () -> ()
    %cst_17 = arith.constant dense<0xFF800000> : vector<4x8xf32>
    %45 = vector.multi_reduction <maximumf>, %44, %cst_17 [2] : vector<4x8x8xf32> to vector<4x8xf32>
    %46 = vector.shape_cast %45 : vector<4x8xf32> to vector<4x8x1xf32>
    %47 = vector.broadcast %46 : vector<4x8x1xf32> to vector<4x8x8xf32>
    %48 = arith.subf %44, %47 : vector<4x8x8xf32>
    %49 = math.exp %48 : vector<4x8x8xf32>
    %cst_18 = arith.constant dense<0.000000e+00> : vector<4x8xf32>
    %50 = vector.multi_reduction <add>, %49, %cst_18 [2] : vector<4x8x8xf32> to vector<4x8xf32>
    %51 = vector.shape_cast %50 : vector<4x8xf32> to vector<4x8x1xf32>
    %52 = tpu.reciprocal %51 {approx = true} : vector<4x8x1xf32> -> vector<4x8x1xf32>
    %53 = vector.broadcast %52 : vector<4x8x1xf32> to vector<4x8x8xf32>
    %54 = arith.mulf %49, %53 : vector<4x8x8xf32>
    %55 = arith.truncf %54 : vector<4x8x8xf32> to vector<4x8x8xbf16>
    "tpu.trace_start"() <{level = 10 : i32, message = "nqk,knd->qnd"}> : () -> ()
    %cst_19 = arith.constant dense<0.000000e+00> : vector<4x8x8xf32>
    %56 = tpu.matmul %43, %55, %cst_19 {dimension_numbers = #tpu.dot_dimension_numbers<[0], [2], [2], [1], [0, 1, 0, 2, 1, 1], [1], [0]>} : vector<8x4x8xbf16>, vector<4x8x8xbf16>, vector<4x8x8xf32> -> vector<4x8x8xf32>
    %57 = tpu.transpose %56, [2, 0, 1] : vector<4x8x8xf32> -> vector<8x4x8xf32>
    "tpu.trace_stop"() : () -> ()
    %58 = vector.shape_cast %57 : vector<8x4x8xf32> to vector<8x32xf32>
    %c0_20 = arith.constant 0 : index
    %c0_21 = arith.constant 0 : index
    %59 = vector.load %arg6[%c0_20, %c0_21] : memref<32x32xbf16, #tpu.memory_space<vmem>>, vector<32x32xbf16>
    %60 = arith.truncf %58 : vector<8x32xf32> to vector<8x32xbf16>
    %cst_22 = arith.constant dense<0.000000e+00> : vector<8x32xf32>
    %61 = tpu.matmul %60, %59, %cst_22 {dimension_numbers = #tpu.dot_dimension_numbers<[1], [0], [0], [1], [0, 0, 1, 1], [], []>} : vector<8x32xbf16>, vector<32x32xbf16>, vector<8x32xf32> -> vector<8x32xf32>
    %62 = arith.addf %2, %61 : vector<8x32xf32>
    %c0_23 = arith.constant 0 : index
    %c0_24 = arith.constant 0 : index
    %63 = vector.load %arg7[%c0_23, %c0_24] : memref<1x32xf32, #tpu.memory_space<vmem>>, vector<1x32xf32>
    %64 = vector.broadcast %63 : vector<1x32xf32> to vector<8x32xf32>
    %65 = arith.addf %62, %64 : vector<8x32xf32>
    %c0_25 = arith.constant 0 : index
    %c0_26 = arith.constant 0 : index
    %66 = vector.load %arg8[%c0_25, %c0_26] : memref<1x32xf32, #tpu.memory_space<vmem>>, vector<1x32xf32>
    %c0_27 = arith.constant 0 : index
    %c0_28 = arith.constant 0 : index
    %67 = vector.load %arg9[%c0_27, %c0_28] : memref<1x32xf32, #tpu.memory_space<vmem>>, vector<1x32xf32>
    %cst_29 = arith.constant dense<0.000000e+00> : vector<8xf32>
    %68 = vector.multi_reduction <add>, %65, %cst_29 [1] : vector<8x32xf32> to vector<8xf32>
    %69 = vector.shape_cast %68 : vector<8xf32> to vector<8x1xf32>
    %cst_30 = arith.constant 3.200000e+01 : f32
    %70 = vector.broadcast %cst_30 : f32 to vector<8x1xf32>
    %71 = arith.divf %69, %70 : vector<8x1xf32>
    %72 = vector.broadcast %71 : vector<8x1xf32> to vector<8x32xf32>
    %73 = arith.subf %65, %72 : vector<8x32xf32>
    %74 = arith.mulf %73, %73 : vector<8x32xf32>
    %cst_31 = arith.constant dense<0.000000e+00> : vector<8xf32>
    %75 = vector.multi_reduction <add>, %74, %cst_31 [1] : vector<8x32xf32> to vector<8xf32>
    %76 = vector.shape_cast %75 : vector<8xf32> to vector<8x1xf32>
    %cst_32 = arith.constant 3.200000e+01 : f32
    %77 = vector.broadcast %cst_32 : f32 to vector<8x1xf32>
    %78 = arith.divf %76, %77 : vector<8x1xf32>
    %79 = vector.broadcast %71 : vector<8x1xf32> to vector<8x32xf32>
    %80 = arith.subf %65, %79 : vector<8x32xf32>
    %cst_33 = arith.constant 9.99999974E-6 : f32
    %81 = vector.broadcast %cst_33 : f32 to vector<8x1xf32>
    %82 = arith.addf %78, %81 : vector<8x1xf32>
    %83 = math.rsqrt %82 : vector<8x1xf32>
    %84 = vector.broadcast %83 : vector<8x1xf32> to vector<8x32xf32>
    %85 = arith.mulf %80, %84 : vector<8x32xf32>
    %86 = vector.broadcast %66 : vector<1x32xf32> to vector<8x32xf32>
    %87 = arith.mulf %85, %86 : vector<8x32xf32>
    %88 = vector.broadcast %67 : vector<1x32xf32> to vector<8x32xf32>
    %89 = arith.addf %87, %88 : vector<8x32xf32>
    %c0_34 = arith.constant 0 : index
    %c0_35 = arith.constant 0 : index
    %90 = vector.load %arg10[%c0_34, %c0_35] : memref<32x64xbf16, #tpu.memory_space<vmem>>, vector<32x64xbf16>
    %91 = arith.truncf %89 : vector<8x32xf32> to vector<8x32xbf16>
    %cst_36 = arith.constant dense<0.000000e+00> : vector<8x64xf32>
    %92 = tpu.matmul %91, %90, %cst_36 {dimension_numbers = #tpu.dot_dimension_numbers<[1], [0], [0], [1], [0, 0, 1, 1], [], []>} : vector<8x32xbf16>, vector<32x64xbf16>, vector<8x64xf32> -> vector<8x64xf32>
    %c0_37 = arith.constant 0 : index
    %c0_38 = arith.constant 0 : index
    %93 = vector.load %arg11[%c0_37, %c0_38] : memref<1x64xf32, #tpu.memory_space<vmem>>, vector<1x64xf32>
    %94 = vector.broadcast %93 : vector<1x64xf32> to vector<8x64xf32>
    %95 = arith.addf %92, %94 : vector<8x64xf32>
    %cst_39 = arith.constant 5.000000e-01 : f32
    %96 = vector.broadcast %cst_39 : f32 to vector<8x64xf32>
    %97 = arith.mulf %96, %95 : vector<8x64xf32>
    %cst_40 = arith.constant 4.471500e-02 : f32
    %98 = vector.broadcast %cst_40 : f32 to vector<8x64xf32>
    %99 = arith.mulf %98, %95 : vector<8x64xf32>
    %100 = arith.mulf %99, %95 : vector<8x64xf32>
    %101 = arith.mulf %100, %95 : vector<8x64xf32>
    %102 = arith.addf %95, %101 : vector<8x64xf32>
    %cst_41 = arith.constant 0.797884583 : f32
    %103 = vector.broadcast %cst_41 : f32 to vector<8x64xf32>
    %104 = arith.mulf %103, %102 : vector<8x64xf32>
    %105 = math.tanh %104 : vector<8x64xf32>
    %cst_42 = arith.constant 1.000000e+00 : f32
    %106 = vector.broadcast %cst_42 : f32 to vector<8x64xf32>
    %107 = arith.addf %106, %105 : vector<8x64xf32>
    %108 = arith.mulf %97, %107 : vector<8x64xf32>
    %c0_43 = arith.constant 0 : index
    %c0_44 = arith.constant 0 : index
    %109 = vector.load %arg12[%c0_43, %c0_44] : memref<64x32xbf16, #tpu.memory_space<vmem>>, vector<64x32xbf16>
    %110 = arith.truncf %108 : vector<8x64xf32> to vector<8x64xbf16>
    %cst_45 = arith.constant dense<0.000000e+00> : vector<8x32xf32>
    %111 = tpu.matmul %110, %109, %cst_45 {dimension_numbers = #tpu.dot_dimension_numbers<[1], [0], [0], [1], [0, 0, 1, 1], [], []>} : vector<8x64xbf16>, vector<64x32xbf16>, vector<8x32xf32> -> vector<8x32xf32>
    %c0_46 = arith.constant 0 : index
    %c0_47 = arith.constant 0 : index
    %112 = vector.load %arg13[%c0_46, %c0_47] : memref<1x32xf32, #tpu.memory_space<vmem>>, vector<1x32xf32>
    %113 = vector.broadcast %112 : vector<1x32xf32> to vector<8x32xf32>
    %114 = arith.addf %111, %113 : vector<8x32xf32>
    %115 = arith.addf %65, %114 : vector<8x32xf32>
    %116 = arith.truncf %115 : vector<8x32xf32> to vector<8x32xbf16>
    %c0_48 = arith.constant 0 : index
    %c0_49 = arith.constant 0 : index
    %c0_50 = arith.constant 0 : index
    %117 = vector.load %arg14[%c0_48, %c0_49, %c0_50] : memref<1x8x32xbf16, #tpu.memory_space<vmem>>, vector<1x8x32xbf16>
    %118 = vector.shape_cast %117 : vector<1x8x32xbf16> to vector<8x32xbf16>
    %119 = vector.shape_cast %116 : vector<8x32xbf16> to vector<1x8x32xbf16>
    tpu.vector_store %arg14[%c0_48, %c0_49, %c0_50], %119 {strides = array<i32>} : memref<1x8x32xbf16, #tpu.memory_space<vmem>>, vector<1x8x32xbf16>,
    return
  }
  func.func @transform_0(%arg0: i32) -> (i32, i32, i32) {
    %c0_i32 = arith.constant 0 : i32
    %c0_i32_0 = arith.constant 0 : i32
    %c0_i32_1 = arith.constant 0 : i32
    return %arg0, %c0_i32, %c0_i32_0 : i32, i32, i32
  }
  func.func @transform_1(%arg0: i32) -> (i32, i32) {
    %c0_i32 = arith.constant 0 : i32
    %c0_i32_0 = arith.constant 0 : i32
    %c0_i32_1 = arith.constant 0 : i32
    return %c0_i32, %c0_i32_0 : i32, i32
  }
  func.func @transform_2(%arg0: i32) -> (i32, i32) {
    %c0_i32 = arith.constant 0 : i32
    %c0_i32_0 = arith.constant 0 : i32
    %c0_i32_1 = arith.constant 0 : i32
    return %c0_i32, %c0_i32_0 : i32, i32
  }
  func.func @transform_3(%arg0: i32) -> (i32, i32) {
    %c0_i32 = arith.constant 0 : i32
    %c0_i32_0 = arith.constant 0 : i32
    %c0_i32_1 = arith.constant 0 : i32
    return %c0_i32, %c0_i32_0 : i32, i32
  }
  func.func @transform_4(%arg0: i32) -> (i32, i32) {
    %c0_i32 = arith.constant 0 : i32
    %c0_i32_0 = arith.constant 0 : i32
    %c0_i32_1 = arith.constant 0 : i32
    return %c0_i32, %c0_i32_0 : i32, i32
  }
  func.func @transform_5(%arg0: i32) -> (i32, i32) {
    %c0_i32 = arith.constant 0 : i32
    %c0_i32_0 = arith.constant 0 : i32
    %c0_i32_1 = arith.constant 0 : i32
    return %c0_i32, %c0_i32_0 : i32, i32
  }
  func.func @transform_6(%arg0: i32) -> (i32, i32) {
    %c0_i32 = arith.constant 0 : i32
    %c0_i32_0 = arith.constant 0 : i32
    %c0_i32_1 = arith.constant 0 : i32
    return %c0_i32, %c0_i32_0 : i32, i32
  }
  func.func @transform_7(%arg0: i32) -> (i32, i32) {
    %c0_i32 = arith.constant 0 : i32
    %c0_i32_0 = arith.constant 0 : i32
    %c0_i32_1 = arith.constant 0 : i32
    return %c0_i32, %c0_i32_0 : i32, i32
  }
  func.func @transform_8(%arg0: i32) -> (i32, i32) {
    %c0_i32 = arith.constant 0 : i32
    %c0_i32_0 = arith.constant 0 : i32
    %c0_i32_1 = arith.constant 0 : i32
    return %c0_i32, %c0_i32_0 : i32, i32
  }
  func.func @transform_9(%arg0: i32) -> (i32, i32) {
    %c0_i32 = arith.constant 0 : i32
    %c0_i32_0 = arith.constant 0 : i32
    %c0_i32_1 = arith.constant 0 : i32
    return %c0_i32, %c0_i32_0 : i32, i32
  }
  func.func @transform_10(%arg0: i32) -> (i32, i32) {
    %c0_i32 = arith.constant 0 : i32
    %c0_i32_0 = arith.constant 0 : i32
    %c0_i32_1 = arith.constant 0 : i32
    return %c0_i32, %c0_i32_0 : i32, i32
  }
  func.func @transform_11(%arg0: i32) -> (i32, i32) {
    %c0_i32 = arith.constant 0 : i32
    %c0_i32_0 = arith.constant 0 : i32
    %c0_i32_1 = arith.constant 0 : i32
    return %c0_i32, %c0_i32_0 : i32, i32
  }
  func.func @transform_12(%arg0: i32) -> (i32, i32) {
    %c0_i32 = arith.constant 0 : i32
    %c0_i32_0 = arith.constant 0 : i32
    %c0_i32_1 = arith.constant 0 : i32
    return %c0_i32, %c0_i32_0 : i32, i32
  }
  func.func @transform_13(%arg0: i32) -> (i32, i32, i32) {
    %c0_i32 = arith.constant 0 : i32
    %c0_i32_0 = arith.constant 0 : i32
    %c0_i32_1 = arith.constant 0 : i32
    return %arg0, %c0_i32, %c0_i32_0 : i32, i32, i32
  }
}

module attributes {stable_mosaic.version = 11 : i64} {
  func.func @_encoder_layer_kernel(%arg0: i32, %arg1: memref<1x8x32xbf16, #tpu.memory_space<vmem>>, %arg2: memref<1x32xf32, #tpu.memory_space<vmem>>, %arg3: memref<1x32xf32, #tpu.memory_space<vmem>>, %arg4: memref<32x96xbf16, #tpu.memory_space<vmem>>, %arg5: memref<1x96xf32, #tpu.memory_space<vmem>>, %arg6: memref<32x32xbf16, #tpu.memory_space<vmem>>, %arg7: memref<1x32xf32, #tpu.memory_space<vmem>>, %arg8: memref<1x32xf32, #tpu.memory_space<vmem>>, %arg9: memref<1x32xf32, #tpu.memory_space<vmem>>, %arg10: memref<32x64xbf16, #tpu.memory_space<vmem>>, %arg11: memref<1x64xf32, #tpu.memory_space<vmem>>, %arg12: memref<64x32xbf16, #tpu.memory_space<vmem>>, %arg13: memref<1x32xf32, #tpu.memory_space<vmem>>, %arg14: memref<1x8x32xf32, #tpu.memory_space<vmem>>) attributes {dimension_semantics = [#tpu.dimension_semantics<parallel>], iteration_bounds = array<i64: 2>, scalar_prefetch = 0 : i64, scratch_operands = 0 : i64, tpu.core_type = #tpu.core_type<tc>, window_params = [{transform_indices = @transform_0, window_bounds = array<i64: 1, 8, 32>}, {pipeline_mode = #tpu.pipeline_mode<synchronous>, transform_indices = @transform_1, window_bounds = array<i64: 1, 32>}, {pipeline_mode = #tpu.pipeline_mode<synchronous>, transform_indices = @transform_2, window_bounds = array<i64: 1, 32>}, {pipeline_mode = #tpu.pipeline_mode<synchronous>, transform_indices = @transform_3, window_bounds = array<i64: 32, 96>}, {pipeline_mode = #tpu.pipeline_mode<synchronous>, transform_indices = @transform_4, window_bounds = array<i64: 1, 96>}, {pipeline_mode = #tpu.pipeline_mode<synchronous>, transform_indices = @transform_5, window_bounds = array<i64: 32, 32>}, {pipeline_mode = #tpu.pipeline_mode<synchronous>, transform_indices = @transform_6, window_bounds = array<i64: 1, 32>}, {pipeline_mode = #tpu.pipeline_mode<synchronous>, transform_indices = @transform_7, window_bounds = array<i64: 1, 32>}, {pipeline_mode = #tpu.pipeline_mode<synchronous>, transform_indices = @transform_8, window_bounds = array<i64: 1, 32>}, {pipeline_mode = #tpu.pipeline_mode<synchronous>, transform_indices = @transform_9, window_bounds = array<i64: 32, 64>}, {pipeline_mode = #tpu.pipeline_mode<synchronous>, transform_indices = @transform_10, window_bounds = array<i64: 1, 64>}, {pipeline_mode = #tpu.pipeline_mode<synchronous>, transform_indices = @transform_11, window_bounds = array<i64: 64, 32>}, {pipeline_mode = #tpu.pipeline_mode<synchronous>, transform_indices = @transform_12, window_bounds = array<i64: 1, 32>}, {transform_indices = @transform_13, window_bounds = array<i64: 1, 8, 32>}]} {
    %c0 = arith.constant 0 : index
    %c0_0 = arith.constant 0 : index
    %c0_1 = arith.constant 0 : index
    %0 = vector.load %arg1[%c0, %c0_0, %c0_1] : memref<1x8x32xbf16, #tpu.memory_space<vmem>>, vector<1x8x32xbf16>
    %1 = vector.shape_cast %0 : vector<1x8x32xbf16> to vector<8x32xbf16>
    %2 = arith.extf %1 : vector<8x32xbf16> to vector<8x32xf32>
    %c0_2 = arith.constant 0 : index
    %c0_3 = arith.constant 0 : index
    %3 = vector.load %arg2[%c0_2, %c0_3] : memref<1x32xf32, #tpu.memory_space<vmem>>, vector<1x32xf32>
    %c0_4 = arith.constant 0 : index
    %c0_5 = arith.constant 0 : index
    %4 = vector.load %arg3[%c0_4, %c0_5] : memref<1x32xf32, #tpu.memory_space<vmem>>, vector<1x32xf32>
    %cst = arith.constant dense<0.000000e+00> : vector<8xf32>
    %5 = vector.multi_reduction <add>, %2, %cst [1] : vector<8x32xf32> to vector<8xf32>
    %6 = vector.shape_cast %5 : vector<8xf32> to vector<8x1xf32>
    %cst_6 = arith.constant 3.200000e+01 : f32
    %7 = vector.broadcast %cst_6 : f32 to vector<8x1xf32>
    %8 = arith.divf %6, %7 : vector<8x1xf32>
    %9 = vector.broadcast %8 : vector<8x1xf32> to vector<8x32xf32>
    %10 = arith.subf %2, %9 : vector<8x32xf32>
    %11 = arith.mulf %10, %10 : vector<8x32xf32>
    %cst_7 = arith.constant dense<0.000000e+00> : vector<8xf32>
    %12 = vector.multi_reduction <add>, %11, %cst_7 [1] : vector<8x32xf32> to vector<8xf32>
    %13 = vector.shape_cast %12 : vector<8xf32> to vector<8x1xf32>
    %cst_8 = arith.constant 3.200000e+01 : f32
    %14 = vector.broadcast %cst_8 : f32 to vector<8x1xf32>
    %15 = arith.divf %13, %14 : vector<8x1xf32>
    %16 = vector.broadcast %8 : vector<8x1xf32> to vector<8x32xf32>
    %17 = arith.subf %2, %16 : vector<8x32xf32>
    %cst_9 = arith.constant 9.99999974E-6 : f32
    %18 = vector.broadcast %cst_9 : f32 to vector<8x1xf32>
    %19 = arith.addf %15, %18 : vector<8x1xf32>
    %20 = math.rsqrt %19 : vector<8x1xf32>
    %21 = vector.broadcast %20 : vector<8x1xf32> to vector<8x32xf32>
    %22 = arith.mulf %17, %21 : vector<8x32xf32>
    %23 = vector.broadcast %3 : vector<1x32xf32> to vector<8x32xf32>
    %24 = arith.mulf %22, %23 : vector<8x32xf32>
    %25 = vector.broadcast %4 : vector<1x32xf32> to vector<8x32xf32>
    %26 = arith.addf %24, %25 : vector<8x32xf32>
    %c0_10 = arith.constant 0 : index
    %c0_11 = arith.constant 0 : index
    %27 = vector.load %arg4[%c0_10, %c0_11] : memref<32x96xbf16, #tpu.memory_space<vmem>>, vector<32x96xbf16>
    %28 = arith.truncf %26 : vector<8x32xf32> to vector<8x32xbf16>
    %cst_12 = arith.constant dense<0.000000e+00> : vector<8x96xf32>
    %29 = tpu.matmul %28, %27, %cst_12 {dimension_numbers = #tpu.dot_dimension_numbers<[1], [0], [0], [1], [0, 0, 1, 1], [], []>} : vector<8x32xbf16>, vector<32x96xbf16>, vector<8x96xf32> -> vector<8x96xf32>
    %c0_13 = arith.constant 0 : index
    %c0_14 = arith.constant 0 : index
    %30 = vector.load %arg5[%c0_13, %c0_14] : memref<1x96xf32, #tpu.memory_space<vmem>>, vector<1x96xf32>
    %31 = vector.broadcast %30 : vector<1x96xf32> to vector<8x96xf32>
    %32 = arith.addf %29, %31 : vector<8x96xf32>
    %33 = vector.extract_strided_slice %32 {offsets = [0, 0], sizes = [8, 32], strides = [1, 1]} : vector<8x96xf32> to vector<8x32xf32>
    %cst_15 = arith.constant 0.353553385 : f32
    %34 = vector.broadcast %cst_15 : f32 to vector<8x32xf32>
    %35 = arith.mulf %33, %34 : vector<8x32xf32>
    %36 = vector.shape_cast %35 : vector<8x32xf32> to vector<8x4x8xf32>
    %37 = arith.truncf %36 : vector<8x4x8xf32> to vector<8x4x8xbf16>
    %38 = vector.extract_strided_slice %32 {offsets = [0, 32], sizes = [8, 32], strides = [1, 1]} : vector<8x96xf32> to vector<8x32xf32>
    %39 = vector.shape_cast %38 : vector<8x32xf32> to vector<8x4x8xf32>
    %40 = arith.truncf %39 : vector<8x4x8xf32> to vector<8x4x8xbf16>
    %41 = vector.extract_strided_slice %32 {offsets = [0, 64], sizes = [8, 32], strides = [1, 1]} : vector<8x96xf32> to vector<8x32xf32>
    %42 = vector.shape_cast %41 : vector<8x32xf32> to vector<8x4x8xf32>
    %43 = arith.truncf %42 : vector<8x4x8xf32> to vector<8x4x8xbf16>
    "tpu.trace_start"() <{level = 10 : i32, message = "qnd,knd->nqk"}> : () -> ()
    %cst_16 = arith.constant dense<0.000000e+00> : vector<4x8x8xf32>
    %44 = tpu.matmul %37, %40, %cst_16 {dimension_numbers = #tpu.dot_dimension_numbers<[2], [2], [0], [0], [0, 1, 0, 0, 1, 0], [1], [1]>} : vector<8x4x8xbf16>, vector<8x4x8xbf16>, vector<4x8x8xf32> -> vector<4x8x8xf32>
    "tpu.trace_stop"() : () -> ()
    %cst_17 = arith.constant dense<0xFF800000> : vector<4x8xf32>
    %45 = vector.multi_reduction <maximumf>, %44, %cst_17 [2] : vector<4x8x8xf32> to vector<4x8xf32>
    %46 = vector.shape_cast %45 : vector<4x8xf32> to vector<4x8x1xf32>
    %47 = vector.broadcast %46 : vector<4x8x1xf32> to vector<4x8x8xf32>
    %48 = arith.subf %44, %47 : vector<4x8x8xf32>
    %49 = math.exp %48 : vector<4x8x8xf32>
    %cst_18 = arith.constant dense<0.000000e+00> : vector<4x8xf32>
    %50 = vector.multi_reduction <add>, %49, %cst_18 [2] : vector<4x8x8xf32> to vector<4x8xf32>
    %51 = vector.shape_cast %50 : vector<4x8xf32> to vector<4x8x1xf32>
    %52 = tpu.reciprocal %51 {approx = true} : vector<4x8x1xf32> -> vector<4x8x1xf32>
    %53 = vector.broadcast %52 : vector<4x8x1xf32> to vector<4x8x8xf32>
    %54 = arith.mulf %49, %53 : vector<4x8x8xf32>
    %55 = arith.truncf %54 : vector<4x8x8xf32> to vector<4x8x8xbf16>
    "tpu.trace_start"() <{level = 10 : i32, message = "nqk,knd->qnd"}> : () -> ()
    %cst_19 = arith.constant dense<0.000000e+00> : vector<4x8x8xf32>
    %56 = tpu.matmul %43, %55, %cst_19 {dimension_numbers = #tpu.dot_dimension_numbers<[0], [2], [2], [1], [0, 1, 0, 2, 1, 1], [1], [0]>} : vector<8x4x8xbf16>, vector<4x8x8xbf16>, vector<4x8x8xf32> -> vector<4x8x8xf32>
    %57 = tpu.transpose %56, [2, 0, 1] : vector<4x8x8xf32> -> vector<8x4x8xf32>
    "tpu.trace_stop"() : () -> ()
    %58 = vector.shape_cast %57 : vector<8x4x8xf32> to vector<8x32xf32>
    %c0_20 = arith.constant 0 : index
    %c0_21 = arith.constant 0 : index
    %59 = vector.load %arg6[%c0_20, %c0_21] : memref<32x32xbf16, #tpu.memory_space<vmem>>, vector<32x32xbf16>
    %60 = arith.truncf %58 : vector<8x32xf32> to vector<8x32xbf16>
    %cst_22 = arith.constant dense<0.000000e+00> : vector<8x32xf32>
    %61 = tpu.matmul %60, %59, %cst_22 {dimension_numbers = #tpu.dot_dimension_numbers<[1], [0], [0], [1], [0, 0, 1, 1], [], []>} : vector<8x32xbf16>, vector<32x32xbf16>, vector<8x32xf32> -> vector<8x32xf32>
    %62 = arith.addf %2, %61 : vector<8x32xf32>
    %c0_23 = arith.constant 0 : index
    %c0_24 = arith.constant 0 : index
    %63 = vector.load %arg7[%c0_23, %c0_24] : memref<1x32xf32, #tpu.memory_space<vmem>>, vector<1x32xf32>
    %64 = vector.broadcast %63 : vector<1x32xf32> to vector<8x32xf32>
    %65 = arith.addf %62, %64 : vector<8x32xf32>
    %c0_25 = arith.constant 0 : index
    %c0_26 = arith.constant 0 : index
    %66 = vector.load %arg8[%c0_25, %c0_26] : memref<1x32xf32, #tpu.memory_space<vmem>>, vector<1x32xf32>
    %c0_27 = arith.constant 0 : index
    %c0_28 = arith.constant 0 : index
    %67 = vector.load %arg9[%c0_27, %c0_28] : memref<1x32xf32, #tpu.memory_space<vmem>>, vector<1x32xf32>
    %cst_29 = arith.constant dense<0.000000e+00> : vector<8xf32>
    %68 = vector.multi_reduction <add>, %65, %cst_29 [1] : vector<8x32xf32> to vector<8xf32>
    %69 = vector.shape_cast %68 : vector<8xf32> to vector<8x1xf32>
    %cst_30 = arith.constant 3.200000e+01 : f32
    %70 = vector.broadcast %cst_30 : f32 to vector<8x1xf32>
    %71 = arith.divf %69, %70 : vector<8x1xf32>
    %72 = vector.broadcast %71 : vector<8x1xf32> to vector<8x32xf32>
    %73 = arith.subf %65, %72 : vector<8x32xf32>
    %74 = arith.mulf %73, %73 : vector<8x32xf32>
    %cst_31 = arith.constant dense<0.000000e+00> : vector<8xf32>
    %75 = vector.multi_reduction <add>, %74, %cst_31 [1] : vector<8x32xf32> to vector<8xf32>
    %76 = vector.shape_cast %75 : vector<8xf32> to vector<8x1xf32>
    %cst_32 = arith.constant 3.200000e+01 : f32
    %77 = vector.broadcast %cst_32 : f32 to vector<8x1xf32>
    %78 = arith.divf %76, %77 : vector<8x1xf32>
    %79 = vector.broadcast %71 : vector<8x1xf32> to vector<8x32xf32>
    %80 = arith.subf %65, %79 : vector<8x32xf32>
    %cst_33 = arith.constant 9.99999974E-6 : f32
    %81 = vector.broadcast %cst_33 : f32 to vector<8x1xf32>
    %82 = arith.addf %78, %81 : vector<8x1xf32>
    %83 = math.rsqrt %82 : vector<8x1xf32>
    %84 = vector.broadcast %83 : vector<8x1xf32> to vector<8x32xf32>
    %85 = arith.mulf %80, %84 : vector<8x32xf32>
    %86 = vector.broadcast %66 : vector<1x32xf32> to vector<8x32xf32>
    %87 = arith.mulf %85, %86 : vector<8x32xf32>
    %88 = vector.broadcast %67 : vector<1x32xf32> to vector<8x32xf32>
    %89 = arith.addf %87, %88 : vector<8x32xf32>
    %c0_34 = arith.constant 0 : index
    %c0_35 = arith.constant 0 : index
    %90 = vector.load %arg10[%c0_34, %c0_35] : memref<32x64xbf16, #tpu.memory_space<vmem>>, vector<32x64xbf16>
    %91 = arith.truncf %89 : vector<8x32xf32> to vector<8x32xbf16>
    %cst_36 = arith.constant dense<0.000000e+00> : vector<8x64xf32>
    %92 = tpu.matmul %91, %90, %cst_36 {dimension_numbers = #tpu.dot_dimension_numbers<[1], [0], [0], [1], [0, 0, 1, 1], [], []>} : vector<8x32xbf16>, vector<32x64xbf16>, vector<8x64xf32> -> vector<8x64xf32>
    %c0_37 = arith.constant 0 : index
    %c0_38 = arith.constant 0 : index
    %93 = vector.load %arg11[%c0_37, %c0_38] : memref<1x64xf32, #tpu.memory_space<vmem>>, vector<1x64xf32>
    %94 = vector.broadcast %93 : vector<1x64xf32> to vector<8x64xf32>
    %95 = arith.addf %92, %94 : vector<8x64xf32>
    %cst_39 = arith.constant 5.000000e-01 : f32
    %96 = vector.broadcast %cst_39 : f32 to vector<8x64xf32>
    %97 = arith.mulf %96, %95 : vector<8x64xf32>
    %cst_40 = arith.constant 4.471500e-02 : f32
    %98 = vector.broadcast %cst_40 : f32 to vector<8x64xf32>
    %99 = arith.mulf %98, %95 : vector<8x64xf32>
    %100 = arith.mulf %99, %95 : vector<8x64xf32>
    %101 = arith.mulf %100, %95 : vector<8x64xf32>
    %102 = arith.addf %95, %101 : vector<8x64xf32>
    %cst_41 = arith.constant 0.797884583 : f32
    %103 = vector.broadcast %cst_41 : f32 to vector<8x64xf32>
    %104 = arith.mulf %103, %102 : vector<8x64xf32>
    %105 = math.tanh %104 : vector<8x64xf32>
    %cst_42 = arith.constant 1.000000e+00 : f32
    %106 = vector.broadcast %cst_42 : f32 to vector<8x64xf32>
    %107 = arith.addf %106, %105 : vector<8x64xf32>
    %108 = arith.mulf %97, %107 : vector<8x64xf32>
    %c0_43 = arith.constant 0 : index
    %c0_44 = arith.constant 0 : index
    %109 = vector.load %arg12[%c0_43, %c0_44] : memref<64x32xbf16, #tpu.memory_space<vmem>>, vector<64x32xbf16>
    %110 = arith.truncf %108 : vector<8x64xf32> to vector<8x64xbf16>
    %cst_45 = arith.constant dense<0.000000e+00> : vector<8x32xf32>
    %111 = tpu.matmul %110, %109, %cst_45 {dimension_numbers = #tpu.dot_dimension_numbers<[1], [0], [0], [1], [0, 0, 1, 1], [], []>} : vector<8x64xbf16>, vector<64x32xbf16>, vector<8x32xf32> -> vector<8x32xf32>
    %c0_46 = arith.constant 0 : index
    %c0_47 = arith.constant 0 : index
    %112 = vector.load %arg13[%c0_46, %c0_47] : memref<1x32xf32, #tpu.memory_space<vmem>>, vector<1x32xf32>
    %113 = vector.broadcast %112 : vector<1x32xf32> to vector<8x32xf32>
    %114 = arith.addf %111, %113 : vector<8x32xf32>
    %115 = arith.addf %65, %114 : vector<8x32xf32>
    %c0_48 = arith.constant 0 : index
    %c0_49 = arith.constant 0 : index
    %c0_50 = arith.constant 0 : index
    %116 = vector.load %arg14[%c0_48, %c0_49, %c0_50] : memref<1x8x32xf32, #tpu.memory_space<vmem>>, vector<1x8x32xf32>
    %117 = vector.shape_cast %116 : vector<1x8x32xf32> to vector<8x32xf32>
    %118 = vector.shape_cast %115 : vector<8x32xf32> to vector<1x8x32xf32>
    tpu.vector_store %arg14[%c0_48, %c0_49, %c0_50], %118 {strides = array<i32>} : memref<1x8x32xf32, #tpu.memory_space<vmem>>, vector<1x8x32xf32>,
    return
  }
  func.func @transform_0(%arg0: i32) -> (i32, i32, i32) {
    %c0_i32 = arith.constant 0 : i32
    %c0_i32_0 = arith.constant 0 : i32
    %c0_i32_1 = arith.constant 0 : i32
    return %arg0, %c0_i32, %c0_i32_0 : i32, i32, i32
  }
  func.func @transform_1(%arg0: i32) -> (i32, i32) {
    %c0_i32 = arith.constant 0 : i32
    %c0_i32_0 = arith.constant 0 : i32
    %c0_i32_1 = arith.constant 0 : i32
    return %c0_i32, %c0_i32_0 : i32, i32
  }
  func.func @transform_2(%arg0: i32) -> (i32, i32) {
    %c0_i32 = arith.constant 0 : i32
    %c0_i32_0 = arith.constant 0 : i32
    %c0_i32_1 = arith.constant 0 : i32
    return %c0_i32, %c0_i32_0 : i32, i32
  }
  func.func @transform_3(%arg0: i32) -> (i32, i32) {
    %c0_i32 = arith.constant 0 : i32
    %c0_i32_0 = arith.constant 0 : i32
    %c0_i32_1 = arith.constant 0 : i32
    return %c0_i32, %c0_i32_0 : i32, i32
  }
  func.func @transform_4(%arg0: i32) -> (i32, i32) {
    %c0_i32 = arith.constant 0 : i32
    %c0_i32_0 = arith.constant 0 : i32
    %c0_i32_1 = arith.constant 0 : i32
    return %c0_i32, %c0_i32_0 : i32, i32
  }
  func.func @transform_5(%arg0: i32) -> (i32, i32) {
    %c0_i32 = arith.constant 0 : i32
    %c0_i32_0 = arith.constant 0 : i32
    %c0_i32_1 = arith.constant 0 : i32
    return %c0_i32, %c0_i32_0 : i32, i32
  }
  func.func @transform_6(%arg0: i32) -> (i32, i32) {
    %c0_i32 = arith.constant 0 : i32
    %c0_i32_0 = arith.constant 0 : i32
    %c0_i32_1 = arith.constant 0 : i32
    return %c0_i32, %c0_i32_0 : i32, i32
  }
  func.func @transform_7(%arg0: i32) -> (i32, i32) {
    %c0_i32 = arith.constant 0 : i32
    %c0_i32_0 = arith.constant 0 : i32
    %c0_i32_1 = arith.constant 0 : i32
    return %c0_i32, %c0_i32_0 : i32, i32
  }
  func.func @transform_8(%arg0: i32) -> (i32, i32) {
    %c0_i32 = arith.constant 0 : i32
    %c0_i32_0 = arith.constant 0 : i32
    %c0_i32_1 = arith.constant 0 : i32
    return %c0_i32, %c0_i32_0 : i32, i32
  }
  func.func @transform_9(%arg0: i32) -> (i32, i32) {
    %c0_i32 = arith.constant 0 : i32
    %c0_i32_0 = arith.constant 0 : i32
    %c0_i32_1 = arith.constant 0 : i32
    return %c0_i32, %c0_i32_0 : i32, i32
  }
  func.func @transform_10(%arg0: i32) -> (i32, i32) {
    %c0_i32 = arith.constant 0 : i32
    %c0_i32_0 = arith.constant 0 : i32
    %c0_i32_1 = arith.constant 0 : i32
    return %c0_i32, %c0_i32_0 : i32, i32
  }
  func.func @transform_11(%arg0: i32) -> (i32, i32) {
    %c0_i32 = arith.constant 0 : i32
    %c0_i32_0 = arith.constant 0 : i32
    %c0_i32_1 = arith.constant 0 : i32
    return %c0_i32, %c0_i32_0 : i32, i32
  }
  func.func @transform_12(%arg0: i32) -> (i32, i32) {
    %c0_i32 = arith.constant 0 : i32
    %c0_i32_0 = arith.constant 0 : i32
    %c0_i32_1 = arith.constant 0 : i32
    return %c0_i32, %c0_i32_0 : i32, i32
  }
  func.func @transform_13(%arg0: i32) -> (i32, i32, i32) {
    %c0_i32 = arith.constant 0 : i32
    %c0_i32_0 = arith.constant 0 : i32
    %c0_i32_1 = arith.constant 0 : i32
    return %arg0, %c0_i32, %c0_i32_0 : i32, i32, i32
  }
}

</mosaic_0001>

<llo_original>
// kernel: wav2vec2_forward.10
$region0: #{wav2vec2_forward.10}
  #allocation0 [shape = 'u32[]', space=smem, size = 0x4, offset = 0x4, fixed_abs, tag = 'smem constant byte address 0x4 - core index']
  #allocation1 [shape = 'u32[144,128]{1,0:T(1,128)}', space=vmem, size = 0x12000, scoped, tag = 'internal scratch']
  %s0 = inlined_call_operand.hbm [shape: bf16[16,32], index: 0, kind: input, shape index: {}]
  %s1 = inlined_call_operand.hbm [shape: f32[1,32], index: 1, kind: input, shape index: {}]
  %s2 = inlined_call_operand.hbm [shape: f32[1,32], index: 2, kind: input, shape index: {}]
  %s3 = inlined_call_operand.hbm [shape: bf16[32,32], index: 3, kind: input, shape index: {}]
  %s4 = inlined_call_operand.hbm [shape: f32[1,32], index: 4, kind: input, shape index: {}]
  %s5 = inlined_call_operand.hbm [shape: bf16[16,32], index: 5, kind: output, shape index: {}]
  %s6 = sld [smem:[#allocation0]]
  $region50: #{wav2vec2_forward.10} parent=0
    _
  %s8 = ssub.s32 1, %s6
  %s9 = scalar_select 0, %s8, %s6
  $region1: #{wav2vec2_forward.10} parent=0
    #allocation2 [shape = 'u8[4096]{0}', space=vmem, size = 0x1000, scoped, tag = 'input window, operand 0, single buffered']
    #allocation3 [shape = 's32[1]{0}', space=sflag, size = 0x4, scoped, tag = 'scoped memory for wav2vec2_forward.10']
    #allocation4 [shape = 's32[1]{0}', space=sflag, size = 0x4, scoped, tag = 'scoped memory for wav2vec2_forward.10']
    #allocation5 [shape = 'u8[512]{0}', space=vmem, size = 0x400, scoped, tag = 'input window, operand 1, single buffered']
    #allocation6 [shape = 's32[1]{0}', space=sflag, size = 0x4, scoped, tag = 'scoped memory for wav2vec2_forward.10']
    #allocation7 [shape = 'u8[512]{0}', space=vmem, size = 0x400, scoped, tag = 'input window, operand 2, single buffered']
    #allocation8 [shape = 'u8[8192]{0}', space=vmem, size = 0x2000, scoped, tag = 'input window, operand 3, single buffered']
    #allocation9 [shape = 's32[1]{0}', space=sflag, size = 0x4, scoped, tag = 'scoped memory for wav2vec2_forward.10']
    #allocation10 [shape = 'u8[512]{0}', space=vmem, size = 0x400, scoped, tag = 'input window, operand 4, single buffered']
    #allocation11 [shape = 'u8[4096]{0}', space=vmem, size = 0x1000, scoped, tag = 'output window, operand 0, single buffered']
    %10 = vsyncpa [#allocation3], 0
    %11 = vsyncpa [#allocation6], 0
    %12 = vsyncpa [#allocation9], 0
    %13 = vsyncpa [#allocation4], 0
    // Predicated region
    $region2: #{wav2vec2_forward.10} parent=1 // pred_check
      _
    $region3: #{wav2vec2_forward.10} parent=1 // pred_check_branch
      %15 = sbr.rel (0) target = $region5
    $region4: #{wav2vec2_forward.10} parent=1 // pred_region
      %s17 = ssub.s32 128, 128
      %18 = vsyncadd [#allocation3], %s17
      %s19 = sshll.u32 [#allocation2], 4
      %s20 = int_to_ptr.vmem [resolvable:$true] %s19
      %25 = dma.hbm_to_vmem [thread:$0]  %s0, 128, %s20, [#allocation3], 64, 64, 4
    $region5: #{wav2vec2_forward.10} parent=1 // pred_fallthru
      _
    // Predicated region
    $region6: #{wav2vec2_forward.10} parent=1 // pred_check
      _
    $region7: #{wav2vec2_forward.10} parent=1 // pred_check_branch
      %27 = sbr.rel (0) target = $region9
    $region8: #{wav2vec2_forward.10} parent=1 // pred_region
      %s29 = ssub.s32 16, 16
      %30 = vsyncadd [#allocation6], %s29
      %s32 = sshll.u32 [#allocation5], 4
      %s33 = int_to_ptr.vmem [resolvable:$true] %s32
      %35 = dma.hbm_to_vmem [thread:$0]  %s1, 16, %s33, [#allocation6]
    $region9: #{wav2vec2_forward.10} parent=1 // pred_fallthru
      _
    // Predicated region
    $region10: #{wav2vec2_forward.10} parent=1 // pred_check
      _
    $region11: #{wav2vec2_forward.10} parent=1 // pred_check_branch
      %37 = sbr.rel (0) target = $region13
    $region12: #{wav2vec2_forward.10} parent=1 // pred_region
      %s39 = ssub.s32 16, 16
      %40 = vsyncadd [#allocation6], %s39
      %s42 = sshll.u32 [#allocation7], 4
      %s43 = int_to_ptr.vmem [resolvable:$true] %s42
      %45 = dma.hbm_to_vmem [thread:$0]  %s2, 16, %s43, [#allocation6]
    $region13: #{wav2vec2_forward.10} parent=1 // pred_fallthru
      _
    // Predicated region
    $region14: #{wav2vec2_forward.10} parent=1 // pred_check
      _
    $region15: #{wav2vec2_forward.10} parent=1 // pred_check_branch
      %47 = sbr.rel (0) target = $region17
    $region16: #{wav2vec2_forward.10} parent=1 // pred_region
      %s49 = ssub.s32 256, 256
      %50 = vsyncadd [#allocation9], %s49
      %s51 = sshll.u32 [#allocation8], 4
      %s52 = int_to_ptr.vmem [resolvable:$true] %s51
      %57 = dma.hbm_to_vmem [thread:$0]  %s3, 256, %s52, [#allocation9], 64, 64, 4
    $region17: #{wav2vec2_forward.10} parent=1 // pred_fallthru
      _
    // Predicated region
    $region18: #{wav2vec2_forward.10} parent=1 // pred_check
      _
    $region19: #{wav2vec2_forward.10} parent=1 // pred_check_branch
      %59 = sbr.rel (0) target = $region21
    $region20: #{wav2vec2_forward.10} parent=1 // pred_region
      %s61 = ssub.s32 16, 16
      %62 = vsyncadd [#allocation9], %s61
      %s64 = sshll.u32 [#allocation10], 4
      %s65 = int_to_ptr.vmem [resolvable:$true] %s64
      %67 = dma.hbm_to_vmem [thread:$0]  %s4, 16, %s65, [#allocation9]
    $region21: #{wav2vec2_forward.10} parent=1 // pred_fallthru
      _
    // Predicated region
    $region22: #{wav2vec2_forward.10} parent=1 // pred_check
      _
    $region23: #{wav2vec2_forward.10} parent=1 // pred_check_branch
      %69 = sbr.rel (0) target = $region25
    $region24: #{wav2vec2_forward.10} parent=1 // pred_region
      %70 = dma.done [#allocation3], 128
    $region25: #{wav2vec2_forward.10} parent=1 // pred_fallthru
      _
    // Predicated region
    $region26: #{wav2vec2_forward.10} parent=1 // pred_check
      _
    $region27: #{wav2vec2_forward.10} parent=1 // pred_check_branch
      %72 = sbr.rel (0) target = $region29
    $region28: #{wav2vec2_forward.10} parent=1 // pred_region
      %73 = dma.done [#allocation6], 16
    $region29: #{wav2vec2_forward.10} parent=1 // pred_fallthru
      _
    // Predicated region
    $region30: #{wav2vec2_forward.10} parent=1 // pred_check
      _
    $region31: #{wav2vec2_forward.10} parent=1 // pred_check_branch
      %75 = sbr.rel (0) target = $region33
    $region32: #{wav2vec2_forward.10} parent=1 // pred_region
      %76 = dma.done [#allocation6], 16
    $region33: #{wav2vec2_forward.10} parent=1 // pred_fallthru
      _
    // Predicated region
    $region34: #{wav2vec2_forward.10} parent=1 // pred_check
      _
    $region35: #{wav2vec2_forward.10} parent=1 // pred_check_branch
      %78 = sbr.rel (0) target = $region37
    $region36: #{wav2vec2_forward.10} parent=1 // pred_region
      %79 = dma.done [#allocation9], 256
    $region37: #{wav2vec2_forward.10} parent=1 // pred_fallthru
      _
    // Predicated region
    $region38: #{wav2vec2_forward.10} parent=1 // pred_check
      _
    $region39: #{wav2vec2_forward.10} parent=1 // pred_check_branch
      %81 = sbr.rel (0) target = $region41
    $region40: #{wav2vec2_forward.10} parent=1 // pred_region
      %82 = dma.done [#allocation9], 16
    $region41: #{wav2vec2_forward.10} parent=1 // pred_fallthru
      _
    %v84 = vld [vmem:[#allocation2] sm:$0xf]
    %v85 = vld [vmem:[#allocation2 + $0x4] sm:$0xf]
    %v86 = vunpack.c.l.bf16 %v84
    %v87 = vunpack.c.l.bf16 %v85
    %v88 = vld [vmem:[#allocation5] sm:$0x1]
    %v89 = vld [vmem:[#allocation7] sm:$0x1]
    %vm90 = vcmask 261120
    %v91 = vsel %vm90, %v86, 0.0
    %92 = vadd.xlane.f32.xlu0 %v91
    %v93 = vpop.xlane.xlu0 %92
    %v94 = vsel %vm90, %v87, 0.0
    %95 = vadd.xlane.f32.xlu0 %v94
    %v96 = vpop.xlane.xlu0 %95
    %v97 = vrcp.pop 32.0
    %v98 = vmul.f32 %v93, %v97
    %v99 = vmul.f32 %v96, %v97
    %v100 = vsub.f32 %v86, %v98
    %v101 = vsub.f32 %v87, %v99
    %v102 = vmul.f32 %v100, %v100
    %v103 = vmul.f32 %v101, %v101
    %v104 = vsel %vm90, %v102, 0.0
    %105 = vadd.xlane.f32.xlu0 %v104
    %v106 = vpop.xlane.xlu0 %105
    %v107 = vsel %vm90, %v103, 0.0
    %108 = vadd.xlane.f32.xlu0 %v107
    %v109 = vpop.xlane.xlu0 %108
    %v110 = vmul.f32 %v106, %v97
    %v111 = vmul.f32 %v109, %v97
    %v112 = vadd.f32 %v110, 1e-05
    %v113 = vadd.f32 %v111, 1e-05
    %v114 = vrsqrt.pop %v112
    %v115 = vrsqrt.pop %v113
    %v116 = vmul.f32 %v100, %v114
    %v117 = vmul.f32 %v101, %v115
    %v119 = vlaneseq
    %v120 = vshrl.u32 %v119, 7
    %v121 = vsub.s32 0, %v120
    %v122 = vrot.slane %v88, %v121
    %v124 = vmul.f32 %v116, %v122
    %v125 = vmul.f32 %v117, %v122
    %v127 = vlaneseq
    %v128 = vshrl.u32 %v127, 7
    %v129 = vsub.s32 0, %v128
    %v130 = vrot.slane %v89, %v129
    %v132 = vadd.f32 %v124, %v130
    %v133 = vadd.f32 %v125, %v130
    %v134 = vld [vmem:[#allocation8] sm:$0xf]
    %v135 = vld [vmem:[#allocation8 + $0x4] sm:$0xf]
    %v136 = vld [vmem:[#allocation8 + $0x8] sm:$0xf]
    %v137 = vld [vmem:[#allocation8 + $0xc] sm:$0xf]
    %v138 = vpack.c.bf16 %v133, %v132
    %v139 = vld [vmem:[#allocation10] sm:$0x1]
    %v141 = vlaneseq
    %v142 = vshrl.u32 %v141, 7
    %v143 = vsub.s32 0, %v142
    %v144 = vrot.slane %v139, %v143
    %v150 = vunpack.c.l.b16 %v134
    %v151 = vunpack.c.l.b16 %v135
    %v152 = vunpack.c.l.b16 %v136
    %v153 = vunpack.c.l.b16 %v137
    %v154 = vpack.c.b16 %v151, %v150
    %v155 = vpack.c.b16 %v153, %v152
    %v159 = vsel %vm90, %v138, 0
    %161 = vmatprep.subr.bf16.mxu0 0
    %162 = vmatpush1.bf16.msra.mxu0 %v154
    %163 = vmatprep.subr.bf16.mxu0 0
    %164 = vmatpush1.bf16.msra.mxu0 %v155
    %165 = vmatprep.subr.bf16.mxu0 0
    %166 = vmatpush1.bf16.msra.mxu0 0
    %167 = vmatprep.subr.bf16.mxu0 0
    %168 = vmatpush1.bf16.msra.mxu0 0
    %169 = vmatprep.subr.bf16.mxu0 0
    %170 = vmatpush1.bf16.msra.mxu0 0
    %171 = vmatprep.subr.bf16.mxu0 0
    %172 = vmatpush1.bf16.msra.mxu0 0
    %173 = vmatprep.subr.bf16.mxu0 0
    %174 = vmatpush1.bf16.msra.mxu0 0
    %175 = vmatprep.subr.bf16.mxu0 0
    %176 = vmatpush1.bf16.msra.mxu0 0
    %177 = vmatprep.subr.bf16.mxu0 0
    %178 = vmatpush1.bf16.msra.mxu0 0
    %179 = vmatprep.subr.bf16.mxu0 0
    %180 = vmatpush1.bf16.msra.mxu0 0
    %181 = vmatprep.subr.bf16.mxu0 0
    %182 = vmatpush1.bf16.msra.mxu0 0
    %183 = vmatprep.subr.bf16.mxu0 0
    %184 = vmatpush1.bf16.msra.mxu0 0
    %185 = vmatprep.subr.bf16.mxu0 0
    %186 = vmatpush1.bf16.msra.mxu0 0
    %187 = vmatprep.subr.bf16.mxu0 0
    %188 = vmatpush1.bf16.msra.mxu0 0
    %189 = vmatprep.subr.bf16.mxu0 0
    %190 = vmatpush1.bf16.msra.mxu0 0
    %191 = vmatprep.subr.bf16.mxu0 0
    %192 = vmatpush1.bf16.msra.mxu0 0
    %193 = vmatprep.mubr.bf16.mxu0 0
    %194 = vmatmul.mubr.bf16.gmra.mrb[0].mxu0 %v159
    %v195 = vpop.f32.mrb[0].mxu0
    %v196 = vadd.f32 %v144, %v195
    %v197 = vpop.f32.mrb[0].mxu0
    %v198 = vpop.f32.mrb[0].mxu0
    %v199 = vadd.f32 %v144, %v198
    %v200 = vpop.f32.mrb[0].mxu0
    %201 = vdwg.mxu0
    %v202 = vpack.c.bf16 %v199, %v196
    %v204 = vunpack.c.l.b16 %v202
    %v205 = vunpack.c.h.b16 %v202
    %v206 = vpack.c.b16 %v204, %v204
    %v207 = vpack.c.b16 %v205, %v205
    %vm210 = vcmask 257024
    %211 = vst.msk [vmem:[#allocation11] sm:$0xf] %vm210, %v206
    %212 = vst.msk [vmem:[#allocation11 + $0x4] sm:$0xf] %vm210, %v207
    // Predicated region
    $region42: #{wav2vec2_forward.10} parent=1 // pred_check
      _
    $region43: #{wav2vec2_forward.10} parent=1 // pred_check_branch
      %214 = sbr.rel (0) target = $region45
    $region44: #{wav2vec2_forward.10} parent=1 // pred_region
      %s216 = ssub.s32 128, 128
      %217 = vsyncadd [#allocation4], %s216
      %s218 = sshll.u32 [#allocation11], 4
      %s219 = int_to_ptr.vmem [resolvable:$true] %s218
      %224 = dma.vmem_to_hbm [thread:$0]  %s219, 128, %s5, [#allocation4], 64, 64, 4
    $region45: #{wav2vec2_forward.10} parent=1 // pred_fallthru
      _
    // Predicated region
    $region46: #{wav2vec2_forward.10} parent=1 // pred_check
      _
    $region47: #{wav2vec2_forward.10} parent=1 // pred_check_branch
      %226 = sbr.rel (0) target = $region49
    $region48: #{wav2vec2_forward.10} parent=1 // pred_region
      %227 = dma.done [#allocation4], 128
    $region49: #{wav2vec2_forward.10} parent=1 // pred_fallthru
      _
    %228 = vsyncpa [#allocation3], 1
    %229 = vsyncpa [#allocation6], 1
    %230 = vsyncpa [#allocation9], 1
    %231 = vsyncpa [#allocation4], 1

// kernel: wav2vec2_forward.9
$region0: #{wav2vec2_forward.9}
  #allocation0 [shape = 'u32[]', space=smem, size = 0x4, offset = 0x4, fixed_abs, tag = 'smem constant byte address 0x4 - core index']
  #allocation1 [shape = 'u32[144,128]{1,0:T(1,128)}', space=vmem, size = 0x12000, scoped, tag = 'internal scratch']
  %s0 = inlined_call_operand.hbm [shape: bf16[2,8,64], index: 0, kind: input, shape index: {}]
  %s1 = inlined_call_operand.hbm [shape: bf16[1,64,32], index: 1, kind: input, shape index: {}]
  %s2 = inlined_call_operand.hbm [shape: f32[1,32], index: 2, kind: input, shape index: {}]
  %s3 = inlined_call_operand.hbm [shape: f32[1,32], index: 3, kind: input, shape index: {}]
  %s4 = inlined_call_operand.hbm [shape: f32[1,32], index: 4, kind: input, shape index: {}]
  %s5 = inlined_call_operand.hbm [shape: bf16[2,8,32], index: 5, kind: output, shape index: {}]
  %s6 = sld [smem:[#allocation0]]
  $region73: #{wav2vec2_forward.9} parent=0
    _
  %s8 = ssub.s32 1, %s6
  %s9 = scalar_select 0, %s8, %s6
  $region1: #{wav2vec2_forward.9} parent=0
    #allocation2 [shape = 'u8[4096]{0}', space=vmem, size = 0x1000, scoped, tag = 'input window, operand 0']
    #allocation3 [shape = 's32[2]{0}', space=sflag, size = 0x8, scoped, tag = 'scoped memory for wav2vec2_forward.9']
    #allocation4 [shape = 's32[2]{0}', space=sflag, size = 0x8, scoped, tag = 'scoped memory for wav2vec2_forward.9']
    #allocation5 [shape = 'u8[16384]{0}', space=vmem, size = 0x4000, scoped, tag = 'input window, operand 1, single buffered']
    #allocation6 [shape = 's32[1]{0}', space=sflag, size = 0x4, scoped, tag = 'scoped memory for wav2vec2_forward.9']
    #allocation7 [shape = 'u8[512]{0}', space=vmem, size = 0x400, scoped, tag = 'input window, operand 2, single buffered']
    #allocation8 [shape = 'u8[512]{0}', space=vmem, size = 0x400, scoped, tag = 'input window, operand 3, single buffered']
    #allocation9 [shape = 's32[1]{0}', space=sflag, size = 0x4, scoped, tag = 'scoped memory for wav2vec2_forward.9']
    #allocation10 [shape = 'u8[512]{0}', space=vmem, size = 0x400, scoped, tag = 'input window, operand 4, single buffered']
    #allocation11 [shape = 'u8[4096]{0}', space=vmem, size = 0x1000, scoped, tag = 'output window, operand 0']
    %10 = vsyncpa [#allocation3], 0
    %s11 = scalar_lea.sflag [#allocation3], 1
    %12 = vsyncpa %s11, 0
    %13 = vsyncpa [#allocation6], 0
    %14 = vsyncpa [#allocation9], 0
    %15 = vsyncpa [#allocation4], 0
    %s16 = scalar_lea.sflag [#allocation4], 1
    %17 = vsyncpa %s16, 0
    loop: start=0, step=1, limit=4
    $region2: #{wav2vec2_forward.9} parent=1 // loop_pre_header
      _
    $region3: #{wav2vec2_forward.9} parent=1 // loop_header
      %s19 = sphi 0, %s23
      %p20 = scmp.ge.s32.totalorder %s19, 4
      %s29 = sphi 0, %s31
      %s32 = sphi 0, %s29
      %s33 = sphi 0, %s32
      %s49 = sphi 0, %s33
      %s53 = sphi 0, %s53
      %s55 = sphi 0, %s53
      %s56 = sphi 0, %s55
      %s70 = sphi 0, %s56
      %s74 = sphi 0, %s74
      %s76 = sphi 0, %s74
      %s77 = sphi 0, %s76
      %s91 = sphi 0, %s77
      %s95 = sphi 0, %s95
      %s97 = sphi 0, %s95
      %s98 = sphi 0, %s97
      %s112 = sphi 0, %s98
      %s116 = sphi 0, %s116
      %s118 = sphi 0, %s116
      %s119 = sphi 0, %s118
      %s133 = sphi 0, %s119
      %s139 = sphi 0, %s141
      %s142 = sphi 0, %s139
      %s143 = sphi 0, %s142
      %s159 = sphi 0, %s143
    $region4: #{wav2vec2_forward.9} parent=1 // loop_header_branch
      %22 = sbr.rel (%p20) target = $region8
    $region5: #{wav2vec2_forward.9} parent=1 // loop_body
      %s24 = ssub.s32 %s19, 1
      %s25 = ssub.s32 %s19, 2
      %s26 = sadd.s32 %s19, 1
      %s27 = ssub.s32 %s19, %s26
      %p28 = scmp.eq.s32.totalorder %s27, 0
      %s30 = sadd.s32 %s29, 1
      %s31 = scalar_select %p28, %s29, %s30
      %p34 = pneg %p28
      %p35 = scmp.eq.s32.totalorder %s19, 1
      %p36 = por %p34, %p35
      %p37 = scmp.ne.s32.totalorder %s29, %s32
      %p38 = scmp.eq.s32.totalorder %s19, 0
      %p39 = por %p37, %p38
      %p40 = scmp.ne.s32.totalorder %s29, %s32
      %p41 = scmp.eq.s32.totalorder %s24, 1
      %p42 = por %p40, %p41
      %p43 = scmp.ne.s32.totalorder %s32, %s33
      %p44 = scmp.eq.s32.totalorder %s24, 0
      %p45 = por %p43, %p44
      %p46 = scmp.ne.s32.totalorder %s32, %s33
      %p47 = scmp.eq.s32.totalorder %s25, 1
      %p48 = por %p46, %p47
      %p50 = scmp.ne.s32.totalorder %s33, %s49
      %p51 = scmp.eq.s32.totalorder %s25, 0
      %p52 = por %p50, %p51
      %s54 = sadd.s32 %s53, 1
      %p57 = scmp.eq.s32.totalorder %s19, 1
      %p58 = scmp.ne.s32.totalorder %s53, %s55
      %p59 = scmp.eq.s32.totalorder %s19, 0
      %p60 = por %p58, %p59
      %p61 = scmp.ne.s32.totalorder %s53, %s55
      %p62 = scmp.eq.s32.totalorder %s24, 1
      %p63 = por %p61, %p62
      %p64 = scmp.ne.s32.totalorder %s55, %s56
      %p65 = scmp.eq.s32.totalorder %s24, 0
      %p66 = por %p64, %p65
      %p67 = scmp.ne.s32.totalorder %s55, %s56
      %p68 = scmp.eq.s32.totalorder %s25, 1
      %p69 = por %p67, %p68
      %p71 = scmp.ne.s32.totalorder %s56, %s70
      %p72 = scmp.eq.s32.totalorder %s25, 0
      %p73 = por %p71, %p72
      %s75 = sadd.s32 %s74, 1
      %p78 = scmp.eq.s32.totalorder %s19, 1
      %p79 = scmp.ne.s32.totalorder %s74, %s76
      %p80 = scmp.eq.s32.totalorder %s19, 0
      %p81 = por %p79, %p80
      %p82 = scmp.ne.s32.totalorder %s74, %s76
      %p83 = scmp.eq.s32.totalorder %s24, 1
      %p84 = por %p82, %p83
      %p85 = scmp.ne.s32.totalorder %s76, %s77
      %p86 = scmp.eq.s32.totalorder %s24, 0
      %p87 = por %p85, %p86
      %p88 = scmp.ne.s32.totalorder %s76, %s77
      %p89 = scmp.eq.s32.totalorder %s25, 1
      %p90 = por %p88, %p89
      %p92 = scmp.ne.s32.totalorder %s77, %s91
      %p93 = scmp.eq.s32.totalorder %s25, 0
      %p94 = por %p92, %p93
      %s96 = sadd.s32 %s95, 1
      %p99 = scmp.eq.s32.totalorder %s19, 1
      %p100 = scmp.ne.s32.totalorder %s95, %s97
      %p101 = scmp.eq.s32.totalorder %s19, 0
      %p102 = por %p100, %p101
      %p103 = scmp.ne.s32.totalorder %s95, %s97
      %p104 = scmp.eq.s32.totalorder %s24, 1
      %p105 = por %p103, %p104
      %p106 = scmp.ne.s32.totalorder %s97, %s98
      %p107 = scmp.eq.s32.totalorder %s24, 0
      %p108 = por %p106, %p107
      %p109 = scmp.ne.s32.totalorder %s97, %s98
      %p110 = scmp.eq.s32.totalorder %s25, 1
      %p111 = por %p109, %p110
      %p113 = scmp.ne.s32.totalorder %s98, %s112
      %p114 = scmp.eq.s32.totalorder %s25, 0
      %p115 = por %p113, %p114
      %s117 = sadd.s32 %s116, 1
      %p120 = scmp.eq.s32.totalorder %s19, 1
      %p121 = scmp.ne.s32.totalorder %s116, %s118
      %p122 = scmp.eq.s32.totalorder %s19, 0
      %p123 = por %p121, %p122
      %p124 = scmp.ne.s32.totalorder %s116, %s118
      %p125 = scmp.eq.s32.totalorder %s24, 1
      %p126 = por %p124, %p125
      %p127 = scmp.ne.s32.totalorder %s118, %s119
      %p128 = scmp.eq.s32.totalorder %s24, 0
      %p129 = por %p127, %p128
      %p130 = scmp.ne.s32.totalorder %s118, %s119
      %p131 = scmp.eq.s32.totalorder %s25, 1
      %p132 = por %p130, %p131
      %p134 = scmp.ne.s32.totalorder %s119, %s133
      %p135 = scmp.eq.s32.totalorder %s25, 0
      %p136 = por %p134, %p135
      %s137 = ssub.s32 %s19, %s26
      %p138 = scmp.eq.s32.totalorder %s137, 0
      %s140 = sadd.s32 %s139, 1
      %s141 = scalar_select %p138, %s139, %s140
      %p144 = pneg %p138
      %p145 = scmp.eq.s32.totalorder %s19, 1
      %p146 = por %p144, %p145
      %p147 = scmp.ne.s32.totalorder %s139, %s142
      %p148 = scmp.eq.s32.totalorder %s19, 0
      %p149 = por %p147, %p148
      %p150 = scmp.ne.s32.totalorder %s139, %s142
      %p151 = scmp.eq.s32.totalorder %s24, 1
      %p152 = por %p150, %p151
      %p153 = scmp.ne.s32.totalorder %s142, %s143
      %p154 = scmp.eq.s32.totalorder %s24, 0
      %p155 = por %p153, %p154
      %p156 = scmp.ne.s32.totalorder %s142, %s143
      %p157 = scmp.eq.s32.totalorder %s25, 1
      %p158 = por %p156, %p157
      %p160 = scmp.ne.s32.totalorder %s143, %s159
      %p161 = scmp.eq.s32.totalorder %s25, 0
      %p162 = por %p160, %p161
      %p163 = scmp.le.s32.totalorder 1, %s19
      %p164 = scmp.lt.s32.totalorder %s19, 3
      %p165 = pnand %p163, %p164
      %p166 = pneg %p165
      // Predicated region
      $region9: #{wav2vec2_forward.9} parent=5 // pred_check
        _
      $region10: #{wav2vec2_forward.9} parent=5 // pred_check_branch
        %168 = sbr.rel (%p165) target = $region12
      $region11: #{wav2vec2_forward.9} parent=5 // pred_region
        %s169 = ssub.s32 %s19, 1
        // Predicated region
        $region13: #{wav2vec2_forward.9} parent=11 // pred_check
          %p170 = pneg %p66
        $region14: #{wav2vec2_forward.9} parent=11 // pred_check_branch
          %172 = sbr.rel (%p170) target = $region16
        $region15: #{wav2vec2_forward.9} parent=11 // pred_region
          %s174 = ssub.s32 512, 512
          %175 = vsyncadd [#allocation6], %s174
          %s176 = sshll.u32 [#allocation5], 4
          %s177 = int_to_ptr.vmem [resolvable:$true] %s176
          %182 = dma.hbm_to_vmem [thread:$0]  %s1, 512, %s177, [#allocation6], 64, 64, 4
        $region16: #{wav2vec2_forward.9} parent=11 // pred_fallthru
          _
        // Predicated region
        $region17: #{wav2vec2_forward.9} parent=11 // pred_check
          %p183 = pneg %p87
        $region18: #{wav2vec2_forward.9} parent=11 // pred_check_branch
          %185 = sbr.rel (%p183) target = $region20
        $region19: #{wav2vec2_forward.9} parent=11 // pred_region
          %s187 = ssub.s32 16, 16
          %188 = vsyncadd [#allocation6], %s187
          %s190 = sshll.u32 [#allocation7], 4
          %s191 = int_to_ptr.vmem [resolvable:$true] %s190
          %193 = dma.hbm_to_vmem [thread:$0]  %s2, 16, %s191, [#allocation6]
        $region20: #{wav2vec2_forward.9} parent=11 // pred_fallthru
          _
        // Predicated region
        $region21: #{wav2vec2_forward.9} parent=11 // pred_check
          %p194 = pneg %p108
        $region22: #{wav2vec2_forward.9} parent=11 // pred_check_branch
          %196 = sbr.rel (%p194) target = $region24
        $region23: #{wav2vec2_forward.9} parent=11 // pred_region
          %s198 = ssub.s32 16, 16
          %199 = vsyncadd [#allocation9], %s198
          %s201 = sshll.u32 [#allocation8], 4
          %s202 = int_to_ptr.vmem [resolvable:$true] %s201
          %204 = dma.hbm_to_vmem [thread:$0]  %s3, 16, %s202, [#allocation9]
        $region24: #{wav2vec2_forward.9} parent=11 // pred_fallthru
          _
        // Predicated region
        $region25: #{wav2vec2_forward.9} parent=11 // pred_check
          %p205 = pneg %p129
        $region26: #{wav2vec2_forward.9} parent=11 // pred_check_branch
          %207 = sbr.rel (%p205) target = $region28
        $region27: #{wav2vec2_forward.9} parent=11 // pred_region
          %s209 = ssub.s32 16, 16
          %210 = vsyncadd [#allocation9], %s209
          %s212 = sshll.u32 [#allocation10], 4
          %s213 = int_to_ptr.vmem [resolvable:$true] %s212
          %215 = dma.hbm_to_vmem [thread:$0]  %s4, 16, %s213, [#allocation9]
        $region28: #{wav2vec2_forward.9} parent=11 // pred_fallthru
          _
      $region12: #{wav2vec2_forward.9} parent=5 // pred_fallthru
        _
      %p216 = scmp.lt.s32.totalorder %s19, 2
      // Predicated region
      $region29: #{wav2vec2_forward.9} parent=5 // pred_check
        %p217 = pneg %p216
      $region30: #{wav2vec2_forward.9} parent=5 // pred_check_branch
        %219 = sbr.rel (%p217) target = $region32
      $region31: #{wav2vec2_forward.9} parent=5 // pred_region
        // Predicated region
        $region33: #{wav2vec2_forward.9} parent=31 // pred_check
          %p220 = pneg %p39
        $region34: #{wav2vec2_forward.9} parent=31 // pred_check_branch
          %222 = sbr.rel (%p220) target = $region36
        $region35: #{wav2vec2_forward.9} parent=31 // pred_region
          %s223 = sand.u32 %s29, 1
          %s224 = scalar_lea.sflag [#allocation3], %s223
          %s225 = sand.u32 %s29, 1
          %s226 = smul.addr %s225, 4
          %s227 = scalar_lea.vmem [#allocation2], %s226
          %s229 = ssub.s32 64, 64
          %230 = vsyncadd %s224, %s229
          %s231 = smul.addr %s19, 64
          %s232 = scalar_lea.hbm %s0, %s231
          %s234 = sshll.u32 %s227, 4
          %s235 = int_to_ptr.vmem [resolvable:$true] %s234
          %237 = dma.hbm_to_vmem [thread:$0]  %s232, 64, %s235, %s224
        $region36: #{wav2vec2_forward.9} parent=31 // pred_fallthru
          _
      $region32: #{wav2vec2_forward.9} parent=5 // pred_fallthru
        _
      %p238 = scmp.le.s32.totalorder 1, %s19
      %p239 = scmp.lt.s32.totalorder %s19, 3
      %p240 = pnand %p238, %p239
      %p241 = pneg %p240
      // Predicated region
      $region37: #{wav2vec2_forward.9} parent=5 // pred_check
        _
      $region38: #{wav2vec2_forward.9} parent=5 // pred_check_branch
        %243 = sbr.rel (%p240) target = $region40
      $region39: #{wav2vec2_forward.9} parent=5 // pred_region
        %s244 = ssub.s32 %s19, 1
        %s245 = sand.u32 %s32, 1
        %s246 = scalar_lea.sflag [#allocation3], %s245
        %s247 = sand.u32 %s32, 1
        %s248 = smul.addr %s247, 4
        %s249 = scalar_lea.vmem [#allocation2], %s248
        // Predicated region
        $region41: #{wav2vec2_forward.9} parent=39 // pred_check
          %p250 = pneg %p45
        $region42: #{wav2vec2_forward.9} parent=39 // pred_check_branch
          %252 = sbr.rel (%p250) target = $region44
        $region43: #{wav2vec2_forward.9} parent=39 // pred_region
          %253 = dma.done %s246, 64
        $region44: #{wav2vec2_forward.9} parent=39 // pred_fallthru
          _
        // Predicated region
        $region45: #{wav2vec2_forward.9} parent=39 // pred_check
          %p254 = pneg %p66
        $region46: #{wav2vec2_forward.9} parent=39 // pred_check_branch
          %256 = sbr.rel (%p254) target = $region48
        $region47: #{wav2vec2_forward.9} parent=39 // pred_region
          %257 = dma.done [#allocation6], 512
        $region48: #{wav2vec2_forward.9} parent=39 // pred_fallthru
          _
        // Predicated region
        $region49: #{wav2vec2_forward.9} parent=39 // pred_check
          %p258 = pneg %p87
        $region50: #{wav2vec2_forward.9} parent=39 // pred_check_branch
          %260 = sbr.rel (%p258) target = $region52
        $region51: #{wav2vec2_forward.9} parent=39 // pred_region
          %261 = dma.done [#allocation6], 16
        $region52: #{wav2vec2_forward.9} parent=39 // pred_fallthru
          _
        // Predicated region
        $region53: #{wav2vec2_forward.9} parent=39 // pred_check
          %p262 = pneg %p108
        $region54: #{wav2vec2_forward.9} parent=39 // pred_check_branch
          %264 = sbr.rel (%p262) target = $region56
        $region55: #{wav2vec2_forward.9} parent=39 // pred_region
          %265 = dma.done [#allocation9], 16
        $region56: #{wav2vec2_forward.9} parent=39 // pred_fallthru
          _
        // Predicated region
        $region57: #{wav2vec2_forward.9} parent=39 // pred_check
          %p266 = pneg %p129
        $region58: #{wav2vec2_forward.9} parent=39 // pred_check_branch
          %268 = sbr.rel (%p266) target = $region60
        $region59: #{wav2vec2_forward.9} parent=39 // pred_region
          %269 = dma.done [#allocation9], 16
        $region60: #{wav2vec2_forward.9} parent=39 // pred_fallthru
          _
        %s270 = sand.u32 %s32, 1
        %s271 = scalar_lea.sflag [#allocation3], %s270
        %s272 = sand.u32 %s32, 1
        %s273 = smul.addr %s272, 4
        %s274 = scalar_lea.vmem [#allocation2], %s273
        %p275 = pneg %p45
        %p276 = pneg %p42
        %p277 = pneg %p66
        %p278 = pneg %p63
        %p279 = pneg %p87
        %p280 = pneg %p84
        %p281 = pneg %p108
        %p282 = pneg %p105
        %p283 = pneg %p129
        %p284 = pneg %p126
        %p285 = pneg %p155
        %p286 = pneg %p152
        %s287 = sand.u32 %s142, 1
        %s288 = scalar_lea.sflag [#allocation4], %s287
        %s289 = sand.u32 %s142, 1
        %s290 = smul.addr %s289, 4
        %s291 = scalar_lea.vmem [#allocation11], %s290
        %v293 = vld [vmem:[%s249] sm:$0xf]
        %v294 = vld [vmem:[#allocation5] sm:$0xf]
        %v295 = vld [vmem:[#allocation5 + $0x4] sm:$0xf]
        %v296 = vld [vmem:[#allocation5 + $0x8] sm:$0xf]
        %v297 = vld [vmem:[#allocation5 + $0xc] sm:$0xf]
        %v298 = vld [vmem:[#allocation5 + $0x10] sm:$0xf]
        %v299 = vld [vmem:[#allocation5 + $0x14] sm:$0xf]
        %v300 = vld [vmem:[#allocation5 + $0x18] sm:$0xf]
        %v301 = vld [vmem:[#allocation5 + $0x1c] sm:$0xf]
        %v302 = vld [vmem:[#allocation7] sm:$0x1]
        %v304 = vlaneseq
        %v305 = vshrl.u32 %v304, 7
        %v306 = vsub.s32 0, %v305
        %v307 = vrot.slane %v302, %v306
        %v317 = vunpack.c.l.b16 %v294
        %v318 = vunpack.c.l.b16 %v295
        %v319 = vunpack.c.l.b16 %v296
        %v320 = vunpack.c.l.b16 %v297
        %v321 = vunpack.c.l.b16 %v298
        %v322 = vunpack.c.l.b16 %v299
        %v323 = vunpack.c.l.b16 %v300
        %v324 = vunpack.c.l.b16 %v301
        %v325 = vpack.c.b16 %v318, %v317
        %v326 = vpack.c.b16 %v320, %v319
        %v327 = vpack.c.b16 %v322, %v321
        %v328 = vpack.c.b16 %v324, %v323
        %vm333 = vcmask 523264
        %v335 = vsel %vm333, %v293, 0
        %337 = vmatprep.subr.bf16.mxu0 0
        %338 = vmatpush1.bf16.msra.mxu0 %v325
        %339 = vmatprep.subr.bf16.mxu0 0
        %340 = vmatpush1.bf16.msra.mxu0 %v326
        %341 = vmatprep.subr.bf16.mxu0 0
        %342 = vmatpush1.bf16.msra.mxu0 %v327
        %343 = vmatprep.subr.bf16.mxu0 0
        %344 = vmatpush1.bf16.msra.mxu0 %v328
        %345 = vmatprep.subr.bf16.mxu0 0
        %346 = vmatpush1.bf16.msra.mxu0 0
        %347 = vmatprep.subr.bf16.mxu0 0
        %348 = vmatpush1.bf16.msra.mxu0 0
        %349 = vmatprep.subr.bf16.mxu0 0
        %350 = vmatpush1.bf16.msra.mxu0 0
        %351 = vmatprep.subr.bf16.mxu0 0
        %352 = vmatpush1.bf16.msra.mxu0 0
        %353 = vmatprep.subr.bf16.mxu0 0
        %354 = vmatpush1.bf16.msra.mxu0 0
        %355 = vmatprep.subr.bf16.mxu0 0
        %356 = vmatpush1.bf16.msra.mxu0 0
        %357 = vmatprep.subr.bf16.mxu0 0
        %358 = vmatpush1.bf16.msra.mxu0 0
        %359 = vmatprep.subr.bf16.mxu0 0
        %360 = vmatpush1.bf16.msra.mxu0 0
        %361 = vmatprep.subr.bf16.mxu0 0
        %362 = vmatpush1.bf16.msra.mxu0 0
        %363 = vmatprep.subr.bf16.mxu0 0
        %364 = vmatpush1.bf16.msra.mxu0 0
        %365 = vmatprep.subr.bf16.mxu0 0
        %366 = vmatpush1.bf16.msra.mxu0 0
        %367 = vmatprep.subr.bf16.mxu0 0
        %368 = vmatpush1.bf16.msra.mxu0 0
        %369 = vmatprep.mubr.bf16.mxu0 0
        %370 = vmatmul.mubr.bf16.gmra.mrb[0].mxu0 %v335
        %v371 = vpop.f32.mrb[0].mxu0
        %v372 = vadd.f32 %v307, %v371
        %v373 = vpop.f32.mrb[0].mxu0
        %v374 = vpop.f32.mrb[0].mxu0
        %v375 = vpop.f32.mrb[0].mxu0
        %376 = vdwg.mxu0
        %v377 = vld [vmem:[#allocation8] sm:$0x1]
        %v378 = vld [vmem:[#allocation10] sm:$0x1]
        %vm379 = vcmask 261120
        %v380 = vsel %vm379, %v372, 0.0
        %381 = vadd.xlane.f32.xlu0 %v380
        %v382 = vpop.xlane.xlu0 %381
        %v383 = vrcp.pop 32.0
        %v384 = vmul.f32 %v382, %v383
        %v385 = vsub.f32 %v372, %v384
        %v386 = vmul.f32 %v385, %v385
        %v387 = vsel %vm379, %v386, 0.0
        %388 = vadd.xlane.f32.xlu0 %v387
        %v389 = vpop.xlane.xlu0 %388
        %v390 = vmul.f32 %v389, %v383
        %v391 = vadd.f32 %v390, 1e-05
        %v392 = vrsqrt.pop %v391
        %v393 = vmul.f32 %v385, %v392
        %v395 = vlaneseq
        %v396 = vshrl.u32 %v395, 7
        %v397 = vsub.s32 0, %v396
        %v398 = vrot.slane %v377, %v397
        %v400 = vmul.f32 %v393, %v398
        %v402 = vlaneseq
        %v403 = vshrl.u32 %v402, 7
        %v404 = vsub.s32 0, %v403
        %v405 = vrot.slane %v378, %v404
        %v407 = vadd.f32 %v400, %v405
        %v408 = vmul.f32 %v407, 0.5
        %v409 = vmul.f32 %v407, 0.044715
        %v410 = vmul.f32 %v409, %v407
        %v411 = vmul.f32 %v410, %v407
        %v412 = vadd.f32 %v407, %v411
        %v413 = vmul.f32 %v412, 0.7978846
        %v414 = vtanh.pop %v413
        %v415 = vadd.f32 %v414, 1.0
        %v416 = vmul.f32 %v408, %v415
        %v417 = vpack.c.bf16 %v416, %v416
        %vm418 = vcmask 257024
        %419 = vst.msk [vmem:[%s291] sm:$0xf] %vm418, %v417
        %s420 = sand.u32 %s142, 1
        %s421 = scalar_lea.sflag [#allocation4], %s420
        %s422 = sand.u32 %s142, 1
        %s423 = smul.addr %s422, 4
        %s424 = scalar_lea.vmem [#allocation11], %s423
        // Predicated region
        $region61: #{wav2vec2_forward.9} parent=39 // pred_check
          %p425 = pneg %p152
        $region62: #{wav2vec2_forward.9} parent=39 // pred_check_branch
          %427 = sbr.rel (%p425) target = $region64
        $region63: #{wav2vec2_forward.9} parent=39 // pred_region
          %s429 = ssub.s32 64, 64
          %430 = vsyncadd %s421, %s429
          %s431 = smul.addr %s24, 64
          %s432 = scalar_lea.hbm %s5, %s431
          %s434 = sshll.u32 %s424, 4
          %s435 = int_to_ptr.vmem [resolvable:$true] %s434
          %437 = dma.vmem_to_hbm [thread:$0]  %s435, 64, %s432, %s421
        $region64: #{wav2vec2_forward.9} parent=39 // pred_fallthru
          _
      $region40: #{wav2vec2_forward.9} parent=5 // pred_fallthru
        _
      %p438 = scmp.le.s32.totalorder 2, %s19
      // Predicated region
      $region65: #{wav2vec2_forward.9} parent=5 // pred_check
        %p439 = pneg %p438
      $region66: #{wav2vec2_forward.9} parent=5 // pred_check_branch
        %441 = sbr.rel (%p439) target = $region68
      $region67: #{wav2vec2_forward.9} parent=5 // pred_region
        %s442 = ssub.s32 %s19, 2
        // Predicated region
        $region69: #{wav2vec2_forward.9} parent=67 // pred_check
          %p443 = pneg %p158
        $region70: #{wav2vec2_forward.9} parent=67 // pred_check_branch
          %445 = sbr.rel (%p443) target = $region72
        $region71: #{wav2vec2_forward.9} parent=67 // pred_region
          %s446 = sand.u32 %s143, 1
          %s447 = scalar_lea.sflag [#allocation4], %s446
          %s448 = sand.u32 %s143, 1
          %s449 = smul.addr %s448, 4
          %s450 = scalar_lea.vmem [#allocation11], %s449
          %451 = dma.done %s447, 64
        $region72: #{wav2vec2_forward.9} parent=67 // pred_fallthru
          _
      $region68: #{wav2vec2_forward.9} parent=5 // pred_fallthru
        _
    $region6: #{wav2vec2_forward.9} parent=1 // loop_footer
      %s23 = sadd.s32 1, %s19
    $region7: #{wav2vec2_forward.9} parent=1 // loop_footer_branch
      %18 = sbr.rel target = $region3
    $region8: #{wav2vec2_forward.9} parent=1 // loop_exit
      _
    %452 = vsyncpa [#allocation3], 1
    %s453 = scalar_lea.sflag [#allocation3], 1
    %454 = vsyncpa %s453, 1
    %455 = vsyncpa [#allocation6], 1
    %456 = vsyncpa [#allocation9], 1
    %457 = vsyncpa [#allocation4], 1
    %s458 = scalar_lea.sflag [#allocation4], 1
    %459 = vsyncpa %s458, 1

// kernel: wav2vec2_forward.7
$region0: #{wav2vec2_forward.7}
  #allocation0 [shape = 'u32[]', space=smem, size = 0x4, offset = 0x4, fixed_abs, tag = 'smem constant byte address 0x4 - core index']
  #allocation1 [shape = 'u32[144,128]{1,0:T(1,128)}', space=vmem, size = 0x12000, scoped, tag = 'internal scratch']
  %s0 = inlined_call_operand.hbm [shape: f32[2,36,5], index: 0, kind: input, shape index: {}]
  %s1 = inlined_call_operand.hbm [shape: bf16[2,5,32], index: 1, kind: input, shape index: {}]
  %s2 = inlined_call_operand.hbm [shape: f32[1,32], index: 2, kind: input, shape index: {}]
  %s3 = inlined_call_operand.hbm [shape: f32[1,32], index: 3, kind: input, shape index: {}]
  %s4 = inlined_call_operand.hbm [shape: f32[1,32], index: 4, kind: input, shape index: {}]
  %s5 = inlined_call_operand.hbm [shape: bf16[2,35,32], index: 5, kind: output, shape index: {}]
  %s6 = sld [smem:[#allocation0]]
  $region73: #{wav2vec2_forward.7} parent=0
    _
  %s8 = ssub.s32 1, %s6
  %s9 = scalar_select 0, %s8, %s6
  $region1: #{wav2vec2_forward.7} parent=0
    #allocation2 [shape = 'u8[40960]{0}', space=vmem, size = 0xa000, scoped, tag = 'input window, operand 0']
    #allocation3 [shape = 's32[2]{0}', space=sflag, size = 0x8, scoped, tag = 'scoped memory for wav2vec2_forward.7']
    #allocation4 [shape = 's32[2]{0}', space=sflag, size = 0x8, scoped, tag = 'scoped memory for wav2vec2_forward.7']
    #allocation5 [shape = 'u8[4096]{0}', space=vmem, size = 0x1000, scoped, tag = 'input window, operand 1, single buffered']
    #allocation6 [shape = 's32[1]{0}', space=sflag, size = 0x4, scoped, tag = 'scoped memory for wav2vec2_forward.7']
    #allocation7 [shape = 'u8[512]{0}', space=vmem, size = 0x400, scoped, tag = 'input window, operand 2, single buffered']
    #allocation8 [shape = 'u8[512]{0}', space=vmem, size = 0x400, scoped, tag = 'input window, operand 3, single buffered']
    #allocation9 [shape = 's32[1]{0}', space=sflag, size = 0x4, scoped, tag = 'scoped memory for wav2vec2_forward.7']
    #allocation10 [shape = 'u8[512]{0}', space=vmem, size = 0x400, scoped, tag = 'input window, operand 4, single buffered']
    #allocation11 [shape = 'u8[20480]{0}', space=vmem, size = 0x5000, scoped, tag = 'output window, operand 0']
    %10 = vsyncpa [#allocation3], 0
    %s11 = scalar_lea.sflag [#allocation3], 1
    %12 = vsyncpa %s11, 0
    %13 = vsyncpa [#allocation6], 0
    %14 = vsyncpa [#allocation9], 0
    %15 = vsyncpa [#allocation4], 0
    %s16 = scalar_lea.sflag [#allocation4], 1
    %17 = vsyncpa %s16, 0
    loop: start=0, step=1, limit=4
    $region2: #{wav2vec2_forward.7} parent=1 // loop_pre_header
      _
    $region3: #{wav2vec2_forward.7} parent=1 // loop_header
      %s19 = sphi 0, %s23
      %p20 = scmp.ge.s32.totalorder %s19, 4
      %s29 = sphi 0, %s31
      %s32 = sphi 0, %s29
      %s33 = sphi 0, %s32
      %s49 = sphi 0, %s33
      %s53 = sphi 0, %s53
      %s55 = sphi 0, %s53
      %s56 = sphi 0, %s55
      %s70 = sphi 0, %s56
      %s74 = sphi 0, %s74
      %s76 = sphi 0, %s74
      %s77 = sphi 0, %s76
      %s91 = sphi 0, %s77
      %s95 = sphi 0, %s95
      %s97 = sphi 0, %s95
      %s98 = sphi 0, %s97
      %s112 = sphi 0, %s98
      %s116 = sphi 0, %s116
      %s118 = sphi 0, %s116
      %s119 = sphi 0, %s118
      %s133 = sphi 0, %s119
      %s139 = sphi 0, %s141
      %s142 = sphi 0, %s139
      %s143 = sphi 0, %s142
      %s159 = sphi 0, %s143
    $region4: #{wav2vec2_forward.7} parent=1 // loop_header_branch
      %22 = sbr.rel (%p20) target = $region8
    $region5: #{wav2vec2_forward.7} parent=1 // loop_body
      %s24 = ssub.s32 %s19, 1
      %s25 = ssub.s32 %s19, 2
      %s26 = sadd.s32 %s19, 1
      %s27 = ssub.s32 %s19, %s26
      %p28 = scmp.eq.s32.totalorder %s27, 0
      %s30 = sadd.s32 %s29, 1
      %s31 = scalar_select %p28, %s29, %s30
      %p34 = pneg %p28
      %p35 = scmp.eq.s32.totalorder %s19, 1
      %p36 = por %p34, %p35
      %p37 = scmp.ne.s32.totalorder %s29, %s32
      %p38 = scmp.eq.s32.totalorder %s19, 0
      %p39 = por %p37, %p38
      %p40 = scmp.ne.s32.totalorder %s29, %s32
      %p41 = scmp.eq.s32.totalorder %s24, 1
      %p42 = por %p40, %p41
      %p43 = scmp.ne.s32.totalorder %s32, %s33
      %p44 = scmp.eq.s32.totalorder %s24, 0
      %p45 = por %p43, %p44
      %p46 = scmp.ne.s32.totalorder %s32, %s33
      %p47 = scmp.eq.s32.totalorder %s25, 1
      %p48 = por %p46, %p47
      %p50 = scmp.ne.s32.totalorder %s33, %s49
      %p51 = scmp.eq.s32.totalorder %s25, 0
      %p52 = por %p50, %p51
      %s54 = sadd.s32 %s53, 1
      %p57 = scmp.eq.s32.totalorder %s19, 1
      %p58 = scmp.ne.s32.totalorder %s53, %s55
      %p59 = scmp.eq.s32.totalorder %s19, 0
      %p60 = por %p58, %p59
      %p61 = scmp.ne.s32.totalorder %s53, %s55
      %p62 = scmp.eq.s32.totalorder %s24, 1
      %p63 = por %p61, %p62
      %p64 = scmp.ne.s32.totalorder %s55, %s56
      %p65 = scmp.eq.s32.totalorder %s24, 0
      %p66 = por %p64, %p65
      %p67 = scmp.ne.s32.totalorder %s55, %s56
      %p68 = scmp.eq.s32.totalorder %s25, 1
      %p69 = por %p67, %p68
      %p71 = scmp.ne.s32.totalorder %s56, %s70
      %p72 = scmp.eq.s32.totalorder %s25, 0
      %p73 = por %p71, %p72
      %s75 = sadd.s32 %s74, 1
      %p78 = scmp.eq.s32.totalorder %s19, 1
      %p79 = scmp.ne.s32.totalorder %s74, %s76
      %p80 = scmp.eq.s32.totalorder %s19, 0
      %p81 = por %p79, %p80
      %p82 = scmp.ne.s32.totalorder %s74, %s76
      %p83 = scmp.eq.s32.totalorder %s24, 1
      %p84 = por %p82, %p83
      %p85 = scmp.ne.s32.totalorder %s76, %s77
      %p86 = scmp.eq.s32.totalorder %s24, 0
      %p87 = por %p85, %p86
      %p88 = scmp.ne.s32.totalorder %s76, %s77
      %p89 = scmp.eq.s32.totalorder %s25, 1
      %p90 = por %p88, %p89
      %p92 = scmp.ne.s32.totalorder %s77, %s91
      %p93 = scmp.eq.s32.totalorder %s25, 0
      %p94 = por %p92, %p93
      %s96 = sadd.s32 %s95, 1
      %p99 = scmp.eq.s32.totalorder %s19, 1
      %p100 = scmp.ne.s32.totalorder %s95, %s97
      %p101 = scmp.eq.s32.totalorder %s19, 0
      %p102 = por %p100, %p101
      %p103 = scmp.ne.s32.totalorder %s95, %s97
      %p104 = scmp.eq.s32.totalorder %s24, 1
      %p105 = por %p103, %p104
      %p106 = scmp.ne.s32.totalorder %s97, %s98
      %p107 = scmp.eq.s32.totalorder %s24, 0
      %p108 = por %p106, %p107
      %p109 = scmp.ne.s32.totalorder %s97, %s98
      %p110 = scmp.eq.s32.totalorder %s25, 1
      %p111 = por %p109, %p110
      %p113 = scmp.ne.s32.totalorder %s98, %s112
      %p114 = scmp.eq.s32.totalorder %s25, 0
      %p115 = por %p113, %p114
      %s117 = sadd.s32 %s116, 1
      %p120 = scmp.eq.s32.totalorder %s19, 1
      %p121 = scmp.ne.s32.totalorder %s116, %s118
      %p122 = scmp.eq.s32.totalorder %s19, 0
      %p123 = por %p121, %p122
      %p124 = scmp.ne.s32.totalorder %s116, %s118
      %p125 = scmp.eq.s32.totalorder %s24, 1
      %p126 = por %p124, %p125
      %p127 = scmp.ne.s32.totalorder %s118, %s119
      %p128 = scmp.eq.s32.totalorder %s24, 0
      %p129 = por %p127, %p128
      %p130 = scmp.ne.s32.totalorder %s118, %s119
      %p131 = scmp.eq.s32.totalorder %s25, 1
      %p132 = por %p130, %p131
      %p134 = scmp.ne.s32.totalorder %s119, %s133
      %p135 = scmp.eq.s32.totalorder %s25, 0
      %p136 = por %p134, %p135
      %s137 = ssub.s32 %s19, %s26
      %p138 = scmp.eq.s32.totalorder %s137, 0
      %s140 = sadd.s32 %s139, 1
      %s141 = scalar_select %p138, %s139, %s140
      %p144 = pneg %p138
      %p145 = scmp.eq.s32.totalorder %s19, 1
      %p146 = por %p144, %p145
      %p147 = scmp.ne.s32.totalorder %s139, %s142
      %p148 = scmp.eq.s32.totalorder %s19, 0
      %p149 = por %p147, %p148
      %p150 = scmp.ne.s32.totalorder %s139, %s142
      %p151 = scmp.eq.s32.totalorder %s24, 1
      %p152 = por %p150, %p151
      %p153 = scmp.ne.s32.totalorder %s142, %s143
      %p154 = scmp.eq.s32.totalorder %s24, 0
      %p155 = por %p153, %p154
      %p156 = scmp.ne.s32.totalorder %s142, %s143
      %p157 = scmp.eq.s32.totalorder %s25, 1
      %p158 = por %p156, %p157
      %p160 = scmp.ne.s32.totalorder %s143, %s159
      %p161 = scmp.eq.s32.totalorder %s25, 0
      %p162 = por %p160, %p161
      %p163 = scmp.le.s32.totalorder 1, %s19
      %p164 = scmp.lt.s32.totalorder %s19, 3
      %p165 = pnand %p163, %p164
      %p166 = pneg %p165
      // Predicated region
      $region9: #{wav2vec2_forward.7} parent=5 // pred_check
        _
      $region10: #{wav2vec2_forward.7} parent=5 // pred_check_branch
        %168 = sbr.rel (%p165) target = $region12
      $region11: #{wav2vec2_forward.7} parent=5 // pred_region
        %s169 = ssub.s32 %s19, 1
        // Predicated region
        $region13: #{wav2vec2_forward.7} parent=11 // pred_check
          %p170 = pneg %p66
        $region14: #{wav2vec2_forward.7} parent=11 // pred_check_branch
          %172 = sbr.rel (%p170) target = $region16
        $region15: #{wav2vec2_forward.7} parent=11 // pred_region
          %s174 = ssub.s32 128, 128
          %175 = vsyncadd [#allocation6], %s174
          %s176 = sshll.u32 [#allocation5], 4
          %s177 = int_to_ptr.vmem [resolvable:$true] %s176
          %182 = dma.hbm_to_vmem [thread:$0]  %s1, 128, %s177, [#allocation6], 64, 64, 4
        $region16: #{wav2vec2_forward.7} parent=11 // pred_fallthru
          _
        // Predicated region
        $region17: #{wav2vec2_forward.7} parent=11 // pred_check
          %p183 = pneg %p87
        $region18: #{wav2vec2_forward.7} parent=11 // pred_check_branch
          %185 = sbr.rel (%p183) target = $region20
        $region19: #{wav2vec2_forward.7} parent=11 // pred_region
          %s187 = ssub.s32 16, 16
          %188 = vsyncadd [#allocation6], %s187
          %s190 = sshll.u32 [#allocation7], 4
          %s191 = int_to_ptr.vmem [resolvable:$true] %s190
          %193 = dma.hbm_to_vmem [thread:$0]  %s2, 16, %s191, [#allocation6]
        $region20: #{wav2vec2_forward.7} parent=11 // pred_fallthru
          _
        // Predicated region
        $region21: #{wav2vec2_forward.7} parent=11 // pred_check
          %p194 = pneg %p108
        $region22: #{wav2vec2_forward.7} parent=11 // pred_check_branch
          %196 = sbr.rel (%p194) target = $region24
        $region23: #{wav2vec2_forward.7} parent=11 // pred_region
          %s198 = ssub.s32 16, 16
          %199 = vsyncadd [#allocation9], %s198
          %s201 = sshll.u32 [#allocation8], 4
          %s202 = int_to_ptr.vmem [resolvable:$true] %s201
          %204 = dma.hbm_to_vmem [thread:$0]  %s3, 16, %s202, [#allocation9]
        $region24: #{wav2vec2_forward.7} parent=11 // pred_fallthru
          _
        // Predicated region
        $region25: #{wav2vec2_forward.7} parent=11 // pred_check
          %p205 = pneg %p129
        $region26: #{wav2vec2_forward.7} parent=11 // pred_check_branch
          %207 = sbr.rel (%p205) target = $region28
        $region27: #{wav2vec2_forward.7} parent=11 // pred_region
          %s209 = ssub.s32 16, 16
          %210 = vsyncadd [#allocation9], %s209
          %s212 = sshll.u32 [#allocation10], 4
          %s213 = int_to_ptr.vmem [resolvable:$true] %s212
          %215 = dma.hbm_to_vmem [thread:$0]  %s4, 16, %s213, [#allocation9]
        $region28: #{wav2vec2_forward.7} parent=11 // pred_fallthru
          _
      $region12: #{wav2vec2_forward.7} parent=5 // pred_fallthru
        _
      %p216 = scmp.lt.s32.totalorder %s19, 2
      // Predicated region
      $region29: #{wav2vec2_forward.7} parent=5 // pred_check
        %p217 = pneg %p216
      $region30: #{wav2vec2_forward.7} parent=5 // pred_check_branch
        %219 = sbr.rel (%p217) target = $region32
      $region31: #{wav2vec2_forward.7} parent=5 // pred_region
        // Predicated region
        $region33: #{wav2vec2_forward.7} parent=31 // pred_check
          %p220 = pneg %p39
        $region34: #{wav2vec2_forward.7} parent=31 // pred_check_branch
          %222 = sbr.rel (%p220) target = $region36
        $region35: #{wav2vec2_forward.7} parent=31 // pred_region
          %s223 = sand.u32 %s29, 1
          %s224 = scalar_lea.sflag [#allocation3], %s223
          %s225 = sand.u32 %s29, 1
          %s226 = smul.addr %s225, 40
          %s227 = scalar_lea.vmem [#allocation2], %s226
          %s229 = ssub.s32 640, 640
          %230 = vsyncadd %s224, %s229
          %s231 = smul.addr %s19, 5
          %s232 = smul.addr %s231, 128
          %s233 = scalar_lea.hbm %s0, %s232
          %s234 = sshll.u32 %s227, 4
          %s235 = int_to_ptr.vmem [resolvable:$true] %s234
          %240 = dma.hbm_to_vmem [thread:$0]  %s233, 640, %s235, %s224, 128, 128, 8
        $region36: #{wav2vec2_forward.7} parent=31 // pred_fallthru
          _
      $region32: #{wav2vec2_forward.7} parent=5 // pred_fallthru
        _
      %p241 = scmp.le.s32.totalorder 1, %s19
      %p242 = scmp.lt.s32.totalorder %s19, 3
      %p243 = pnand %p241, %p242
      %p244 = pneg %p243
      // Predicated region
      $region37: #{wav2vec2_forward.7} parent=5 // pred_check
        _
      $region38: #{wav2vec2_forward.7} parent=5 // pred_check_branch
        %246 = sbr.rel (%p243) target = $region40
      $region39: #{wav2vec2_forward.7} parent=5 // pred_region
        %s247 = ssub.s32 %s19, 1
        %s248 = sand.u32 %s32, 1
        %s249 = scalar_lea.sflag [#allocation3], %s248
        %s250 = sand.u32 %s32, 1
        %s251 = smul.addr %s250, 40
        %s252 = scalar_lea.vmem [#allocation2], %s251
        // Predicated region
        $region41: #{wav2vec2_forward.7} parent=39 // pred_check
          %p253 = pneg %p45
        $region42: #{wav2vec2_forward.7} parent=39 // pred_check_branch
          %255 = sbr.rel (%p253) target = $region44
        $region43: #{wav2vec2_forward.7} parent=39 // pred_region
          %256 = dma.done %s249, 640
        $region44: #{wav2vec2_forward.7} parent=39 // pred_fallthru
          _
        // Predicated region
        $region45: #{wav2vec2_forward.7} parent=39 // pred_check
          %p257 = pneg %p66
        $region46: #{wav2vec2_forward.7} parent=39 // pred_check_branch
          %259 = sbr.rel (%p257) target = $region48
        $region47: #{wav2vec2_forward.7} parent=39 // pred_region
          %260 = dma.done [#allocation6], 128
        $region48: #{wav2vec2_forward.7} parent=39 // pred_fallthru
          _
        // Predicated region
        $region49: #{wav2vec2_forward.7} parent=39 // pred_check
          %p261 = pneg %p87
        $region50: #{wav2vec2_forward.7} parent=39 // pred_check_branch
          %263 = sbr.rel (%p261) target = $region52
        $region51: #{wav2vec2_forward.7} parent=39 // pred_region
          %264 = dma.done [#allocation6], 16
        $region52: #{wav2vec2_forward.7} parent=39 // pred_fallthru
          _
        // Predicated region
        $region53: #{wav2vec2_forward.7} parent=39 // pred_check
          %p265 = pneg %p108
        $region54: #{wav2vec2_forward.7} parent=39 // pred_check_branch
          %267 = sbr.rel (%p265) target = $region56
        $region55: #{wav2vec2_forward.7} parent=39 // pred_region
          %268 = dma.done [#allocation9], 16
        $region56: #{wav2vec2_forward.7} parent=39 // pred_fallthru
          _
        // Predicated region
        $region57: #{wav2vec2_forward.7} parent=39 // pred_check
          %p269 = pneg %p129
        $region58: #{wav2vec2_forward.7} parent=39 // pred_check_branch
          %271 = sbr.rel (%p269) target = $region60
        $region59: #{wav2vec2_forward.7} parent=39 // pred_region
          %272 = dma.done [#allocation9], 16
        $region60: #{wav2vec2_forward.7} parent=39 // pred_fallthru
          _
        %s273 = sand.u32 %s32, 1
        %s274 = scalar_lea.sflag [#allocation3], %s273
        %s275 = sand.u32 %s32, 1
        %s276 = smul.addr %s275, 40
        %s277 = scalar_lea.vmem [#allocation2], %s276
        %p278 = pneg %p45
        %p279 = pneg %p42
        %p280 = pneg %p66
        %p281 = pneg %p63
        %p282 = pneg %p87
        %p283 = pneg %p84
        %p284 = pneg %p108
        %p285 = pneg %p105
        %p286 = pneg %p129
        %p287 = pneg %p126
        %p288 = pneg %p155
        %p289 = pneg %p152
        %s290 = sand.u32 %s142, 1
        %s291 = scalar_lea.sflag [#allocation4], %s290
        %s292 = sand.u32 %s142, 1
        %s293 = smul.addr %s292, 20
        %s294 = scalar_lea.vmem [#allocation11], %s293
        %v296 = vld [vmem:[%s252] sm:$0xff]
        %v297 = vld [vmem:[%s252 + $0x8] sm:$0xff]
        %v298 = vld [vmem:[%s252 + $0x10] sm:$0xff]
        %v299 = vld [vmem:[%s252 + $0x18] sm:$0xff]
        %v300 = vld [vmem:[%s252 + $0x20] sm:$0xf]
        %v301 = vpack.c.bf16 %v297, %v296
        %v302 = vpack.c.bf16 %v299, %v298
        %v303 = vpack.c.bf16 %v300, %v300
        %v304 = vld [vmem:[#allocation5] sm:$0x7]
        %s305 = scalar_lea.vmem [#allocation5], 4
        %v306 = vld [vmem:[%s305] sm:$0x7]
        %vm307 = vsmask.f32 7424
        %v309 = vshrl.u32 %v301, 16
        %v311 = vshll.u32 %v301, 16
        %v313 = vrot.slane %v311, 1
        %v314 = vor.u32 %v309, %v313
        %v316 = vshll.u32 %v302, 16
        %v318 = vrot.slane %v316, 1
        %v319 = vsel %vm307, %v314, %v318
        %v320 = vshrl.u32 %v302, 16
        %v322 = vor.u32 %v320, %v318
        %v324 = vshll.u32 %v303, 16
        %v326 = vrot.slane %v324, 1
        %v327 = vsel %vm307, %v322, %v326
        %v328 = vshrl.u32 %v303, 16
        %v330 = vor.u32 %v328, %v326
        %vm331 = vcmask 39936
        %v333 = vsel %vm331, %v319, 0
        %v336 = vsel %vm331, %v327, 0
        %v339 = vsel %vm331, %v330, 0
        %vm341 = vcmask 1041408
        %vm342 = vcmask 1042432
        %v343 = vsel %vm341, 4294967295, 65535
        %v344 = vsel %vm342, %v343, 0
        %v346 = vand.u32 %v306, %v344
        %348 = vmatprep.subr.bf16.mxu0 0
        %349 = vmatpush1.bf16.msra.mxu0 %v346
        %350 = vmatprep.subr.bf16.mxu0 0
        %351 = vmatpush1.bf16.msra.mxu0 0
        %352 = vmatprep.subr.bf16.mxu0 0
        %353 = vmatpush1.bf16.msra.mxu0 0
        %354 = vmatprep.subr.bf16.mxu0 0
        %355 = vmatpush1.bf16.msra.mxu0 0
        %356 = vmatprep.subr.bf16.mxu0 0
        %357 = vmatpush1.bf16.msra.mxu0 0
        %358 = vmatprep.subr.bf16.mxu0 0
        %359 = vmatpush1.bf16.msra.mxu0 0
        %360 = vmatprep.subr.bf16.mxu0 0
        %361 = vmatpush1.bf16.msra.mxu0 0
        %362 = vmatprep.subr.bf16.mxu0 0
        %363 = vmatpush1.bf16.msra.mxu0 0
        %364 = vmatprep.subr.bf16.mxu0 0
        %365 = vmatpush1.bf16.msra.mxu0 0
        %366 = vmatprep.subr.bf16.mxu0 0
        %367 = vmatpush1.bf16.msra.mxu0 0
        %368 = vmatprep.subr.bf16.mxu0 0
        %369 = vmatpush1.bf16.msra.mxu0 0
        %370 = vmatprep.subr.bf16.mxu0 0
        %371 = vmatpush1.bf16.msra.mxu0 0
        %372 = vmatprep.subr.bf16.mxu0 0
        %373 = vmatpush1.bf16.msra.mxu0 0
        %374 = vmatprep.subr.bf16.mxu0 0
        %375 = vmatpush1.bf16.msra.mxu0 0
        %376 = vmatprep.subr.bf16.mxu0 0
        %377 = vmatpush1.bf16.msra.mxu0 0
        %378 = vmatprep.subr.bf16.mxu0 0
        %379 = vmatpush1.bf16.msra.mxu0 0
        %380 = vmatprep.mubr.bf16.mxu0 0
        %381 = vmatmul.mubr.bf16.gmra.mrb[0].mxu0 %v333
        %v382 = vpop.f32.mrb[0].mxu0
        %v383 = vadd.f32 0.0, %v382
        %v384 = vpop.f32.mrb[0].mxu0
        %v385 = vpop.f32.mrb[0].mxu0
        %v386 = vadd.f32 0.0, %v385
        %v387 = vpop.f32.mrb[0].mxu0
        %388 = vmatprep.mubr.bf16.mxu0 0
        %389 = vmatmul.mubr.bf16.gmra.mrb[0].mxu0 %v336
        %v390 = vpop.f32.mrb[0].mxu0
        %v391 = vadd.f32 0.0, %v390
        %v392 = vpop.f32.mrb[0].mxu0
        %v393 = vpop.f32.mrb[0].mxu0
        %v394 = vadd.f32 0.0, %v393
        %v395 = vpop.f32.mrb[0].mxu0
        %396 = vmatprep.mubr.bf16.mxu0 0
        %397 = vmatmul.mubr.bf16.gmra.mrb[0].mxu0 %v339
        %v398 = vpop.f32.mrb[0].mxu0
        %v399 = vadd.f32 0.0, %v398
        %v400 = vpop.f32.mrb[0].mxu0
        %v401 = vpop.f32.mrb[0].mxu0
        %v402 = vpop.f32.mrb[0].mxu0
        %403 = vdwg.mxu0
        %v404 = vsel %vm331, %v301, 0
        %v406 = vsel %vm331, %v302, 0
        %v408 = vsel %vm331, %v303, 0
        %v411 = vand.u32 %v304, %v344
        %413 = vmatprep.subr.bf16.mxu0 0
        %414 = vmatpush1.bf16.msra.mxu0 %v411
        %415 = vmatprep.subr.bf16.mxu0 0
        %416 = vmatpush1.bf16.msra.mxu0 0
        %417 = vmatprep.subr.bf16.mxu0 0
        %418 = vmatpush1.bf16.msra.mxu0 0
        %419 = vmatprep.subr.bf16.mxu0 0
        %420 = vmatpush1.bf16.msra.mxu0 0
        %421 = vmatprep.subr.bf16.mxu0 0
        %422 = vmatpush1.bf16.msra.mxu0 0
        %423 = vmatprep.subr.bf16.mxu0 0
        %424 = vmatpush1.bf16.msra.mxu0 0
        %425 = vmatprep.subr.bf16.mxu0 0
        %426 = vmatpush1.bf16.msra.mxu0 0
        %427 = vmatprep.subr.bf16.mxu0 0
        %428 = vmatpush1.bf16.msra.mxu0 0
        %429 = vmatprep.subr.bf16.mxu0 0
        %430 = vmatpush1.bf16.msra.mxu0 0
        %431 = vmatprep.subr.bf16.mxu0 0
        %432 = vmatpush1.bf16.msra.mxu0 0
        %433 = vmatprep.subr.bf16.mxu0 0
        %434 = vmatpush1.bf16.msra.mxu0 0
        %435 = vmatprep.subr.bf16.mxu0 0
        %436 = vmatpush1.bf16.msra.mxu0 0
        %437 = vmatprep.subr.bf16.mxu0 0
        %438 = vmatpush1.bf16.msra.mxu0 0
        %439 = vmatprep.subr.bf16.mxu0 0
        %440 = vmatpush1.bf16.msra.mxu0 0
        %441 = vmatprep.subr.bf16.mxu0 0
        %442 = vmatpush1.bf16.msra.mxu0 0
        %443 = vmatprep.subr.bf16.mxu0 0
        %444 = vmatpush1.bf16.msra.mxu0 0
        %445 = vmatprep.mubr.bf16.mxu0 0
        %446 = vmatmul.mubr.bf16.gmra.mrb[0].mxu0 %v404
        %v447 = vpop.f32.mrb[0].mxu0
        %v448 = vadd.f32 %v383, %v447
        %v449 = vpop.f32.mrb[0].mxu0
        %v450 = vpop.f32.mrb[0].mxu0
        %v451 = vadd.f32 %v386, %v450
        %v452 = vpop.f32.mrb[0].mxu0
        %453 = vmatprep.mubr.bf16.mxu0 0
        %454 = vmatmul.mubr.bf16.gmra.mrb[0].mxu0 %v406
        %v455 = vpop.f32.mrb[0].mxu0
        %v456 = vadd.f32 %v391, %v455
        %v457 = vpop.f32.mrb[0].mxu0
        %v458 = vpop.f32.mrb[0].mxu0
        %v459 = vadd.f32 %v394, %v458
        %v460 = vpop.f32.mrb[0].mxu0
        %461 = vmatprep.mubr.bf16.mxu0 0
        %462 = vmatmul.mubr.bf16.gmra.mrb[0].mxu0 %v408
        %v463 = vpop.f32.mrb[0].mxu0
        %v464 = vadd.f32 %v399, %v463
        %v465 = vpop.f32.mrb[0].mxu0
        %v466 = vpop.f32.mrb[0].mxu0
        %v467 = vpop.f32.mrb[0].mxu0
        %468 = vdwg.mxu0
        %v469 = vld [vmem:[#allocation7] sm:$0x1]
        %v471 = vlaneseq
        %v472 = vshrl.u32 %v471, 7
        %v473 = vsub.s32 0, %v472
        %v474 = vrot.slane %v469, %v473
        %v476 = vadd.f32 %v448, %v474
        %v477 = vadd.f32 %v451, %v474
        %v478 = vadd.f32 %v456, %v474
        %v479 = vadd.f32 %v459, %v474
        %v480 = vadd.f32 %v464, %v474
        %v481 = vld [vmem:[#allocation8] sm:$0x1]
        %v482 = vld [vmem:[#allocation10] sm:$0x1]
        %vm483 = vcmask 261120
        %v484 = vsel %vm483, %v476, 0.0
        %485 = vadd.xlane.f32.xlu0 %v484
        %v486 = vpop.xlane.xlu0 %485
        %v487 = vsel %vm483, %v477, 0.0
        %488 = vadd.xlane.f32.xlu0 %v487
        %v489 = vpop.xlane.xlu0 %488
        %v490 = vsel %vm483, %v478, 0.0
        %491 = vadd.xlane.f32.xlu0 %v490
        %v492 = vpop.xlane.xlu0 %491
        %v493 = vsel %vm483, %v479, 0.0
        %494 = vadd.xlane.f32.xlu0 %v493
        %v495 = vpop.xlane.xlu0 %494
        %vm496 = vcmask 256000
        %v497 = vsel %vm496, %v480, 0.0
        %498 = vadd.xlane.f32.xlu0 %v497
        %v499 = vpop.xlane.xlu0 %498
        %v500 = vrcp.pop 32.0
        %v501 = vmul.f32 %v486, %v500
        %v502 = vmul.f32 %v489, %v500
        %v503 = vmul.f32 %v492, %v500
        %v504 = vmul.f32 %v495, %v500
        %v505 = vmul.f32 %v499, %v500
        %v506 = vsub.f32 %v476, %v501
        %v507 = vsub.f32 %v477, %v502
        %v508 = vsub.f32 %v478, %v503
        %v509 = vsub.f32 %v479, %v504
        %v510 = vsub.f32 %v480, %v505
        %v511 = vmul.f32 %v506, %v506
        %v512 = vmul.f32 %v507, %v507
        %v513 = vmul.f32 %v508, %v508
        %v514 = vmul.f32 %v509, %v509
        %v515 = vmul.f32 %v510, %v510
        %v516 = vsel %vm483, %v511, 0.0
        %517 = vadd.xlane.f32.xlu0 %v516
        %v518 = vpop.xlane.xlu0 %517
        %v519 = vsel %vm483, %v512, 0.0
        %520 = vadd.xlane.f32.xlu0 %v519
        %v521 = vpop.xlane.xlu0 %520
        %v522 = vsel %vm483, %v513, 0.0
        %523 = vadd.xlane.f32.xlu0 %v522
        %v524 = vpop.xlane.xlu0 %523
        %v525 = vsel %vm483, %v514, 0.0
        %526 = vadd.xlane.f32.xlu0 %v525
        %v527 = vpop.xlane.xlu0 %526
        %v528 = vsel %vm496, %v515, 0.0
        %529 = vadd.xlane.f32.xlu0 %v528
        %v530 = vpop.xlane.xlu0 %529
        %v531 = vmul.f32 %v518, %v500
        %v532 = vmul.f32 %v521, %v500
        %v533 = vmul.f32 %v524, %v500
        %v534 = vmul.f32 %v527, %v500
        %v535 = vmul.f32 %v530, %v500
        %v536 = vadd.f32 %v531, 1e-05
        %v537 = vadd.f32 %v532, 1e-05
        %v538 = vadd.f32 %v533, 1e-05
        %v539 = vadd.f32 %v534, 1e-05
        %v540 = vadd.f32 %v535, 1e-05
        %v541 = vrsqrt.pop %v536
        %v542 = vrsqrt.pop %v537
        %v543 = vrsqrt.pop %v538
        %v544 = vrsqrt.pop %v539
        %v545 = vrsqrt.pop %v540
        %v546 = vmul.f32 %v506, %v541
        %v547 = vmul.f32 %v507, %v542
        %v548 = vmul.f32 %v508, %v543
        %v549 = vmul.f32 %v509, %v544
        %v550 = vmul.f32 %v510, %v545
        %v552 = vlaneseq
        %v553 = vshrl.u32 %v552, 7
        %v554 = vsub.s32 0, %v553
        %v555 = vrot.slane %v481, %v554
        %v557 = vmul.f32 %v546, %v555
        %v558 = vmul.f32 %v547, %v555
        %v559 = vmul.f32 %v548, %v555
        %v560 = vmul.f32 %v549, %v555
        %v561 = vmul.f32 %v550, %v555
        %v563 = vlaneseq
        %v564 = vshrl.u32 %v563, 7
        %v565 = vsub.s32 0, %v564
        %v566 = vrot.slane %v482, %v565
        %v568 = vadd.f32 %v557, %v566
        %v569 = vadd.f32 %v558, %v566
        %v570 = vadd.f32 %v559, %v566
        %v571 = vadd.f32 %v560, %v566
        %v572 = vadd.f32 %v561, %v566
        %v573 = vmul.f32 %v568, 0.5
        %v574 = vmul.f32 %v569, 0.5
        %v575 = vmul.f32 %v570, 0.5
        %v576 = vmul.f32 %v571, 0.5
        %v577 = vmul.f32 %v572, 0.5
        %v578 = vmul.f32 %v568, 0.044715
        %v579 = vmul.f32 %v569, 0.044715
        %v580 = vmul.f32 %v570, 0.044715
        %v581 = vmul.f32 %v571, 0.044715
        %v582 = vmul.f32 %v572, 0.044715
        %v583 = vmul.f32 %v578, %v568
        %v584 = vmul.f32 %v579, %v569
        %v585 = vmul.f32 %v580, %v570
        %v586 = vmul.f32 %v581, %v571
        %v587 = vmul.f32 %v582, %v572
        %v588 = vmul.f32 %v583, %v568
        %v589 = vmul.f32 %v584, %v569
        %v590 = vmul.f32 %v585, %v570
        %v591 = vmul.f32 %v586, %v571
        %v592 = vmul.f32 %v587, %v572
        %v593 = vadd.f32 %v568, %v588
        %v594 = vadd.f32 %v569, %v589
        %v595 = vadd.f32 %v570, %v590
        %v596 = vadd.f32 %v571, %v591
        %v597 = vadd.f32 %v572, %v592
        %v598 = vmul.f32 %v593, 0.7978846
        %v599 = vmul.f32 %v594, 0.7978846
        %v600 = vmul.f32 %v595, 0.7978846
        %v601 = vmul.f32 %v596, 0.7978846
        %v602 = vmul.f32 %v597, 0.7978846
        %v603 = vtanh.pop %v598
        %v604 = vtanh.pop %v599
        %v605 = vtanh.pop %v600
        %v606 = vtanh.pop %v601
        %v607 = vtanh.pop %v602
        %v608 = vadd.f32 %v603, 1.0
        %v609 = vadd.f32 %v604, 1.0
        %v610 = vadd.f32 %v605, 1.0
        %v611 = vadd.f32 %v606, 1.0
        %v612 = vadd.f32 %v607, 1.0
        %v613 = vmul.f32 %v573, %v608
        %v614 = vmul.f32 %v574, %v609
        %v615 = vmul.f32 %v575, %v610
        %v616 = vmul.f32 %v576, %v611
        %v617 = vmul.f32 %v577, %v612
        %v618 = vpack.c.bf16 %v614, %v613
        %v619 = vpack.c.bf16 %v616, %v615
        %v620 = vpack.c.bf16 %v617, %v617
        %v624 = vunpack.c.l.b16 %v618
        %v625 = vunpack.c.h.b16 %v618
        %v626 = vunpack.c.l.b16 %v619
        %v627 = vunpack.c.h.b16 %v619
        %v628 = vunpack.c.l.b16 %v620
        %v629 = vpack.c.b16 %v624, %v624
        %v630 = vpack.c.b16 %v625, %v625
        %v631 = vpack.c.b16 %v626, %v626
        %v632 = vpack.c.b16 %v627, %v627
        %v633 = vpack.c.b16 %v628, %v628
        %vm639 = vcmask 257024
        %640 = vst.msk [vmem:[%s294] sm:$0xf] %vm639, %v629
        %641 = vst.msk [vmem:[%s294 + $0x4] sm:$0xf] %vm639, %v630
        %642 = vst.msk [vmem:[%s294 + $0x8] sm:$0xf] %vm639, %v631
        %643 = vst.msk [vmem:[%s294 + $0xc] sm:$0xf] %vm639, %v632
        %vm644 = vcmask 254976
        %vm645 = vsmask.f32 1280
        %vm646 = vmand %vm644, %vm645
        %v647 = vld [vmem:[%s294 + $0x10] sm:$0x3]
        %v648 = vsel %vm646, %v633, %v647
        %649 = vst [vmem:[%s294 + $0x10] sm:$0x3] %v648
        %s650 = sand.u32 %s142, 1
        %s651 = scalar_lea.sflag [#allocation4], %s650
        %s652 = sand.u32 %s142, 1
        %s653 = smul.addr %s652, 20
        %s654 = scalar_lea.vmem [#allocation11], %s653
        // Predicated region
        $region61: #{wav2vec2_forward.7} parent=39 // pred_check
          %p655 = pneg %p152
        $region62: #{wav2vec2_forward.7} parent=39 // pred_check_branch
          %657 = sbr.rel (%p655) target = $region64
        $region63: #{wav2vec2_forward.7} parent=39 // pred_region
          %s659 = ssub.s32 320, 320
          %660 = vsyncadd %s651, %s659
          %s661 = smul.addr %s24, 5
          %s662 = smul.addr %s661, 64
          %s663 = scalar_lea.hbm %s5, %s662
          %s664 = sshll.u32 %s654, 4
          %s665 = int_to_ptr.vmem [resolvable:$true] %s664
          %670 = dma.vmem_to_hbm [thread:$0]  %s665, 320, %s663, %s651, 64, 64, 4
        $region64: #{wav2vec2_forward.7} parent=39 // pred_fallthru
          _
      $region40: #{wav2vec2_forward.7} parent=5 // pred_fallthru
        _
      %p671 = scmp.le.s32.totalorder 2, %s19
      // Predicated region
      $region65: #{wav2vec2_forward.7} parent=5 // pred_check
        %p672 = pneg %p671
      $region66: #{wav2vec2_forward.7} parent=5 // pred_check_branch
        %674 = sbr.rel (%p672) target = $region68
      $region67: #{wav2vec2_forward.7} parent=5 // pred_region
        %s675 = ssub.s32 %s19, 2
        // Predicated region
        $region69: #{wav2vec2_forward.7} parent=67 // pred_check
          %p676 = pneg %p158
        $region70: #{wav2vec2_forward.7} parent=67 // pred_check_branch
          %678 = sbr.rel (%p676) target = $region72
        $region71: #{wav2vec2_forward.7} parent=67 // pred_region
          %s679 = sand.u32 %s143, 1
          %s680 = scalar_lea.sflag [#allocation4], %s679
          %s681 = sand.u32 %s143, 1
          %s682 = smul.addr %s681, 20
          %s683 = scalar_lea.vmem [#allocation11], %s682
          %684 = dma.done %s680, 320
        $region72: #{wav2vec2_forward.7} parent=67 // pred_fallthru
          _
      $region68: #{wav2vec2_forward.7} parent=5 // pred_fallthru
        _
    $region6: #{wav2vec2_forward.7} parent=1 // loop_footer
      %s23 = sadd.s32 1, %s19
    $region7: #{wav2vec2_forward.7} parent=1 // loop_footer_branch
      %18 = sbr.rel target = $region3
    $region8: #{wav2vec2_forward.7} parent=1 // loop_exit
      _
    %685 = vsyncpa [#allocation3], 1
    %s686 = scalar_lea.sflag [#allocation3], 1
    %687 = vsyncpa %s686, 1
    %688 = vsyncpa [#allocation6], 1
    %689 = vsyncpa [#allocation9], 1
    %690 = vsyncpa [#allocation4], 1
    %s691 = scalar_lea.sflag [#allocation4], 1
    %692 = vsyncpa %s691, 1

// kernel: wav2vec2_forward.8
$region0: #{wav2vec2_forward.8}
  #allocation0 [shape = 'u32[]', space=smem, size = 0x4, offset = 0x4, fixed_abs, tag = 'smem constant byte address 0x4 - core index']
  #allocation1 [shape = 'u32[144,128]{1,0:T(1,128)}', space=vmem, size = 0x12000, scoped, tag = 'internal scratch']
  %s0 = inlined_call_operand.hbm [shape: bf16[2,18,64], index: 0, kind: input, shape index: {}]
  %s1 = inlined_call_operand.hbm [shape: bf16[2,64,32], index: 1, kind: input, shape index: {}]
  %s2 = inlined_call_operand.hbm [shape: f32[1,32], index: 2, kind: input, shape index: {}]
  %s3 = inlined_call_operand.hbm [shape: f32[1,32], index: 3, kind: input, shape index: {}]
  %s4 = inlined_call_operand.hbm [shape: f32[1,32], index: 4, kind: input, shape index: {}]
  %s5 = inlined_call_operand.hbm [shape: bf16[2,17,32], index: 5, kind: output, shape index: {}]
  %s6 = sld [smem:[#allocation0]]
  $region73: #{wav2vec2_forward.8} parent=0
    _
  %s8 = ssub.s32 1, %s6
  %s9 = scalar_select 0, %s8, %s6
  $region1: #{wav2vec2_forward.8} parent=0
    #allocation2 [shape = 'u8[12288]{0}', space=vmem, size = 0x3000, scoped, tag = 'input window, operand 0']
    #allocation3 [shape = 's32[2]{0}', space=sflag, size = 0x8, scoped, tag = 'scoped memory for wav2vec2_forward.8']
    #allocation4 [shape = 's32[2]{0}', space=sflag, size = 0x8, scoped, tag = 'scoped memory for wav2vec2_forward.8']
    #allocation5 [shape = 'u8[32768]{0}', space=vmem, size = 0x8000, scoped, tag = 'input window, operand 1, single buffered']
    #allocation6 [shape = 's32[1]{0}', space=sflag, size = 0x4, scoped, tag = 'scoped memory for wav2vec2_forward.8']
    #allocation7 [shape = 'u8[512]{0}', space=vmem, size = 0x400, scoped, tag = 'input window, operand 2, single buffered']
    #allocation8 [shape = 'u8[512]{0}', space=vmem, size = 0x400, scoped, tag = 'input window, operand 3, single buffered']
    #allocation9 [shape = 's32[1]{0}', space=sflag, size = 0x4, scoped, tag = 'scoped memory for wav2vec2_forward.8']
    #allocation10 [shape = 'u8[512]{0}', space=vmem, size = 0x400, scoped, tag = 'input window, operand 4, single buffered']
    #allocation11 [shape = 'u8[12288]{0}', space=vmem, size = 0x3000, scoped, tag = 'output window, operand 0']
    %10 = vsyncpa [#allocation3], 0
    %s11 = scalar_lea.sflag [#allocation3], 1
    %12 = vsyncpa %s11, 0
    %13 = vsyncpa [#allocation6], 0
    %14 = vsyncpa [#allocation9], 0
    %15 = vsyncpa [#allocation4], 0
    %s16 = scalar_lea.sflag [#allocation4], 1
    %17 = vsyncpa %s16, 0
    loop: start=0, step=1, limit=4
    $region2: #{wav2vec2_forward.8} parent=1 // loop_pre_header
      _
    $region3: #{wav2vec2_forward.8} parent=1 // loop_header
      %s19 = sphi 0, %s23
      %p20 = scmp.ge.s32.totalorder %s19, 4
      %s29 = sphi 0, %s31
      %s32 = sphi 0, %s29
      %s33 = sphi 0, %s32
      %s49 = sphi 0, %s33
      %s53 = sphi 0, %s53
      %s55 = sphi 0, %s53
      %s56 = sphi 0, %s55
      %s70 = sphi 0, %s56
      %s74 = sphi 0, %s74
      %s76 = sphi 0, %s74
      %s77 = sphi 0, %s76
      %s91 = sphi 0, %s77
      %s95 = sphi 0, %s95
      %s97 = sphi 0, %s95
      %s98 = sphi 0, %s97
      %s112 = sphi 0, %s98
      %s116 = sphi 0, %s116
      %s118 = sphi 0, %s116
      %s119 = sphi 0, %s118
      %s133 = sphi 0, %s119
      %s139 = sphi 0, %s141
      %s142 = sphi 0, %s139
      %s143 = sphi 0, %s142
      %s159 = sphi 0, %s143
    $region4: #{wav2vec2_forward.8} parent=1 // loop_header_branch
      %22 = sbr.rel (%p20) target = $region8
    $region5: #{wav2vec2_forward.8} parent=1 // loop_body
      %s24 = ssub.s32 %s19, 1
      %s25 = ssub.s32 %s19, 2
      %s26 = sadd.s32 %s19, 1
      %s27 = ssub.s32 %s19, %s26
      %p28 = scmp.eq.s32.totalorder %s27, 0
      %s30 = sadd.s32 %s29, 1
      %s31 = scalar_select %p28, %s29, %s30
      %p34 = pneg %p28
      %p35 = scmp.eq.s32.totalorder %s19, 1
      %p36 = por %p34, %p35
      %p37 = scmp.ne.s32.totalorder %s29, %s32
      %p38 = scmp.eq.s32.totalorder %s19, 0
      %p39 = por %p37, %p38
      %p40 = scmp.ne.s32.totalorder %s29, %s32
      %p41 = scmp.eq.s32.totalorder %s24, 1
      %p42 = por %p40, %p41
      %p43 = scmp.ne.s32.totalorder %s32, %s33
      %p44 = scmp.eq.s32.totalorder %s24, 0
      %p45 = por %p43, %p44
      %p46 = scmp.ne.s32.totalorder %s32, %s33
      %p47 = scmp.eq.s32.totalorder %s25, 1
      %p48 = por %p46, %p47
      %p50 = scmp.ne.s32.totalorder %s33, %s49
      %p51 = scmp.eq.s32.totalorder %s25, 0
      %p52 = por %p50, %p51
      %s54 = sadd.s32 %s53, 1
      %p57 = scmp.eq.s32.totalorder %s19, 1
      %p58 = scmp.ne.s32.totalorder %s53, %s55
      %p59 = scmp.eq.s32.totalorder %s19, 0
      %p60 = por %p58, %p59
      %p61 = scmp.ne.s32.totalorder %s53, %s55
      %p62 = scmp.eq.s32.totalorder %s24, 1
      %p63 = por %p61, %p62
      %p64 = scmp.ne.s32.totalorder %s55, %s56
      %p65 = scmp.eq.s32.totalorder %s24, 0
      %p66 = por %p64, %p65
      %p67 = scmp.ne.s32.totalorder %s55, %s56
      %p68 = scmp.eq.s32.totalorder %s25, 1
      %p69 = por %p67, %p68
      %p71 = scmp.ne.s32.totalorder %s56, %s70
      %p72 = scmp.eq.s32.totalorder %s25, 0
      %p73 = por %p71, %p72
      %s75 = sadd.s32 %s74, 1
      %p78 = scmp.eq.s32.totalorder %s19, 1
      %p79 = scmp.ne.s32.totalorder %s74, %s76
      %p80 = scmp.eq.s32.totalorder %s19, 0
      %p81 = por %p79, %p80
      %p82 = scmp.ne.s32.totalorder %s74, %s76
      %p83 = scmp.eq.s32.totalorder %s24, 1
      %p84 = por %p82, %p83
      %p85 = scmp.ne.s32.totalorder %s76, %s77
      %p86 = scmp.eq.s32.totalorder %s24, 0
      %p87 = por %p85, %p86
      %p88 = scmp.ne.s32.totalorder %s76, %s77
      %p89 = scmp.eq.s32.totalorder %s25, 1
      %p90 = por %p88, %p89
      %p92 = scmp.ne.s32.totalorder %s77, %s91
      %p93 = scmp.eq.s32.totalorder %s25, 0
      %p94 = por %p92, %p93
      %s96 = sadd.s32 %s95, 1
      %p99 = scmp.eq.s32.totalorder %s19, 1
      %p100 = scmp.ne.s32.totalorder %s95, %s97
      %p101 = scmp.eq.s32.totalorder %s19, 0
      %p102 = por %p100, %p101
      %p103 = scmp.ne.s32.totalorder %s95, %s97
      %p104 = scmp.eq.s32.totalorder %s24, 1
      %p105 = por %p103, %p104
      %p106 = scmp.ne.s32.totalorder %s97, %s98
      %p107 = scmp.eq.s32.totalorder %s24, 0
      %p108 = por %p106, %p107
      %p109 = scmp.ne.s32.totalorder %s97, %s98
      %p110 = scmp.eq.s32.totalorder %s25, 1
      %p111 = por %p109, %p110
      %p113 = scmp.ne.s32.totalorder %s98, %s112
      %p114 = scmp.eq.s32.totalorder %s25, 0
      %p115 = por %p113, %p114
      %s117 = sadd.s32 %s116, 1
      %p120 = scmp.eq.s32.totalorder %s19, 1
      %p121 = scmp.ne.s32.totalorder %s116, %s118
      %p122 = scmp.eq.s32.totalorder %s19, 0
      %p123 = por %p121, %p122
      %p124 = scmp.ne.s32.totalorder %s116, %s118
      %p125 = scmp.eq.s32.totalorder %s24, 1
      %p126 = por %p124, %p125
      %p127 = scmp.ne.s32.totalorder %s118, %s119
      %p128 = scmp.eq.s32.totalorder %s24, 0
      %p129 = por %p127, %p128
      %p130 = scmp.ne.s32.totalorder %s118, %s119
      %p131 = scmp.eq.s32.totalorder %s25, 1
      %p132 = por %p130, %p131
      %p134 = scmp.ne.s32.totalorder %s119, %s133
      %p135 = scmp.eq.s32.totalorder %s25, 0
      %p136 = por %p134, %p135
      %s137 = ssub.s32 %s19, %s26
      %p138 = scmp.eq.s32.totalorder %s137, 0
      %s140 = sadd.s32 %s139, 1
      %s141 = scalar_select %p138, %s139, %s140
      %p144 = pneg %p138
      %p145 = scmp.eq.s32.totalorder %s19, 1
      %p146 = por %p144, %p145
      %p147 = scmp.ne.s32.totalorder %s139, %s142
      %p148 = scmp.eq.s32.totalorder %s19, 0
      %p149 = por %p147, %p148
      %p150 = scmp.ne.s32.totalorder %s139, %s142
      %p151 = scmp.eq.s32.totalorder %s24, 1
      %p152 = por %p150, %p151
      %p153 = scmp.ne.s32.totalorder %s142, %s143
      %p154 = scmp.eq.s32.totalorder %s24, 0
      %p155 = por %p153, %p154
      %p156 = scmp.ne.s32.totalorder %s142, %s143
      %p157 = scmp.eq.s32.totalorder %s25, 1
      %p158 = por %p156, %p157
      %p160 = scmp.ne.s32.totalorder %s143, %s159
      %p161 = scmp.eq.s32.totalorder %s25, 0
      %p162 = por %p160, %p161
      %p163 = scmp.le.s32.totalorder 1, %s19
      %p164 = scmp.lt.s32.totalorder %s19, 3
      %p165 = pnand %p163, %p164
      %p166 = pneg %p165
      // Predicated region
      $region9: #{wav2vec2_forward.8} parent=5 // pred_check
        _
      $region10: #{wav2vec2_forward.8} parent=5 // pred_check_branch
        %168 = sbr.rel (%p165) target = $region12
      $region11: #{wav2vec2_forward.8} parent=5 // pred_region
        %s169 = ssub.s32 %s19, 1
        // Predicated region
        $region13: #{wav2vec2_forward.8} parent=11 // pred_check
          %p170 = pneg %p66
        $region14: #{wav2vec2_forward.8} parent=11 // pred_check_branch
          %172 = sbr.rel (%p170) target = $region16
        $region15: #{wav2vec2_forward.8} parent=11 // pred_region
          %s174 = ssub.s32 1024, 1024
          %175 = vsyncadd [#allocation6], %s174
          %s176 = sshll.u32 [#allocation5], 4
          %s177 = int_to_ptr.vmem [resolvable:$true] %s176
          %182 = dma.hbm_to_vmem [thread:$0]  %s1, 1024, %s177, [#allocation6], 64, 64, 4
        $region16: #{wav2vec2_forward.8} parent=11 // pred_fallthru
          _
        // Predicated region
        $region17: #{wav2vec2_forward.8} parent=11 // pred_check
          %p183 = pneg %p87
        $region18: #{wav2vec2_forward.8} parent=11 // pred_check_branch
          %185 = sbr.rel (%p183) target = $region20
        $region19: #{wav2vec2_forward.8} parent=11 // pred_region
          %s187 = ssub.s32 16, 16
          %188 = vsyncadd [#allocation6], %s187
          %s190 = sshll.u32 [#allocation7], 4
          %s191 = int_to_ptr.vmem [resolvable:$true] %s190
          %193 = dma.hbm_to_vmem [thread:$0]  %s2, 16, %s191, [#allocation6]
        $region20: #{wav2vec2_forward.8} parent=11 // pred_fallthru
          _
        // Predicated region
        $region21: #{wav2vec2_forward.8} parent=11 // pred_check
          %p194 = pneg %p108
        $region22: #{wav2vec2_forward.8} parent=11 // pred_check_branch
          %196 = sbr.rel (%p194) target = $region24
        $region23: #{wav2vec2_forward.8} parent=11 // pred_region
          %s198 = ssub.s32 16, 16
          %199 = vsyncadd [#allocation9], %s198
          %s201 = sshll.u32 [#allocation8], 4
          %s202 = int_to_ptr.vmem [resolvable:$true] %s201
          %204 = dma.hbm_to_vmem [thread:$0]  %s3, 16, %s202, [#allocation9]
        $region24: #{wav2vec2_forward.8} parent=11 // pred_fallthru
          _
        // Predicated region
        $region25: #{wav2vec2_forward.8} parent=11 // pred_check
          %p205 = pneg %p129
        $region26: #{wav2vec2_forward.8} parent=11 // pred_check_branch
          %207 = sbr.rel (%p205) target = $region28
        $region27: #{wav2vec2_forward.8} parent=11 // pred_region
          %s209 = ssub.s32 16, 16
          %210 = vsyncadd [#allocation9], %s209
          %s212 = sshll.u32 [#allocation10], 4
          %s213 = int_to_ptr.vmem [resolvable:$true] %s212
          %215 = dma.hbm_to_vmem [thread:$0]  %s4, 16, %s213, [#allocation9]
        $region28: #{wav2vec2_forward.8} parent=11 // pred_fallthru
          _
      $region12: #{wav2vec2_forward.8} parent=5 // pred_fallthru
        _
      %p216 = scmp.lt.s32.totalorder %s19, 2
      // Predicated region
      $region29: #{wav2vec2_forward.8} parent=5 // pred_check
        %p217 = pneg %p216
      $region30: #{wav2vec2_forward.8} parent=5 // pred_check_branch
        %219 = sbr.rel (%p217) target = $region32
      $region31: #{wav2vec2_forward.8} parent=5 // pred_region
        // Predicated region
        $region33: #{wav2vec2_forward.8} parent=31 // pred_check
          %p220 = pneg %p39
        $region34: #{wav2vec2_forward.8} parent=31 // pred_check_branch
          %222 = sbr.rel (%p220) target = $region36
        $region35: #{wav2vec2_forward.8} parent=31 // pred_region
          %s223 = sand.u32 %s29, 1
          %s224 = scalar_lea.sflag [#allocation3], %s223
          %s225 = sand.u32 %s29, 1
          %s226 = smul.addr %s225, 12
          %s227 = scalar_lea.vmem [#allocation2], %s226
          %s229 = ssub.s32 192, 192
          %230 = vsyncadd %s224, %s229
          %s231 = smul.addr %s19, 3
          %s232 = smul.addr %s231, 64
          %s233 = scalar_lea.hbm %s0, %s232
          %s234 = sshll.u32 %s227, 4
          %s235 = int_to_ptr.vmem [resolvable:$true] %s234
          %240 = dma.hbm_to_vmem [thread:$0]  %s233, 192, %s235, %s224, 64, 64, 4
        $region36: #{wav2vec2_forward.8} parent=31 // pred_fallthru
          _
      $region32: #{wav2vec2_forward.8} parent=5 // pred_fallthru
        _
      %p241 = scmp.le.s32.totalorder 1, %s19
      %p242 = scmp.lt.s32.totalorder %s19, 3
      %p243 = pnand %p241, %p242
      %p244 = pneg %p243
      // Predicated region
      $region37: #{wav2vec2_forward.8} parent=5 // pred_check
        _
      $region38: #{wav2vec2_forward.8} parent=5 // pred_check_branch
        %246 = sbr.rel (%p243) target = $region40
      $region39: #{wav2vec2_forward.8} parent=5 // pred_region
        %s247 = ssub.s32 %s19, 1
        %s248 = sand.u32 %s32, 1
        %s249 = scalar_lea.sflag [#allocation3], %s248
        %s250 = sand.u32 %s32, 1
        %s251 = smul.addr %s250, 12
        %s252 = scalar_lea.vmem [#allocation2], %s251
        // Predicated region
        $region41: #{wav2vec2_forward.8} parent=39 // pred_check
          %p253 = pneg %p45
        $region42: #{wav2vec2_forward.8} parent=39 // pred_check_branch
          %255 = sbr.rel (%p253) target = $region44
        $region43: #{wav2vec2_forward.8} parent=39 // pred_region
          %256 = dma.done %s249, 192
        $region44: #{wav2vec2_forward.8} parent=39 // pred_fallthru
          _
        // Predicated region
        $region45: #{wav2vec2_forward.8} parent=39 // pred_check
          %p257 = pneg %p66
        $region46: #{wav2vec2_forward.8} parent=39 // pred_check_branch
          %259 = sbr.rel (%p257) target = $region48
        $region47: #{wav2vec2_forward.8} parent=39 // pred_region
          %260 = dma.done [#allocation6], 1024
        $region48: #{wav2vec2_forward.8} parent=39 // pred_fallthru
          _
        // Predicated region
        $region49: #{wav2vec2_forward.8} parent=39 // pred_check
          %p261 = pneg %p87
        $region50: #{wav2vec2_forward.8} parent=39 // pred_check_branch
          %263 = sbr.rel (%p261) target = $region52
        $region51: #{wav2vec2_forward.8} parent=39 // pred_region
          %264 = dma.done [#allocation6], 16
        $region52: #{wav2vec2_forward.8} parent=39 // pred_fallthru
          _
        // Predicated region
        $region53: #{wav2vec2_forward.8} parent=39 // pred_check
          %p265 = pneg %p108
        $region54: #{wav2vec2_forward.8} parent=39 // pred_check_branch
          %267 = sbr.rel (%p265) target = $region56
        $region55: #{wav2vec2_forward.8} parent=39 // pred_region
          %268 = dma.done [#allocation9], 16
        $region56: #{wav2vec2_forward.8} parent=39 // pred_fallthru
          _
        // Predicated region
        $region57: #{wav2vec2_forward.8} parent=39 // pred_check
          %p269 = pneg %p129
        $region58: #{wav2vec2_forward.8} parent=39 // pred_check_branch
          %271 = sbr.rel (%p269) target = $region60
        $region59: #{wav2vec2_forward.8} parent=39 // pred_region
          %272 = dma.done [#allocation9], 16
        $region60: #{wav2vec2_forward.8} parent=39 // pred_fallthru
          _
        %s273 = sand.u32 %s32, 1
        %s274 = scalar_lea.sflag [#allocation3], %s273
        %s275 = sand.u32 %s32, 1
        %s276 = smul.addr %s275, 12
        %s277 = scalar_lea.vmem [#allocation2], %s276
        %p278 = pneg %p45
        %p279 = pneg %p42
        %p280 = pneg %p66
        %p281 = pneg %p63
        %p282 = pneg %p87
        %p283 = pneg %p84
        %p284 = pneg %p108
        %p285 = pneg %p105
        %p286 = pneg %p129
        %p287 = pneg %p126
        %p288 = pneg %p155
        %p289 = pneg %p152
        %s290 = sand.u32 %s142, 1
        %s291 = scalar_lea.sflag [#allocation4], %s290
        %s292 = sand.u32 %s142, 1
        %s293 = smul.addr %s292, 12
        %s294 = scalar_lea.vmem [#allocation11], %s293
        %v296 = vld [vmem:[%s252] sm:$0xf]
        %v297 = vld [vmem:[%s252 + $0x4] sm:$0xf]
        %v298 = vld [vmem:[%s252 + $0x8] sm:$0x1]
        %v299 = vld [vmem:[#allocation5] sm:$0xf]
        %v300 = vld [vmem:[#allocation5 + $0x4] sm:$0xf]
        %v301 = vld [vmem:[#allocation5 + $0x8] sm:$0xf]
        %v302 = vld [vmem:[#allocation5 + $0xc] sm:$0xf]
        %v303 = vld [vmem:[#allocation5 + $0x10] sm:$0xf]
        %v304 = vld [vmem:[#allocation5 + $0x14] sm:$0xf]
        %v305 = vld [vmem:[#allocation5 + $0x18] sm:$0xf]
        %v306 = vld [vmem:[#allocation5 + $0x1c] sm:$0xf]
        %s307 = scalar_lea.vmem [#allocation5], 32
        %v308 = vld [vmem:[%s307] sm:$0xf]
        %v309 = vld [vmem:[%s307 + $0x4] sm:$0xf]
        %v310 = vld [vmem:[%s307 + $0x8] sm:$0xf]
        %v311 = vld [vmem:[%s307 + $0xc] sm:$0xf]
        %v312 = vld [vmem:[%s307 + $0x10] sm:$0xf]
        %v313 = vld [vmem:[%s307 + $0x14] sm:$0xf]
        %v314 = vld [vmem:[%s307 + $0x18] sm:$0xf]
        %v315 = vld [vmem:[%s307 + $0x1c] sm:$0xf]
        %v319 = vunpack.c.l.b16 %v296
        %v320 = vunpack.c.l.b16 %v297
        %v321 = vunpack.c.l.b16 %v298
        %v322 = vpack.c.b16 %v320, %v319
        %v323 = vpack.c.b16 %v321, %v321
        %vm324 = vsmask.f32 7424
        %v326 = vshrl.u32 %v322, 16
        %v328 = vshll.u32 %v322, 16
        %v330 = vrot.slane %v328, 1
        %v331 = vor.u32 %v326, %v330
        %v333 = vshll.u32 %v323, 16
        %v335 = vrot.slane %v333, 1
        %v336 = vsel %vm324, %v331, %v335
        %v337 = vshrl.u32 %v323, 16
        %v347 = vunpack.c.l.b16 %v308
        %v348 = vunpack.c.l.b16 %v309
        %v349 = vunpack.c.l.b16 %v310
        %v350 = vunpack.c.l.b16 %v311
        %v351 = vunpack.c.l.b16 %v312
        %v352 = vunpack.c.l.b16 %v313
        %v353 = vunpack.c.l.b16 %v314
        %v354 = vunpack.c.l.b16 %v315
        %v355 = vpack.c.b16 %v348, %v347
        %v356 = vpack.c.b16 %v350, %v349
        %v357 = vpack.c.b16 %v352, %v351
        %v358 = vpack.c.b16 %v354, %v353
        %vm363 = vcmask 523264
        %v365 = vsel %vm363, %v336, 0
        %v368 = vsel %vm363, %v337, 0
        %370 = vmatprep.subr.bf16.mxu0 0
        %371 = vmatpush1.bf16.msra.mxu0 %v355
        %372 = vmatprep.subr.bf16.mxu0 0
        %373 = vmatpush1.bf16.msra.mxu0 %v356
        %374 = vmatprep.subr.bf16.mxu0 0
        %375 = vmatpush1.bf16.msra.mxu0 %v357
        %376 = vmatprep.subr.bf16.mxu0 0
        %377 = vmatpush1.bf16.msra.mxu0 %v358
        %378 = vmatprep.subr.bf16.mxu0 0
        %379 = vmatpush1.bf16.msra.mxu0 0
        %380 = vmatprep.subr.bf16.mxu0 0
        %381 = vmatpush1.bf16.msra.mxu0 0
        %382 = vmatprep.subr.bf16.mxu0 0
        %383 = vmatpush1.bf16.msra.mxu0 0
        %384 = vmatprep.subr.bf16.mxu0 0
        %385 = vmatpush1.bf16.msra.mxu0 0
        %386 = vmatprep.subr.bf16.mxu0 0
        %387 = vmatpush1.bf16.msra.mxu0 0
        %388 = vmatprep.subr.bf16.mxu0 0
        %389 = vmatpush1.bf16.msra.mxu0 0
        %390 = vmatprep.subr.bf16.mxu0 0
        %391 = vmatpush1.bf16.msra.mxu0 0
        %392 = vmatprep.subr.bf16.mxu0 0
        %393 = vmatpush1.bf16.msra.mxu0 0
        %394 = vmatprep.subr.bf16.mxu0 0
        %395 = vmatpush1.bf16.msra.mxu0 0
        %396 = vmatprep.subr.bf16.mxu0 0
        %397 = vmatpush1.bf16.msra.mxu0 0
        %398 = vmatprep.subr.bf16.mxu0 0
        %399 = vmatpush1.bf16.msra.mxu0 0
        %400 = vmatprep.subr.bf16.mxu0 0
        %401 = vmatpush1.bf16.msra.mxu0 0
        %402 = vmatprep.mubr.bf16.mxu0 0
        %403 = vmatmul.mubr.bf16.gmra.mrb[0].mxu0 %v365
        %v404 = vpop.f32.mrb[0].mxu0
        %v405 = vadd.f32 0.0, %v404
        %v406 = vpop.f32.mrb[0].mxu0
        %v407 = vpop.f32.mrb[0].mxu0
        %v408 = vadd.f32 0.0, %v407
        %v409 = vpop.f32.mrb[0].mxu0
        %410 = vmatprep.mubr.bf16.mxu0 0
        %411 = vmatmul.mubr.bf16.gmra.mrb[0].mxu0 %v368
        %v412 = vpop.f32.mrb[0].mxu0
        %v413 = vadd.f32 0.0, %v412
        %v414 = vpop.f32.mrb[0].mxu0
        %v415 = vpop.f32.mrb[0].mxu0
        %v416 = vpop.f32.mrb[0].mxu0
        %417 = vdwg.mxu0
        %v426 = vunpack.c.l.b16 %v299
        %v427 = vunpack.c.l.b16 %v300
        %v428 = vunpack.c.l.b16 %v301
        %v429 = vunpack.c.l.b16 %v302
        %v430 = vunpack.c.l.b16 %v303
        %v431 = vunpack.c.l.b16 %v304
        %v432 = vunpack.c.l.b16 %v305
        %v433 = vunpack.c.l.b16 %v306
        %v434 = vpack.c.b16 %v427, %v426
        %v435 = vpack.c.b16 %v429, %v428
        %v436 = vpack.c.b16 %v431, %v430
        %v437 = vpack.c.b16 %v433, %v432
        %v442 = vsel %vm363, %v322, 0
        %v444 = vsel %vm363, %v323, 0
        %446 = vmatprep.subr.bf16.mxu0 0
        %447 = vmatpush1.bf16.msra.mxu0 %v434
        %448 = vmatprep.subr.bf16.mxu0 0
        %449 = vmatpush1.bf16.msra.mxu0 %v435
        %450 = vmatprep.subr.bf16.mxu0 0
        %451 = vmatpush1.bf16.msra.mxu0 %v436
        %452 = vmatprep.subr.bf16.mxu0 0
        %453 = vmatpush1.bf16.msra.mxu0 %v437
        %454 = vmatprep.subr.bf16.mxu0 0
        %455 = vmatpush1.bf16.msra.mxu0 0
        %456 = vmatprep.subr.bf16.mxu0 0
        %457 = vmatpush1.bf16.msra.mxu0 0
        %458 = vmatprep.subr.bf16.mxu0 0
        %459 = vmatpush1.bf16.msra.mxu0 0
        %460 = vmatprep.subr.bf16.mxu0 0
        %461 = vmatpush1.bf16.msra.mxu0 0
        %462 = vmatprep.subr.bf16.mxu0 0
        %463 = vmatpush1.bf16.msra.mxu0 0
        %464 = vmatprep.subr.bf16.mxu0 0
        %465 = vmatpush1.bf16.msra.mxu0 0
        %466 = vmatprep.subr.bf16.mxu0 0
        %467 = vmatpush1.bf16.msra.mxu0 0
        %468 = vmatprep.subr.bf16.mxu0 0
        %469 = vmatpush1.bf16.msra.mxu0 0
        %470 = vmatprep.subr.bf16.mxu0 0
        %471 = vmatpush1.bf16.msra.mxu0 0
        %472 = vmatprep.subr.bf16.mxu0 0
        %473 = vmatpush1.bf16.msra.mxu0 0
        %474 = vmatprep.subr.bf16.mxu0 0
        %475 = vmatpush1.bf16.msra.mxu0 0
        %476 = vmatprep.subr.bf16.mxu0 0
        %477 = vmatpush1.bf16.msra.mxu0 0
        %478 = vmatprep.mubr.bf16.mxu0 0
        %479 = vmatmul.mubr.bf16.gmra.mrb[0].mxu0 %v442
        %v480 = vpop.f32.mrb[0].mxu0
        %v481 = vadd.f32 %v405, %v480
        %v482 = vpop.f32.mrb[0].mxu0
        %v483 = vpop.f32.mrb[0].mxu0
        %v484 = vadd.f32 %v408, %v483
        %v485 = vpop.f32.mrb[0].mxu0
        %486 = vmatprep.mubr.bf16.mxu0 0
        %487 = vmatmul.mubr.bf16.gmra.mrb[0].mxu0 %v444
        %v488 = vpop.f32.mrb[0].mxu0
        %v489 = vadd.f32 %v413, %v488
        %v490 = vpop.f32.mrb[0].mxu0
        %v491 = vpop.f32.mrb[0].mxu0
        %v492 = vpop.f32.mrb[0].mxu0
        %493 = vdwg.mxu0
        %v494 = vld [vmem:[#allocation7] sm:$0x1]
        %v496 = vlaneseq
        %v497 = vshrl.u32 %v496, 7
        %v498 = vsub.s32 0, %v497
        %v499 = vrot.slane %v494, %v498
        %v501 = vadd.f32 %v481, %v499
        %v502 = vadd.f32 %v484, %v499
        %v503 = vadd.f32 %v489, %v499
        %v504 = vld [vmem:[#allocation8] sm:$0x1]
        %v505 = vld [vmem:[#allocation10] sm:$0x1]
        %vm506 = vcmask 261120
        %v507 = vsel %vm506, %v501, 0.0
        %508 = vadd.xlane.f32.xlu0 %v507
        %v509 = vpop.xlane.xlu0 %508
        %v510 = vsel %vm506, %v502, 0.0
        %511 = vadd.xlane.f32.xlu0 %v510
        %v512 = vpop.xlane.xlu0 %511
        %vm513 = vcmask 253952
        %v514 = vsel %vm513, %v503, 0.0
        %515 = vadd.xlane.f32.xlu0 %v514
        %v516 = vpop.xlane.xlu0 %515
        %v517 = vrcp.pop 32.0
        %v518 = vmul.f32 %v509, %v517
        %v519 = vmul.f32 %v512, %v517
        %v520 = vmul.f32 %v516, %v517
        %v521 = vsub.f32 %v501, %v518
        %v522 = vsub.f32 %v502, %v519
        %v523 = vsub.f32 %v503, %v520
        %v524 = vmul.f32 %v521, %v521
        %v525 = vmul.f32 %v522, %v522
        %v526 = vmul.f32 %v523, %v523
        %v527 = vsel %vm506, %v524, 0.0
        %528 = vadd.xlane.f32.xlu0 %v527
        %v529 = vpop.xlane.xlu0 %528
        %v530 = vsel %vm506, %v525, 0.0
        %531 = vadd.xlane.f32.xlu0 %v530
        %v532 = vpop.xlane.xlu0 %531
        %v533 = vsel %vm513, %v526, 0.0
        %534 = vadd.xlane.f32.xlu0 %v533
        %v535 = vpop.xlane.xlu0 %534
        %v536 = vmul.f32 %v529, %v517
        %v537 = vmul.f32 %v532, %v517
        %v538 = vmul.f32 %v535, %v517
        %v539 = vadd.f32 %v536, 1e-05
        %v540 = vadd.f32 %v537, 1e-05
        %v541 = vadd.f32 %v538, 1e-05
        %v542 = vrsqrt.pop %v539
        %v543 = vrsqrt.pop %v540
        %v544 = vrsqrt.pop %v541
        %v545 = vmul.f32 %v521, %v542
        %v546 = vmul.f32 %v522, %v543
        %v547 = vmul.f32 %v523, %v544
        %v549 = vlaneseq
        %v550 = vshrl.u32 %v549, 7
        %v551 = vsub.s32 0, %v550
        %v552 = vrot.slane %v504, %v551
        %v554 = vmul.f32 %v545, %v552
        %v555 = vmul.f32 %v546, %v552
        %v556 = vmul.f32 %v547, %v552
        %v558 = vlaneseq
        %v559 = vshrl.u32 %v558, 7
        %v560 = vsub.s32 0, %v559
        %v561 = vrot.slane %v505, %v560
        %v563 = vadd.f32 %v554, %v561
        %v564 = vadd.f32 %v555, %v561
        %v565 = vadd.f32 %v556, %v561
        %v566 = vmul.f32 %v563, 0.5
        %v567 = vmul.f32 %v564, 0.5
        %v568 = vmul.f32 %v565, 0.5
        %v569 = vmul.f32 %v563, 0.044715
        %v570 = vmul.f32 %v564, 0.044715
        %v571 = vmul.f32 %v565, 0.044715
        %v572 = vmul.f32 %v569, %v563
        %v573 = vmul.f32 %v570, %v564
        %v574 = vmul.f32 %v571, %v565
        %v575 = vmul.f32 %v572, %v563
        %v576 = vmul.f32 %v573, %v564
        %v577 = vmul.f32 %v574, %v565
        %v578 = vadd.f32 %v563, %v575
        %v579 = vadd.f32 %v564, %v576
        %v580 = vadd.f32 %v565, %v577
        %v581 = vmul.f32 %v578, 0.7978846
        %v582 = vmul.f32 %v579, 0.7978846
        %v583 = vmul.f32 %v580, 0.7978846
        %v584 = vtanh.pop %v581
        %v585 = vtanh.pop %v582
        %v586 = vtanh.pop %v583
        %v587 = vadd.f32 %v584, 1.0
        %v588 = vadd.f32 %v585, 1.0
        %v589 = vadd.f32 %v586, 1.0
        %v590 = vmul.f32 %v566, %v587
        %v591 = vmul.f32 %v567, %v588
        %v592 = vmul.f32 %v568, %v589
        %v593 = vpack.c.bf16 %v591, %v590
        %v594 = vpack.c.bf16 %v592, %v592
        %v597 = vunpack.c.l.b16 %v593
        %v598 = vunpack.c.h.b16 %v593
        %v599 = vunpack.c.l.b16 %v594
        %v600 = vpack.c.b16 %v597, %v597
        %v601 = vpack.c.b16 %v598, %v598
        %v602 = vpack.c.b16 %v599, %v599
        %vm606 = vcmask 257024
        %607 = vst.msk [vmem:[%s294] sm:$0xf] %vm606, %v600
        %608 = vst.msk [vmem:[%s294 + $0x4] sm:$0xf] %vm606, %v601
        %vm609 = vcmask 253952
        %vm610 = vsmask.f32 256
        %vm611 = vmand %vm609, %vm610
        %v612 = vld [vmem:[%s294 + $0x8] sm:$0x1]
        %v613 = vsel %vm611, %v602, %v612
        %614 = vst [vmem:[%s294 + $0x8] sm:$0x1] %v613
        %s615 = sand.u32 %s142, 1
        %s616 = scalar_lea.sflag [#allocation4], %s615
        %s617 = sand.u32 %s142, 1
        %s618 = smul.addr %s617, 12
        %s619 = scalar_lea.vmem [#allocation11], %s618
        // Predicated region
        $region61: #{wav2vec2_forward.8} parent=39 // pred_check
          %p620 = pneg %p152
        $region62: #{wav2vec2_forward.8} parent=39 // pred_check_branch
          %622 = sbr.rel (%p620) target = $region64
        $region63: #{wav2vec2_forward.8} parent=39 // pred_region
          %s624 = ssub.s32 192, 192
          %625 = vsyncadd %s616, %s624
          %s626 = smul.addr %s24, 3
          %s627 = smul.addr %s626, 64
          %s628 = scalar_lea.hbm %s5, %s627
          %s629 = sshll.u32 %s619, 4
          %s630 = int_to_ptr.vmem [resolvable:$true] %s629
          %635 = dma.vmem_to_hbm [thread:$0]  %s630, 192, %s628, %s616, 64, 64, 4
        $region64: #{wav2vec2_forward.8} parent=39 // pred_fallthru
          _
      $region40: #{wav2vec2_forward.8} parent=5 // pred_fallthru
        _
      %p636 = scmp.le.s32.totalorder 2, %s19
      // Predicated region
      $region65: #{wav2vec2_forward.8} parent=5 // pred_check
        %p637 = pneg %p636
      $region66: #{wav2vec2_forward.8} parent=5 // pred_check_branch
        %639 = sbr.rel (%p637) target = $region68
      $region67: #{wav2vec2_forward.8} parent=5 // pred_region
        %s640 = ssub.s32 %s19, 2
        // Predicated region
        $region69: #{wav2vec2_forward.8} parent=67 // pred_check
          %p641 = pneg %p158
        $region70: #{wav2vec2_forward.8} parent=67 // pred_check_branch
          %643 = sbr.rel (%p641) target = $region72
        $region71: #{wav2vec2_forward.8} parent=67 // pred_region
          %s644 = sand.u32 %s143, 1
          %s645 = scalar_lea.sflag [#allocation4], %s644
          %s646 = sand.u32 %s143, 1
          %s647 = smul.addr %s646, 12
          %s648 = scalar_lea.vmem [#allocation11], %s647
          %649 = dma.done %s645, 192
        $region72: #{wav2vec2_forward.8} parent=67 // pred_fallthru
          _
      $region68: #{wav2vec2_forward.8} parent=5 // pred_fallthru
        _
    $region6: #{wav2vec2_forward.8} parent=1 // loop_footer
      %s23 = sadd.s32 1, %s19
    $region7: #{wav2vec2_forward.8} parent=1 // loop_footer_branch
      %18 = sbr.rel target = $region3
    $region8: #{wav2vec2_forward.8} parent=1 // loop_exit
      _
    %650 = vsyncpa [#allocation3], 1
    %s651 = scalar_lea.sflag [#allocation3], 1
    %652 = vsyncpa %s651, 1
    %653 = vsyncpa [#allocation6], 1
    %654 = vsyncpa [#allocation9], 1
    %655 = vsyncpa [#allocation4], 1
    %s656 = scalar_lea.sflag [#allocation4], 1
    %657 = vsyncpa %s656, 1

// kernel: wav2vec2_forward.11
$region0: #{wav2vec2_forward.11}
  #allocation0 [shape = 'u32[]', space=smem, size = 0x4, offset = 0x4, fixed_abs, tag = 'smem constant byte address 0x4 - core index']
  #allocation1 [shape = 'u32[144,128]{1,0:T(1,128)}', space=vmem, size = 0x12000, scoped, tag = 'internal scratch']
  %s0 = inlined_call_operand.hbm [shape: bf16[2,12,32], index: 0, kind: input, shape index: {}]
  %s1 = inlined_call_operand.hbm [shape: bf16[8,16,16], index: 1, kind: input, shape index: {}]
  %s2 = inlined_call_operand.hbm [shape: f32[1,32], index: 2, kind: input, shape index: {}]
  %s3 = inlined_call_operand.hbm [shape: bf16[2,8,32], index: 3, kind: input, shape index: {}]
  %s4 = inlined_call_operand.hbm [shape: bf16[2,8,32], index: 4, kind: output, shape index: {}]
  %s5 = sld [smem:[#allocation0]]
  $region65: #{wav2vec2_forward.11} parent=0
    _
  %s7 = ssub.s32 1, %s5
  %s8 = scalar_select 0, %s7, %s5
  $region1: #{wav2vec2_forward.11} parent=0
    #allocation2 [shape = 'u8[8192]{0}', space=vmem, size = 0x2000, scoped, tag = 'input window, operand 0']
    #allocation3 [shape = 's32[2]{0}', space=sflag, size = 0x8, scoped, tag = 'scoped memory for wav2vec2_forward.11']
    #allocation4 [shape = 's32[2]{0}', space=sflag, size = 0x8, scoped, tag = 'scoped memory for wav2vec2_forward.11']
    #allocation5 [shape = 'u8[32768]{0}', space=vmem, size = 0x8000, scoped, tag = 'input window, operand 1, single buffered']
    #allocation6 [shape = 's32[1]{0}', space=sflag, size = 0x4, scoped, tag = 'scoped memory for wav2vec2_forward.11']
    #allocation7 [shape = 'u8[512]{0}', space=vmem, size = 0x400, scoped, tag = 'input window, operand 2, single buffered']
    #allocation8 [shape = 'u8[4096]{0}', space=vmem, size = 0x1000, scoped, tag = 'input window, operand 3']
    #allocation9 [shape = 's32[2]{0}', space=sflag, size = 0x8, scoped, tag = 'scoped memory for wav2vec2_forward.11']
    #allocation10 [shape = 'u8[4096]{0}', space=vmem, size = 0x1000, scoped, tag = 'output window, operand 0']
    %9 = vsyncpa [#allocation3], 0
    %s10 = scalar_lea.sflag [#allocation3], 1
    %11 = vsyncpa %s10, 0
    %12 = vsyncpa [#allocation6], 0
    %13 = vsyncpa [#allocation9], 0
    %s14 = scalar_lea.sflag [#allocation9], 1
    %15 = vsyncpa %s14, 0
    %16 = vsyncpa [#allocation4], 0
    %s17 = scalar_lea.sflag [#allocation4], 1
    %18 = vsyncpa %s17, 0
    loop: start=0, step=1, limit=4
    $region2: #{wav2vec2_forward.11} parent=1 // loop_pre_header
      _
    $region3: #{wav2vec2_forward.11} parent=1 // loop_header
      %s20 = sphi 0, %s24
      %p21 = scmp.ge.s32.totalorder %s20, 4
      %s30 = sphi 0, %s32
      %s33 = sphi 0, %s30
      %s34 = sphi 0, %s33
      %s50 = sphi 0, %s34
      %s54 = sphi 0, %s54
      %s56 = sphi 0, %s54
      %s57 = sphi 0, %s56
      %s71 = sphi 0, %s57
      %s75 = sphi 0, %s75
      %s77 = sphi 0, %s75
      %s78 = sphi 0, %s77
      %s92 = sphi 0, %s78
      %s98 = sphi 0, %s100
      %s101 = sphi 0, %s98
      %s102 = sphi 0, %s101
      %s118 = sphi 0, %s102
      %s124 = sphi 0, %s126
      %s127 = sphi 0, %s124
      %s128 = sphi 0, %s127
      %s144 = sphi 0, %s128
    $region4: #{wav2vec2_forward.11} parent=1 // loop_header_branch
      %23 = sbr.rel (%p21) target = $region8
    $region5: #{wav2vec2_forward.11} parent=1 // loop_body
      %s25 = ssub.s32 %s20, 1
      %s26 = ssub.s32 %s20, 2
      %s27 = sadd.s32 %s20, 1
      %s28 = ssub.s32 %s20, %s27
      %p29 = scmp.eq.s32.totalorder %s28, 0
      %s31 = sadd.s32 %s30, 1
      %s32 = scalar_select %p29, %s30, %s31
      %p35 = pneg %p29
      %p36 = scmp.eq.s32.totalorder %s20, 1
      %p37 = por %p35, %p36
      %p38 = scmp.ne.s32.totalorder %s30, %s33
      %p39 = scmp.eq.s32.totalorder %s20, 0
      %p40 = por %p38, %p39
      %p41 = scmp.ne.s32.totalorder %s30, %s33
      %p42 = scmp.eq.s32.totalorder %s25, 1
      %p43 = por %p41, %p42
      %p44 = scmp.ne.s32.totalorder %s33, %s34
      %p45 = scmp.eq.s32.totalorder %s25, 0
      %p46 = por %p44, %p45
      %p47 = scmp.ne.s32.totalorder %s33, %s34
      %p48 = scmp.eq.s32.totalorder %s26, 1
      %p49 = por %p47, %p48
      %p51 = scmp.ne.s32.totalorder %s34, %s50
      %p52 = scmp.eq.s32.totalorder %s26, 0
      %p53 = por %p51, %p52
      %s55 = sadd.s32 %s54, 1
      %p58 = scmp.eq.s32.totalorder %s20, 1
      %p59 = scmp.ne.s32.totalorder %s54, %s56
      %p60 = scmp.eq.s32.totalorder %s20, 0
      %p61 = por %p59, %p60
      %p62 = scmp.ne.s32.totalorder %s54, %s56
      %p63 = scmp.eq.s32.totalorder %s25, 1
      %p64 = por %p62, %p63
      %p65 = scmp.ne.s32.totalorder %s56, %s57
      %p66 = scmp.eq.s32.totalorder %s25, 0
      %p67 = por %p65, %p66
      %p68 = scmp.ne.s32.totalorder %s56, %s57
      %p69 = scmp.eq.s32.totalorder %s26, 1
      %p70 = por %p68, %p69
      %p72 = scmp.ne.s32.totalorder %s57, %s71
      %p73 = scmp.eq.s32.totalorder %s26, 0
      %p74 = por %p72, %p73
      %s76 = sadd.s32 %s75, 1
      %p79 = scmp.eq.s32.totalorder %s20, 1
      %p80 = scmp.ne.s32.totalorder %s75, %s77
      %p81 = scmp.eq.s32.totalorder %s20, 0
      %p82 = por %p80, %p81
      %p83 = scmp.ne.s32.totalorder %s75, %s77
      %p84 = scmp.eq.s32.totalorder %s25, 1
      %p85 = por %p83, %p84
      %p86 = scmp.ne.s32.totalorder %s77, %s78
      %p87 = scmp.eq.s32.totalorder %s25, 0
      %p88 = por %p86, %p87
      %p89 = scmp.ne.s32.totalorder %s77, %s78
      %p90 = scmp.eq.s32.totalorder %s26, 1
      %p91 = por %p89, %p90
      %p93 = scmp.ne.s32.totalorder %s78, %s92
      %p94 = scmp.eq.s32.totalorder %s26, 0
      %p95 = por %p93, %p94
      %s96 = ssub.s32 %s20, %s27
      %p97 = scmp.eq.s32.totalorder %s96, 0
      %s99 = sadd.s32 %s98, 1
      %s100 = scalar_select %p97, %s98, %s99
      %p103 = pneg %p97
      %p104 = scmp.eq.s32.totalorder %s20, 1
      %p105 = por %p103, %p104
      %p106 = scmp.ne.s32.totalorder %s98, %s101
      %p107 = scmp.eq.s32.totalorder %s20, 0
      %p108 = por %p106, %p107
      %p109 = scmp.ne.s32.totalorder %s98, %s101
      %p110 = scmp.eq.s32.totalorder %s25, 1
      %p111 = por %p109, %p110
      %p112 = scmp.ne.s32.totalorder %s101, %s102
      %p113 = scmp.eq.s32.totalorder %s25, 0
      %p114 = por %p112, %p113
      %p115 = scmp.ne.s32.totalorder %s101, %s102
      %p116 = scmp.eq.s32.totalorder %s26, 1
      %p117 = por %p115, %p116
      %p119 = scmp.ne.s32.totalorder %s102, %s118
      %p120 = scmp.eq.s32.totalorder %s26, 0
      %p121 = por %p119, %p120
      %s122 = ssub.s32 %s20, %s27
      %p123 = scmp.eq.s32.totalorder %s122, 0
      %s125 = sadd.s32 %s124, 1
      %s126 = scalar_select %p123, %s124, %s125
      %p129 = pneg %p123
      %p130 = scmp.eq.s32.totalorder %s20, 1
      %p131 = por %p129, %p130
      %p132 = scmp.ne.s32.totalorder %s124, %s127
      %p133 = scmp.eq.s32.totalorder %s20, 0
      %p134 = por %p132, %p133
      %p135 = scmp.ne.s32.totalorder %s124, %s127
      %p136 = scmp.eq.s32.totalorder %s25, 1
      %p137 = por %p135, %p136
      %p138 = scmp.ne.s32.totalorder %s127, %s128
      %p139 = scmp.eq.s32.totalorder %s25, 0
      %p140 = por %p138, %p139
      %p141 = scmp.ne.s32.totalorder %s127, %s128
      %p142 = scmp.eq.s32.totalorder %s26, 1
      %p143 = por %p141, %p142
      %p145 = scmp.ne.s32.totalorder %s128, %s144
      %p146 = scmp.eq.s32.totalorder %s26, 0
      %p147 = por %p145, %p146
      %p148 = scmp.le.s32.totalorder 1, %s20
      %p149 = scmp.lt.s32.totalorder %s20, 3
      %p150 = pnand %p148, %p149
      %p151 = pneg %p150
      // Predicated region
      $region9: #{wav2vec2_forward.11} parent=5 // pred_check
        _
      $region10: #{wav2vec2_forward.11} parent=5 // pred_check_branch
        %153 = sbr.rel (%p150) target = $region12
      $region11: #{wav2vec2_forward.11} parent=5 // pred_region
        %s154 = ssub.s32 %s20, 1
        // Predicated region
        $region13: #{wav2vec2_forward.11} parent=11 // pred_check
          %p155 = pneg %p67
        $region14: #{wav2vec2_forward.11} parent=11 // pred_check_branch
          %157 = sbr.rel (%p155) target = $region16
        $region15: #{wav2vec2_forward.11} parent=11 // pred_region
          %s159 = ssub.s32 1024, 1024
          %160 = vsyncadd [#allocation6], %s159
          %s161 = sshll.u32 [#allocation5], 4
          %s162 = int_to_ptr.vmem [resolvable:$true] %s161
          %167 = dma.hbm_to_vmem [thread:$0]  %s1, 1024, %s162, [#allocation6], 64, 64, 4
        $region16: #{wav2vec2_forward.11} parent=11 // pred_fallthru
          _
        // Predicated region
        $region17: #{wav2vec2_forward.11} parent=11 // pred_check
          %p168 = pneg %p88
        $region18: #{wav2vec2_forward.11} parent=11 // pred_check_branch
          %170 = sbr.rel (%p168) target = $region20
        $region19: #{wav2vec2_forward.11} parent=11 // pred_region
          %s172 = ssub.s32 16, 16
          %173 = vsyncadd [#allocation6], %s172
          %s175 = sshll.u32 [#allocation7], 4
          %s176 = int_to_ptr.vmem [resolvable:$true] %s175
          %178 = dma.hbm_to_vmem [thread:$0]  %s2, 16, %s176, [#allocation6]
        $region20: #{wav2vec2_forward.11} parent=11 // pred_fallthru
          _
      $region12: #{wav2vec2_forward.11} parent=5 // pred_fallthru
        _
      %p179 = scmp.lt.s32.totalorder %s20, 2
      // Predicated region
      $region21: #{wav2vec2_forward.11} parent=5 // pred_check
        %p180 = pneg %p179
      $region22: #{wav2vec2_forward.11} parent=5 // pred_check_branch
        %182 = sbr.rel (%p180) target = $region24
      $region23: #{wav2vec2_forward.11} parent=5 // pred_region
        // Predicated region
        $region25: #{wav2vec2_forward.11} parent=23 // pred_check
          %p183 = pneg %p40
        $region26: #{wav2vec2_forward.11} parent=23 // pred_check_branch
          %185 = sbr.rel (%p183) target = $region28
        $region27: #{wav2vec2_forward.11} parent=23 // pred_region
          %s186 = sand.u32 %s30, 1
          %s187 = scalar_lea.sflag [#allocation3], %s186
          %s188 = sand.u32 %s30, 1
          %s189 = smul.addr %s188, 8
          %s190 = scalar_lea.vmem [#allocation2], %s189
          %s192 = ssub.s32 128, 128
          %193 = vsyncadd %s187, %s192
          %s194 = smul.addr %s20, 2
          %s195 = smul.addr %s194, 64
          %s196 = scalar_lea.hbm %s0, %s195
          %s197 = sshll.u32 %s190, 4
          %s198 = int_to_ptr.vmem [resolvable:$true] %s197
          %203 = dma.hbm_to_vmem [thread:$0]  %s196, 128, %s198, %s187, 64, 64, 4
        $region28: #{wav2vec2_forward.11} parent=23 // pred_fallthru
          _
        // Predicated region
        $region29: #{wav2vec2_forward.11} parent=23 // pred_check
          %p204 = pneg %p108
        $region30: #{wav2vec2_forward.11} parent=23 // pred_check_branch
          %206 = sbr.rel (%p204) target = $region32
        $region31: #{wav2vec2_forward.11} parent=23 // pred_region
          %s207 = sand.u32 %s98, 1
          %s208 = scalar_lea.sflag [#allocation9], %s207
          %s209 = sand.u32 %s98, 1
          %s210 = smul.addr %s209, 4
          %s211 = scalar_lea.vmem [#allocation8], %s210
          %s213 = ssub.s32 64, 64
          %214 = vsyncadd %s208, %s213
          %s215 = smul.addr %s20, 64
          %s216 = scalar_lea.hbm %s3, %s215
          %s218 = sshll.u32 %s211, 4
          %s219 = int_to_ptr.vmem [resolvable:$true] %s218
          %221 = dma.hbm_to_vmem [thread:$0]  %s216, 64, %s219, %s208
        $region32: #{wav2vec2_forward.11} parent=23 // pred_fallthru
          _
      $region24: #{wav2vec2_forward.11} parent=5 // pred_fallthru
        _
      %p222 = scmp.le.s32.totalorder 1, %s20
      %p223 = scmp.lt.s32.totalorder %s20, 3
      %p224 = pnand %p222, %p223
      %p225 = pneg %p224
      // Predicated region
      $region33: #{wav2vec2_forward.11} parent=5 // pred_check
        _
      $region34: #{wav2vec2_forward.11} parent=5 // pred_check_branch
        %227 = sbr.rel (%p224) target = $region36
      $region35: #{wav2vec2_forward.11} parent=5 // pred_region
        %s228 = ssub.s32 %s20, 1
        %s229 = sand.u32 %s33, 1
        %s230 = scalar_lea.sflag [#allocation3], %s229
        %s231 = sand.u32 %s33, 1
        %s232 = smul.addr %s231, 8
        %s233 = scalar_lea.vmem [#allocation2], %s232
        // Predicated region
        $region37: #{wav2vec2_forward.11} parent=35 // pred_check
          %p234 = pneg %p46
        $region38: #{wav2vec2_forward.11} parent=35 // pred_check_branch
          %236 = sbr.rel (%p234) target = $region40
        $region39: #{wav2vec2_forward.11} parent=35 // pred_region
          %237 = dma.done %s230, 128
        $region40: #{wav2vec2_forward.11} parent=35 // pred_fallthru
          _
        // Predicated region
        $region41: #{wav2vec2_forward.11} parent=35 // pred_check
          %p238 = pneg %p67
        $region42: #{wav2vec2_forward.11} parent=35 // pred_check_branch
          %240 = sbr.rel (%p238) target = $region44
        $region43: #{wav2vec2_forward.11} parent=35 // pred_region
          %241 = dma.done [#allocation6], 1024
        $region44: #{wav2vec2_forward.11} parent=35 // pred_fallthru
          _
        // Predicated region
        $region45: #{wav2vec2_forward.11} parent=35 // pred_check
          %p242 = pneg %p88
        $region46: #{wav2vec2_forward.11} parent=35 // pred_check_branch
          %244 = sbr.rel (%p242) target = $region48
        $region47: #{wav2vec2_forward.11} parent=35 // pred_region
          %245 = dma.done [#allocation6], 16
        $region48: #{wav2vec2_forward.11} parent=35 // pred_fallthru
          _
        %s246 = sand.u32 %s101, 1
        %s247 = scalar_lea.sflag [#allocation9], %s246
        %s248 = sand.u32 %s101, 1
        %s249 = smul.addr %s248, 4
        %s250 = scalar_lea.vmem [#allocation8], %s249
        // Predicated region
        $region49: #{wav2vec2_forward.11} parent=35 // pred_check
          %p251 = pneg %p114
        $region50: #{wav2vec2_forward.11} parent=35 // pred_check_branch
          %253 = sbr.rel (%p251) target = $region52
        $region51: #{wav2vec2_forward.11} parent=35 // pred_region
          %254 = dma.done %s247, 64
        $region52: #{wav2vec2_forward.11} parent=35 // pred_fallthru
          _
        %s255 = sand.u32 %s33, 1
        %s256 = scalar_lea.sflag [#allocation3], %s255
        %s257 = sand.u32 %s33, 1
        %s258 = smul.addr %s257, 8
        %s259 = scalar_lea.vmem [#allocation2], %s258
        %p260 = pneg %p46
        %p261 = pneg %p43
        %p262 = pneg %p67
        %p263 = pneg %p64
        %p264 = pneg %p88
        %p265 = pneg %p85
        %s266 = sand.u32 %s101, 1
        %s267 = scalar_lea.sflag [#allocation9], %s266
        %s268 = sand.u32 %s101, 1
        %s269 = smul.addr %s268, 4
        %s270 = scalar_lea.vmem [#allocation8], %s269
        %p271 = pneg %p114
        %p272 = pneg %p111
        %p273 = pneg %p140
        %p274 = pneg %p137
        %s275 = sand.u32 %s127, 1
        %s276 = scalar_lea.sflag [#allocation4], %s275
        %s277 = sand.u32 %s127, 1
        %s278 = smul.addr %s277, 4
        %s279 = scalar_lea.vmem [#allocation10], %s278
        %v281 = vld [vmem:[%s233] sm:$0xf]
        %v282 = vld [vmem:[%s233 + $0x4] sm:$0x3]
        %v283 = vld [vmem:[#allocation5] sm:$0xf]
        %v284 = vld [vmem:[#allocation5 + $0x4] sm:$0xf]
        %s285 = scalar_lea.vmem [#allocation5], 16
        %v286 = vld [vmem:[%s285] sm:$0xf]
        %v287 = vld [vmem:[%s285 + $0x4] sm:$0xf]
        %v290 = vunpack.c.l.b16 %v281
        %v291 = vunpack.c.l.b16 %v282
        %v292 = vpack.c.b16 %v291, %v290
        %v294 = vshrl.u32 %v292, 16
        %v296 = vshll.u32 %v292, 16
        %v298 = vrot.slane %v296, 1
        %v299 = vor.u32 %v294, %v298
        %v302 = vunpack.c.l.b16 %v286
        %v303 = vunpack.c.l.b16 %v287
        %v304 = vpack.c.b16 %v303, %v302
        %vm306 = vcmask 130048
        %v308 = vsel %vm306, %v299, 0
        %310 = vmatprep.subr.bf16.mxu0 0
        %311 = vmatpush1.bf16.msra.mxu0 %v304
        %312 = vmatprep.subr.bf16.mxu0 0
        %313 = vmatpush1.bf16.msra.mxu0 0
        %314 = vmatprep.subr.bf16.mxu0 0
        %315 = vmatpush1.bf16.msra.mxu0 0
        %316 = vmatprep.subr.bf16.mxu0 0
        %317 = vmatpush1.bf16.msra.mxu0 0
        %318 = vmatprep.subr.bf16.mxu0 0
        %319 = vmatpush1.bf16.msra.mxu0 0
        %320 = vmatprep.subr.bf16.mxu0 0
        %321 = vmatpush1.bf16.msra.mxu0 0
        %322 = vmatprep.subr.bf16.mxu0 0
        %323 = vmatpush1.bf16.msra.mxu0 0
        %324 = vmatprep.subr.bf16.mxu0 0
        %325 = vmatpush1.bf16.msra.mxu0 0
        %326 = vmatprep.subr.bf16.mxu0 0
        %327 = vmatpush1.bf16.msra.mxu0 0
        %328 = vmatprep.subr.bf16.mxu0 0
        %329 = vmatpush1.bf16.msra.mxu0 0
        %330 = vmatprep.subr.bf16.mxu0 0
        %331 = vmatpush1.bf16.msra.mxu0 0
        %332 = vmatprep.subr.bf16.mxu0 0
        %333 = vmatpush1.bf16.msra.mxu0 0
        %334 = vmatprep.subr.bf16.mxu0 0
        %335 = vmatpush1.bf16.msra.mxu0 0
        %336 = vmatprep.subr.bf16.mxu0 0
        %337 = vmatpush1.bf16.msra.mxu0 0
        %338 = vmatprep.subr.bf16.mxu0 0
        %339 = vmatpush1.bf16.msra.mxu0 0
        %340 = vmatprep.subr.bf16.mxu0 0
        %341 = vmatpush1.bf16.msra.mxu0 0
        %342 = vmatprep.mubr.bf16.mxu0 0
        %343 = vmatmul.mubr.bf16.gmra.mrb[0].mxu0 %v308
        %v344 = vpop.f32.mrb[0].mxu0
        %v345 = vadd.f32 0.0, %v344
        %v346 = vpop.f32.mrb[0].mxu0
        %v347 = vpop.f32.mrb[0].mxu0
        %v348 = vpop.f32.mrb[0].mxu0
        %349 = vdwg.mxu0
        %v352 = vunpack.c.l.b16 %v283
        %v353 = vunpack.c.l.b16 %v284
        %v354 = vpack.c.b16 %v353, %v352
        %v357 = vsel %vm306, %v281, 0
        %359 = vmatprep.subr.bf16.mxu0 0
        %360 = vmatpush1.bf16.msra.mxu0 %v354
        %361 = vmatprep.subr.bf16.mxu0 0
        %362 = vmatpush1.bf16.msra.mxu0 0
        %363 = vmatprep.subr.bf16.mxu0 0
        %364 = vmatpush1.bf16.msra.mxu0 0
        %365 = vmatprep.subr.bf16.mxu0 0
        %366 = vmatpush1.bf16.msra.mxu0 0
        %367 = vmatprep.subr.bf16.mxu0 0
        %368 = vmatpush1.bf16.msra.mxu0 0
        %369 = vmatprep.subr.bf16.mxu0 0
        %370 = vmatpush1.bf16.msra.mxu0 0
        %371 = vmatprep.subr.bf16.mxu0 0
        %372 = vmatpush1.bf16.msra.mxu0 0
        %373 = vmatprep.subr.bf16.mxu0 0
        %374 = vmatpush1.bf16.msra.mxu0 0
        %375 = vmatprep.subr.bf16.mxu0 0
        %376 = vmatpush1.bf16.msra.mxu0 0
        %377 = vmatprep.subr.bf16.mxu0 0
        %378 = vmatpush1.bf16.msra.mxu0 0
        %379 = vmatprep.subr.bf16.mxu0 0
        %380 = vmatpush1.bf16.msra.mxu0 0
        %381 = vmatprep.subr.bf16.mxu0 0
        %382 = vmatpush1.bf16.msra.mxu0 0
        %383 = vmatprep.subr.bf16.mxu0 0
        %384 = vmatpush1.bf16.msra.mxu0 0
        %385 = vmatprep.subr.bf16.mxu0 0
        %386 = vmatpush1.bf16.msra.mxu0 0
        %387 = vmatprep.subr.bf16.mxu0 0
        %388 = vmatpush1.bf16.msra.mxu0 0
        %389 = vmatprep.subr.bf16.mxu0 0
        %390 = vmatpush1.bf16.msra.mxu0 0
        %391 = vmatprep.mubr.bf16.mxu0 0
        %392 = vmatmul.mubr.bf16.gmra.mrb[0].mxu0 %v357
        %v393 = vpop.f32.mrb[0].mxu0
        %v394 = vadd.f32 %v345, %v393
        %v395 = vpop.f32.mrb[0].mxu0
        %v396 = vpop.f32.mrb[0].mxu0
        %v397 = vpop.f32.mrb[0].mxu0
        %398 = vdwg.mxu0
        %s399 = scalar_lea.vmem [#allocation5], 32
        %v400 = vld [vmem:[%s399] sm:$0xf]
        %v401 = vld [vmem:[%s399 + $0x4] sm:$0xf]
        %v402 = vrot.slane %v292, 1
        %v405 = vunpack.c.l.b16 %v400
        %v406 = vunpack.c.l.b16 %v401
        %v407 = vpack.c.b16 %v406, %v405
        %v410 = vsel %vm306, %v402, 0
        %412 = vmatprep.subr.bf16.mxu0 0
        %413 = vmatpush1.bf16.msra.mxu0 %v407
        %414 = vmatprep.subr.bf16.mxu0 0
        %415 = vmatpush1.bf16.msra.mxu0 0
        %416 = vmatprep.subr.bf16.mxu0 0
        %417 = vmatpush1.bf16.msra.mxu0 0
        %418 = vmatprep.subr.bf16.mxu0 0
        %419 = vmatpush1.bf16.msra.mxu0 0
        %420 = vmatprep.subr.bf16.mxu0 0
        %421 = vmatpush1.bf16.msra.mxu0 0
        %422 = vmatprep.subr.bf16.mxu0 0
        %423 = vmatpush1.bf16.msra.mxu0 0
        %424 = vmatprep.subr.bf16.mxu0 0
        %425 = vmatpush1.bf16.msra.mxu0 0
        %426 = vmatprep.subr.bf16.mxu0 0
        %427 = vmatpush1.bf16.msra.mxu0 0
        %428 = vmatprep.subr.bf16.mxu0 0
        %429 = vmatpush1.bf16.msra.mxu0 0
        %430 = vmatprep.subr.bf16.mxu0 0
        %431 = vmatpush1.bf16.msra.mxu0 0
        %432 = vmatprep.subr.bf16.mxu0 0
        %433 = vmatpush1.bf16.msra.mxu0 0
        %434 = vmatprep.subr.bf16.mxu0 0
        %435 = vmatpush1.bf16.msra.mxu0 0
        %436 = vmatprep.subr.bf16.mxu0 0
        %437 = vmatpush1.bf16.msra.mxu0 0
        %438 = vmatprep.subr.bf16.mxu0 0
        %439 = vmatpush1.bf16.msra.mxu0 0
        %440 = vmatprep.subr.bf16.mxu0 0
        %441 = vmatpush1.bf16.msra.mxu0 0
        %442 = vmatprep.subr.bf16.mxu0 0
        %443 = vmatpush1.bf16.msra.mxu0 0
        %444 = vmatprep.mubr.bf16.mxu0 0
        %445 = vmatmul.mubr.bf16.gmra.mrb[0].mxu0 %v410
        %v446 = vpop.f32.mrb[0].mxu0
        %v447 = vadd.f32 0.0, %v446
        %v448 = vpop.f32.mrb[0].mxu0
        %v449 = vpop.f32.mrb[0].mxu0
        %v450 = vpop.f32.mrb[0].mxu0
        %451 = vdwg.mxu0
        %v452 = vadd.f32 %v394, %v447
        %s453 = scalar_lea.vmem [#allocation5], 48
        %v454 = vld [vmem:[%s453] sm:$0xf]
        %v455 = vld [vmem:[%s453 + $0x4] sm:$0xf]
        %v456 = vrot.slane %v294, 1
        %v457 = vrot.slane %v296, 2
        %v458 = vor.u32 %v456, %v457
        %v461 = vunpack.c.l.b16 %v454
        %v462 = vunpack.c.l.b16 %v455
        %v463 = vpack.c.b16 %v462, %v461
        %v466 = vsel %vm306, %v458, 0
        %468 = vmatprep.subr.bf16.mxu0 0
        %469 = vmatpush1.bf16.msra.mxu0 %v463
        %470 = vmatprep.subr.bf16.mxu0 0
        %471 = vmatpush1.bf16.msra.mxu0 0
        %472 = vmatprep.subr.bf16.mxu0 0
        %473 = vmatpush1.bf16.msra.mxu0 0
        %474 = vmatprep.subr.bf16.mxu0 0
        %475 = vmatpush1.bf16.msra.mxu0 0
        %476 = vmatprep.subr.bf16.mxu0 0
        %477 = vmatpush1.bf16.msra.mxu0 0
        %478 = vmatprep.subr.bf16.mxu0 0
        %479 = vmatpush1.bf16.msra.mxu0 0
        %480 = vmatprep.subr.bf16.mxu0 0
        %481 = vmatpush1.bf16.msra.mxu0 0
        %482 = vmatprep.subr.bf16.mxu0 0
        %483 = vmatpush1.bf16.msra.mxu0 0
        %484 = vmatprep.subr.bf16.mxu0 0
        %485 = vmatpush1.bf16.msra.mxu0 0
        %486 = vmatprep.subr.bf16.mxu0 0
        %487 = vmatpush1.bf16.msra.mxu0 0
        %488 = vmatprep.subr.bf16.mxu0 0
        %489 = vmatpush1.bf16.msra.mxu0 0
        %490 = vmatprep.subr.bf16.mxu0 0
        %491 = vmatpush1.bf16.msra.mxu0 0
        %492 = vmatprep.subr.bf16.mxu0 0
        %493 = vmatpush1.bf16.msra.mxu0 0
        %494 = vmatprep.subr.bf16.mxu0 0
        %495 = vmatpush1.bf16.msra.mxu0 0
        %496 = vmatprep.subr.bf16.mxu0 0
        %497 = vmatpush1.bf16.msra.mxu0 0
        %498 = vmatprep.subr.bf16.mxu0 0
        %499 = vmatpush1.bf16.msra.mxu0 0
        %500 = vmatprep.mubr.bf16.mxu0 0
        %501 = vmatmul.mubr.bf16.gmra.mrb[0].mxu0 %v466
        %v502 = vpop.f32.mrb[0].mxu0
        %v503 = vadd.f32 0.0, %v502
        %v504 = vpop.f32.mrb[0].mxu0
        %v505 = vpop.f32.mrb[0].mxu0
        %v506 = vpop.f32.mrb[0].mxu0
        %507 = vdwg.mxu0
        %v508 = vadd.f32 %v452, %v503
        %s509 = scalar_lea.vmem [#allocation5], 8
        %v510 = vld [vmem:[%s509] sm:$0xf]
        %v511 = vld [vmem:[%s509 + $0x4] sm:$0xf]
        %s512 = scalar_lea.vmem [#allocation5], 24
        %v513 = vld [vmem:[%s512] sm:$0xf]
        %v514 = vld [vmem:[%s512 + $0x4] sm:$0xf]
        %515 = vrot.lane.b32.xlu0 %v299, 112
        %v516 = vpop.permute.xlu0 %515
        %v519 = vunpack.c.l.b16 %v513
        %v520 = vunpack.c.l.b16 %v514
        %v521 = vpack.c.b16 %v520, %v519
        %v524 = vsel %vm306, %v516, 0
        %526 = vmatprep.subr.bf16.mxu0 0
        %527 = vmatpush1.bf16.msra.mxu0 %v521
        %528 = vmatprep.subr.bf16.mxu0 0
        %529 = vmatpush1.bf16.msra.mxu0 0
        %530 = vmatprep.subr.bf16.mxu0 0
        %531 = vmatpush1.bf16.msra.mxu0 0
        %532 = vmatprep.subr.bf16.mxu0 0
        %533 = vmatpush1.bf16.msra.mxu0 0
        %534 = vmatprep.subr.bf16.mxu0 0
        %535 = vmatpush1.bf16.msra.mxu0 0
        %536 = vmatprep.subr.bf16.mxu0 0
        %537 = vmatpush1.bf16.msra.mxu0 0
        %538 = vmatprep.subr.bf16.mxu0 0
        %539 = vmatpush1.bf16.msra.mxu0 0
        %540 = vmatprep.subr.bf16.mxu0 0
        %541 = vmatpush1.bf16.msra.mxu0 0
        %542 = vmatprep.subr.bf16.mxu0 0
        %543 = vmatpush1.bf16.msra.mxu0 0
        %544 = vmatprep.subr.bf16.mxu0 0
        %545 = vmatpush1.bf16.msra.mxu0 0
        %546 = vmatprep.subr.bf16.mxu0 0
        %547 = vmatpush1.bf16.msra.mxu0 0
        %548 = vmatprep.subr.bf16.mxu0 0
        %549 = vmatpush1.bf16.msra.mxu0 0
        %550 = vmatprep.subr.bf16.mxu0 0
        %551 = vmatpush1.bf16.msra.mxu0 0
        %552 = vmatprep.subr.bf16.mxu0 0
        %553 = vmatpush1.bf16.msra.mxu0 0
        %554 = vmatprep.subr.bf16.mxu0 0
        %555 = vmatpush1.bf16.msra.mxu0 0
        %556 = vmatprep.subr.bf16.mxu0 0
        %557 = vmatpush1.bf16.msra.mxu0 0
        %558 = vmatprep.mubr.bf16.mxu0 0
        %559 = vmatmul.mubr.bf16.gmra.mrb[0].mxu0 %v524
        %v560 = vpop.f32.mrb[0].mxu0
        %v561 = vadd.f32 0.0, %v560
        %v562 = vpop.f32.mrb[0].mxu0
        %v563 = vpop.f32.mrb[0].mxu0
        %v564 = vpop.f32.mrb[0].mxu0
        %565 = vdwg.mxu0
        %v566 = vpack.c.b16 %v290, %v290
        %567 = vrot.lane.b32.xlu0 %v566, 112
        %v568 = vpop.permute.xlu0 %567
        %v571 = vunpack.c.l.b16 %v510
        %v572 = vunpack.c.l.b16 %v511
        %v573 = vpack.c.b16 %v572, %v571
        %v576 = vsel %vm306, %v568, 0
        %578 = vmatprep.subr.bf16.mxu0 0
        %579 = vmatpush1.bf16.msra.mxu0 %v573
        %580 = vmatprep.subr.bf16.mxu0 0
        %581 = vmatpush1.bf16.msra.mxu0 0
        %582 = vmatprep.subr.bf16.mxu0 0
        %583 = vmatpush1.bf16.msra.mxu0 0
        %584 = vmatprep.subr.bf16.mxu0 0
        %585 = vmatpush1.bf16.msra.mxu0 0
        %586 = vmatprep.subr.bf16.mxu0 0
        %587 = vmatpush1.bf16.msra.mxu0 0
        %588 = vmatprep.subr.bf16.mxu0 0
        %589 = vmatpush1.bf16.msra.mxu0 0
        %590 = vmatprep.subr.bf16.mxu0 0
        %591 = vmatpush1.bf16.msra.mxu0 0
        %592 = vmatprep.subr.bf16.mxu0 0
        %593 = vmatpush1.bf16.msra.mxu0 0
        %594 = vmatprep.subr.bf16.mxu0 0
        %595 = vmatpush1.bf16.msra.mxu0 0
        %596 = vmatprep.subr.bf16.mxu0 0
        %597 = vmatpush1.bf16.msra.mxu0 0
        %598 = vmatprep.subr.bf16.mxu0 0
        %599 = vmatpush1.bf16.msra.mxu0 0
        %600 = vmatprep.subr.bf16.mxu0 0
        %601 = vmatpush1.bf16.msra.mxu0 0
        %602 = vmatprep.subr.bf16.mxu0 0
        %603 = vmatpush1.bf16.msra.mxu0 0
        %604 = vmatprep.subr.bf16.mxu0 0
        %605 = vmatpush1.bf16.msra.mxu0 0
        %606 = vmatprep.subr.bf16.mxu0 0
        %607 = vmatpush1.bf16.msra.mxu0 0
        %608 = vmatprep.subr.bf16.mxu0 0
        %609 = vmatpush1.bf16.msra.mxu0 0
        %610 = vmatprep.mubr.bf16.mxu0 0
        %611 = vmatmul.mubr.bf16.gmra.mrb[0].mxu0 %v576
        %v612 = vpop.f32.mrb[0].mxu0
        %v613 = vadd.f32 %v561, %v612
        %v614 = vpop.f32.mrb[0].mxu0
        %v615 = vpop.f32.mrb[0].mxu0
        %v616 = vpop.f32.mrb[0].mxu0
        %617 = vdwg.mxu0
        %s618 = scalar_lea.vmem [#allocation5], 40
        %v619 = vld [vmem:[%s618] sm:$0xf]
        %v620 = vld [vmem:[%s618 + $0x4] sm:$0xf]
        %621 = vrot.lane.b32.xlu0 %v402, 112
        %v622 = vpop.permute.xlu0 %621
        %v625 = vunpack.c.l.b16 %v619
        %v626 = vunpack.c.l.b16 %v620
        %v627 = vpack.c.b16 %v626, %v625
        %v630 = vsel %vm306, %v622, 0
        %632 = vmatprep.subr.bf16.mxu0 0
        %633 = vmatpush1.bf16.msra.mxu0 %v627
        %634 = vmatprep.subr.bf16.mxu0 0
        %635 = vmatpush1.bf16.msra.mxu0 0
        %636 = vmatprep.subr.bf16.mxu0 0
        %637 = vmatpush1.bf16.msra.mxu0 0
        %638 = vmatprep.subr.bf16.mxu0 0
        %639 = vmatpush1.bf16.msra.mxu0 0
        %640 = vmatprep.subr.bf16.mxu0 0
        %641 = vmatpush1.bf16.msra.mxu0 0
        %642 = vmatprep.subr.bf16.mxu0 0
        %643 = vmatpush1.bf16.msra.mxu0 0
        %644 = vmatprep.subr.bf16.mxu0 0
        %645 = vmatpush1.bf16.msra.mxu0 0
        %646 = vmatprep.subr.bf16.mxu0 0
        %647 = vmatpush1.bf16.msra.mxu0 0
        %648 = vmatprep.subr.bf16.mxu0 0
        %649 = vmatpush1.bf16.msra.mxu0 0
        %650 = vmatprep.subr.bf16.mxu0 0
        %651 = vmatpush1.bf16.msra.mxu0 0
        %652 = vmatprep.subr.bf16.mxu0 0
        %653 = vmatpush1.bf16.msra.mxu0 0
        %654 = vmatprep.subr.bf16.mxu0 0
        %655 = vmatpush1.bf16.msra.mxu0 0
        %656 = vmatprep.subr.bf16.mxu0 0
        %657 = vmatpush1.bf16.msra.mxu0 0
        %658 = vmatprep.subr.bf16.mxu0 0
        %659 = vmatpush1.bf16.msra.mxu0 0
        %660 = vmatprep.subr.bf16.mxu0 0
        %661 = vmatpush1.bf16.msra.mxu0 0
        %662 = vmatprep.subr.bf16.mxu0 0
        %663 = vmatpush1.bf16.msra.mxu0 0
        %664 = vmatprep.mubr.bf16.mxu0 0
        %665 = vmatmul.mubr.bf16.gmra.mrb[0].mxu0 %v630
        %v666 = vpop.f32.mrb[0].mxu0
        %v667 = vadd.f32 0.0, %v666
        %v668 = vpop.f32.mrb[0].mxu0
        %v669 = vpop.f32.mrb[0].mxu0
        %v670 = vpop.f32.mrb[0].mxu0
        %671 = vdwg.mxu0
        %v672 = vadd.f32 %v613, %v667
        %s673 = scalar_lea.vmem [#allocation5], 56
        %v674 = vld [vmem:[%s673] sm:$0xf]
        %v675 = vld [vmem:[%s673 + $0x4] sm:$0xf]
        %676 = vrot.lane.b32.xlu0 %v458, 112
        %v677 = vpop.permute.xlu0 %676
        %v680 = vunpack.c.l.b16 %v674
        %v681 = vunpack.c.l.b16 %v675
        %v682 = vpack.c.b16 %v681, %v680
        %v685 = vsel %vm306, %v677, 0
        %687 = vmatprep.subr.bf16.mxu0 0
        %688 = vmatpush1.bf16.msra.mxu0 %v682
        %689 = vmatprep.subr.bf16.mxu0 0
        %690 = vmatpush1.bf16.msra.mxu0 0
        %691 = vmatprep.subr.bf16.mxu0 0
        %692 = vmatpush1.bf16.msra.mxu0 0
        %693 = vmatprep.subr.bf16.mxu0 0
        %694 = vmatpush1.bf16.msra.mxu0 0
        %695 = vmatprep.subr.bf16.mxu0 0
        %696 = vmatpush1.bf16.msra.mxu0 0
        %697 = vmatprep.subr.bf16.mxu0 0
        %698 = vmatpush1.bf16.msra.mxu0 0
        %699 = vmatprep.subr.bf16.mxu0 0
        %700 = vmatpush1.bf16.msra.mxu0 0
        %701 = vmatprep.subr.bf16.mxu0 0
        %702 = vmatpush1.bf16.msra.mxu0 0
        %703 = vmatprep.subr.bf16.mxu0 0
        %704 = vmatpush1.bf16.msra.mxu0 0
        %705 = vmatprep.subr.bf16.mxu0 0
        %706 = vmatpush1.bf16.msra.mxu0 0
        %707 = vmatprep.subr.bf16.mxu0 0
        %708 = vmatpush1.bf16.msra.mxu0 0
        %709 = vmatprep.subr.bf16.mxu0 0
        %710 = vmatpush1.bf16.msra.mxu0 0
        %711 = vmatprep.subr.bf16.mxu0 0
        %712 = vmatpush1.bf16.msra.mxu0 0
        %713 = vmatprep.subr.bf16.mxu0 0
        %714 = vmatpush1.bf16.msra.mxu0 0
        %715 = vmatprep.subr.bf16.mxu0 0
        %716 = vmatpush1.bf16.msra.mxu0 0
        %717 = vmatprep.subr.bf16.mxu0 0
        %718 = vmatpush1.bf16.msra.mxu0 0
        %719 = vmatprep.mubr.bf16.mxu0 0
        %720 = vmatmul.mubr.bf16.gmra.mrb[0].mxu0 %v685
        %v721 = vpop.f32.mrb[0].mxu0
        %v722 = vadd.f32 0.0, %v721
        %v723 = vpop.f32.mrb[0].mxu0
        %v724 = vpop.f32.mrb[0].mxu0
        %v725 = vpop.f32.mrb[0].mxu0
        %726 = vdwg.mxu0
        %v727 = vadd.f32 %v672, %v722
        %729 = vrot.lane.b32.xlu0 %v727, 16
        %v730 = vpop.permute.xlu0 %729
        %v732 = vsel %vm306, %v508, %v730
        %v733 = vld [vmem:[#allocation7] sm:$0x1]
        %v735 = vlaneseq
        %v736 = vshrl.u32 %v735, 7
        %v737 = vsub.s32 0, %v736
        %v738 = vrot.slane %v733, %v737
        %v740 = vadd.f32 %v732, %v738
        %v741 = vmul.f32 %v740, 0.5
        %v742 = vmul.f32 %v740, 0.044715
        %v743 = vmul.f32 %v742, %v740
        %v744 = vmul.f32 %v743, %v740
        %v745 = vadd.f32 %v740, %v744
        %v746 = vmul.f32 %v745, 0.7978846
        %v747 = vtanh.pop %v746
        %v748 = vadd.f32 %v747, 1.0
        %v749 = vmul.f32 %v741, %v748
        %v750 = vld [vmem:[%s250] sm:$0xf]
        %v751 = vunpack.c.l.bf16 %v750
        %v752 = vadd.f32 %v751, %v749
        %v753 = vpack.c.bf16 %v752, %v752
        %vm754 = vcmask 257024
        %755 = vst.msk [vmem:[%s279] sm:$0xf] %vm754, %v753
        %s756 = sand.u32 %s127, 1
        %s757 = scalar_lea.sflag [#allocation4], %s756
        %s758 = sand.u32 %s127, 1
        %s759 = smul.addr %s758, 4
        %s760 = scalar_lea.vmem [#allocation10], %s759
        // Predicated region
        $region53: #{wav2vec2_forward.11} parent=35 // pred_check
          %p761 = pneg %p137
        $region54: #{wav2vec2_forward.11} parent=35 // pred_check_branch
          %763 = sbr.rel (%p761) target = $region56
        $region55: #{wav2vec2_forward.11} parent=35 // pred_region
          %s765 = ssub.s32 64, 64
          %766 = vsyncadd %s757, %s765
          %s767 = smul.addr %s25, 64
          %s768 = scalar_lea.hbm %s4, %s767
          %s770 = sshll.u32 %s760, 4
          %s771 = int_to_ptr.vmem [resolvable:$true] %s770
          %773 = dma.vmem_to_hbm [thread:$0]  %s771, 64, %s768, %s757
        $region56: #{wav2vec2_forward.11} parent=35 // pred_fallthru
          _
      $region36: #{wav2vec2_forward.11} parent=5 // pred_fallthru
        _
      %p774 = scmp.le.s32.totalorder 2, %s20
      // Predicated region
      $region57: #{wav2vec2_forward.11} parent=5 // pred_check
        %p775 = pneg %p774
      $region58: #{wav2vec2_forward.11} parent=5 // pred_check_branch
        %777 = sbr.rel (%p775) target = $region60
      $region59: #{wav2vec2_forward.11} parent=5 // pred_region
        %s778 = ssub.s32 %s20, 2
        // Predicated region
        $region61: #{wav2vec2_forward.11} parent=59 // pred_check
          %p779 = pneg %p143
        $region62: #{wav2vec2_forward.11} parent=59 // pred_check_branch
          %781 = sbr.rel (%p779) target = $region64
        $region63: #{wav2vec2_forward.11} parent=59 // pred_region
          %s782 = sand.u32 %s128, 1
          %s783 = scalar_lea.sflag [#allocation4], %s782
          %s784 = sand.u32 %s128, 1
          %s785 = smul.addr %s784, 4
          %s786 = scalar_lea.vmem [#allocation10], %s785
          %787 = dma.done %s783, 64
        $region64: #{wav2vec2_forward.11} parent=59 // pred_fallthru
          _
      $region60: #{wav2vec2_forward.11} parent=5 // pred_fallthru
        _
    $region6: #{wav2vec2_forward.11} parent=1 // loop_footer
      %s24 = sadd.s32 1, %s20
    $region7: #{wav2vec2_forward.11} parent=1 // loop_footer_branch
      %19 = sbr.rel target = $region3
    $region8: #{wav2vec2_forward.11} parent=1 // loop_exit
      _
    %788 = vsyncpa [#allocation3], 1
    %s789 = scalar_lea.sflag [#allocation3], 1
    %790 = vsyncpa %s789, 1
    %791 = vsyncpa [#allocation6], 1
    %792 = vsyncpa [#allocation9], 1
    %s793 = scalar_lea.sflag [#allocation9], 1
    %794 = vsyncpa %s793, 1
    %795 = vsyncpa [#allocation4], 1
    %s796 = scalar_lea.sflag [#allocation4], 1
    %797 = vsyncpa %s796, 1

// kernel: wav2vec2_forward.12
$region0: #{wav2vec2_forward.12}
  #allocation0 [shape = 'u32[]', space=smem, size = 0x4, offset = 0x4, fixed_abs, tag = 'smem constant byte address 0x4 - core index']
  #allocation1 [shape = 'u32[144,128]{1,0:T(1,128)}', space=vmem, size = 0x12000, scoped, tag = 'internal scratch']
  %s0 = inlined_call_operand.hbm [shape: bf16[2,8,32], index: 0, kind: input, shape index: {}]
  %s1 = inlined_call_operand.hbm [shape: f32[1,32], index: 1, kind: input, shape index: {}]
  %s2 = inlined_call_operand.hbm [shape: f32[1,32], index: 2, kind: input, shape index: {}]
  %s3 = inlined_call_operand.hbm [shape: bf16[32,96], index: 3, kind: input, shape index: {}]
  %s4 = inlined_call_operand.hbm [shape: f32[1,96], index: 4, kind: input, shape index: {}]
  %s5 = inlined_call_operand.hbm [shape: bf16[32,32], index: 5, kind: input, shape index: {}]
  %s6 = inlined_call_operand.hbm [shape: f32[1,32], index: 6, kind: input, shape index: {}]
  %s7 = inlined_call_operand.hbm [shape: f32[1,32], index: 7, kind: input, shape index: {}]
  %s8 = inlined_call_operand.hbm [shape: f32[1,32], index: 8, kind: input, shape index: {}]
  %s9 = inlined_call_operand.hbm [shape: bf16[32,64], index: 9, kind: input, shape index: {}]
  %s10 = inlined_call_operand.hbm [shape: f32[1,64], index: 10, kind: input, shape index: {}]
  %s11 = inlined_call_operand.hbm [shape: bf16[64,32], index: 11, kind: input, shape index: {}]
  %s12 = inlined_call_operand.hbm [shape: f32[1,32], index: 12, kind: input, shape index: {}]
  %s13 = inlined_call_operand.hbm [shape: bf16[2,8,32], index: 13, kind: output, shape index: {}]
  %s14 = sld [smem:[#allocation0]]
  $region137: #{wav2vec2_forward.12} parent=0
    _
  %s16 = ssub.s32 1, %s14
  %s17 = scalar_select 0, %s16, %s14
  $region1: #{wav2vec2_forward.12} parent=0
    #allocation2 [shape = 'u8[4096]{0}', space=vmem, size = 0x1000, scoped, tag = 'input window, operand 0']
    #allocation3 [shape = 's32[2]{0}', space=sflag, size = 0x8, scoped, tag = 'scoped memory for wav2vec2_forward.12']
    #allocation4 [shape = 's32[2]{0}', space=sflag, size = 0x8, scoped, tag = 'scoped memory for wav2vec2_forward.12']
    #allocation5 [shape = 'u8[512]{0}', space=vmem, size = 0x400, scoped, tag = 'input window, operand 1, single buffered']
    #allocation6 [shape = 's32[1]{0}', space=sflag, size = 0x4, scoped, tag = 'scoped memory for wav2vec2_forward.12']
    #allocation7 [shape = 'u8[512]{0}', space=vmem, size = 0x400, scoped, tag = 'input window, operand 2, single buffered']
    #allocation8 [shape = 'u8[8192]{0}', space=vmem, size = 0x2000, scoped, tag = 'input window, operand 3, single buffered']
    #allocation9 [shape = 's32[1]{0}', space=sflag, size = 0x4, scoped, tag = 'scoped memory for wav2vec2_forward.12']
    #allocation10 [shape = 'u8[512]{0}', space=vmem, size = 0x400, scoped, tag = 'input window, operand 4, single buffered']
    #allocation11 [shape = 'u8[8192]{0}', space=vmem, size = 0x2000, scoped, tag = 'input window, operand 5, single buffered']
    #allocation12 [shape = 's32[1]{0}', space=sflag, size = 0x4, scoped, tag = 'scoped memory for wav2vec2_forward.12']
    #allocation13 [shape = 'u8[512]{0}', space=vmem, size = 0x400, scoped, tag = 'input window, operand 6, single buffered']
    #allocation14 [shape = 'u8[512]{0}', space=vmem, size = 0x400, scoped, tag = 'input window, operand 7, single buffered']
    #allocation15 [shape = 's32[1]{0}', space=sflag, size = 0x4, scoped, tag = 'scoped memory for wav2vec2_forward.12']
    #allocation16 [shape = 'u8[512]{0}', space=vmem, size = 0x400, scoped, tag = 'input window, operand 8, single buffered']
    #allocation17 [shape = 'u8[8192]{0}', space=vmem, size = 0x2000, scoped, tag = 'input window, operand 9, single buffered']
    #allocation18 [shape = 's32[1]{0}', space=sflag, size = 0x4, scoped, tag = 'scoped memory for wav2vec2_forward.12']
    #allocation19 [shape = 'u8[512]{0}', space=vmem, size = 0x400, scoped, tag = 'input window, operand 10, single buffered']
    #allocation20 [shape = 'u8[16384]{0}', space=vmem, size = 0x4000, scoped, tag = 'input window, operand 11, single buffered']
    #allocation21 [shape = 's32[1]{0}', space=sflag, size = 0x4, scoped, tag = 'scoped memory for wav2vec2_forward.12']
    #allocation22 [shape = 'u8[512]{0}', space=vmem, size = 0x400, scoped, tag = 'input window, operand 12, single buffered']
    #allocation23 [shape = 'u8[4096]{0}', space=vmem, size = 0x1000, scoped, tag = 'output window, operand 0']
    %18 = vsyncpa [#allocation3], 0
    %s19 = scalar_lea.sflag [#allocation3], 1
    %20 = vsyncpa %s19, 0
    %21 = vsyncpa [#allocation6], 0
    %22 = vsyncpa [#allocation9], 0
    %23 = vsyncpa [#allocation12], 0
    %24 = vsyncpa [#allocation15], 0
    %25 = vsyncpa [#allocation18], 0
    %26 = vsyncpa [#allocation21], 0
    %27 = vsyncpa [#allocation4], 0
    %s28 = scalar_lea.sflag [#allocation4], 1
    %29 = vsyncpa %s28, 0
    loop: start=0, step=1, limit=4
    $region2: #{wav2vec2_forward.12} parent=1 // loop_pre_header
      _
    $region3: #{wav2vec2_forward.12} parent=1 // loop_header
      %s31 = sphi 0, %s35
      %p32 = scmp.ge.s32.totalorder %s31, 4
      %s41 = sphi 0, %s43
      %s44 = sphi 0, %s41
      %s45 = sphi 0, %s44
      %s61 = sphi 0, %s45
      %s65 = sphi 0, %s65
      %s67 = sphi 0, %s65
      %s68 = sphi 0, %s67
      %s82 = sphi 0, %s68
      %s86 = sphi 0, %s86
      %s88 = sphi 0, %s86
      %s89 = sphi 0, %s88
      %s103 = sphi 0, %s89
      %s107 = sphi 0, %s107
      %s109 = sphi 0, %s107
      %s110 = sphi 0, %s109
      %s124 = sphi 0, %s110
      %s128 = sphi 0, %s128
      %s130 = sphi 0, %s128
      %s131 = sphi 0, %s130
      %s145 = sphi 0, %s131
      %s149 = sphi 0, %s149
      %s151 = sphi 0, %s149
      %s152 = sphi 0, %s151
      %s166 = sphi 0, %s152
      %s170 = sphi 0, %s170
      %s172 = sphi 0, %s170
      %s173 = sphi 0, %s172
      %s187 = sphi 0, %s173
      %s191 = sphi 0, %s191
      %s193 = sphi 0, %s191
      %s194 = sphi 0, %s193
      %s208 = sphi 0, %s194
      %s212 = sphi 0, %s212
      %s214 = sphi 0, %s212
      %s215 = sphi 0, %s214
      %s229 = sphi 0, %s215
      %s233 = sphi 0, %s233
      %s235 = sphi 0, %s233
      %s236 = sphi 0, %s235
      %s250 = sphi 0, %s236
      %s254 = sphi 0, %s254
      %s256 = sphi 0, %s254
      %s257 = sphi 0, %s256
      %s271 = sphi 0, %s257
      %s275 = sphi 0, %s275
      %s277 = sphi 0, %s275
      %s278 = sphi 0, %s277
      %s292 = sphi 0, %s278
      %s296 = sphi 0, %s296
      %s298 = sphi 0, %s296
      %s299 = sphi 0, %s298
      %s313 = sphi 0, %s299
      %s319 = sphi 0, %s321
      %s322 = sphi 0, %s319
      %s323 = sphi 0, %s322
      %s339 = sphi 0, %s323
    $region4: #{wav2vec2_forward.12} parent=1 // loop_header_branch
      %34 = sbr.rel (%p32) target = $region8
    $region5: #{wav2vec2_forward.12} parent=1 // loop_body
      %s36 = ssub.s32 %s31, 1
      %s37 = ssub.s32 %s31, 2
      %s38 = sadd.s32 %s31, 1
      %s39 = ssub.s32 %s31, %s38
      %p40 = scmp.eq.s32.totalorder %s39, 0
      %s42 = sadd.s32 %s41, 1
      %s43 = scalar_select %p40, %s41, %s42
      %p46 = pneg %p40
      %p47 = scmp.eq.s32.totalorder %s31, 1
      %p48 = por %p46, %p47
      %p49 = scmp.ne.s32.totalorder %s41, %s44
      %p50 = scmp.eq.s32.totalorder %s31, 0
      %p51 = por %p49, %p50
      %p52 = scmp.ne.s32.totalorder %s41, %s44
      %p53 = scmp.eq.s32.totalorder %s36, 1
      %p54 = por %p52, %p53
      %p55 = scmp.ne.s32.totalorder %s44, %s45
      %p56 = scmp.eq.s32.totalorder %s36, 0
      %p57 = por %p55, %p56
      %p58 = scmp.ne.s32.totalorder %s44, %s45
      %p59 = scmp.eq.s32.totalorder %s37, 1
      %p60 = por %p58, %p59
      %p62 = scmp.ne.s32.totalorder %s45, %s61
      %p63 = scmp.eq.s32.totalorder %s37, 0
      %p64 = por %p62, %p63
      %s66 = sadd.s32 %s65, 1
      %p69 = scmp.eq.s32.totalorder %s31, 1
      %p70 = scmp.ne.s32.totalorder %s65, %s67
      %p71 = scmp.eq.s32.totalorder %s31, 0
      %p72 = por %p70, %p71
      %p73 = scmp.ne.s32.totalorder %s65, %s67
      %p74 = scmp.eq.s32.totalorder %s36, 1
      %p75 = por %p73, %p74
      %p76 = scmp.ne.s32.totalorder %s67, %s68
      %p77 = scmp.eq.s32.totalorder %s36, 0
      %p78 = por %p76, %p77
      %p79 = scmp.ne.s32.totalorder %s67, %s68
      %p80 = scmp.eq.s32.totalorder %s37, 1
      %p81 = por %p79, %p80
      %p83 = scmp.ne.s32.totalorder %s68, %s82
      %p84 = scmp.eq.s32.totalorder %s37, 0
      %p85 = por %p83, %p84
      %s87 = sadd.s32 %s86, 1
      %p90 = scmp.eq.s32.totalorder %s31, 1
      %p91 = scmp.ne.s32.totalorder %s86, %s88
      %p92 = scmp.eq.s32.totalorder %s31, 0
      %p93 = por %p91, %p92
      %p94 = scmp.ne.s32.totalorder %s86, %s88
      %p95 = scmp.eq.s32.totalorder %s36, 1
      %p96 = por %p94, %p95
      %p97 = scmp.ne.s32.totalorder %s88, %s89
      %p98 = scmp.eq.s32.totalorder %s36, 0
      %p99 = por %p97, %p98
      %p100 = scmp.ne.s32.totalorder %s88, %s89
      %p101 = scmp.eq.s32.totalorder %s37, 1
      %p102 = por %p100, %p101
      %p104 = scmp.ne.s32.totalorder %s89, %s103
      %p105 = scmp.eq.s32.totalorder %s37, 0
      %p106 = por %p104, %p105
      %s108 = sadd.s32 %s107, 1
      %p111 = scmp.eq.s32.totalorder %s31, 1
      %p112 = scmp.ne.s32.totalorder %s107, %s109
      %p113 = scmp.eq.s32.totalorder %s31, 0
      %p114 = por %p112, %p113
      %p115 = scmp.ne.s32.totalorder %s107, %s109
      %p116 = scmp.eq.s32.totalorder %s36, 1
      %p117 = por %p115, %p116
      %p118 = scmp.ne.s32.totalorder %s109, %s110
      %p119 = scmp.eq.s32.totalorder %s36, 0
      %p120 = por %p118, %p119
      %p121 = scmp.ne.s32.totalorder %s109, %s110
      %p122 = scmp.eq.s32.totalorder %s37, 1
      %p123 = por %p121, %p122
      %p125 = scmp.ne.s32.totalorder %s110, %s124
      %p126 = scmp.eq.s32.totalorder %s37, 0
      %p127 = por %p125, %p126
      %s129 = sadd.s32 %s128, 1
      %p132 = scmp.eq.s32.totalorder %s31, 1
      %p133 = scmp.ne.s32.totalorder %s128, %s130
      %p134 = scmp.eq.s32.totalorder %s31, 0
      %p135 = por %p133, %p134
      %p136 = scmp.ne.s32.totalorder %s128, %s130
      %p137 = scmp.eq.s32.totalorder %s36, 1
      %p138 = por %p136, %p137
      %p139 = scmp.ne.s32.totalorder %s130, %s131
      %p140 = scmp.eq.s32.totalorder %s36, 0
      %p141 = por %p139, %p140
      %p142 = scmp.ne.s32.totalorder %s130, %s131
      %p143 = scmp.eq.s32.totalorder %s37, 1
      %p144 = por %p142, %p143
      %p146 = scmp.ne.s32.totalorder %s131, %s145
      %p147 = scmp.eq.s32.totalorder %s37, 0
      %p148 = por %p146, %p147
      %s150 = sadd.s32 %s149, 1
      %p153 = scmp.eq.s32.totalorder %s31, 1
      %p154 = scmp.ne.s32.totalorder %s149, %s151
      %p155 = scmp.eq.s32.totalorder %s31, 0
      %p156 = por %p154, %p155
      %p157 = scmp.ne.s32.totalorder %s149, %s151
      %p158 = scmp.eq.s32.totalorder %s36, 1
      %p159 = por %p157, %p158
      %p160 = scmp.ne.s32.totalorder %s151, %s152
      %p161 = scmp.eq.s32.totalorder %s36, 0
      %p162 = por %p160, %p161
      %p163 = scmp.ne.s32.totalorder %s151, %s152
      %p164 = scmp.eq.s32.totalorder %s37, 1
      %p165 = por %p163, %p164
      %p167 = scmp.ne.s32.totalorder %s152, %s166
      %p168 = scmp.eq.s32.totalorder %s37, 0
      %p169 = por %p167, %p168
      %s171 = sadd.s32 %s170, 1
      %p174 = scmp.eq.s32.totalorder %s31, 1
      %p175 = scmp.ne.s32.totalorder %s170, %s172
      %p176 = scmp.eq.s32.totalorder %s31, 0
      %p177 = por %p175, %p176
      %p178 = scmp.ne.s32.totalorder %s170, %s172
      %p179 = scmp.eq.s32.totalorder %s36, 1
      %p180 = por %p178, %p179
      %p181 = scmp.ne.s32.totalorder %s172, %s173
      %p182 = scmp.eq.s32.totalorder %s36, 0
      %p183 = por %p181, %p182
      %p184 = scmp.ne.s32.totalorder %s172, %s173
      %p185 = scmp.eq.s32.totalorder %s37, 1
      %p186 = por %p184, %p185
      %p188 = scmp.ne.s32.totalorder %s173, %s187
      %p189 = scmp.eq.s32.totalorder %s37, 0
      %p190 = por %p188, %p189
      %s192 = sadd.s32 %s191, 1
      %p195 = scmp.eq.s32.totalorder %s31, 1
      %p196 = scmp.ne.s32.totalorder %s191, %s193
      %p197 = scmp.eq.s32.totalorder %s31, 0
      %p198 = por %p196, %p197
      %p199 = scmp.ne.s32.totalorder %s191, %s193
      %p200 = scmp.eq.s32.totalorder %s36, 1
      %p201 = por %p199, %p200
      %p202 = scmp.ne.s32.totalorder %s193, %s194
      %p203 = scmp.eq.s32.totalorder %s36, 0
      %p204 = por %p202, %p203
      %p205 = scmp.ne.s32.totalorder %s193, %s194
      %p206 = scmp.eq.s32.totalorder %s37, 1
      %p207 = por %p205, %p206
      %p209 = scmp.ne.s32.totalorder %s194, %s208
      %p210 = scmp.eq.s32.totalorder %s37, 0
      %p211 = por %p209, %p210
      %s213 = sadd.s32 %s212, 1
      %p216 = scmp.eq.s32.totalorder %s31, 1
      %p217 = scmp.ne.s32.totalorder %s212, %s214
      %p218 = scmp.eq.s32.totalorder %s31, 0
      %p219 = por %p217, %p218
      %p220 = scmp.ne.s32.totalorder %s212, %s214
      %p221 = scmp.eq.s32.totalorder %s36, 1
      %p222 = por %p220, %p221
      %p223 = scmp.ne.s32.totalorder %s214, %s215
      %p224 = scmp.eq.s32.totalorder %s36, 0
      %p225 = por %p223, %p224
      %p226 = scmp.ne.s32.totalorder %s214, %s215
      %p227 = scmp.eq.s32.totalorder %s37, 1
      %p228 = por %p226, %p227
      %p230 = scmp.ne.s32.totalorder %s215, %s229
      %p231 = scmp.eq.s32.totalorder %s37, 0
      %p232 = por %p230, %p231
      %s234 = sadd.s32 %s233, 1
      %p237 = scmp.eq.s32.totalorder %s31, 1
      %p238 = scmp.ne.s32.totalorder %s233, %s235
      %p239 = scmp.eq.s32.totalorder %s31, 0
      %p240 = por %p238, %p239
      %p241 = scmp.ne.s32.totalorder %s233, %s235
      %p242 = scmp.eq.s32.totalorder %s36, 1
      %p243 = por %p241, %p242
      %p244 = scmp.ne.s32.totalorder %s235, %s236
      %p245 = scmp.eq.s32.totalorder %s36, 0
      %p246 = por %p244, %p245
      %p247 = scmp.ne.s32.totalorder %s235, %s236
      %p248 = scmp.eq.s32.totalorder %s37, 1
      %p249 = por %p247, %p248
      %p251 = scmp.ne.s32.totalorder %s236, %s250
      %p252 = scmp.eq.s32.totalorder %s37, 0
      %p253 = por %p251, %p252
      %s255 = sadd.s32 %s254, 1
      %p258 = scmp.eq.s32.totalorder %s31, 1
      %p259 = scmp.ne.s32.totalorder %s254, %s256
      %p260 = scmp.eq.s32.totalorder %s31, 0
      %p261 = por %p259, %p260
      %p262 = scmp.ne.s32.totalorder %s254, %s256
      %p263 = scmp.eq.s32.totalorder %s36, 1
      %p264 = por %p262, %p263
      %p265 = scmp.ne.s32.totalorder %s256, %s257
      %p266 = scmp.eq.s32.totalorder %s36, 0
      %p267 = por %p265, %p266
      %p268 = scmp.ne.s32.totalorder %s256, %s257
      %p269 = scmp.eq.s32.totalorder %s37, 1
      %p270 = por %p268, %p269
      %p272 = scmp.ne.s32.totalorder %s257, %s271
      %p273 = scmp.eq.s32.totalorder %s37, 0
      %p274 = por %p272, %p273
      %s276 = sadd.s32 %s275, 1
      %p279 = scmp.eq.s32.totalorder %s31, 1
      %p280 = scmp.ne.s32.totalorder %s275, %s277
      %p281 = scmp.eq.s32.totalorder %s31, 0
      %p282 = por %p280, %p281
      %p283 = scmp.ne.s32.totalorder %s275, %s277
      %p284 = scmp.eq.s32.totalorder %s36, 1
      %p285 = por %p283, %p284
      %p286 = scmp.ne.s32.totalorder %s277, %s278
      %p287 = scmp.eq.s32.totalorder %s36, 0
      %p288 = por %p286, %p287
      %p289 = scmp.ne.s32.totalorder %s277, %s278
      %p290 = scmp.eq.s32.totalorder %s37, 1
      %p291 = por %p289, %p290
      %p293 = scmp.ne.s32.totalorder %s278, %s292
      %p294 = scmp.eq.s32.totalorder %s37, 0
      %p295 = por %p293, %p294
      %s297 = sadd.s32 %s296, 1
      %p300 = scmp.eq.s32.totalorder %s31, 1
      %p301 = scmp.ne.s32.totalorder %s296, %s298
      %p302 = scmp.eq.s32.totalorder %s31, 0
      %p303 = por %p301, %p302
      %p304 = scmp.ne.s32.totalorder %s296, %s298
      %p305 = scmp.eq.s32.totalorder %s36, 1
      %p306 = por %p304, %p305
      %p307 = scmp.ne.s32.totalorder %s298, %s299
      %p308 = scmp.eq.s32.totalorder %s36, 0
      %p309 = por %p307, %p308
      %p310 = scmp.ne.s32.totalorder %s298, %s299
      %p311 = scmp.eq.s32.totalorder %s37, 1
      %p312 = por %p310, %p311
      %p314 = scmp.ne.s32.totalorder %s299, %s313
      %p315 = scmp.eq.s32.totalorder %s37, 0
      %p316 = por %p314, %p315
      %s317 = ssub.s32 %s31, %s38
      %p318 = scmp.eq.s32.totalorder %s317, 0
      %s320 = sadd.s32 %s319, 1
      %s321 = scalar_select %p318, %s319, %s320
      %p324 = pneg %p318
      %p325 = scmp.eq.s32.totalorder %s31, 1
      %p326 = por %p324, %p325
      %p327 = scmp.ne.s32.totalorder %s319, %s322
      %p328 = scmp.eq.s32.totalorder %s31, 0
      %p329 = por %p327, %p328
      %p330 = scmp.ne.s32.totalorder %s319, %s322
      %p331 = scmp.eq.s32.totalorder %s36, 1
      %p332 = por %p330, %p331
      %p333 = scmp.ne.s32.totalorder %s322, %s323
      %p334 = scmp.eq.s32.totalorder %s36, 0
      %p335 = por %p333, %p334
      %p336 = scmp.ne.s32.totalorder %s322, %s323
      %p337 = scmp.eq.s32.totalorder %s37, 1
      %p338 = por %p336, %p337
      %p340 = scmp.ne.s32.totalorder %s323, %s339
      %p341 = scmp.eq.s32.totalorder %s37, 0
      %p342 = por %p340, %p341
      %p343 = scmp.le.s32.totalorder 1, %s31
      %p344 = scmp.lt.s32.totalorder %s31, 3
      %p345 = pnand %p343, %p344
      %p346 = pneg %p345
      // Predicated region
      $region9: #{wav2vec2_forward.12} parent=5 // pred_check
        _
      $region10: #{wav2vec2_forward.12} parent=5 // pred_check_branch
        %348 = sbr.rel (%p345) target = $region12
      $region11: #{wav2vec2_forward.12} parent=5 // pred_region
        %s349 = ssub.s32 %s31, 1
        // Predicated region
        $region13: #{wav2vec2_forward.12} parent=11 // pred_check
          %p350 = pneg %p78
        $region14: #{wav2vec2_forward.12} parent=11 // pred_check_branch
          %352 = sbr.rel (%p350) target = $region16
        $region15: #{wav2vec2_forward.12} parent=11 // pred_region
          %s354 = ssub.s32 16, 16
          %355 = vsyncadd [#allocation6], %s354
          %s357 = sshll.u32 [#allocation5], 4
          %s358 = int_to_ptr.vmem [resolvable:$true] %s357
          %360 = dma.hbm_to_vmem [thread:$0]  %s1, 16, %s358, [#allocation6]
        $region16: #{wav2vec2_forward.12} parent=11 // pred_fallthru
          _
        // Predicated region
        $region17: #{wav2vec2_forward.12} parent=11 // pred_check
          %p361 = pneg %p99
        $region18: #{wav2vec2_forward.12} parent=11 // pred_check_branch
          %363 = sbr.rel (%p361) target = $region20
        $region19: #{wav2vec2_forward.12} parent=11 // pred_region
          %s365 = ssub.s32 16, 16
          %366 = vsyncadd [#allocation6], %s365
          %s368 = sshll.u32 [#allocation7], 4
          %s369 = int_to_ptr.vmem [resolvable:$true] %s368
          %371 = dma.hbm_to_vmem [thread:$0]  %s2, 16, %s369, [#allocation6]
        $region20: #{wav2vec2_forward.12} parent=11 // pred_fallthru
          _
        // Predicated region
        $region21: #{wav2vec2_forward.12} parent=11 // pred_check
          %p372 = pneg %p120
        $region22: #{wav2vec2_forward.12} parent=11 // pred_check_branch
          %374 = sbr.rel (%p372) target = $region24
        $region23: #{wav2vec2_forward.12} parent=11 // pred_region
          %s376 = ssub.s32 256, 256
          %377 = vsyncadd [#allocation9], %s376
          %s378 = sshll.u32 [#allocation8], 4
          %s379 = int_to_ptr.vmem [resolvable:$true] %s378
          %384 = dma.hbm_to_vmem [thread:$0]  %s3, 256, %s379, [#allocation9], 64, 64, 4
        $region24: #{wav2vec2_forward.12} parent=11 // pred_fallthru
          _
        // Predicated region
        $region25: #{wav2vec2_forward.12} parent=11 // pred_check
          %p385 = pneg %p141
        $region26: #{wav2vec2_forward.12} parent=11 // pred_check_branch
          %387 = sbr.rel (%p385) target = $region28
        $region27: #{wav2vec2_forward.12} parent=11 // pred_region
          %s389 = ssub.s32 16, 16
          %390 = vsyncadd [#allocation9], %s389
          %s392 = sshll.u32 [#allocation10], 4
          %s393 = int_to_ptr.vmem [resolvable:$true] %s392
          %395 = dma.hbm_to_vmem [thread:$0]  %s4, 16, %s393, [#allocation9]
        $region28: #{wav2vec2_forward.12} parent=11 // pred_fallthru
          _
        // Predicated region
        $region29: #{wav2vec2_forward.12} parent=11 // pred_check
          %p396 = pneg %p162
        $region30: #{wav2vec2_forward.12} parent=11 // pred_check_branch
          %398 = sbr.rel (%p396) target = $region32
        $region31: #{wav2vec2_forward.12} parent=11 // pred_region
          %s400 = ssub.s32 256, 256
          %401 = vsyncadd [#allocation12], %s400
          %s402 = sshll.u32 [#allocation11], 4
          %s403 = int_to_ptr.vmem [resolvable:$true] %s402
          %408 = dma.hbm_to_vmem [thread:$0]  %s5, 256, %s403, [#allocation12], 64, 64, 4
        $region32: #{wav2vec2_forward.12} parent=11 // pred_fallthru
          _
        // Predicated region
        $region33: #{wav2vec2_forward.12} parent=11 // pred_check
          %p409 = pneg %p183
        $region34: #{wav2vec2_forward.12} parent=11 // pred_check_branch
          %411 = sbr.rel (%p409) target = $region36
        $region35: #{wav2vec2_forward.12} parent=11 // pred_region
          %s413 = ssub.s32 16, 16
          %414 = vsyncadd [#allocation12], %s413
          %s416 = sshll.u32 [#allocation13], 4
          %s417 = int_to_ptr.vmem [resolvable:$true] %s416
          %419 = dma.hbm_to_vmem [thread:$0]  %s6, 16, %s417, [#allocation12]
        $region36: #{wav2vec2_forward.12} parent=11 // pred_fallthru
          _
        // Predicated region
        $region37: #{wav2vec2_forward.12} parent=11 // pred_check
          %p420 = pneg %p204
        $region38: #{wav2vec2_forward.12} parent=11 // pred_check_branch
          %422 = sbr.rel (%p420) target = $region40
        $region39: #{wav2vec2_forward.12} parent=11 // pred_region
          %s424 = ssub.s32 16, 16
          %425 = vsyncadd [#allocation15], %s424
          %s427 = sshll.u32 [#allocation14], 4
          %s428 = int_to_ptr.vmem [resolvable:$true] %s427
          %430 = dma.hbm_to_vmem [thread:$0]  %s7, 16, %s428, [#allocation15]
        $region40: #{wav2vec2_forward.12} parent=11 // pred_fallthru
          _
        // Predicated region
        $region41: #{wav2vec2_forward.12} parent=11 // pred_check
          %p431 = pneg %p225
        $region42: #{wav2vec2_forward.12} parent=11 // pred_check_branch
          %433 = sbr.rel (%p431) target = $region44
        $region43: #{wav2vec2_forward.12} parent=11 // pred_region
          %s435 = ssub.s32 16, 16
          %436 = vsyncadd [#allocation15], %s435
          %s438 = sshll.u32 [#allocation16], 4
          %s439 = int_to_ptr.vmem [resolvable:$true] %s438
          %441 = dma.hbm_to_vmem [thread:$0]  %s8, 16, %s439, [#allocation15]
        $region44: #{wav2vec2_forward.12} parent=11 // pred_fallthru
          _
        // Predicated region
        $region45: #{wav2vec2_forward.12} parent=11 // pred_check
          %p442 = pneg %p246
        $region46: #{wav2vec2_forward.12} parent=11 // pred_check_branch
          %444 = sbr.rel (%p442) target = $region48
        $region47: #{wav2vec2_forward.12} parent=11 // pred_region
          %s446 = ssub.s32 256, 256
          %447 = vsyncadd [#allocation18], %s446
          %s448 = sshll.u32 [#allocation17], 4
          %s449 = int_to_ptr.vmem [resolvable:$true] %s448
          %454 = dma.hbm_to_vmem [thread:$0]  %s9, 256, %s449, [#allocation18], 64, 64, 4
        $region48: #{wav2vec2_forward.12} parent=11 // pred_fallthru
          _
        // Predicated region
        $region49: #{wav2vec2_forward.12} parent=11 // pred_check
          %p455 = pneg %p267
        $region50: #{wav2vec2_forward.12} parent=11 // pred_check_branch
          %457 = sbr.rel (%p455) target = $region52
        $region51: #{wav2vec2_forward.12} parent=11 // pred_region
          %s459 = ssub.s32 16, 16
          %460 = vsyncadd [#allocation18], %s459
          %s462 = sshll.u32 [#allocation19], 4
          %s463 = int_to_ptr.vmem [resolvable:$true] %s462
          %465 = dma.hbm_to_vmem [thread:$0]  %s10, 16, %s463, [#allocation18]
        $region52: #{wav2vec2_forward.12} parent=11 // pred_fallthru
          _
        // Predicated region
        $region53: #{wav2vec2_forward.12} parent=11 // pred_check
          %p466 = pneg %p288
        $region54: #{wav2vec2_forward.12} parent=11 // pred_check_branch
          %468 = sbr.rel (%p466) target = $region56
        $region55: #{wav2vec2_forward.12} parent=11 // pred_region
          %s470 = ssub.s32 512, 512
          %471 = vsyncadd [#allocation21], %s470
          %s472 = sshll.u32 [#allocation20], 4
          %s473 = int_to_ptr.vmem [resolvable:$true] %s472
          %478 = dma.hbm_to_vmem [thread:$0]  %s11, 512, %s473, [#allocation21], 64, 64, 4
        $region56: #{wav2vec2_forward.12} parent=11 // pred_fallthru
          _
        // Predicated region
        $region57: #{wav2vec2_forward.12} parent=11 // pred_check
          %p479 = pneg %p309
        $region58: #{wav2vec2_forward.12} parent=11 // pred_check_branch
          %481 = sbr.rel (%p479) target = $region60
        $region59: #{wav2vec2_forward.12} parent=11 // pred_region
          %s483 = ssub.s32 16, 16
          %484 = vsyncadd [#allocation21], %s483
          %s486 = sshll.u32 [#allocation22], 4
          %s487 = int_to_ptr.vmem [resolvable:$true] %s486
          %489 = dma.hbm_to_vmem [thread:$0]  %s12, 16, %s487, [#allocation21]
        $region60: #{wav2vec2_forward.12} parent=11 // pred_fallthru
          _
      $region12: #{wav2vec2_forward.12} parent=5 // pred_fallthru
        _
      %p490 = scmp.lt.s32.totalorder %s31, 2
      // Predicated region
      $region61: #{wav2vec2_forward.12} parent=5 // pred_check
        %p491 = pneg %p490
      $region62: #{wav2vec2_forward.12} parent=5 // pred_check_branch
        %493 = sbr.rel (%p491) target = $region64
      $region63: #{wav2vec2_forward.12} parent=5 // pred_region
        // Predicated region
        $region65: #{wav2vec2_forward.12} parent=63 // pred_check
          %p494 = pneg %p51
        $region66: #{wav2vec2_forward.12} parent=63 // pred_check_branch
          %496 = sbr.rel (%p494) target = $region68
        $region67: #{wav2vec2_forward.12} parent=63 // pred_region
          %s497 = sand.u32 %s41, 1
          %s498 = scalar_lea.sflag [#allocation3], %s497
          %s499 = sand.u32 %s41, 1
          %s500 = smul.addr %s499, 4
          %s501 = scalar_lea.vmem [#allocation2], %s500
          %s503 = ssub.s32 64, 64
          %504 = vsyncadd %s498, %s503
          %s505 = smul.addr %s31, 64
          %s506 = scalar_lea.hbm %s0, %s505
          %s508 = sshll.u32 %s501, 4
          %s509 = int_to_ptr.vmem [resolvable:$true] %s508
          %511 = dma.hbm_to_vmem [thread:$0]  %s506, 64, %s509, %s498
        $region68: #{wav2vec2_forward.12} parent=63 // pred_fallthru
          _
      $region64: #{wav2vec2_forward.12} parent=5 // pred_fallthru
        _
      %p512 = scmp.le.s32.totalorder 1, %s31
      %p513 = scmp.lt.s32.totalorder %s31, 3
      %p514 = pnand %p512, %p513
      %p515 = pneg %p514
      // Predicated region
      $region69: #{wav2vec2_forward.12} parent=5 // pred_check
        _
      $region70: #{wav2vec2_forward.12} parent=5 // pred_check_branch
        %517 = sbr.rel (%p514) target = $region72
      $region71: #{wav2vec2_forward.12} parent=5 // pred_region
        %s518 = ssub.s32 %s31, 1
        %s519 = sand.u32 %s44, 1
        %s520 = scalar_lea.sflag [#allocation3], %s519
        %s521 = sand.u32 %s44, 1
        %s522 = smul.addr %s521, 4
        %s523 = scalar_lea.vmem [#allocation2], %s522
        // Predicated region
        $region73: #{wav2vec2_forward.12} parent=71 // pred_check
          %p524 = pneg %p57
        $region74: #{wav2vec2_forward.12} parent=71 // pred_check_branch
          %526 = sbr.rel (%p524) target = $region76
        $region75: #{wav2vec2_forward.12} parent=71 // pred_region
          %527 = dma.done %s520, 64
        $region76: #{wav2vec2_forward.12} parent=71 // pred_fallthru
          _
        // Predicated region
        $region77: #{wav2vec2_forward.12} parent=71 // pred_check
          %p528 = pneg %p78
        $region78: #{wav2vec2_forward.12} parent=71 // pred_check_branch
          %530 = sbr.rel (%p528) target = $region80
        $region79: #{wav2vec2_forward.12} parent=71 // pred_region
          %531 = dma.done [#allocation6], 16
        $region80: #{wav2vec2_forward.12} parent=71 // pred_fallthru
          _
        // Predicated region
        $region81: #{wav2vec2_forward.12} parent=71 // pred_check
          %p532 = pneg %p99
        $region82: #{wav2vec2_forward.12} parent=71 // pred_check_branch
          %534 = sbr.rel (%p532) target = $region84
        $region83: #{wav2vec2_forward.12} parent=71 // pred_region
          %535 = dma.done [#allocation6], 16
        $region84: #{wav2vec2_forward.12} parent=71 // pred_fallthru
          _
        // Predicated region
        $region85: #{wav2vec2_forward.12} parent=71 // pred_check
          %p536 = pneg %p120
        $region86: #{wav2vec2_forward.12} parent=71 // pred_check_branch
          %538 = sbr.rel (%p536) target = $region88
        $region87: #{wav2vec2_forward.12} parent=71 // pred_region
          %539 = dma.done [#allocation9], 256
        $region88: #{wav2vec2_forward.12} parent=71 // pred_fallthru
          _
        // Predicated region
        $region89: #{wav2vec2_forward.12} parent=71 // pred_check
          %p540 = pneg %p141
        $region90: #{wav2vec2_forward.12} parent=71 // pred_check_branch
          %542 = sbr.rel (%p540) target = $region92
        $region91: #{wav2vec2_forward.12} parent=71 // pred_region
          %543 = dma.done [#allocation9], 16
        $region92: #{wav2vec2_forward.12} parent=71 // pred_fallthru
          _
        // Predicated region
        $region93: #{wav2vec2_forward.12} parent=71 // pred_check
          %p544 = pneg %p162
        $region94: #{wav2vec2_forward.12} parent=71 // pred_check_branch
          %546 = sbr.rel (%p544) target = $region96
        $region95: #{wav2vec2_forward.12} parent=71 // pred_region
          %547 = dma.done [#allocation12], 256
        $region96: #{wav2vec2_forward.12} parent=71 // pred_fallthru
          _
        // Predicated region
        $region97: #{wav2vec2_forward.12} parent=71 // pred_check
          %p548 = pneg %p183
        $region98: #{wav2vec2_forward.12} parent=71 // pred_check_branch
          %550 = sbr.rel (%p548) target = $region100
        $region99: #{wav2vec2_forward.12} parent=71 // pred_region
          %551 = dma.done [#allocation12], 16
        $region100: #{wav2vec2_forward.12} parent=71 // pred_fallthru
          _
        // Predicated region
        $region101: #{wav2vec2_forward.12} parent=71 // pred_check
          %p552 = pneg %p204
        $region102: #{wav2vec2_forward.12} parent=71 // pred_check_branch
          %554 = sbr.rel (%p552) target = $region104
        $region103: #{wav2vec2_forward.12} parent=71 // pred_region
          %555 = dma.done [#allocation15], 16
        $region104: #{wav2vec2_forward.12} parent=71 // pred_fallthru
          _
        // Predicated region
        $region105: #{wav2vec2_forward.12} parent=71 // pred_check
          %p556 = pneg %p225
        $region106: #{wav2vec2_forward.12} parent=71 // pred_check_branch
          %558 = sbr.rel (%p556) target = $region108
        $region107: #{wav2vec2_forward.12} parent=71 // pred_region
          %559 = dma.done [#allocation15], 16
        $region108: #{wav2vec2_forward.12} parent=71 // pred_fallthru
          _
        // Predicated region
        $region109: #{wav2vec2_forward.12} parent=71 // pred_check
          %p560 = pneg %p246
        $region110: #{wav2vec2_forward.12} parent=71 // pred_check_branch
          %562 = sbr.rel (%p560) target = $region112
        $region111: #{wav2vec2_forward.12} parent=71 // pred_region
          %563 = dma.done [#allocation18], 256
        $region112: #{wav2vec2_forward.12} parent=71 // pred_fallthru
          _
        // Predicated region
        $region113: #{wav2vec2_forward.12} parent=71 // pred_check
          %p564 = pneg %p267
        $region114: #{wav2vec2_forward.12} parent=71 // pred_check_branch
          %566 = sbr.rel (%p564) target = $region116
        $region115: #{wav2vec2_forward.12} parent=71 // pred_region
          %567 = dma.done [#allocation18], 16
        $region116: #{wav2vec2_forward.12} parent=71 // pred_fallthru
          _
        // Predicated region
        $region117: #{wav2vec2_forward.12} parent=71 // pred_check
          %p568 = pneg %p288
        $region118: #{wav2vec2_forward.12} parent=71 // pred_check_branch
          %570 = sbr.rel (%p568) target = $region120
        $region119: #{wav2vec2_forward.12} parent=71 // pred_region
          %571 = dma.done [#allocation21], 512
        $region120: #{wav2vec2_forward.12} parent=71 // pred_fallthru
          _
        // Predicated region
        $region121: #{wav2vec2_forward.12} parent=71 // pred_check
          %p572 = pneg %p309
        $region122: #{wav2vec2_forward.12} parent=71 // pred_check_branch
          %574 = sbr.rel (%p572) target = $region124
        $region123: #{wav2vec2_forward.12} parent=71 // pred_region
          %575 = dma.done [#allocation21], 16
        $region124: #{wav2vec2_forward.12} parent=71 // pred_fallthru
          _
        %s576 = sand.u32 %s44, 1
        %s577 = scalar_lea.sflag [#allocation3], %s576
        %s578 = sand.u32 %s44, 1
        %s579 = smul.addr %s578, 4
        %s580 = scalar_lea.vmem [#allocation2], %s579
        %p581 = pneg %p57
        %p582 = pneg %p54
        %p583 = pneg %p78
        %p584 = pneg %p75
        %p585 = pneg %p99
        %p586 = pneg %p96
        %p587 = pneg %p120
        %p588 = pneg %p117
        %p589 = pneg %p141
        %p590 = pneg %p138
        %p591 = pneg %p162
        %p592 = pneg %p159
        %p593 = pneg %p183
        %p594 = pneg %p180
        %p595 = pneg %p204
        %p596 = pneg %p201
        %p597 = pneg %p225
        %p598 = pneg %p222
        %p599 = pneg %p246
        %p600 = pneg %p243
        %p601 = pneg %p267
        %p602 = pneg %p264
        %p603 = pneg %p288
        %p604 = pneg %p285
        %p605 = pneg %p309
        %p606 = pneg %p306
        %p607 = pneg %p335
        %p608 = pneg %p332
        %s609 = sand.u32 %s322, 1
        %s610 = scalar_lea.sflag [#allocation4], %s609
        %s611 = sand.u32 %s322, 1
        %s612 = smul.addr %s611, 4
        %s613 = scalar_lea.vmem [#allocation23], %s612
        %v615 = vld [vmem:[%s523] sm:$0xf]
        %v616 = vunpack.c.l.bf16 %v615
        %v617 = vld [vmem:[#allocation5] sm:$0x1]
        %v618 = vld [vmem:[#allocation7] sm:$0x1]
        %vm619 = vcmask 261120
        %v620 = vsel %vm619, %v616, 0.0
        %621 = vadd.xlane.f32.xlu0 %v620
        %v622 = vpop.xlane.xlu0 %621
        %v623 = vrcp.pop 32.0
        %v624 = vmul.f32 %v622, %v623
        %v625 = vsub.f32 %v616, %v624
        %v626 = vmul.f32 %v625, %v625
        %v627 = vsel %vm619, %v626, 0.0
        %628 = vadd.xlane.f32.xlu0 %v627
        %v629 = vpop.xlane.xlu0 %628
        %v630 = vmul.f32 %v629, %v623
        %v631 = vadd.f32 %v630, 1e-05
        %v632 = vrsqrt.pop %v631
        %v633 = vmul.f32 %v625, %v632
        %v635 = vlaneseq
        %v636 = vshrl.u32 %v635, 7
        %v637 = vsub.s32 0, %v636
        %v638 = vrot.slane %v617, %v637
        %v640 = vmul.f32 %v633, %v638
        %v642 = vlaneseq
        %v643 = vshrl.u32 %v642, 7
        %v644 = vsub.s32 0, %v643
        %v645 = vrot.slane %v618, %v644
        %v647 = vadd.f32 %v640, %v645
        %v648 = vld [vmem:[#allocation8] sm:$0xf]
        %v649 = vld [vmem:[#allocation8 + $0x4] sm:$0xf]
        %v650 = vld [vmem:[#allocation8 + $0x8] sm:$0xf]
        %v651 = vld [vmem:[#allocation8 + $0xc] sm:$0xf]
        %v652 = vpack.c.bf16 %v647, %v647
        %v653 = vld [vmem:[#allocation10] sm:$0x1]
        %v655 = vlaneseq
        %v656 = vshrl.u32 %v655, 7
        %v657 = vsub.s32 0, %v656
        %v658 = vrot.slane %v653, %v657
        %v664 = vunpack.c.l.b16 %v648
        %v665 = vunpack.c.l.b16 %v649
        %v666 = vunpack.c.l.b16 %v650
        %v667 = vunpack.c.l.b16 %v651
        %v668 = vpack.c.b16 %v665, %v664
        %v669 = vpack.c.b16 %v667, %v666
        %v673 = vsel %vm619, %v652, 0
        %675 = vmatprep.subr.bf16.mxu0 0
        %676 = vmatpush1.bf16.msra.mxu0 %v668
        %677 = vmatprep.subr.bf16.mxu0 0
        %678 = vmatpush1.bf16.msra.mxu0 %v669
        %679 = vmatprep.subr.bf16.mxu0 0
        %680 = vmatpush1.bf16.msra.mxu0 0
        %681 = vmatprep.subr.bf16.mxu0 0
        %682 = vmatpush1.bf16.msra.mxu0 0
        %683 = vmatprep.subr.bf16.mxu0 0
        %684 = vmatpush1.bf16.msra.mxu0 0
        %685 = vmatprep.subr.bf16.mxu0 0
        %686 = vmatpush1.bf16.msra.mxu0 0
        %687 = vmatprep.subr.bf16.mxu0 0
        %688 = vmatpush1.bf16.msra.mxu0 0
        %689 = vmatprep.subr.bf16.mxu0 0
        %690 = vmatpush1.bf16.msra.mxu0 0
        %691 = vmatprep.subr.bf16.mxu0 0
        %692 = vmatpush1.bf16.msra.mxu0 0
        %693 = vmatprep.subr.bf16.mxu0 0
        %694 = vmatpush1.bf16.msra.mxu0 0
        %695 = vmatprep.subr.bf16.mxu0 0
        %696 = vmatpush1.bf16.msra.mxu0 0
        %697 = vmatprep.subr.bf16.mxu0 0
        %698 = vmatpush1.bf16.msra.mxu0 0
        %699 = vmatprep.subr.bf16.mxu0 0
        %700 = vmatpush1.bf16.msra.mxu0 0
        %701 = vmatprep.subr.bf16.mxu0 0
        %702 = vmatpush1.bf16.msra.mxu0 0
        %703 = vmatprep.subr.bf16.mxu0 0
        %704 = vmatpush1.bf16.msra.mxu0 0
        %705 = vmatprep.subr.bf16.mxu0 0
        %706 = vmatpush1.bf16.msra.mxu0 0
        %707 = vmatprep.mubr.bf16.mxu0 0
        %708 = vmatmul.mubr.bf16.gmra.mrb[0].mxu0 %v673
        %v709 = vpop.f32.mrb[0].mxu0
        %v710 = vadd.f32 %v658, %v709
        %v711 = vpop.f32.mrb[0].mxu0
        %v712 = vpop.f32.mrb[0].mxu0
        %v713 = vpop.f32.mrb[0].mxu0
        %714 = vdwg.mxu0
        %v715 = vmul.f32 %v710, 0.35355338
        %717 = vrot.lane.b32.xlu0 %v715, 120
        %v718 = vpop.permute.xlu0 %717
        %720 = vrot.lane.b32.xlu0 %v715, 112
        %v721 = vpop.permute.xlu0 %720
        %723 = vrot.lane.b32.xlu0 %v715, 104
        %v724 = vpop.permute.xlu0 %723
        %v726 = vcombine.low %v715, %v721
        %v727 = vcombine.high %v715, %v721
        %v729 = vunpack.c.l.s4 1983009808
        %v730 = vunpack.c.0.s8 %v729
        %v731 = vlaneseq
        %v732 = vshrl.u32 %v731, 7
        %v733 = vsub.s32 %v730, %v732
        %v734 = vrot.slane %v726, %v733
        %v736 = vunpack.c.l.s4 1983009808
        %v737 = vunpack.c.0.s8 %v736
        %v738 = vlaneseq
        %v739 = vshrl.u32 %v738, 7
        %v740 = vsub.s32 %v737, %v739
        %v741 = vrot.slane %v727, %v740
        %v742 = vcombine.low %v718, %v724
        %v743 = vcombine.high %v718, %v724
        %v745 = vunpack.c.l.s4 1983009808
        %v746 = vunpack.c.0.s8 %v745
        %v747 = vlaneseq
        %v748 = vshrl.u32 %v747, 7
        %v749 = vsub.s32 %v746, %v748
        %v750 = vrot.slane %v742, %v749
        %v752 = vunpack.c.l.s4 1983009808
        %v753 = vunpack.c.0.s8 %v752
        %v754 = vlaneseq
        %v755 = vshrl.u32 %v754, 7
        %v756 = vsub.s32 %v753, %v755
        %v757 = vrot.slane %v743, %v756
        %v758 = vcombine.low %v734, %v750
        %v759 = vcombine.high %v734, %v750
        %v761 = vunpack.c.l.s4 1934713408
        %v762 = vunpack.c.0.s8 %v761
        %v763 = vlaneseq
        %v764 = vshrl.u32 %v763, 7
        %v765 = vsub.s32 %v762, %v764
        %v766 = vrot.slane %v758, %v765
        %v768 = vunpack.c.l.s4 1934713408
        %v769 = vunpack.c.0.s8 %v768
        %v770 = vlaneseq
        %v771 = vshrl.u32 %v770, 7
        %v772 = vsub.s32 %v769, %v771
        %v773 = vrot.slane %v759, %v772
        %v774 = vcombine.low %v741, %v757
        %v775 = vcombine.high %v741, %v757
        %v777 = vunpack.c.l.s4 1934713408
        %v778 = vunpack.c.0.s8 %v777
        %v779 = vlaneseq
        %v780 = vshrl.u32 %v779, 7
        %v781 = vsub.s32 %v778, %v780
        %v782 = vrot.slane %v774, %v781
        %v784 = vunpack.c.l.s4 1934713408
        %v785 = vunpack.c.0.s8 %v784
        %v786 = vlaneseq
        %v787 = vshrl.u32 %v786, 7
        %v788 = vsub.s32 %v785, %v787
        %v789 = vrot.slane %v775, %v788
        %v790 = vcombine.high %v766, 0.0
        %v791 = vcombine.high %v773, 0.0
        %v792 = vcombine.high %v782, 0.0
        %v793 = vcombine.high %v789, 0.0
        %v794 = vpack.c.bf16 %v766, %v766
        %v795 = vpack.c.bf16 %v790, %v790
        %v796 = vpack.c.bf16 %v773, %v773
        %v797 = vpack.c.bf16 %v791, %v791
        %v798 = vpack.c.bf16 %v782, %v782
        %v799 = vpack.c.bf16 %v792, %v792
        %v800 = vpack.c.bf16 %v789, %v789
        %v801 = vpack.c.bf16 %v793, %v793
        %803 = vrot.lane.b32.xlu0 %v710, 120
        %v804 = vpop.permute.xlu0 %803
        %805 = vrot.lane.b32.xlu0 %v710, 112
        %v806 = vpop.permute.xlu0 %805
        %807 = vrot.lane.b32.xlu0 %v710, 104
        %v808 = vpop.permute.xlu0 %807
        %809 = vrot.lane.b32.xlu0 %v710, 96
        %v810 = vpop.permute.xlu0 %809
        %811 = vrot.lane.b32.xlu0 %v804, 96
        %v812 = vpop.permute.xlu0 %811
        %813 = vrot.lane.b32.xlu0 %v806, 96
        %v814 = vpop.permute.xlu0 %813
        %815 = vrot.lane.b32.xlu0 %v808, 96
        %v816 = vpop.permute.xlu0 %815
        %v821 = vcombine.low %v810, %v814
        %v822 = vcombine.high %v810, %v814
        %v824 = vunpack.c.l.s4 1983009808
        %v825 = vunpack.c.0.s8 %v824
        %v826 = vlaneseq
        %v827 = vshrl.u32 %v826, 7
        %v828 = vsub.s32 %v825, %v827
        %v829 = vrot.slane %v821, %v828
        %v831 = vunpack.c.l.s4 1983009808
        %v832 = vunpack.c.0.s8 %v831
        %v833 = vlaneseq
        %v834 = vshrl.u32 %v833, 7
        %v835 = vsub.s32 %v832, %v834
        %v836 = vrot.slane %v822, %v835
        %v837 = vcombine.low %v812, %v816
        %v838 = vcombine.high %v812, %v816
        %v840 = vunpack.c.l.s4 1983009808
        %v841 = vunpack.c.0.s8 %v840
        %v842 = vlaneseq
        %v843 = vshrl.u32 %v842, 7
        %v844 = vsub.s32 %v841, %v843
        %v845 = vrot.slane %v837, %v844
        %v847 = vunpack.c.l.s4 1983009808
        %v848 = vunpack.c.0.s8 %v847
        %v849 = vlaneseq
        %v850 = vshrl.u32 %v849, 7
        %v851 = vsub.s32 %v848, %v850
        %v852 = vrot.slane %v838, %v851
        %v853 = vcombine.low %v829, %v845
        %v854 = vcombine.high %v829, %v845
        %v856 = vunpack.c.l.s4 1934713408
        %v857 = vunpack.c.0.s8 %v856
        %v858 = vlaneseq
        %v859 = vshrl.u32 %v858, 7
        %v860 = vsub.s32 %v857, %v859
        %v861 = vrot.slane %v853, %v860
        %v863 = vunpack.c.l.s4 1934713408
        %v864 = vunpack.c.0.s8 %v863
        %v865 = vlaneseq
        %v866 = vshrl.u32 %v865, 7
        %v867 = vsub.s32 %v864, %v866
        %v868 = vrot.slane %v854, %v867
        %v869 = vcombine.low %v836, %v852
        %v870 = vcombine.high %v836, %v852
        %v872 = vunpack.c.l.s4 1934713408
        %v873 = vunpack.c.0.s8 %v872
        %v874 = vlaneseq
        %v875 = vshrl.u32 %v874, 7
        %v876 = vsub.s32 %v873, %v875
        %v877 = vrot.slane %v869, %v876
        %v879 = vunpack.c.l.s4 1934713408
        %v880 = vunpack.c.0.s8 %v879
        %v881 = vlaneseq
        %v882 = vshrl.u32 %v881, 7
        %v883 = vsub.s32 %v880, %v882
        %v884 = vrot.slane %v870, %v883
        %v885 = vcombine.high %v861, 0.0
        %v886 = vcombine.high %v868, 0.0
        %v887 = vcombine.high %v877, 0.0
        %v888 = vcombine.high %v884, 0.0
        %v889 = vpack.c.bf16 %v861, %v861
        %v890 = vpack.c.bf16 %v885, %v885
        %v891 = vpack.c.bf16 %v868, %v868
        %v892 = vpack.c.bf16 %v886, %v886
        %v893 = vpack.c.bf16 %v877, %v877
        %v894 = vpack.c.bf16 %v887, %v887
        %v895 = vpack.c.bf16 %v884, %v884
        %v896 = vpack.c.bf16 %v888, %v888
        %897 = vrot.lane.b32.xlu0 %v710, 64
        %v898 = vpop.permute.xlu0 %897
        %899 = vrot.lane.b32.xlu0 %v804, 64
        %v900 = vpop.permute.xlu0 %899
        %901 = vrot.lane.b32.xlu0 %v806, 64
        %v902 = vpop.permute.xlu0 %901
        %903 = vrot.lane.b32.xlu0 %v808, 64
        %v904 = vpop.permute.xlu0 %903
        %v909 = vcombine.low %v898, %v902
        %v910 = vcombine.high %v898, %v902
        %v912 = vunpack.c.l.s4 1983009808
        %v913 = vunpack.c.0.s8 %v912
        %v914 = vlaneseq
        %v915 = vshrl.u32 %v914, 7
        %v916 = vsub.s32 %v913, %v915
        %v917 = vrot.slane %v909, %v916
        %v919 = vunpack.c.l.s4 1983009808
        %v920 = vunpack.c.0.s8 %v919
        %v921 = vlaneseq
        %v922 = vshrl.u32 %v921, 7
        %v923 = vsub.s32 %v920, %v922
        %v924 = vrot.slane %v910, %v923
        %v925 = vcombine.low %v900, %v904
        %v926 = vcombine.high %v900, %v904
        %v928 = vunpack.c.l.s4 1983009808
        %v929 = vunpack.c.0.s8 %v928
        %v930 = vlaneseq
        %v931 = vshrl.u32 %v930, 7
        %v932 = vsub.s32 %v929, %v931
        %v933 = vrot.slane %v925, %v932
        %v935 = vunpack.c.l.s4 1983009808
        %v936 = vunpack.c.0.s8 %v935
        %v937 = vlaneseq
        %v938 = vshrl.u32 %v937, 7
        %v939 = vsub.s32 %v936, %v938
        %v940 = vrot.slane %v926, %v939
        %v941 = vcombine.low %v917, %v933
        %v942 = vcombine.high %v917, %v933
        %v944 = vunpack.c.l.s4 1934713408
        %v945 = vunpack.c.0.s8 %v944
        %v946 = vlaneseq
        %v947 = vshrl.u32 %v946, 7
        %v948 = vsub.s32 %v945, %v947
        %v949 = vrot.slane %v941, %v948
        %v951 = vunpack.c.l.s4 1934713408
        %v952 = vunpack.c.0.s8 %v951
        %v953 = vlaneseq
        %v954 = vshrl.u32 %v953, 7
        %v955 = vsub.s32 %v952, %v954
        %v956 = vrot.slane %v942, %v955
        %v957 = vcombine.low %v924, %v940
        %v958 = vcombine.high %v924, %v940
        %v960 = vunpack.c.l.s4 1934713408
        %v961 = vunpack.c.0.s8 %v960
        %v962 = vlaneseq
        %v963 = vshrl.u32 %v962, 7
        %v964 = vsub.s32 %v961, %v963
        %v965 = vrot.slane %v957, %v964
        %v967 = vunpack.c.l.s4 1934713408
        %v968 = vunpack.c.0.s8 %v967
        %v969 = vlaneseq
        %v970 = vshrl.u32 %v969, 7
        %v971 = vsub.s32 %v968, %v970
        %v972 = vrot.slane %v958, %v971
        %v973 = vcombine.high %v949, 0.0
        %v974 = vcombine.high %v956, 0.0
        %v975 = vcombine.high %v965, 0.0
        %v976 = vcombine.high %v972, 0.0
        %v977 = vpack.c.bf16 %v949, %v949
        %v978 = vpack.c.bf16 %v973, %v973
        %v979 = vpack.c.bf16 %v956, %v956
        %v980 = vpack.c.bf16 %v974, %v974
        %v981 = vpack.c.bf16 %v965, %v965
        %v982 = vpack.c.bf16 %v975, %v975
        %v983 = vpack.c.bf16 %v972, %v972
        %v984 = vpack.c.bf16 %v976, %v976
        %v985 = vcombine.low %v794, %v798
        %v987 = vunpack.c.l.s4 1983009808
        %v988 = vunpack.c.0.s8 %v987
        %v989 = vlaneseq
        %v990 = vshrl.u32 %v989, 7
        %v991 = vsub.s32 %v988, %v990
        %v992 = vrot.slane %v985, %v991
        %v993 = vcombine.low %v796, %v800
        %v995 = vunpack.c.l.s4 1983009808
        %v996 = vunpack.c.0.s8 %v995
        %v997 = vlaneseq
        %v998 = vshrl.u32 %v997, 7
        %v999 = vsub.s32 %v996, %v998
        %v1000 = vrot.slane %v993, %v999
        %v1001 = vcombine.low %v992, %v1000
        %v1003 = vunpack.c.l.s4 1934713408
        %v1004 = vunpack.c.0.s8 %v1003
        %v1005 = vlaneseq
        %v1006 = vshrl.u32 %v1005, 7
        %v1007 = vsub.s32 %v1004, %v1006
        %v1008 = vrot.slane %v1001, %v1007
        %v1009 = vcombine.high %v1008, 0
        %v1010 = vcombine.low %v795, %v799
        %v1012 = vunpack.c.l.s4 1983009808
        %v1013 = vunpack.c.0.s8 %v1012
        %v1014 = vlaneseq
        %v1015 = vshrl.u32 %v1014, 7
        %v1016 = vsub.s32 %v1013, %v1015
        %v1017 = vrot.slane %v1010, %v1016
        %v1018 = vcombine.low %v797, %v801
        %v1020 = vunpack.c.l.s4 1983009808
        %v1021 = vunpack.c.0.s8 %v1020
        %v1022 = vlaneseq
        %v1023 = vshrl.u32 %v1022, 7
        %v1024 = vsub.s32 %v1021, %v1023
        %v1025 = vrot.slane %v1018, %v1024
        %v1026 = vcombine.low %v1017, %v1025
        %v1028 = vunpack.c.l.s4 1934713408
        %v1029 = vunpack.c.0.s8 %v1028
        %v1030 = vlaneseq
        %v1031 = vshrl.u32 %v1030, 7
        %v1032 = vsub.s32 %v1029, %v1031
        %v1033 = vrot.slane %v1026, %v1032
        %v1034 = vcombine.high %v1033, 0
        %v1037 = vpack.i.b16 %v1033, %v1008
        %v1038 = vshrl.u32 %v1008, 16
        %v1039 = vshrl.u32 %v1033, 16
        %v1040 = vpack.i.b16 %v1039, %v1038
        %v1043 = vpack.i.b16 %v1034, %v1009
        %v1044 = vshrl.u32 %v1009, 16
        %v1045 = vshrl.u32 %v1034, 16
        %v1046 = vpack.i.b16 %v1045, %v1044
        %1047 = vxpose.xlu0.c.b16.start [1/8] %v889, 128
        %1048 = vxpose.xlu0.c.b16.cont [2/8] 0, 128
        %1049 = vxpose.xlu0.c.b16.cont [3/8] 0, 128
        %1050 = vxpose.xlu0.c.b16.cont [4/8] 0, 128
        %1051 = vxpose.xlu0.c.b16.cont [5/8] 0, 128
        %1052 = vxpose.xlu0.c.b16.cont [6/8] 0, 128
        %1053 = vxpose.xlu0.c.b16.cont [7/8] 0, 128
        %1054 = vxpose.xlu0.c.b16.end [8/8] 0, 128
        %v1055 = vpop.trf.xlu0
        %v1056 = vpop.trf.xlu0
        %v1057 = vpop.trf.xlu0
        %v1058 = vpop.trf.xlu0
        %v1059 = vpop.trf.xlu0
        %v1060 = vpop.trf.xlu0
        %v1061 = vpop.trf.xlu0
        %v1062 = vpop.trf.xlu0
        %1063 = vxpose.xlu0.c.b16.start [1/8] %v890, 128
        %1064 = vxpose.xlu0.c.b16.cont [2/8] 0, 128
        %1065 = vxpose.xlu0.c.b16.cont [3/8] 0, 128
        %1066 = vxpose.xlu0.c.b16.cont [4/8] 0, 128
        %1067 = vxpose.xlu0.c.b16.cont [5/8] 0, 128
        %1068 = vxpose.xlu0.c.b16.cont [6/8] 0, 128
        %1069 = vxpose.xlu0.c.b16.cont [7/8] 0, 128
        %1070 = vxpose.xlu0.c.b16.end [8/8] 0, 128
        %v1071 = vpop.trf.xlu0
        %v1072 = vpop.trf.xlu0
        %v1073 = vpop.trf.xlu0
        %v1074 = vpop.trf.xlu0
        %v1075 = vpop.trf.xlu0
        %v1076 = vpop.trf.xlu0
        %v1077 = vpop.trf.xlu0
        %v1078 = vpop.trf.xlu0
        %1079 = vxpose.xlu0.c.b16.start [1/8] %v891, 128
        %1080 = vxpose.xlu0.c.b16.cont [2/8] 0, 128
        %1081 = vxpose.xlu0.c.b16.cont [3/8] 0, 128
        %1082 = vxpose.xlu0.c.b16.cont [4/8] 0, 128
        %1083 = vxpose.xlu0.c.b16.cont [5/8] 0, 128
        %1084 = vxpose.xlu0.c.b16.cont [6/8] 0, 128
        %1085 = vxpose.xlu0.c.b16.cont [7/8] 0, 128
        %1086 = vxpose.xlu0.c.b16.end [8/8] 0, 128
        %v1087 = vpop.trf.xlu0
        %v1088 = vpop.trf.xlu0
        %v1089 = vpop.trf.xlu0
        %v1090 = vpop.trf.xlu0
        %v1091 = vpop.trf.xlu0
        %v1092 = vpop.trf.xlu0
        %v1093 = vpop.trf.xlu0
        %v1094 = vpop.trf.xlu0
        %1095 = vxpose.xlu0.c.b16.start [1/8] %v892, 128
        %1096 = vxpose.xlu0.c.b16.cont [2/8] 0, 128
        %1097 = vxpose.xlu0.c.b16.cont [3/8] 0, 128
        %1098 = vxpose.xlu0.c.b16.cont [4/8] 0, 128
        %1099 = vxpose.xlu0.c.b16.cont [5/8] 0, 128
        %1100 = vxpose.xlu0.c.b16.cont [6/8] 0, 128
        %1101 = vxpose.xlu0.c.b16.cont [7/8] 0, 128
        %1102 = vxpose.xlu0.c.b16.end [8/8] 0, 128
        %v1103 = vpop.trf.xlu0
        %v1104 = vpop.trf.xlu0
        %v1105 = vpop.trf.xlu0
        %v1106 = vpop.trf.xlu0
        %v1107 = vpop.trf.xlu0
        %v1108 = vpop.trf.xlu0
        %v1109 = vpop.trf.xlu0
        %v1110 = vpop.trf.xlu0
        %1111 = vxpose.xlu0.c.b16.start [1/8] %v893, 128
        %1112 = vxpose.xlu0.c.b16.cont [2/8] 0, 128
        %1113 = vxpose.xlu0.c.b16.cont [3/8] 0, 128
        %1114 = vxpose.xlu0.c.b16.cont [4/8] 0, 128
        %1115 = vxpose.xlu0.c.b16.cont [5/8] 0, 128
        %1116 = vxpose.xlu0.c.b16.cont [6/8] 0, 128
        %1117 = vxpose.xlu0.c.b16.cont [7/8] 0, 128
        %1118 = vxpose.xlu0.c.b16.end [8/8] 0, 128
        %v1119 = vpop.trf.xlu0
        %v1120 = vpop.trf.xlu0
        %v1121 = vpop.trf.xlu0
        %v1122 = vpop.trf.xlu0
        %v1123 = vpop.trf.xlu0
        %v1124 = vpop.trf.xlu0
        %v1125 = vpop.trf.xlu0
        %v1126 = vpop.trf.xlu0
        %1127 = vxpose.xlu0.c.b16.start [1/8] %v894, 128
        %1128 = vxpose.xlu0.c.b16.cont [2/8] 0, 128
        %1129 = vxpose.xlu0.c.b16.cont [3/8] 0, 128
        %1130 = vxpose.xlu0.c.b16.cont [4/8] 0, 128
        %1131 = vxpose.xlu0.c.b16.cont [5/8] 0, 128
        %1132 = vxpose.xlu0.c.b16.cont [6/8] 0, 128
        %1133 = vxpose.xlu0.c.b16.cont [7/8] 0, 128
        %1134 = vxpose.xlu0.c.b16.end [8/8] 0, 128
        %v1135 = vpop.trf.xlu0
        %v1136 = vpop.trf.xlu0
        %v1137 = vpop.trf.xlu0
        %v1138 = vpop.trf.xlu0
        %v1139 = vpop.trf.xlu0
        %v1140 = vpop.trf.xlu0
        %v1141 = vpop.trf.xlu0
        %v1142 = vpop.trf.xlu0
        %1143 = vxpose.xlu0.c.b16.start [1/8] %v895, 128
        %1144 = vxpose.xlu0.c.b16.cont [2/8] 0, 128
        %1145 = vxpose.xlu0.c.b16.cont [3/8] 0, 128
        %1146 = vxpose.xlu0.c.b16.cont [4/8] 0, 128
        %1147 = vxpose.xlu0.c.b16.cont [5/8] 0, 128
        %1148 = vxpose.xlu0.c.b16.cont [6/8] 0, 128
        %1149 = vxpose.xlu0.c.b16.cont [7/8] 0, 128
        %1150 = vxpose.xlu0.c.b16.end [8/8] 0, 128
        %v1151 = vpop.trf.xlu0
        %v1152 = vpop.trf.xlu0
        %v1153 = vpop.trf.xlu0
        %v1154 = vpop.trf.xlu0
        %v1155 = vpop.trf.xlu0
        %v1156 = vpop.trf.xlu0
        %v1157 = vpop.trf.xlu0
        %v1158 = vpop.trf.xlu0
        %1159 = vxpose.xlu0.c.b16.start [1/8] %v896, 128
        %1160 = vxpose.xlu0.c.b16.cont [2/8] 0, 128
        %1161 = vxpose.xlu0.c.b16.cont [3/8] 0, 128
        %1162 = vxpose.xlu0.c.b16.cont [4/8] 0, 128
        %1163 = vxpose.xlu0.c.b16.cont [5/8] 0, 128
        %1164 = vxpose.xlu0.c.b16.cont [6/8] 0, 128
        %1165 = vxpose.xlu0.c.b16.cont [7/8] 0, 128
        %1166 = vxpose.xlu0.c.b16.end [8/8] 0, 128
        %v1167 = vpop.trf.xlu0
        %v1168 = vpop.trf.xlu0
        %v1169 = vpop.trf.xlu0
        %v1170 = vpop.trf.xlu0
        %v1171 = vpop.trf.xlu0
        %v1172 = vpop.trf.xlu0
        %v1173 = vpop.trf.xlu0
        %v1174 = vpop.trf.xlu0
        %v1175 = vcombine.low %v1055, %v1119
        %v1177 = vunpack.c.l.s4 1983009808
        %v1178 = vunpack.c.0.s8 %v1177
        %v1179 = vlaneseq
        %v1180 = vshrl.u32 %v1179, 7
        %v1181 = vsub.s32 %v1178, %v1180
        %v1182 = vrot.slane %v1175, %v1181
        %v1183 = vcombine.low %v1087, %v1151
        %v1185 = vunpack.c.l.s4 1983009808
        %v1186 = vunpack.c.0.s8 %v1185
        %v1187 = vlaneseq
        %v1188 = vshrl.u32 %v1187, 7
        %v1189 = vsub.s32 %v1186, %v1188
        %v1190 = vrot.slane %v1183, %v1189
        %v1191 = vcombine.low %v1182, %v1190
        %v1192 = vcombine.high %v1182, %v1190
        %v1194 = vunpack.c.l.s4 1934713408
        %v1195 = vunpack.c.0.s8 %v1194
        %v1196 = vlaneseq
        %v1197 = vshrl.u32 %v1196, 7
        %v1198 = vsub.s32 %v1195, %v1197
        %v1199 = vrot.slane %v1191, %v1198
        %v1201 = vunpack.c.l.s4 1934713408
        %v1202 = vunpack.c.0.s8 %v1201
        %v1203 = vlaneseq
        %v1204 = vshrl.u32 %v1203, 7
        %v1205 = vsub.s32 %v1202, %v1204
        %v1206 = vrot.slane %v1192, %v1205
        %v1207 = vcombine.high %v1199, 0
        %v1208 = vcombine.high %v1206, 0
        %v1209 = vcombine.low %v1071, %v1135
        %v1211 = vunpack.c.l.s4 1983009808
        %v1212 = vunpack.c.0.s8 %v1211
        %v1213 = vlaneseq
        %v1214 = vshrl.u32 %v1213, 7
        %v1215 = vsub.s32 %v1212, %v1214
        %v1216 = vrot.slane %v1209, %v1215
        %v1217 = vcombine.low %v1103, %v1167
        %v1219 = vunpack.c.l.s4 1983009808
        %v1220 = vunpack.c.0.s8 %v1219
        %v1221 = vlaneseq
        %v1222 = vshrl.u32 %v1221, 7
        %v1223 = vsub.s32 %v1220, %v1222
        %v1224 = vrot.slane %v1217, %v1223
        %v1225 = vcombine.low %v1216, %v1224
        %v1226 = vcombine.high %v1216, %v1224
        %v1228 = vunpack.c.l.s4 1934713408
        %v1229 = vunpack.c.0.s8 %v1228
        %v1230 = vlaneseq
        %v1231 = vshrl.u32 %v1230, 7
        %v1232 = vsub.s32 %v1229, %v1231
        %v1233 = vrot.slane %v1225, %v1232
        %v1235 = vunpack.c.l.s4 1934713408
        %v1236 = vunpack.c.0.s8 %v1235
        %v1237 = vlaneseq
        %v1238 = vshrl.u32 %v1237, 7
        %v1239 = vsub.s32 %v1236, %v1238
        %v1240 = vrot.slane %v1226, %v1239
        %v1241 = vcombine.high %v1233, 0
        %v1242 = vcombine.high %v1240, 0
        %v1245 = vpack.i.b16 %v1233, %v1199
        %v1247 = vshrl.u32 %v1199, 16
        %v1248 = vshrl.u32 %v1233, 16
        %v1249 = vpack.i.b16 %v1248, %v1247
        %v1253 = vpack.i.b16 %v1241, %v1207
        %v1255 = vshrl.u32 %v1207, 16
        %v1256 = vshrl.u32 %v1241, 16
        %v1257 = vpack.i.b16 %v1256, %v1255
        %v1261 = vpack.i.b16 %v1240, %v1206
        %v1263 = vshrl.u32 %v1206, 16
        %v1264 = vshrl.u32 %v1240, 16
        %v1265 = vpack.i.b16 %v1264, %v1263
        %v1269 = vpack.i.b16 %v1242, %v1208
        %v1271 = vshrl.u32 %v1208, 16
        %v1272 = vshrl.u32 %v1242, 16
        %v1273 = vpack.i.b16 %v1272, %v1271
        %1275 = vxpose.xlu0.c.b16.start [1/8] %v1245, 128
        %1276 = vxpose.xlu0.c.b16.cont [2/8] 0, 128
        %1277 = vxpose.xlu0.c.b16.cont [3/8] 0, 128
        %1278 = vxpose.xlu0.c.b16.cont [4/8] 0, 128
        %1279 = vxpose.xlu0.c.b16.cont [5/8] 0, 128
        %1280 = vxpose.xlu0.c.b16.cont [6/8] 0, 128
        %1281 = vxpose.xlu0.c.b16.cont [7/8] 0, 128
        %1282 = vxpose.xlu0.c.b16.end [8/8] 0, 128
        %v1283 = vpop.trf.xlu0
        %v1284 = vpop.trf.xlu0
        %v1285 = vpop.trf.xlu0
        %v1286 = vpop.trf.xlu0
        %v1287 = vpop.trf.xlu0
        %v1288 = vpop.trf.xlu0
        %v1289 = vpop.trf.xlu0
        %v1290 = vpop.trf.xlu0
        %1291 = vxpose.xlu0.c.b16.start [1/8] %v1249, 128
        %1292 = vxpose.xlu0.c.b16.cont [2/8] 0, 128
        %1293 = vxpose.xlu0.c.b16.cont [3/8] 0, 128
        %1294 = vxpose.xlu0.c.b16.cont [4/8] 0, 128
        %1295 = vxpose.xlu0.c.b16.cont [5/8] 0, 128
        %1296 = vxpose.xlu0.c.b16.cont [6/8] 0, 128
        %1297 = vxpose.xlu0.c.b16.cont [7/8] 0, 128
        %1298 = vxpose.xlu0.c.b16.end [8/8] 0, 128
        %v1299 = vpop.trf.xlu0
        %v1300 = vpop.trf.xlu0
        %v1301 = vpop.trf.xlu0
        %v1302 = vpop.trf.xlu0
        %v1303 = vpop.trf.xlu0
        %v1304 = vpop.trf.xlu0
        %v1305 = vpop.trf.xlu0
        %v1306 = vpop.trf.xlu0
        %1307 = vxpose.xlu0.c.b16.start [1/8] %v1253, 128
        %1308 = vxpose.xlu0.c.b16.cont [2/8] 0, 128
        %1309 = vxpose.xlu0.c.b16.cont [3/8] 0, 128
        %1310 = vxpose.xlu0.c.b16.cont [4/8] 0, 128
        %1311 = vxpose.xlu0.c.b16.cont [5/8] 0, 128
        %1312 = vxpose.xlu0.c.b16.cont [6/8] 0, 128
        %1313 = vxpose.xlu0.c.b16.cont [7/8] 0, 128
        %1314 = vxpose.xlu0.c.b16.end [8/8] 0, 128
        %v1315 = vpop.trf.xlu0
        %v1316 = vpop.trf.xlu0
        %v1317 = vpop.trf.xlu0
        %v1318 = vpop.trf.xlu0
        %v1319 = vpop.trf.xlu0
        %v1320 = vpop.trf.xlu0
        %v1321 = vpop.trf.xlu0
        %v1322 = vpop.trf.xlu0
        %1323 = vxpose.xlu0.c.b16.start [1/8] %v1257, 128
        %1324 = vxpose.xlu0.c.b16.cont [2/8] 0, 128
        %1325 = vxpose.xlu0.c.b16.cont [3/8] 0, 128
        %1326 = vxpose.xlu0.c.b16.cont [4/8] 0, 128
        %1327 = vxpose.xlu0.c.b16.cont [5/8] 0, 128
        %1328 = vxpose.xlu0.c.b16.cont [6/8] 0, 128
        %1329 = vxpose.xlu0.c.b16.cont [7/8] 0, 128
        %1330 = vxpose.xlu0.c.b16.end [8/8] 0, 128
        %v1331 = vpop.trf.xlu0
        %v1332 = vpop.trf.xlu0
        %v1333 = vpop.trf.xlu0
        %v1334 = vpop.trf.xlu0
        %v1335 = vpop.trf.xlu0
        %v1336 = vpop.trf.xlu0
        %v1337 = vpop.trf.xlu0
        %v1338 = vpop.trf.xlu0
        %1339 = vxpose.xlu0.c.b16.start [1/8] %v1261, 128
        %1340 = vxpose.xlu0.c.b16.cont [2/8] 0, 128
        %1341 = vxpose.xlu0.c.b16.cont [3/8] 0, 128
        %1342 = vxpose.xlu0.c.b16.cont [4/8] 0, 128
        %1343 = vxpose.xlu0.c.b16.cont [5/8] 0, 128
        %1344 = vxpose.xlu0.c.b16.cont [6/8] 0, 128
        %1345 = vxpose.xlu0.c.b16.cont [7/8] 0, 128
        %1346 = vxpose.xlu0.c.b16.end [8/8] 0, 128
        %v1347 = vpop.trf.xlu0
        %v1348 = vpop.trf.xlu0
        %v1349 = vpop.trf.xlu0
        %v1350 = vpop.trf.xlu0
        %v1351 = vpop.trf.xlu0
        %v1352 = vpop.trf.xlu0
        %v1353 = vpop.trf.xlu0
        %v1354 = vpop.trf.xlu0
        %1355 = vxpose.xlu0.c.b16.start [1/8] %v1265, 128
        %1356 = vxpose.xlu0.c.b16.cont [2/8] 0, 128
        %1357 = vxpose.xlu0.c.b16.cont [3/8] 0, 128
        %1358 = vxpose.xlu0.c.b16.cont [4/8] 0, 128
        %1359 = vxpose.xlu0.c.b16.cont [5/8] 0, 128
        %1360 = vxpose.xlu0.c.b16.cont [6/8] 0, 128
        %1361 = vxpose.xlu0.c.b16.cont [7/8] 0, 128
        %1362 = vxpose.xlu0.c.b16.end [8/8] 0, 128
        %v1363 = vpop.trf.xlu0
        %v1364 = vpop.trf.xlu0
        %v1365 = vpop.trf.xlu0
        %v1366 = vpop.trf.xlu0
        %v1367 = vpop.trf.xlu0
        %v1368 = vpop.trf.xlu0
        %v1369 = vpop.trf.xlu0
        %v1370 = vpop.trf.xlu0
        %1371 = vxpose.xlu0.c.b16.start [1/8] %v1269, 128
        %1372 = vxpose.xlu0.c.b16.cont [2/8] 0, 128
        %1373 = vxpose.xlu0.c.b16.cont [3/8] 0, 128
        %1374 = vxpose.xlu0.c.b16.cont [4/8] 0, 128
        %1375 = vxpose.xlu0.c.b16.cont [5/8] 0, 128
        %1376 = vxpose.xlu0.c.b16.cont [6/8] 0, 128
        %1377 = vxpose.xlu0.c.b16.cont [7/8] 0, 128
        %1378 = vxpose.xlu0.c.b16.end [8/8] 0, 128
        %v1379 = vpop.trf.xlu0
        %v1380 = vpop.trf.xlu0
        %v1381 = vpop.trf.xlu0
        %v1382 = vpop.trf.xlu0
        %v1383 = vpop.trf.xlu0
        %v1384 = vpop.trf.xlu0
        %v1385 = vpop.trf.xlu0
        %v1386 = vpop.trf.xlu0
        %1387 = vxpose.xlu0.c.b16.start [1/8] %v1273, 128
        %1388 = vxpose.xlu0.c.b16.cont [2/8] 0, 128
        %1389 = vxpose.xlu0.c.b16.cont [3/8] 0, 128
        %1390 = vxpose.xlu0.c.b16.cont [4/8] 0, 128
        %1391 = vxpose.xlu0.c.b16.cont [5/8] 0, 128
        %1392 = vxpose.xlu0.c.b16.cont [6/8] 0, 128
        %1393 = vxpose.xlu0.c.b16.cont [7/8] 0, 128
        %1394 = vxpose.xlu0.c.b16.end [8/8] 0, 128
        %v1395 = vpop.trf.xlu0
        %v1396 = vpop.trf.xlu0
        %v1397 = vpop.trf.xlu0
        %v1398 = vpop.trf.xlu0
        %v1399 = vpop.trf.xlu0
        %v1400 = vpop.trf.xlu0
        %v1401 = vpop.trf.xlu0
        %v1402 = vpop.trf.xlu0
        %v1403 = vcombine.low %v1283, %v1347
        %v1405 = vunpack.c.l.s4 1983009808
        %v1406 = vunpack.c.0.s8 %v1405
        %v1407 = vlaneseq
        %v1408 = vshrl.u32 %v1407, 7
        %v1409 = vsub.s32 %v1406, %v1408
        %v1410 = vrot.slane %v1403, %v1409
        %v1411 = vcombine.low %v1315, %v1379
        %v1413 = vunpack.c.l.s4 1983009808
        %v1414 = vunpack.c.0.s8 %v1413
        %v1415 = vlaneseq
        %v1416 = vshrl.u32 %v1415, 7
        %v1417 = vsub.s32 %v1414, %v1416
        %v1418 = vrot.slane %v1411, %v1417
        %v1419 = vcombine.low %v1410, %v1418
        %v1421 = vunpack.c.l.s4 1934713408
        %v1422 = vunpack.c.0.s8 %v1421
        %v1423 = vlaneseq
        %v1424 = vshrl.u32 %v1423, 7
        %v1425 = vsub.s32 %v1422, %v1424
        %v1426 = vrot.slane %v1419, %v1425
        %v1427 = vcombine.high %v1426, 0
        %v1428 = vcombine.low %v1299, %v1363
        %v1430 = vunpack.c.l.s4 1983009808
        %v1431 = vunpack.c.0.s8 %v1430
        %v1432 = vlaneseq
        %v1433 = vshrl.u32 %v1432, 7
        %v1434 = vsub.s32 %v1431, %v1433
        %v1435 = vrot.slane %v1428, %v1434
        %v1436 = vcombine.low %v1331, %v1395
        %v1438 = vunpack.c.l.s4 1983009808
        %v1439 = vunpack.c.0.s8 %v1438
        %v1440 = vlaneseq
        %v1441 = vshrl.u32 %v1440, 7
        %v1442 = vsub.s32 %v1439, %v1441
        %v1443 = vrot.slane %v1436, %v1442
        %v1444 = vcombine.low %v1435, %v1443
        %v1446 = vunpack.c.l.s4 1934713408
        %v1447 = vunpack.c.0.s8 %v1446
        %v1448 = vlaneseq
        %v1449 = vshrl.u32 %v1448, 7
        %v1450 = vsub.s32 %v1447, %v1449
        %v1451 = vrot.slane %v1444, %v1450
        %v1452 = vcombine.high %v1451, 0
        %v1455 = vpack.i.b16 %v1451, %v1426
        %v1456 = vshrl.u32 %v1426, 16
        %v1457 = vshrl.u32 %v1451, 16
        %v1458 = vpack.i.b16 %v1457, %v1456
        %v1461 = vpack.i.b16 %v1452, %v1427
        %v1462 = vshrl.u32 %v1427, 16
        %v1463 = vshrl.u32 %v1452, 16
        %v1464 = vpack.i.b16 %v1463, %v1462
        %vm1465 = vcmask 64512
        %v1467 = vsel %vm1465, %v1037, 0
        %vm1469 = vcmask 1043456
        %v1471 = vsel %vm1469, %v1455, 0
        %1473 = vmatprep.subr.bf16.mxu0 0
        %1474 = vmatpush1.bf16.msra.mxu0 %v1471
        %1475 = vmatprep.subr.bf16.mxu0 0
        %1476 = vmatpush1.bf16.msra.mxu0 0
        %1477 = vmatprep.subr.bf16.mxu0 0
        %1478 = vmatpush1.bf16.msra.mxu0 0
        %1479 = vmatprep.subr.bf16.mxu0 0
        %1480 = vmatpush1.bf16.msra.mxu0 0
        %1481 = vmatprep.subr.bf16.mxu0 0
        %1482 = vmatpush1.bf16.msra.mxu0 0
        %1483 = vmatprep.subr.bf16.mxu0 0
        %1484 = vmatpush1.bf16.msra.mxu0 0
        %1485 = vmatprep.subr.bf16.mxu0 0
        %1486 = vmatpush1.bf16.msra.mxu0 0
        %1487 = vmatprep.subr.bf16.mxu0 0
        %1488 = vmatpush1.bf16.msra.mxu0 0
        %1489 = vmatprep.subr.bf16.mxu0 0
        %1490 = vmatpush1.bf16.msra.mxu0 0
        %1491 = vmatprep.subr.bf16.mxu0 0
        %1492 = vmatpush1.bf16.msra.mxu0 0
        %1493 = vmatprep.subr.bf16.mxu0 0
        %1494 = vmatpush1.bf16.msra.mxu0 0
        %1495 = vmatprep.subr.bf16.mxu0 0
        %1496 = vmatpush1.bf16.msra.mxu0 0
        %1497 = vmatprep.subr.bf16.mxu0 0
        %1498 = vmatpush1.bf16.msra.mxu0 0
        %1499 = vmatprep.subr.bf16.mxu0 0
        %1500 = vmatpush1.bf16.msra.mxu0 0
        %1501 = vmatprep.subr.bf16.mxu0 0
        %1502 = vmatpush1.bf16.msra.mxu0 0
        %1503 = vmatprep.subr.bf16.mxu0 0
        %1504 = vmatpush1.bf16.msra.mxu0 0
        %1505 = vmatprep.mubr.bf16.mxu0 0
        %1506 = vmatmul.mubr.bf16.gmra.mrb[0].mxu0 %v1467
        %v1507 = vpop.f32.mrb[0].mxu0
        %v1508 = vadd.f32 0.0, %v1507
        %v1509 = vpop.f32.mrb[0].mxu0
        %v1510 = vpop.f32.mrb[0].mxu0
        %v1511 = vpop.f32.mrb[0].mxu0
        %1512 = vdwg.mxu0
        %v1514 = vsel %vm1465, %v1040, 0
        %v1517 = vsel %vm1469, %v1458, 0
        %1519 = vmatprep.subr.bf16.mxu0 0
        %1520 = vmatpush1.bf16.msra.mxu0 %v1517
        %1521 = vmatprep.subr.bf16.mxu0 0
        %1522 = vmatpush1.bf16.msra.mxu0 0
        %1523 = vmatprep.subr.bf16.mxu0 0
        %1524 = vmatpush1.bf16.msra.mxu0 0
        %1525 = vmatprep.subr.bf16.mxu0 0
        %1526 = vmatpush1.bf16.msra.mxu0 0
        %1527 = vmatprep.subr.bf16.mxu0 0
        %1528 = vmatpush1.bf16.msra.mxu0 0
        %1529 = vmatprep.subr.bf16.mxu0 0
        %1530 = vmatpush1.bf16.msra.mxu0 0
        %1531 = vmatprep.subr.bf16.mxu0 0
        %1532 = vmatpush1.bf16.msra.mxu0 0
        %1533 = vmatprep.subr.bf16.mxu0 0
        %1534 = vmatpush1.bf16.msra.mxu0 0
        %1535 = vmatprep.subr.bf16.mxu0 0
        %1536 = vmatpush1.bf16.msra.mxu0 0
        %1537 = vmatprep.subr.bf16.mxu0 0
        %1538 = vmatpush1.bf16.msra.mxu0 0
        %1539 = vmatprep.subr.bf16.mxu0 0
        %1540 = vmatpush1.bf16.msra.mxu0 0
        %1541 = vmatprep.subr.bf16.mxu0 0
        %1542 = vmatpush1.bf16.msra.mxu0 0
        %1543 = vmatprep.subr.bf16.mxu0 0
        %1544 = vmatpush1.bf16.msra.mxu0 0
        %1545 = vmatprep.subr.bf16.mxu0 0
        %1546 = vmatpush1.bf16.msra.mxu0 0
        %1547 = vmatprep.subr.bf16.mxu0 0
        %1548 = vmatpush1.bf16.msra.mxu0 0
        %1549 = vmatprep.subr.bf16.mxu0 0
        %1550 = vmatpush1.bf16.msra.mxu0 0
        %1551 = vmatprep.mubr.bf16.mxu0 0
        %1552 = vmatmul.mubr.bf16.gmra.mrb[0].mxu0 %v1514
        %v1553 = vpop.f32.mrb[0].mxu0
        %v1554 = vadd.f32 0.0, %v1553
        %v1555 = vpop.f32.mrb[0].mxu0
        %v1556 = vpop.f32.mrb[0].mxu0
        %v1557 = vpop.f32.mrb[0].mxu0
        %1558 = vdwg.mxu0
        %v1560 = vsel %vm1465, %v1043, 0
        %v1563 = vsel %vm1469, %v1461, 0
        %1565 = vmatprep.subr.bf16.mxu0 0
        %1566 = vmatpush1.bf16.msra.mxu0 %v1563
        %1567 = vmatprep.subr.bf16.mxu0 0
        %1568 = vmatpush1.bf16.msra.mxu0 0
        %1569 = vmatprep.subr.bf16.mxu0 0
        %1570 = vmatpush1.bf16.msra.mxu0 0
        %1571 = vmatprep.subr.bf16.mxu0 0
        %1572 = vmatpush1.bf16.msra.mxu0 0
        %1573 = vmatprep.subr.bf16.mxu0 0
        %1574 = vmatpush1.bf16.msra.mxu0 0
        %1575 = vmatprep.subr.bf16.mxu0 0
        %1576 = vmatpush1.bf16.msra.mxu0 0
        %1577 = vmatprep.subr.bf16.mxu0 0
        %1578 = vmatpush1.bf16.msra.mxu0 0
        %1579 = vmatprep.subr.bf16.mxu0 0
        %1580 = vmatpush1.bf16.msra.mxu0 0
        %1581 = vmatprep.subr.bf16.mxu0 0
        %1582 = vmatpush1.bf16.msra.mxu0 0
        %1583 = vmatprep.subr.bf16.mxu0 0
        %1584 = vmatpush1.bf16.msra.mxu0 0
        %1585 = vmatprep.subr.bf16.mxu0 0
        %1586 = vmatpush1.bf16.msra.mxu0 0
        %1587 = vmatprep.subr.bf16.mxu0 0
        %1588 = vmatpush1.bf16.msra.mxu0 0
        %1589 = vmatprep.subr.bf16.mxu0 0
        %1590 = vmatpush1.bf16.msra.mxu0 0
        %1591 = vmatprep.subr.bf16.mxu0 0
        %1592 = vmatpush1.bf16.msra.mxu0 0
        %1593 = vmatprep.subr.bf16.mxu0 0
        %1594 = vmatpush1.bf16.msra.mxu0 0
        %1595 = vmatprep.subr.bf16.mxu0 0
        %1596 = vmatpush1.bf16.msra.mxu0 0
        %1597 = vmatprep.mubr.bf16.mxu0 0
        %1598 = vmatmul.mubr.bf16.gmra.mrb[0].mxu0 %v1560
        %v1599 = vpop.f32.mrb[0].mxu0
        %v1600 = vadd.f32 0.0, %v1599
        %v1601 = vpop.f32.mrb[0].mxu0
        %v1602 = vpop.f32.mrb[0].mxu0
        %v1603 = vpop.f32.mrb[0].mxu0
        %1604 = vdwg.mxu0
        %v1606 = vsel %vm1465, %v1046, 0
        %v1609 = vsel %vm1469, %v1464, 0
        %1611 = vmatprep.subr.bf16.mxu0 0
        %1612 = vmatpush1.bf16.msra.mxu0 %v1609
        %1613 = vmatprep.subr.bf16.mxu0 0
        %1614 = vmatpush1.bf16.msra.mxu0 0
        %1615 = vmatprep.subr.bf16.mxu0 0
        %1616 = vmatpush1.bf16.msra.mxu0 0
        %1617 = vmatprep.subr.bf16.mxu0 0
        %1618 = vmatpush1.bf16.msra.mxu0 0
        %1619 = vmatprep.subr.bf16.mxu0 0
        %1620 = vmatpush1.bf16.msra.mxu0 0
        %1621 = vmatprep.subr.bf16.mxu0 0
        %1622 = vmatpush1.bf16.msra.mxu0 0
        %1623 = vmatprep.subr.bf16.mxu0 0
        %1624 = vmatpush1.bf16.msra.mxu0 0
        %1625 = vmatprep.subr.bf16.mxu0 0
        %1626 = vmatpush1.bf16.msra.mxu0 0
        %1627 = vmatprep.subr.bf16.mxu0 0
        %1628 = vmatpush1.bf16.msra.mxu0 0
        %1629 = vmatprep.subr.bf16.mxu0 0
        %1630 = vmatpush1.bf16.msra.mxu0 0
        %1631 = vmatprep.subr.bf16.mxu0 0
        %1632 = vmatpush1.bf16.msra.mxu0 0
        %1633 = vmatprep.subr.bf16.mxu0 0
        %1634 = vmatpush1.bf16.msra.mxu0 0
        %1635 = vmatprep.subr.bf16.mxu0 0
        %1636 = vmatpush1.bf16.msra.mxu0 0
        %1637 = vmatprep.subr.bf16.mxu0 0
        %1638 = vmatpush1.bf16.msra.mxu0 0
        %1639 = vmatprep.subr.bf16.mxu0 0
        %1640 = vmatpush1.bf16.msra.mxu0 0
        %1641 = vmatprep.subr.bf16.mxu0 0
        %1642 = vmatpush1.bf16.msra.mxu0 0
        %1643 = vmatprep.mubr.bf16.mxu0 0
        %1644 = vmatmul.mubr.bf16.gmra.mrb[0].mxu0 %v1606
        %v1645 = vpop.f32.mrb[0].mxu0
        %v1646 = vadd.f32 0.0, %v1645
        %v1647 = vpop.f32.mrb[0].mxu0
        %v1648 = vpop.f32.mrb[0].mxu0
        %v1649 = vpop.f32.mrb[0].mxu0
        %1650 = vdwg.mxu0
        %v1651 = vsel %vm1465, %v1508, -inf
        %1652 = vmax.xlane.f32.xlu0 %v1651
        %v1653 = vpop.xlane.xlu0 %1652
        %v1654 = vsel %vm1465, %v1554, -inf
        %1655 = vmax.xlane.f32.xlu0 %v1654
        %v1656 = vpop.xlane.xlu0 %1655
        %v1657 = vsel %vm1465, %v1600, -inf
        %1658 = vmax.xlane.f32.xlu0 %v1657
        %v1659 = vpop.xlane.xlu0 %1658
        %v1660 = vsel %vm1465, %v1646, -inf
        %1661 = vmax.xlane.f32.xlu0 %v1660
        %v1662 = vpop.xlane.xlu0 %1661
        %v1663 = vsub.f32 %v1508, %v1653
        %v1664 = vsub.f32 %v1554, %v1656
        %v1665 = vsub.f32 %v1600, %v1659
        %v1666 = vsub.f32 %v1646, %v1662
        %v1667 = vmul.f32 %v1663, 1.442695
        %v1668 = vpow.pop %v1667
        %v1669 = vmul.f32 %v1664, 1.442695
        %v1670 = vpow.pop %v1669
        %v1671 = vmul.f32 %v1665, 1.442695
        %v1672 = vpow.pop %v1671
        %v1673 = vmul.f32 %v1666, 1.442695
        %v1674 = vpow.pop %v1673
        %v1675 = vsel %vm1465, %v1668, 0.0
        %1676 = vadd.xlane.f32.xlu0 %v1675
        %v1677 = vpop.xlane.xlu0 %1676
        %v1678 = vsel %vm1465, %v1670, 0.0
        %1679 = vadd.xlane.f32.xlu0 %v1678
        %v1680 = vpop.xlane.xlu0 %1679
        %v1681 = vsel %vm1465, %v1672, 0.0
        %1682 = vadd.xlane.f32.xlu0 %v1681
        %v1683 = vpop.xlane.xlu0 %1682
        %v1684 = vsel %vm1465, %v1674, 0.0
        %1685 = vadd.xlane.f32.xlu0 %v1684
        %v1686 = vpop.xlane.xlu0 %1685
        %v1687 = vrcp.pop %v1677
        %v1688 = vrcp.pop %v1680
        %v1689 = vrcp.pop %v1683
        %v1690 = vrcp.pop %v1686
        %v1691 = vmul.f32 %v1668, %v1687
        %v1692 = vmul.f32 %v1670, %v1688
        %v1693 = vmul.f32 %v1672, %v1689
        %v1694 = vmul.f32 %v1674, %v1690
        %v1695 = vpack.c.bf16 %v1691, %v1691
        %v1696 = vpack.c.bf16 %v1692, %v1692
        %v1697 = vpack.c.bf16 %v1693, %v1693
        %v1698 = vpack.c.bf16 %v1694, %v1694
        %1699 = vxpose.xlu0.c.b16.start [1/8] %v977, 128
        %1700 = vxpose.xlu0.c.b16.cont [2/8] 0, 128
        %1701 = vxpose.xlu0.c.b16.cont [3/8] 0, 128
        %1702 = vxpose.xlu0.c.b16.cont [4/8] 0, 128
        %1703 = vxpose.xlu0.c.b16.cont [5/8] 0, 128
        %1704 = vxpose.xlu0.c.b16.cont [6/8] 0, 128
        %1705 = vxpose.xlu0.c.b16.cont [7/8] 0, 128
        %1706 = vxpose.xlu0.c.b16.end [8/8] 0, 128
        %v1707 = vpop.trf.xlu0
        %v1708 = vpop.trf.xlu0
        %v1709 = vpop.trf.xlu0
        %v1710 = vpop.trf.xlu0
        %v1711 = vpop.trf.xlu0
        %v1712 = vpop.trf.xlu0
        %v1713 = vpop.trf.xlu0
        %v1714 = vpop.trf.xlu0
        %1715 = vxpose.xlu0.c.b16.start [1/8] %v978, 128
        %1716 = vxpose.xlu0.c.b16.cont [2/8] 0, 128
        %1717 = vxpose.xlu0.c.b16.cont [3/8] 0, 128
        %1718 = vxpose.xlu0.c.b16.cont [4/8] 0, 128
        %1719 = vxpose.xlu0.c.b16.cont [5/8] 0, 128
        %1720 = vxpose.xlu0.c.b16.cont [6/8] 0, 128
        %1721 = vxpose.xlu0.c.b16.cont [7/8] 0, 128
        %1722 = vxpose.xlu0.c.b16.end [8/8] 0, 128
        %v1723 = vpop.trf.xlu0
        %v1724 = vpop.trf.xlu0
        %v1725 = vpop.trf.xlu0
        %v1726 = vpop.trf.xlu0
        %v1727 = vpop.trf.xlu0
        %v1728 = vpop.trf.xlu0
        %v1729 = vpop.trf.xlu0
        %v1730 = vpop.trf.xlu0
        %1731 = vxpose.xlu0.c.b16.start [1/8] %v979, 128
        %1732 = vxpose.xlu0.c.b16.cont [2/8] 0, 128
        %1733 = vxpose.xlu0.c.b16.cont [3/8] 0, 128
        %1734 = vxpose.xlu0.c.b16.cont [4/8] 0, 128
        %1735 = vxpose.xlu0.c.b16.cont [5/8] 0, 128
        %1736 = vxpose.xlu0.c.b16.cont [6/8] 0, 128
        %1737 = vxpose.xlu0.c.b16.cont [7/8] 0, 128
        %1738 = vxpose.xlu0.c.b16.end [8/8] 0, 128
        %v1739 = vpop.trf.xlu0
        %v1740 = vpop.trf.xlu0
        %v1741 = vpop.trf.xlu0
        %v1742 = vpop.trf.xlu0
        %v1743 = vpop.trf.xlu0
        %v1744 = vpop.trf.xlu0
        %v1745 = vpop.trf.xlu0
        %v1746 = vpop.trf.xlu0
        %1747 = vxpose.xlu0.c.b16.start [1/8] %v980, 128
        %1748 = vxpose.xlu0.c.b16.cont [2/8] 0, 128
        %1749 = vxpose.xlu0.c.b16.cont [3/8] 0, 128
        %1750 = vxpose.xlu0.c.b16.cont [4/8] 0, 128
        %1751 = vxpose.xlu0.c.b16.cont [5/8] 0, 128
        %1752 = vxpose.xlu0.c.b16.cont [6/8] 0, 128
        %1753 = vxpose.xlu0.c.b16.cont [7/8] 0, 128
        %1754 = vxpose.xlu0.c.b16.end [8/8] 0, 128
        %v1755 = vpop.trf.xlu0
        %v1756 = vpop.trf.xlu0
        %v1757 = vpop.trf.xlu0
        %v1758 = vpop.trf.xlu0
        %v1759 = vpop.trf.xlu0
        %v1760 = vpop.trf.xlu0
        %v1761 = vpop.trf.xlu0
        %v1762 = vpop.trf.xlu0
        %1763 = vxpose.xlu0.c.b16.start [1/8] %v981, 128
        %1764 = vxpose.xlu0.c.b16.cont [2/8] 0, 128
        %1765 = vxpose.xlu0.c.b16.cont [3/8] 0, 128
        %1766 = vxpose.xlu0.c.b16.cont [4/8] 0, 128
        %1767 = vxpose.xlu0.c.b16.cont [5/8] 0, 128
        %1768 = vxpose.xlu0.c.b16.cont [6/8] 0, 128
        %1769 = vxpose.xlu0.c.b16.cont [7/8] 0, 128
        %1770 = vxpose.xlu0.c.b16.end [8/8] 0, 128
        %v1771 = vpop.trf.xlu0
        %v1772 = vpop.trf.xlu0
        %v1773 = vpop.trf.xlu0
        %v1774 = vpop.trf.xlu0
        %v1775 = vpop.trf.xlu0
        %v1776 = vpop.trf.xlu0
        %v1777 = vpop.trf.xlu0
        %v1778 = vpop.trf.xlu0
        %1779 = vxpose.xlu0.c.b16.start [1/8] %v982, 128
        %1780 = vxpose.xlu0.c.b16.cont [2/8] 0, 128
        %1781 = vxpose.xlu0.c.b16.cont [3/8] 0, 128
        %1782 = vxpose.xlu0.c.b16.cont [4/8] 0, 128
        %1783 = vxpose.xlu0.c.b16.cont [5/8] 0, 128
        %1784 = vxpose.xlu0.c.b16.cont [6/8] 0, 128
        %1785 = vxpose.xlu0.c.b16.cont [7/8] 0, 128
        %1786 = vxpose.xlu0.c.b16.end [8/8] 0, 128
        %v1787 = vpop.trf.xlu0
        %v1788 = vpop.trf.xlu0
        %v1789 = vpop.trf.xlu0
        %v1790 = vpop.trf.xlu0
        %v1791 = vpop.trf.xlu0
        %v1792 = vpop.trf.xlu0
        %v1793 = vpop.trf.xlu0
        %v1794 = vpop.trf.xlu0
        %1795 = vxpose.xlu0.c.b16.start [1/8] %v983, 128
        %1796 = vxpose.xlu0.c.b16.cont [2/8] 0, 128
        %1797 = vxpose.xlu0.c.b16.cont [3/8] 0, 128
        %1798 = vxpose.xlu0.c.b16.cont [4/8] 0, 128
        %1799 = vxpose.xlu0.c.b16.cont [5/8] 0, 128
        %1800 = vxpose.xlu0.c.b16.cont [6/8] 0, 128
        %1801 = vxpose.xlu0.c.b16.cont [7/8] 0, 128
        %1802 = vxpose.xlu0.c.b16.end [8/8] 0, 128
        %v1803 = vpop.trf.xlu0
        %v1804 = vpop.trf.xlu0
        %v1805 = vpop.trf.xlu0
        %v1806 = vpop.trf.xlu0
        %v1807 = vpop.trf.xlu0
        %v1808 = vpop.trf.xlu0
        %v1809 = vpop.trf.xlu0
        %v1810 = vpop.trf.xlu0
        %1811 = vxpose.xlu0.c.b16.start [1/8] %v984, 128
        %1812 = vxpose.xlu0.c.b16.cont [2/8] 0, 128
        %1813 = vxpose.xlu0.c.b16.cont [3/8] 0, 128
        %1814 = vxpose.xlu0.c.b16.cont [4/8] 0, 128
        %1815 = vxpose.xlu0.c.b16.cont [5/8] 0, 128
        %1816 = vxpose.xlu0.c.b16.cont [6/8] 0, 128
        %1817 = vxpose.xlu0.c.b16.cont [7/8] 0, 128
        %1818 = vxpose.xlu0.c.b16.end [8/8] 0, 128
        %v1819 = vpop.trf.xlu0
        %v1820 = vpop.trf.xlu0
        %v1821 = vpop.trf.xlu0
        %v1822 = vpop.trf.xlu0
        %v1823 = vpop.trf.xlu0
        %v1824 = vpop.trf.xlu0
        %v1825 = vpop.trf.xlu0
        %v1826 = vpop.trf.xlu0
        %v1827 = vcombine.low %v1707, %v1771
        %v1829 = vunpack.c.l.s4 1983009808
        %v1830 = vunpack.c.0.s8 %v1829
        %v1831 = vlaneseq
        %v1832 = vshrl.u32 %v1831, 7
        %v1833 = vsub.s32 %v1830, %v1832
        %v1834 = vrot.slane %v1827, %v1833
        %v1835 = vcombine.low %v1739, %v1803
        %v1837 = vunpack.c.l.s4 1983009808
        %v1838 = vunpack.c.0.s8 %v1837
        %v1839 = vlaneseq
        %v1840 = vshrl.u32 %v1839, 7
        %v1841 = vsub.s32 %v1838, %v1840
        %v1842 = vrot.slane %v1835, %v1841
        %v1843 = vcombine.low %v1834, %v1842
        %v1844 = vcombine.high %v1834, %v1842
        %v1846 = vunpack.c.l.s4 1934713408
        %v1847 = vunpack.c.0.s8 %v1846
        %v1848 = vlaneseq
        %v1849 = vshrl.u32 %v1848, 7
        %v1850 = vsub.s32 %v1847, %v1849
        %v1851 = vrot.slane %v1843, %v1850
        %v1853 = vunpack.c.l.s4 1934713408
        %v1854 = vunpack.c.0.s8 %v1853
        %v1855 = vlaneseq
        %v1856 = vshrl.u32 %v1855, 7
        %v1857 = vsub.s32 %v1854, %v1856
        %v1858 = vrot.slane %v1844, %v1857
        %v1859 = vcombine.high %v1851, 0
        %v1860 = vcombine.high %v1858, 0
        %v1861 = vcombine.low %v1723, %v1787
        %v1863 = vunpack.c.l.s4 1983009808
        %v1864 = vunpack.c.0.s8 %v1863
        %v1865 = vlaneseq
        %v1866 = vshrl.u32 %v1865, 7
        %v1867 = vsub.s32 %v1864, %v1866
        %v1868 = vrot.slane %v1861, %v1867
        %v1869 = vcombine.low %v1755, %v1819
        %v1871 = vunpack.c.l.s4 1983009808
        %v1872 = vunpack.c.0.s8 %v1871
        %v1873 = vlaneseq
        %v1874 = vshrl.u32 %v1873, 7
        %v1875 = vsub.s32 %v1872, %v1874
        %v1876 = vrot.slane %v1869, %v1875
        %v1877 = vcombine.low %v1868, %v1876
        %v1878 = vcombine.high %v1868, %v1876
        %v1880 = vunpack.c.l.s4 1934713408
        %v1881 = vunpack.c.0.s8 %v1880
        %v1882 = vlaneseq
        %v1883 = vshrl.u32 %v1882, 7
        %v1884 = vsub.s32 %v1881, %v1883
        %v1885 = vrot.slane %v1877, %v1884
        %v1887 = vunpack.c.l.s4 1934713408
        %v1888 = vunpack.c.0.s8 %v1887
        %v1889 = vlaneseq
        %v1890 = vshrl.u32 %v1889, 7
        %v1891 = vsub.s32 %v1888, %v1890
        %v1892 = vrot.slane %v1878, %v1891
        %v1893 = vcombine.high %v1885, 0
        %v1894 = vcombine.high %v1892, 0
        %v1897 = vpack.i.b16 %v1885, %v1851
        %v1899 = vshrl.u32 %v1851, 16
        %v1900 = vshrl.u32 %v1885, 16
        %v1901 = vpack.i.b16 %v1900, %v1899
        %v1905 = vpack.i.b16 %v1893, %v1859
        %v1907 = vshrl.u32 %v1859, 16
        %v1908 = vshrl.u32 %v1893, 16
        %v1909 = vpack.i.b16 %v1908, %v1907
        %v1913 = vpack.i.b16 %v1892, %v1858
        %v1915 = vshrl.u32 %v1858, 16
        %v1916 = vshrl.u32 %v1892, 16
        %v1917 = vpack.i.b16 %v1916, %v1915
        %v1921 = vpack.i.b16 %v1894, %v1860
        %v1923 = vshrl.u32 %v1860, 16
        %v1924 = vshrl.u32 %v1894, 16
        %v1925 = vpack.i.b16 %v1924, %v1923
        %1927 = vxpose.xlu0.c.b16.start [1/8] %v1897, 128
        %1928 = vxpose.xlu0.c.b16.cont [2/8] 0, 128
        %1929 = vxpose.xlu0.c.b16.cont [3/8] 0, 128
        %1930 = vxpose.xlu0.c.b16.cont [4/8] 0, 128
        %1931 = vxpose.xlu0.c.b16.cont [5/8] 0, 128
        %1932 = vxpose.xlu0.c.b16.cont [6/8] 0, 128
        %1933 = vxpose.xlu0.c.b16.cont [7/8] 0, 128
        %1934 = vxpose.xlu0.c.b16.end [8/8] 0, 128
        %v1935 = vpop.trf.xlu0
        %v1936 = vpop.trf.xlu0
        %v1937 = vpop.trf.xlu0
        %v1938 = vpop.trf.xlu0
        %v1939 = vpop.trf.xlu0
        %v1940 = vpop.trf.xlu0
        %v1941 = vpop.trf.xlu0
        %v1942 = vpop.trf.xlu0
        %1943 = vxpose.xlu0.c.b16.start [1/8] %v1901, 128
        %1944 = vxpose.xlu0.c.b16.cont [2/8] 0, 128
        %1945 = vxpose.xlu0.c.b16.cont [3/8] 0, 128
        %1946 = vxpose.xlu0.c.b16.cont [4/8] 0, 128
        %1947 = vxpose.xlu0.c.b16.cont [5/8] 0, 128
        %1948 = vxpose.xlu0.c.b16.cont [6/8] 0, 128
        %1949 = vxpose.xlu0.c.b16.cont [7/8] 0, 128
        %1950 = vxpose.xlu0.c.b16.end [8/8] 0, 128
        %v1951 = vpop.trf.xlu0
        %v1952 = vpop.trf.xlu0
        %v1953 = vpop.trf.xlu0
        %v1954 = vpop.trf.xlu0
        %v1955 = vpop.trf.xlu0
        %v1956 = vpop.trf.xlu0
        %v1957 = vpop.trf.xlu0
        %v1958 = vpop.trf.xlu0
        %1959 = vxpose.xlu0.c.b16.start [1/8] %v1905, 128
        %1960 = vxpose.xlu0.c.b16.cont [2/8] 0, 128
        %1961 = vxpose.xlu0.c.b16.cont [3/8] 0, 128
        %1962 = vxpose.xlu0.c.b16.cont [4/8] 0, 128
        %1963 = vxpose.xlu0.c.b16.cont [5/8] 0, 128
        %1964 = vxpose.xlu0.c.b16.cont [6/8] 0, 128
        %1965 = vxpose.xlu0.c.b16.cont [7/8] 0, 128
        %1966 = vxpose.xlu0.c.b16.end [8/8] 0, 128
        %v1967 = vpop.trf.xlu0
        %v1968 = vpop.trf.xlu0
        %v1969 = vpop.trf.xlu0
        %v1970 = vpop.trf.xlu0
        %v1971 = vpop.trf.xlu0
        %v1972 = vpop.trf.xlu0
        %v1973 = vpop.trf.xlu0
        %v1974 = vpop.trf.xlu0
        %1975 = vxpose.xlu0.c.b16.start [1/8] %v1909, 128
        %1976 = vxpose.xlu0.c.b16.cont [2/8] 0, 128
        %1977 = vxpose.xlu0.c.b16.cont [3/8] 0, 128
        %1978 = vxpose.xlu0.c.b16.cont [4/8] 0, 128
        %1979 = vxpose.xlu0.c.b16.cont [5/8] 0, 128
        %1980 = vxpose.xlu0.c.b16.cont [6/8] 0, 128
        %1981 = vxpose.xlu0.c.b16.cont [7/8] 0, 128
        %1982 = vxpose.xlu0.c.b16.end [8/8] 0, 128
        %v1983 = vpop.trf.xlu0
        %v1984 = vpop.trf.xlu0
        %v1985 = vpop.trf.xlu0
        %v1986 = vpop.trf.xlu0
        %v1987 = vpop.trf.xlu0
        %v1988 = vpop.trf.xlu0
        %v1989 = vpop.trf.xlu0
        %v1990 = vpop.trf.xlu0
        %1991 = vxpose.xlu0.c.b16.start [1/8] %v1913, 128
        %1992 = vxpose.xlu0.c.b16.cont [2/8] 0, 128
        %1993 = vxpose.xlu0.c.b16.cont [3/8] 0, 128
        %1994 = vxpose.xlu0.c.b16.cont [4/8] 0, 128
        %1995 = vxpose.xlu0.c.b16.cont [5/8] 0, 128
        %1996 = vxpose.xlu0.c.b16.cont [6/8] 0, 128
        %1997 = vxpose.xlu0.c.b16.cont [7/8] 0, 128
        %1998 = vxpose.xlu0.c.b16.end [8/8] 0, 128
        %v1999 = vpop.trf.xlu0
        %v2000 = vpop.trf.xlu0
        %v2001 = vpop.trf.xlu0
        %v2002 = vpop.trf.xlu0
        %v2003 = vpop.trf.xlu0
        %v2004 = vpop.trf.xlu0
        %v2005 = vpop.trf.xlu0
        %v2006 = vpop.trf.xlu0
        %2007 = vxpose.xlu0.c.b16.start [1/8] %v1917, 128
        %2008 = vxpose.xlu0.c.b16.cont [2/8] 0, 128
        %2009 = vxpose.xlu0.c.b16.cont [3/8] 0, 128
        %2010 = vxpose.xlu0.c.b16.cont [4/8] 0, 128
        %2011 = vxpose.xlu0.c.b16.cont [5/8] 0, 128
        %2012 = vxpose.xlu0.c.b16.cont [6/8] 0, 128
        %2013 = vxpose.xlu0.c.b16.cont [7/8] 0, 128
        %2014 = vxpose.xlu0.c.b16.end [8/8] 0, 128
        %v2015 = vpop.trf.xlu0
        %v2016 = vpop.trf.xlu0
        %v2017 = vpop.trf.xlu0
        %v2018 = vpop.trf.xlu0
        %v2019 = vpop.trf.xlu0
        %v2020 = vpop.trf.xlu0
        %v2021 = vpop.trf.xlu0
        %v2022 = vpop.trf.xlu0
        %2023 = vxpose.xlu0.c.b16.start [1/8] %v1921, 128
        %2024 = vxpose.xlu0.c.b16.cont [2/8] 0, 128
        %2025 = vxpose.xlu0.c.b16.cont [3/8] 0, 128
        %2026 = vxpose.xlu0.c.b16.cont [4/8] 0, 128
        %2027 = vxpose.xlu0.c.b16.cont [5/8] 0, 128
        %2028 = vxpose.xlu0.c.b16.cont [6/8] 0, 128
        %2029 = vxpose.xlu0.c.b16.cont [7/8] 0, 128
        %2030 = vxpose.xlu0.c.b16.end [8/8] 0, 128
        %v2031 = vpop.trf.xlu0
        %v2032 = vpop.trf.xlu0
        %v2033 = vpop.trf.xlu0
        %v2034 = vpop.trf.xlu0
        %v2035 = vpop.trf.xlu0
        %v2036 = vpop.trf.xlu0
        %v2037 = vpop.trf.xlu0
        %v2038 = vpop.trf.xlu0
        %2039 = vxpose.xlu0.c.b16.start [1/8] %v1925, 128
        %2040 = vxpose.xlu0.c.b16.cont [2/8] 0, 128
        %2041 = vxpose.xlu0.c.b16.cont [3/8] 0, 128
        %2042 = vxpose.xlu0.c.b16.cont [4/8] 0, 128
        %2043 = vxpose.xlu0.c.b16.cont [5/8] 0, 128
        %2044 = vxpose.xlu0.c.b16.cont [6/8] 0, 128
        %2045 = vxpose.xlu0.c.b16.cont [7/8] 0, 128
        %2046 = vxpose.xlu0.c.b16.end [8/8] 0, 128
        %v2047 = vpop.trf.xlu0
        %v2048 = vpop.trf.xlu0
        %v2049 = vpop.trf.xlu0
        %v2050 = vpop.trf.xlu0
        %v2051 = vpop.trf.xlu0
        %v2052 = vpop.trf.xlu0
        %v2053 = vpop.trf.xlu0
        %v2054 = vpop.trf.xlu0
        %v2055 = vcombine.low %v1935, %v1999
        %v2057 = vunpack.c.l.s4 1983009808
        %v2058 = vunpack.c.0.s8 %v2057
        %v2059 = vlaneseq
        %v2060 = vshrl.u32 %v2059, 7
        %v2061 = vsub.s32 %v2058, %v2060
        %v2062 = vrot.slane %v2055, %v2061
        %v2063 = vcombine.low %v1967, %v2031
        %v2065 = vunpack.c.l.s4 1983009808
        %v2066 = vunpack.c.0.s8 %v2065
        %v2067 = vlaneseq
        %v2068 = vshrl.u32 %v2067, 7
        %v2069 = vsub.s32 %v2066, %v2068
        %v2070 = vrot.slane %v2063, %v2069
        %v2071 = vcombine.low %v2062, %v2070
        %v2073 = vunpack.c.l.s4 1934713408
        %v2074 = vunpack.c.0.s8 %v2073
        %v2075 = vlaneseq
        %v2076 = vshrl.u32 %v2075, 7
        %v2077 = vsub.s32 %v2074, %v2076
        %v2078 = vrot.slane %v2071, %v2077
        %v2079 = vcombine.high %v2078, 0
        %v2080 = vcombine.low %v1951, %v2015
        %v2082 = vunpack.c.l.s4 1983009808
        %v2083 = vunpack.c.0.s8 %v2082
        %v2084 = vlaneseq
        %v2085 = vshrl.u32 %v2084, 7
        %v2086 = vsub.s32 %v2083, %v2085
        %v2087 = vrot.slane %v2080, %v2086
        %v2088 = vcombine.low %v1983, %v2047
        %v2090 = vunpack.c.l.s4 1983009808
        %v2091 = vunpack.c.0.s8 %v2090
        %v2092 = vlaneseq
        %v2093 = vshrl.u32 %v2092, 7
        %v2094 = vsub.s32 %v2091, %v2093
        %v2095 = vrot.slane %v2088, %v2094
        %v2096 = vcombine.low %v2087, %v2095
        %v2098 = vunpack.c.l.s4 1934713408
        %v2099 = vunpack.c.0.s8 %v2098
        %v2100 = vlaneseq
        %v2101 = vshrl.u32 %v2100, 7
        %v2102 = vsub.s32 %v2099, %v2101
        %v2103 = vrot.slane %v2096, %v2102
        %v2104 = vcombine.high %v2103, 0
        %v2107 = vpack.i.b16 %v2103, %v2078
        %v2108 = vshrl.u32 %v2078, 16
        %v2109 = vshrl.u32 %v2103, 16
        %v2110 = vpack.i.b16 %v2109, %v2108
        %v2113 = vpack.i.b16 %v2104, %v2079
        %v2114 = vshrl.u32 %v2079, 16
        %v2115 = vshrl.u32 %v2104, 16
        %v2116 = vpack.i.b16 %v2115, %v2114
        %v2118 = vsel %vm1465, %v2107, 0
        %v2121 = vsel %vm1465, %v1695, 0
        %2123 = vmatprep.subr.bf16.mxu0 0
        %2124 = vmatpush1.bf16.xpose.msra.mxu0 %v2121
        %2125 = vmatprep.subr.bf16.mxu0 0
        %2126 = vmatpush1.bf16.xpose.msra.mxu0 0
        %2127 = vmatprep.subr.bf16.mxu0 0
        %2128 = vmatpush1.bf16.xpose.msra.mxu0 0
        %2129 = vmatprep.subr.bf16.mxu0 0
        %2130 = vmatpush1.bf16.xpose.msra.mxu0 0
        %2131 = vmatprep.subr.bf16.mxu0 0
        %2132 = vmatpush1.bf16.xpose.msra.mxu0 0
        %2133 = vmatprep.subr.bf16.mxu0 0
        %2134 = vmatpush1.bf16.xpose.msra.mxu0 0
        %2135 = vmatprep.subr.bf16.mxu0 0
        %2136 = vmatpush1.bf16.xpose.msra.mxu0 0
        %2137 = vmatprep.subr.bf16.mxu0 0
        %2138 = vmatpush1.bf16.xpose.msra.mxu0 0
        %2139 = vmatprep.subr.bf16.mxu0 0
        %2140 = vmatpush1.bf16.xpose.msra.mxu0 0
        %2141 = vmatprep.subr.bf16.mxu0 0
        %2142 = vmatpush1.bf16.xpose.msra.mxu0 0
        %2143 = vmatprep.subr.bf16.mxu0 0
        %2144 = vmatpush1.bf16.xpose.msra.mxu0 0
        %2145 = vmatprep.subr.bf16.mxu0 0
        %2146 = vmatpush1.bf16.xpose.msra.mxu0 0
        %2147 = vmatprep.subr.bf16.mxu0 0
        %2148 = vmatpush1.bf16.xpose.msra.mxu0 0
        %2149 = vmatprep.subr.bf16.mxu0 0
        %2150 = vmatpush1.bf16.xpose.msra.mxu0 0
        %2151 = vmatprep.subr.bf16.mxu0 0
        %2152 = vmatpush1.bf16.xpose.msra.mxu0 0
        %2153 = vmatprep.subr.bf16.mxu0 0
        %2154 = vmatpush1.bf16.xpose.msra.mxu0 0
        %2155 = vmatprep.mubr.bf16.mxu0 0
        %2156 = vmatmul.mubr.bf16.gmra.mrb[0].mxu0 %v2118
        %v2157 = vpop.f32.mrb[0].mxu0
        %v2158 = vadd.f32 0.0, %v2157
        %v2159 = vpop.f32.mrb[0].mxu0
        %v2160 = vpop.f32.mrb[0].mxu0
        %v2161 = vpop.f32.mrb[0].mxu0
        %2162 = vdwg.mxu0
        %v2164 = vsel %vm1465, %v2110, 0
        %v2167 = vsel %vm1465, %v1696, 0
        %2169 = vmatprep.subr.bf16.mxu0 0
        %2170 = vmatpush1.bf16.xpose.msra.mxu0 %v2167
        %2171 = vmatprep.subr.bf16.mxu0 0
        %2172 = vmatpush1.bf16.xpose.msra.mxu0 0
        %2173 = vmatprep.subr.bf16.mxu0 0
        %2174 = vmatpush1.bf16.xpose.msra.mxu0 0
        %2175 = vmatprep.subr.bf16.mxu0 0
        %2176 = vmatpush1.bf16.xpose.msra.mxu0 0
        %2177 = vmatprep.subr.bf16.mxu0 0
        %2178 = vmatpush1.bf16.xpose.msra.mxu0 0
        %2179 = vmatprep.subr.bf16.mxu0 0
        %2180 = vmatpush1.bf16.xpose.msra.mxu0 0
        %2181 = vmatprep.subr.bf16.mxu0 0
        %2182 = vmatpush1.bf16.xpose.msra.mxu0 0
        %2183 = vmatprep.subr.bf16.mxu0 0
        %2184 = vmatpush1.bf16.xpose.msra.mxu0 0
        %2185 = vmatprep.subr.bf16.mxu0 0
        %2186 = vmatpush1.bf16.xpose.msra.mxu0 0
        %2187 = vmatprep.subr.bf16.mxu0 0
        %2188 = vmatpush1.bf16.xpose.msra.mxu0 0
        %2189 = vmatprep.subr.bf16.mxu0 0
        %2190 = vmatpush1.bf16.xpose.msra.mxu0 0
        %2191 = vmatprep.subr.bf16.mxu0 0
        %2192 = vmatpush1.bf16.xpose.msra.mxu0 0
        %2193 = vmatprep.subr.bf16.mxu0 0
        %2194 = vmatpush1.bf16.xpose.msra.mxu0 0
        %2195 = vmatprep.subr.bf16.mxu0 0
        %2196 = vmatpush1.bf16.xpose.msra.mxu0 0
        %2197 = vmatprep.subr.bf16.mxu0 0
        %2198 = vmatpush1.bf16.xpose.msra.mxu0 0
        %2199 = vmatprep.subr.bf16.mxu0 0
        %2200 = vmatpush1.bf16.xpose.msra.mxu0 0
        %2201 = vmatprep.mubr.bf16.mxu0 0
        %2202 = vmatmul.mubr.bf16.gmra.mrb[0].mxu0 %v2164
        %v2203 = vpop.f32.mrb[0].mxu0
        %v2204 = vadd.f32 0.0, %v2203
        %v2205 = vpop.f32.mrb[0].mxu0
        %v2206 = vpop.f32.mrb[0].mxu0
        %v2207 = vpop.f32.mrb[0].mxu0
        %2208 = vdwg.mxu0
        %v2210 = vsel %vm1465, %v2113, 0
        %v2213 = vsel %vm1465, %v1697, 0
        %2215 = vmatprep.subr.bf16.mxu0 0
        %2216 = vmatpush1.bf16.xpose.msra.mxu0 %v2213
        %2217 = vmatprep.subr.bf16.mxu0 0
        %2218 = vmatpush1.bf16.xpose.msra.mxu0 0
        %2219 = vmatprep.subr.bf16.mxu0 0
        %2220 = vmatpush1.bf16.xpose.msra.mxu0 0
        %2221 = vmatprep.subr.bf16.mxu0 0
        %2222 = vmatpush1.bf16.xpose.msra.mxu0 0
        %2223 = vmatprep.subr.bf16.mxu0 0
        %2224 = vmatpush1.bf16.xpose.msra.mxu0 0
        %2225 = vmatprep.subr.bf16.mxu0 0
        %2226 = vmatpush1.bf16.xpose.msra.mxu0 0
        %2227 = vmatprep.subr.bf16.mxu0 0
        %2228 = vmatpush1.bf16.xpose.msra.mxu0 0
        %2229 = vmatprep.subr.bf16.mxu0 0
        %2230 = vmatpush1.bf16.xpose.msra.mxu0 0
        %2231 = vmatprep.subr.bf16.mxu0 0
        %2232 = vmatpush1.bf16.xpose.msra.mxu0 0
        %2233 = vmatprep.subr.bf16.mxu0 0
        %2234 = vmatpush1.bf16.xpose.msra.mxu0 0
        %2235 = vmatprep.subr.bf16.mxu0 0
        %2236 = vmatpush1.bf16.xpose.msra.mxu0 0
        %2237 = vmatprep.subr.bf16.mxu0 0
        %2238 = vmatpush1.bf16.xpose.msra.mxu0 0
        %2239 = vmatprep.subr.bf16.mxu0 0
        %2240 = vmatpush1.bf16.xpose.msra.mxu0 0
        %2241 = vmatprep.subr.bf16.mxu0 0
        %2242 = vmatpush1.bf16.xpose.msra.mxu0 0
        %2243 = vmatprep.subr.bf16.mxu0 0
        %2244 = vmatpush1.bf16.xpose.msra.mxu0 0
        %2245 = vmatprep.subr.bf16.mxu0 0
        %2246 = vmatpush1.bf16.xpose.msra.mxu0 0
        %2247 = vmatprep.mubr.bf16.mxu0 0
        %2248 = vmatmul.mubr.bf16.gmra.mrb[0].mxu0 %v2210
        %v2249 = vpop.f32.mrb[0].mxu0
        %v2250 = vadd.f32 0.0, %v2249
        %v2251 = vpop.f32.mrb[0].mxu0
        %v2252 = vpop.f32.mrb[0].mxu0
        %v2253 = vpop.f32.mrb[0].mxu0
        %2254 = vdwg.mxu0
        %v2256 = vsel %vm1465, %v2116, 0
        %v2259 = vsel %vm1465, %v1698, 0
        %2261 = vmatprep.subr.bf16.mxu0 0
        %2262 = vmatpush1.bf16.xpose.msra.mxu0 %v2259
        %2263 = vmatprep.subr.bf16.mxu0 0
        %2264 = vmatpush1.bf16.xpose.msra.mxu0 0
        %2265 = vmatprep.subr.bf16.mxu0 0
        %2266 = vmatpush1.bf16.xpose.msra.mxu0 0
        %2267 = vmatprep.subr.bf16.mxu0 0
        %2268 = vmatpush1.bf16.xpose.msra.mxu0 0
        %2269 = vmatprep.subr.bf16.mxu0 0
        %2270 = vmatpush1.bf16.xpose.msra.mxu0 0
        %2271 = vmatprep.subr.bf16.mxu0 0
        %2272 = vmatpush1.bf16.xpose.msra.mxu0 0
        %2273 = vmatprep.subr.bf16.mxu0 0
        %2274 = vmatpush1.bf16.xpose.msra.mxu0 0
        %2275 = vmatprep.subr.bf16.mxu0 0
        %2276 = vmatpush1.bf16.xpose.msra.mxu0 0
        %2277 = vmatprep.subr.bf16.mxu0 0
        %2278 = vmatpush1.bf16.xpose.msra.mxu0 0
        %2279 = vmatprep.subr.bf16.mxu0 0
        %2280 = vmatpush1.bf16.xpose.msra.mxu0 0
        %2281 = vmatprep.subr.bf16.mxu0 0
        %2282 = vmatpush1.bf16.xpose.msra.mxu0 0
        %2283 = vmatprep.subr.bf16.mxu0 0
        %2284 = vmatpush1.bf16.xpose.msra.mxu0 0
        %2285 = vmatprep.subr.bf16.mxu0 0
        %2286 = vmatpush1.bf16.xpose.msra.mxu0 0
        %2287 = vmatprep.subr.bf16.mxu0 0
        %2288 = vmatpush1.bf16.xpose.msra.mxu0 0
        %2289 = vmatprep.subr.bf16.mxu0 0
        %2290 = vmatpush1.bf16.xpose.msra.mxu0 0
        %2291 = vmatprep.subr.bf16.mxu0 0
        %2292 = vmatpush1.bf16.xpose.msra.mxu0 0
        %2293 = vmatprep.mubr.bf16.mxu0 0
        %2294 = vmatmul.mubr.bf16.gmra.mrb[0].mxu0 %v2256
        %v2295 = vpop.f32.mrb[0].mxu0
        %v2296 = vadd.f32 0.0, %v2295
        %v2297 = vpop.f32.mrb[0].mxu0
        %v2298 = vpop.f32.mrb[0].mxu0
        %v2299 = vpop.f32.mrb[0].mxu0
        %2300 = vdwg.mxu0
        %2301 = vxpose.xlu0.b32.start [1/16] %v2158, 128
        %2302 = vxpose.xlu0.b32.cont [2/16] 0.0, 128
        %2303 = vxpose.xlu0.b32.cont [3/16] 0.0, 128
        %2304 = vxpose.xlu0.b32.cont [4/16] 0.0, 128
        %2305 = vxpose.xlu0.b32.cont [5/16] 0.0, 128
        %2306 = vxpose.xlu0.b32.cont [6/16] 0.0, 128
        %2307 = vxpose.xlu0.b32.cont [7/16] 0.0, 128
        %2308 = vxpose.xlu0.b32.cont [8/16] 0.0, 128
        %2309 = vxpose.xlu0.b32.cont [9/16] 0.0, 128
        %2310 = vxpose.xlu0.b32.cont [10/16] 0.0, 128
        %2311 = vxpose.xlu0.b32.cont [11/16] 0.0, 128
        %2312 = vxpose.xlu0.b32.cont [12/16] 0.0, 128
        %2313 = vxpose.xlu0.b32.cont [13/16] 0.0, 128
        %2314 = vxpose.xlu0.b32.cont [14/16] 0.0, 128
        %2315 = vxpose.xlu0.b32.cont [15/16] 0.0, 128
        %2316 = vxpose.xlu0.b32.end [16/16] 0.0, 128
        %v2317 = vpop.trf.xlu0
        %v2318 = vpop.trf.xlu0
        %v2319 = vpop.trf.xlu0
        %v2320 = vpop.trf.xlu0
        %v2321 = vpop.trf.xlu0
        %v2322 = vpop.trf.xlu0
        %v2323 = vpop.trf.xlu0
        %v2324 = vpop.trf.xlu0
        %v2325 = vpop.trf.xlu0
        %v2326 = vpop.trf.xlu0
        %v2327 = vpop.trf.xlu0
        %v2328 = vpop.trf.xlu0
        %v2329 = vpop.trf.xlu0
        %v2330 = vpop.trf.xlu0
        %v2331 = vpop.trf.xlu0
        %v2332 = vpop.trf.xlu0
        %2333 = vxpose.xlu0.b32.start [1/16] %v2204, 128
        %2334 = vxpose.xlu0.b32.cont [2/16] 0.0, 128
        %2335 = vxpose.xlu0.b32.cont [3/16] 0.0, 128
        %2336 = vxpose.xlu0.b32.cont [4/16] 0.0, 128
        %2337 = vxpose.xlu0.b32.cont [5/16] 0.0, 128
        %2338 = vxpose.xlu0.b32.cont [6/16] 0.0, 128
        %2339 = vxpose.xlu0.b32.cont [7/16] 0.0, 128
        %2340 = vxpose.xlu0.b32.cont [8/16] 0.0, 128
        %2341 = vxpose.xlu0.b32.cont [9/16] 0.0, 128
        %2342 = vxpose.xlu0.b32.cont [10/16] 0.0, 128
        %2343 = vxpose.xlu0.b32.cont [11/16] 0.0, 128
        %2344 = vxpose.xlu0.b32.cont [12/16] 0.0, 128
        %2345 = vxpose.xlu0.b32.cont [13/16] 0.0, 128
        %2346 = vxpose.xlu0.b32.cont [14/16] 0.0, 128
        %2347 = vxpose.xlu0.b32.cont [15/16] 0.0, 128
        %2348 = vxpose.xlu0.b32.end [16/16] 0.0, 128
        %v2349 = vpop.trf.xlu0
        %v2350 = vpop.trf.xlu0
        %v2351 = vpop.trf.xlu0
        %v2352 = vpop.trf.xlu0
        %v2353 = vpop.trf.xlu0
        %v2354 = vpop.trf.xlu0
        %v2355 = vpop.trf.xlu0
        %v2356 = vpop.trf.xlu0
        %v2357 = vpop.trf.xlu0
        %v2358 = vpop.trf.xlu0
        %v2359 = vpop.trf.xlu0
        %v2360 = vpop.trf.xlu0
        %v2361 = vpop.trf.xlu0
        %v2362 = vpop.trf.xlu0
        %v2363 = vpop.trf.xlu0
        %v2364 = vpop.trf.xlu0
        %2365 = vxpose.xlu0.b32.start [1/16] %v2250, 128
        %2366 = vxpose.xlu0.b32.cont [2/16] 0.0, 128
        %2367 = vxpose.xlu0.b32.cont [3/16] 0.0, 128
        %2368 = vxpose.xlu0.b32.cont [4/16] 0.0, 128
        %2369 = vxpose.xlu0.b32.cont [5/16] 0.0, 128
        %2370 = vxpose.xlu0.b32.cont [6/16] 0.0, 128
        %2371 = vxpose.xlu0.b32.cont [7/16] 0.0, 128
        %2372 = vxpose.xlu0.b32.cont [8/16] 0.0, 128
        %2373 = vxpose.xlu0.b32.cont [9/16] 0.0, 128
        %2374 = vxpose.xlu0.b32.cont [10/16] 0.0, 128
        %2375 = vxpose.xlu0.b32.cont [11/16] 0.0, 128
        %2376 = vxpose.xlu0.b32.cont [12/16] 0.0, 128
        %2377 = vxpose.xlu0.b32.cont [13/16] 0.0, 128
        %2378 = vxpose.xlu0.b32.cont [14/16] 0.0, 128
        %2379 = vxpose.xlu0.b32.cont [15/16] 0.0, 128
        %2380 = vxpose.xlu0.b32.end [16/16] 0.0, 128
        %v2381 = vpop.trf.xlu0
        %v2382 = vpop.trf.xlu0
        %v2383 = vpop.trf.xlu0
        %v2384 = vpop.trf.xlu0
        %v2385 = vpop.trf.xlu0
        %v2386 = vpop.trf.xlu0
        %v2387 = vpop.trf.xlu0
        %v2388 = vpop.trf.xlu0
        %v2389 = vpop.trf.xlu0
        %v2390 = vpop.trf.xlu0
        %v2391 = vpop.trf.xlu0
        %v2392 = vpop.trf.xlu0
        %v2393 = vpop.trf.xlu0
        %v2394 = vpop.trf.xlu0
        %v2395 = vpop.trf.xlu0
        %v2396 = vpop.trf.xlu0
        %2397 = vxpose.xlu0.b32.start [1/16] %v2296, 128
        %2398 = vxpose.xlu0.b32.cont [2/16] 0.0, 128
        %2399 = vxpose.xlu0.b32.cont [3/16] 0.0, 128
        %2400 = vxpose.xlu0.b32.cont [4/16] 0.0, 128
        %2401 = vxpose.xlu0.b32.cont [5/16] 0.0, 128
        %2402 = vxpose.xlu0.b32.cont [6/16] 0.0, 128
        %2403 = vxpose.xlu0.b32.cont [7/16] 0.0, 128
        %2404 = vxpose.xlu0.b32.cont [8/16] 0.0, 128
        %2405 = vxpose.xlu0.b32.cont [9/16] 0.0, 128
        %2406 = vxpose.xlu0.b32.cont [10/16] 0.0, 128
        %2407 = vxpose.xlu0.b32.cont [11/16] 0.0, 128
        %2408 = vxpose.xlu0.b32.cont [12/16] 0.0, 128
        %2409 = vxpose.xlu0.b32.cont [13/16] 0.0, 128
        %2410 = vxpose.xlu0.b32.cont [14/16] 0.0, 128
        %2411 = vxpose.xlu0.b32.cont [15/16] 0.0, 128
        %2412 = vxpose.xlu0.b32.end [16/16] 0.0, 128
        %v2413 = vpop.trf.xlu0
        %v2414 = vpop.trf.xlu0
        %v2415 = vpop.trf.xlu0
        %v2416 = vpop.trf.xlu0
        %v2417 = vpop.trf.xlu0
        %v2418 = vpop.trf.xlu0
        %v2419 = vpop.trf.xlu0
        %v2420 = vpop.trf.xlu0
        %v2421 = vpop.trf.xlu0
        %v2422 = vpop.trf.xlu0
        %v2423 = vpop.trf.xlu0
        %v2424 = vpop.trf.xlu0
        %v2425 = vpop.trf.xlu0
        %v2426 = vpop.trf.xlu0
        %v2427 = vpop.trf.xlu0
        %v2428 = vpop.trf.xlu0
        %v2429 = vcombine.low %v2317, %v2381
        %v2430 = vcombine.high %v2317, %v2381
        %v2432 = vunpack.c.l.s4 1983009808
        %v2433 = vunpack.c.0.s8 %v2432
        %v2434 = vlaneseq
        %v2435 = vshrl.u32 %v2434, 7
        %v2436 = vsub.s32 %v2433, %v2435
        %v2437 = vrot.slane %v2429, %v2436
        %v2439 = vunpack.c.l.s4 1983009808
        %v2440 = vunpack.c.0.s8 %v2439
        %v2441 = vlaneseq
        %v2442 = vshrl.u32 %v2441, 7
        %v2443 = vsub.s32 %v2440, %v2442
        %v2444 = vrot.slane %v2430, %v2443
        %v2445 = vcombine.low %v2349, %v2413
        %v2446 = vcombine.high %v2349, %v2413
        %v2448 = vunpack.c.l.s4 1983009808
        %v2449 = vunpack.c.0.s8 %v2448
        %v2450 = vlaneseq
        %v2451 = vshrl.u32 %v2450, 7
        %v2452 = vsub.s32 %v2449, %v2451
        %v2453 = vrot.slane %v2445, %v2452
        %v2455 = vunpack.c.l.s4 1983009808
        %v2456 = vunpack.c.0.s8 %v2455
        %v2457 = vlaneseq
        %v2458 = vshrl.u32 %v2457, 7
        %v2459 = vsub.s32 %v2456, %v2458
        %v2460 = vrot.slane %v2446, %v2459
        %v2461 = vcombine.low %v2437, %v2453
        %v2462 = vcombine.high %v2437, %v2453
        %v2464 = vunpack.c.l.s4 1934713408
        %v2465 = vunpack.c.0.s8 %v2464
        %v2466 = vlaneseq
        %v2467 = vshrl.u32 %v2466, 7
        %v2468 = vsub.s32 %v2465, %v2467
        %v2469 = vrot.slane %v2461, %v2468
        %v2471 = vunpack.c.l.s4 1934713408
        %v2472 = vunpack.c.0.s8 %v2471
        %v2473 = vlaneseq
        %v2474 = vshrl.u32 %v2473, 7
        %v2475 = vsub.s32 %v2472, %v2474
        %v2476 = vrot.slane %v2462, %v2475
        %v2477 = vcombine.low %v2444, %v2460
        %v2478 = vcombine.high %v2444, %v2460
        %v2480 = vunpack.c.l.s4 1934713408
        %v2481 = vunpack.c.0.s8 %v2480
        %v2482 = vlaneseq
        %v2483 = vshrl.u32 %v2482, 7
        %v2484 = vsub.s32 %v2481, %v2483
        %v2485 = vrot.slane %v2477, %v2484
        %v2487 = vunpack.c.l.s4 1934713408
        %v2488 = vunpack.c.0.s8 %v2487
        %v2489 = vlaneseq
        %v2490 = vshrl.u32 %v2489, 7
        %v2491 = vsub.s32 %v2488, %v2490
        %v2492 = vrot.slane %v2478, %v2491
        %v2493 = vcombine.high %v2469, 0.0
        %v2494 = vcombine.high %v2476, 0.0
        %v2495 = vcombine.high %v2485, 0.0
        %v2496 = vcombine.high %v2492, 0.0
        %v2497 = vcombine.low %v2469, %v2476
        %v2499 = vunpack.c.l.s4 1983009808
        %v2500 = vunpack.c.0.s8 %v2499
        %v2501 = vlaneseq
        %v2502 = vshrl.u32 %v2501, 7
        %v2503 = vsub.s32 %v2500, %v2502
        %v2504 = vrot.slane %v2497, %v2503
        %v2505 = vcombine.low %v2493, %v2494
        %v2507 = vunpack.c.l.s4 1983009808
        %v2508 = vunpack.c.0.s8 %v2507
        %v2509 = vlaneseq
        %v2510 = vshrl.u32 %v2509, 7
        %v2511 = vsub.s32 %v2508, %v2510
        %v2512 = vrot.slane %v2505, %v2511
        %v2513 = vcombine.low %v2485, %v2492
        %v2515 = vunpack.c.l.s4 1983009808
        %v2516 = vunpack.c.0.s8 %v2515
        %v2517 = vlaneseq
        %v2518 = vshrl.u32 %v2517, 7
        %v2519 = vsub.s32 %v2516, %v2518
        %v2520 = vrot.slane %v2513, %v2519
        %v2521 = vcombine.low %v2495, %v2496
        %v2523 = vunpack.c.l.s4 1983009808
        %v2524 = vunpack.c.0.s8 %v2523
        %v2525 = vlaneseq
        %v2526 = vshrl.u32 %v2525, 7
        %v2527 = vsub.s32 %v2524, %v2526
        %v2528 = vrot.slane %v2521, %v2527
        %v2529 = vcombine.low %v2504, %v2512
        %v2530 = vcombine.high %v2504, %v2512
        %v2532 = vunpack.c.l.s4 1934713408
        %v2533 = vunpack.c.0.s8 %v2532
        %v2534 = vlaneseq
        %v2535 = vshrl.u32 %v2534, 7
        %v2536 = vsub.s32 %v2533, %v2535
        %v2537 = vrot.slane %v2529, %v2536
        %v2539 = vunpack.c.l.s4 1934713408
        %v2540 = vunpack.c.0.s8 %v2539
        %v2541 = vlaneseq
        %v2542 = vshrl.u32 %v2541, 7
        %v2543 = vsub.s32 %v2540, %v2542
        %v2544 = vrot.slane %v2530, %v2543
        %v2545 = vcombine.low %v2520, %v2528
        %v2546 = vcombine.high %v2520, %v2528
        %v2548 = vunpack.c.l.s4 1934713408
        %v2549 = vunpack.c.0.s8 %v2548
        %v2550 = vlaneseq
        %v2551 = vshrl.u32 %v2550, 7
        %v2552 = vsub.s32 %v2549, %v2551
        %v2553 = vrot.slane %v2545, %v2552
        %v2555 = vunpack.c.l.s4 1934713408
        %v2556 = vunpack.c.0.s8 %v2555
        %v2557 = vlaneseq
        %v2558 = vshrl.u32 %v2557, 7
        %v2559 = vsub.s32 %v2556, %v2558
        %v2560 = vrot.slane %v2546, %v2559
        %v2561 = vcombine.low %v2537, %v2553
        %v2562 = vcombine.high %v2537, %v2553
        %v2563 = vcombine.low %v2544, %v2560
        %v2564 = vcombine.high %v2544, %v2560
        %2566 = vrot.lane.b32.xlu0 %v2562, 8
        %v2567 = vpop.permute.xlu0 %2566
        %2570 = vrot.lane.b32.xlu0 %v2563, 16
        %v2571 = vpop.permute.xlu0 %2570
        %2574 = vrot.lane.b32.xlu0 %v2564, 24
        %v2575 = vpop.permute.xlu0 %2574
        %v2577 = vsel %vm1465, %v2561, %v2567
        %vm2578 = vcmask 130048
        %v2579 = vsel %vm2578, %v2577, %v2571
        %vm2580 = vcmask 195584
        %v2581 = vsel %vm2580, %v2579, %v2575
        %v2582 = vld [vmem:[#allocation11] sm:$0xf]
        %v2583 = vld [vmem:[#allocation11 + $0x4] sm:$0xf]
        %v2584 = vld [vmem:[#allocation11 + $0x8] sm:$0xf]
        %v2585 = vld [vmem:[#allocation11 + $0xc] sm:$0xf]
        %v2586 = vpack.c.bf16 %v2581, %v2581
        %v2591 = vunpack.c.l.b16 %v2582
        %v2592 = vunpack.c.l.b16 %v2583
        %v2593 = vunpack.c.l.b16 %v2584
        %v2594 = vunpack.c.l.b16 %v2585
        %v2595 = vpack.c.b16 %v2592, %v2591
        %v2596 = vpack.c.b16 %v2594, %v2593
        %v2600 = vsel %vm619, %v2586, 0
        %2602 = vmatprep.subr.bf16.mxu0 0
        %2603 = vmatpush1.bf16.msra.mxu0 %v2595
        %2604 = vmatprep.subr.bf16.mxu0 0
        %2605 = vmatpush1.bf16.msra.mxu0 %v2596
        %2606 = vmatprep.subr.bf16.mxu0 0
        %2607 = vmatpush1.bf16.msra.mxu0 0
        %2608 = vmatprep.subr.bf16.mxu0 0
        %2609 = vmatpush1.bf16.msra.mxu0 0
        %2610 = vmatprep.subr.bf16.mxu0 0
        %2611 = vmatpush1.bf16.msra.mxu0 0
        %2612 = vmatprep.subr.bf16.mxu0 0
        %2613 = vmatpush1.bf16.msra.mxu0 0
        %2614 = vmatprep.subr.bf16.mxu0 0
        %2615 = vmatpush1.bf16.msra.mxu0 0
        %2616 = vmatprep.subr.bf16.mxu0 0
        %2617 = vmatpush1.bf16.msra.mxu0 0
        %2618 = vmatprep.subr.bf16.mxu0 0
        %2619 = vmatpush1.bf16.msra.mxu0 0
        %2620 = vmatprep.subr.bf16.mxu0 0
        %2621 = vmatpush1.bf16.msra.mxu0 0
        %2622 = vmatprep.subr.bf16.mxu0 0
        %2623 = vmatpush1.bf16.msra.mxu0 0
        %2624 = vmatprep.subr.bf16.mxu0 0
        %2625 = vmatpush1.bf16.msra.mxu0 0
        %2626 = vmatprep.subr.bf16.mxu0 0
        %2627 = vmatpush1.bf16.msra.mxu0 0
        %2628 = vmatprep.subr.bf16.mxu0 0
        %2629 = vmatpush1.bf16.msra.mxu0 0
        %2630 = vmatprep.subr.bf16.mxu0 0
        %2631 = vmatpush1.bf16.msra.mxu0 0
        %2632 = vmatprep.subr.bf16.mxu0 0
        %2633 = vmatpush1.bf16.msra.mxu0 0
        %2634 = vmatprep.mubr.bf16.mxu0 0
        %2635 = vmatmul.mubr.bf16.gmra.mrb[0].mxu0 %v2600
        %v2636 = vpop.f32.mrb[0].mxu0
        %v2637 = vadd.f32 0.0, %v2636
        %v2638 = vpop.f32.mrb[0].mxu0
        %v2639 = vpop.f32.mrb[0].mxu0
        %v2640 = vpop.f32.mrb[0].mxu0
        %2641 = vdwg.mxu0
        %v2642 = vadd.f32 %v616, %v2637
        %v2643 = vld [vmem:[#allocation13] sm:$0x1]
        %v2645 = vlaneseq
        %v2646 = vshrl.u32 %v2645, 7
        %v2647 = vsub.s32 0, %v2646
        %v2648 = vrot.slane %v2643, %v2647
        %v2650 = vadd.f32 %v2642, %v2648
        %v2651 = vld [vmem:[#allocation14] sm:$0x1]
        %v2652 = vld [vmem:[#allocation16] sm:$0x1]
        %v2653 = vsel %vm619, %v2650, 0.0
        %2654 = vadd.xlane.f32.xlu0 %v2653
        %v2655 = vpop.xlane.xlu0 %2654
        %v2656 = vmul.f32 %v2655, %v623
        %v2657 = vsub.f32 %v2650, %v2656
        %v2658 = vmul.f32 %v2657, %v2657
        %v2659 = vsel %vm619, %v2658, 0.0
        %2660 = vadd.xlane.f32.xlu0 %v2659
        %v2661 = vpop.xlane.xlu0 %2660
        %v2662 = vmul.f32 %v2661, %v623
        %v2663 = vadd.f32 %v2662, 1e-05
        %v2664 = vrsqrt.pop %v2663
        %v2665 = vmul.f32 %v2657, %v2664
        %v2667 = vlaneseq
        %v2668 = vshrl.u32 %v2667, 7
        %v2669 = vsub.s32 0, %v2668
        %v2670 = vrot.slane %v2651, %v2669
        %v2672 = vmul.f32 %v2665, %v2670
        %v2674 = vlaneseq
        %v2675 = vshrl.u32 %v2674, 7
        %v2676 = vsub.s32 0, %v2675
        %v2677 = vrot.slane %v2652, %v2676
        %v2679 = vadd.f32 %v2672, %v2677
        %v2680 = vld [vmem:[#allocation17] sm:$0xf]
        %v2681 = vld [vmem:[#allocation17 + $0x4] sm:$0xf]
        %v2682 = vld [vmem:[#allocation17 + $0x8] sm:$0xf]
        %v2683 = vld [vmem:[#allocation17 + $0xc] sm:$0xf]
        %v2684 = vpack.c.bf16 %v2679, %v2679
        %v2685 = vld [vmem:[#allocation19] sm:$0x1]
        %v2687 = vlaneseq
        %v2688 = vshrl.u32 %v2687, 7
        %v2689 = vsub.s32 0, %v2688
        %v2690 = vrot.slane %v2685, %v2689
        %v2696 = vunpack.c.l.b16 %v2680
        %v2697 = vunpack.c.l.b16 %v2681
        %v2698 = vunpack.c.l.b16 %v2682
        %v2699 = vunpack.c.l.b16 %v2683
        %v2700 = vpack.c.b16 %v2697, %v2696
        %v2701 = vpack.c.b16 %v2699, %v2698
        %v2705 = vsel %vm619, %v2684, 0
        %2707 = vmatprep.subr.bf16.mxu0 0
        %2708 = vmatpush1.bf16.msra.mxu0 %v2700
        %2709 = vmatprep.subr.bf16.mxu0 0
        %2710 = vmatpush1.bf16.msra.mxu0 %v2701
        %2711 = vmatprep.subr.bf16.mxu0 0
        %2712 = vmatpush1.bf16.msra.mxu0 0
        %2713 = vmatprep.subr.bf16.mxu0 0
        %2714 = vmatpush1.bf16.msra.mxu0 0
        %2715 = vmatprep.subr.bf16.mxu0 0
        %2716 = vmatpush1.bf16.msra.mxu0 0
        %2717 = vmatprep.subr.bf16.mxu0 0
        %2718 = vmatpush1.bf16.msra.mxu0 0
        %2719 = vmatprep.subr.bf16.mxu0 0
        %2720 = vmatpush1.bf16.msra.mxu0 0
        %2721 = vmatprep.subr.bf16.mxu0 0
        %2722 = vmatpush1.bf16.msra.mxu0 0
        %2723 = vmatprep.subr.bf16.mxu0 0
        %2724 = vmatpush1.bf16.msra.mxu0 0
        %2725 = vmatprep.subr.bf16.mxu0 0
        %2726 = vmatpush1.bf16.msra.mxu0 0
        %2727 = vmatprep.subr.bf16.mxu0 0
        %2728 = vmatpush1.bf16.msra.mxu0 0
        %2729 = vmatprep.subr.bf16.mxu0 0
        %2730 = vmatpush1.bf16.msra.mxu0 0
        %2731 = vmatprep.subr.bf16.mxu0 0
        %2732 = vmatpush1.bf16.msra.mxu0 0
        %2733 = vmatprep.subr.bf16.mxu0 0
        %2734 = vmatpush1.bf16.msra.mxu0 0
        %2735 = vmatprep.subr.bf16.mxu0 0
        %2736 = vmatpush1.bf16.msra.mxu0 0
        %2737 = vmatprep.subr.bf16.mxu0 0
        %2738 = vmatpush1.bf16.msra.mxu0 0
        %2739 = vmatprep.mubr.bf16.mxu0 0
        %2740 = vmatmul.mubr.bf16.gmra.mrb[0].mxu0 %v2705
        %v2741 = vpop.f32.mrb[0].mxu0
        %v2742 = vadd.f32 %v2690, %v2741
        %v2743 = vpop.f32.mrb[0].mxu0
        %v2744 = vpop.f32.mrb[0].mxu0
        %v2745 = vpop.f32.mrb[0].mxu0
        %2746 = vdwg.mxu0
        %v2747 = vmul.f32 %v2742, 0.5
        %v2748 = vmul.f32 %v2742, 0.044715
        %v2749 = vmul.f32 %v2748, %v2742
        %v2750 = vmul.f32 %v2749, %v2742
        %v2751 = vadd.f32 %v2742, %v2750
        %v2752 = vmul.f32 %v2751, 0.7978846
        %v2753 = vtanh.pop %v2752
        %v2754 = vadd.f32 %v2753, 1.0
        %v2755 = vmul.f32 %v2747, %v2754
        %v2756 = vld [vmem:[#allocation20] sm:$0xf]
        %v2757 = vld [vmem:[#allocation20 + $0x4] sm:$0xf]
        %v2758 = vld [vmem:[#allocation20 + $0x8] sm:$0xf]
        %v2759 = vld [vmem:[#allocation20 + $0xc] sm:$0xf]
        %v2760 = vld [vmem:[#allocation20 + $0x10] sm:$0xf]
        %v2761 = vld [vmem:[#allocation20 + $0x14] sm:$0xf]
        %v2762 = vld [vmem:[#allocation20 + $0x18] sm:$0xf]
        %v2763 = vld [vmem:[#allocation20 + $0x1c] sm:$0xf]
        %v2764 = vpack.c.bf16 %v2755, %v2755
        %v2765 = vld [vmem:[#allocation22] sm:$0x1]
        %v2767 = vlaneseq
        %v2768 = vshrl.u32 %v2767, 7
        %v2769 = vsub.s32 0, %v2768
        %v2770 = vrot.slane %v2765, %v2769
        %v2780 = vunpack.c.l.b16 %v2756
        %v2781 = vunpack.c.l.b16 %v2757
        %v2782 = vunpack.c.l.b16 %v2758
        %v2783 = vunpack.c.l.b16 %v2759
        %v2784 = vunpack.c.l.b16 %v2760
        %v2785 = vunpack.c.l.b16 %v2761
        %v2786 = vunpack.c.l.b16 %v2762
        %v2787 = vunpack.c.l.b16 %v2763
        %v2788 = vpack.c.b16 %v2781, %v2780
        %v2789 = vpack.c.b16 %v2783, %v2782
        %v2790 = vpack.c.b16 %v2785, %v2784
        %v2791 = vpack.c.b16 %v2787, %v2786
        %vm2796 = vcmask 523264
        %v2798 = vsel %vm2796, %v2764, 0
        %2800 = vmatprep.subr.bf16.mxu0 0
        %2801 = vmatpush1.bf16.msra.mxu0 %v2788
        %2802 = vmatprep.subr.bf16.mxu0 0
        %2803 = vmatpush1.bf16.msra.mxu0 %v2789
        %2804 = vmatprep.subr.bf16.mxu0 0
        %2805 = vmatpush1.bf16.msra.mxu0 %v2790
        %2806 = vmatprep.subr.bf16.mxu0 0
        %2807 = vmatpush1.bf16.msra.mxu0 %v2791
        %2808 = vmatprep.subr.bf16.mxu0 0
        %2809 = vmatpush1.bf16.msra.mxu0 0
        %2810 = vmatprep.subr.bf16.mxu0 0
        %2811 = vmatpush1.bf16.msra.mxu0 0
        %2812 = vmatprep.subr.bf16.mxu0 0
        %2813 = vmatpush1.bf16.msra.mxu0 0
        %2814 = vmatprep.subr.bf16.mxu0 0
        %2815 = vmatpush1.bf16.msra.mxu0 0
        %2816 = vmatprep.subr.bf16.mxu0 0
        %2817 = vmatpush1.bf16.msra.mxu0 0
        %2818 = vmatprep.subr.bf16.mxu0 0
        %2819 = vmatpush1.bf16.msra.mxu0 0
        %2820 = vmatprep.subr.bf16.mxu0 0
        %2821 = vmatpush1.bf16.msra.mxu0 0
        %2822 = vmatprep.subr.bf16.mxu0 0
        %2823 = vmatpush1.bf16.msra.mxu0 0
        %2824 = vmatprep.subr.bf16.mxu0 0
        %2825 = vmatpush1.bf16.msra.mxu0 0
        %2826 = vmatprep.subr.bf16.mxu0 0
        %2827 = vmatpush1.bf16.msra.mxu0 0
        %2828 = vmatprep.subr.bf16.mxu0 0
        %2829 = vmatpush1.bf16.msra.mxu0 0
        %2830 = vmatprep.subr.bf16.mxu0 0
        %2831 = vmatpush1.bf16.msra.mxu0 0
        %2832 = vmatprep.mubr.bf16.mxu0 0
        %2833 = vmatmul.mubr.bf16.gmra.mrb[0].mxu0 %v2798
        %v2834 = vpop.f32.mrb[0].mxu0
        %v2835 = vadd.f32 %v2770, %v2834
        %v2836 = vpop.f32.mrb[0].mxu0
        %v2837 = vpop.f32.mrb[0].mxu0
        %v2838 = vpop.f32.mrb[0].mxu0
        %2839 = vdwg.mxu0
        %v2840 = vadd.f32 %v2650, %v2835
        %v2841 = vpack.c.bf16 %v2840, %v2840
        %vm2842 = vcmask 257024
        %2843 = vst.msk [vmem:[%s613] sm:$0xf] %vm2842, %v2841
        %s2844 = sand.u32 %s322, 1
        %s2845 = scalar_lea.sflag [#allocation4], %s2844
        %s2846 = sand.u32 %s322, 1
        %s2847 = smul.addr %s2846, 4
        %s2848 = scalar_lea.vmem [#allocation23], %s2847
        // Predicated region
        $region125: #{wav2vec2_forward.12} parent=71 // pred_check
          %p2849 = pneg %p332
        $region126: #{wav2vec2_forward.12} parent=71 // pred_check_branch
          %2851 = sbr.rel (%p2849) target = $region128
        $region127: #{wav2vec2_forward.12} parent=71 // pred_region
          %s2853 = ssub.s32 64, 64
          %2854 = vsyncadd %s2845, %s2853
          %s2855 = smul.addr %s36, 64
          %s2856 = scalar_lea.hbm %s13, %s2855
          %s2858 = sshll.u32 %s2848, 4
          %s2859 = int_to_ptr.vmem [resolvable:$true] %s2858
          %2861 = dma.vmem_to_hbm [thread:$0]  %s2859, 64, %s2856, %s2845
        $region128: #{wav2vec2_forward.12} parent=71 // pred_fallthru
          _
      $region72: #{wav2vec2_forward.12} parent=5 // pred_fallthru
        _
      %p2862 = scmp.le.s32.totalorder 2, %s31
      // Predicated region
      $region129: #{wav2vec2_forward.12} parent=5 // pred_check
        %p2863 = pneg %p2862
      $region130: #{wav2vec2_forward.12} parent=5 // pred_check_branch
        %2865 = sbr.rel (%p2863) target = $region132
      $region131: #{wav2vec2_forward.12} parent=5 // pred_region
        %s2866 = ssub.s32 %s31, 2
        // Predicated region
        $region133: #{wav2vec2_forward.12} parent=131 // pred_check
          %p2867 = pneg %p338
        $region134: #{wav2vec2_forward.12} parent=131 // pred_check_branch
          %2869 = sbr.rel (%p2867) target = $region136
        $region135: #{wav2vec2_forward.12} parent=131 // pred_region
          %s2870 = sand.u32 %s323, 1
          %s2871 = scalar_lea.sflag [#allocation4], %s2870
          %s2872 = sand.u32 %s323, 1
          %s2873 = smul.addr %s2872, 4
          %s2874 = scalar_lea.vmem [#allocation23], %s2873
          %2875 = dma.done %s2871, 64
        $region136: #{wav2vec2_forward.12} parent=131 // pred_fallthru
          _
      $region132: #{wav2vec2_forward.12} parent=5 // pred_fallthru
        _
    $region6: #{wav2vec2_forward.12} parent=1 // loop_footer
      %s35 = sadd.s32 1, %s31
    $region7: #{wav2vec2_forward.12} parent=1 // loop_footer_branch
      %30 = sbr.rel target = $region3
    $region8: #{wav2vec2_forward.12} parent=1 // loop_exit
      _
    %2876 = vsyncpa [#allocation3], 1
    %s2877 = scalar_lea.sflag [#allocation3], 1
    %2878 = vsyncpa %s2877, 1
    %2879 = vsyncpa [#allocation6], 1
    %2880 = vsyncpa [#allocation9], 1
    %2881 = vsyncpa [#allocation12], 1
    %2882 = vsyncpa [#allocation15], 1
    %2883 = vsyncpa [#allocation18], 1
    %2884 = vsyncpa [#allocation21], 1
    %2885 = vsyncpa [#allocation4], 1
    %s2886 = scalar_lea.sflag [#allocation4], 1
    %2887 = vsyncpa %s2886, 1

// kernel: wav2vec2_forward.13
$region0: #{wav2vec2_forward.13}
  #allocation0 [shape = 'u32[]', space=smem, size = 0x4, offset = 0x4, fixed_abs, tag = 'smem constant byte address 0x4 - core index']
  #allocation1 [shape = 'u32[144,128]{1,0:T(1,128)}', space=vmem, size = 0x12000, scoped, tag = 'internal scratch']
  %s0 = inlined_call_operand.hbm [shape: bf16[2,8,32], index: 0, kind: input, shape index: {}]
  %s1 = inlined_call_operand.hbm [shape: f32[1,32], index: 1, kind: input, shape index: {}]
  %s2 = inlined_call_operand.hbm [shape: f32[1,32], index: 2, kind: input, shape index: {}]
  %s3 = inlined_call_operand.hbm [shape: bf16[32,96], index: 3, kind: input, shape index: {}]
  %s4 = inlined_call_operand.hbm [shape: f32[1,96], index: 4, kind: input, shape index: {}]
  %s5 = inlined_call_operand.hbm [shape: bf16[32,32], index: 5, kind: input, shape index: {}]
  %s6 = inlined_call_operand.hbm [shape: f32[1,32], index: 6, kind: input, shape index: {}]
  %s7 = inlined_call_operand.hbm [shape: f32[1,32], index: 7, kind: input, shape index: {}]
  %s8 = inlined_call_operand.hbm [shape: f32[1,32], index: 8, kind: input, shape index: {}]
  %s9 = inlined_call_operand.hbm [shape: bf16[32,64], index: 9, kind: input, shape index: {}]
  %s10 = inlined_call_operand.hbm [shape: f32[1,64], index: 10, kind: input, shape index: {}]
  %s11 = inlined_call_operand.hbm [shape: bf16[64,32], index: 11, kind: input, shape index: {}]
  %s12 = inlined_call_operand.hbm [shape: f32[1,32], index: 12, kind: input, shape index: {}]
  %s13 = inlined_call_operand.hbm [shape: f32[2,8,32], index: 13, kind: output, shape index: {}]
  %s14 = sld [smem:[#allocation0]]
  $region137: #{wav2vec2_forward.13} parent=0
    _
  %s16 = ssub.s32 1, %s14
  %s17 = scalar_select 0, %s16, %s14
  $region1: #{wav2vec2_forward.13} parent=0
    #allocation2 [shape = 'u8[4096]{0}', space=vmem, size = 0x1000, scoped, tag = 'input window, operand 0']
    #allocation3 [shape = 's32[2]{0}', space=sflag, size = 0x8, scoped, tag = 'scoped memory for wav2vec2_forward.13']
    #allocation4 [shape = 's32[2]{0}', space=sflag, size = 0x8, scoped, tag = 'scoped memory for wav2vec2_forward.13']
    #allocation5 [shape = 'u8[512]{0}', space=vmem, size = 0x400, scoped, tag = 'input window, operand 1, single buffered']
    #allocation6 [shape = 's32[1]{0}', space=sflag, size = 0x4, scoped, tag = 'scoped memory for wav2vec2_forward.13']
    #allocation7 [shape = 'u8[512]{0}', space=vmem, size = 0x400, scoped, tag = 'input window, operand 2, single buffered']
    #allocation8 [shape = 'u8[8192]{0}', space=vmem, size = 0x2000, scoped, tag = 'input window, operand 3, single buffered']
    #allocation9 [shape = 's32[1]{0}', space=sflag, size = 0x4, scoped, tag = 'scoped memory for wav2vec2_forward.13']
    #allocation10 [shape = 'u8[512]{0}', space=vmem, size = 0x400, scoped, tag = 'input window, operand 4, single buffered']
    #allocation11 [shape = 'u8[8192]{0}', space=vmem, size = 0x2000, scoped, tag = 'input window, operand 5, single buffered']
    #allocation12 [shape = 's32[1]{0}', space=sflag, size = 0x4, scoped, tag = 'scoped memory for wav2vec2_forward.13']
    #allocation13 [shape = 'u8[512]{0}', space=vmem, size = 0x400, scoped, tag = 'input window, operand 6, single buffered']
    #allocation14 [shape = 'u8[512]{0}', space=vmem, size = 0x400, scoped, tag = 'input window, operand 7, single buffered']
    #allocation15 [shape = 's32[1]{0}', space=sflag, size = 0x4, scoped, tag = 'scoped memory for wav2vec2_forward.13']
    #allocation16 [shape = 'u8[512]{0}', space=vmem, size = 0x400, scoped, tag = 'input window, operand 8, single buffered']
    #allocation17 [shape = 'u8[8192]{0}', space=vmem, size = 0x2000, scoped, tag = 'input window, operand 9, single buffered']
    #allocation18 [shape = 's32[1]{0}', space=sflag, size = 0x4, scoped, tag = 'scoped memory for wav2vec2_forward.13']
    #allocation19 [shape = 'u8[512]{0}', space=vmem, size = 0x400, scoped, tag = 'input window, operand 10, single buffered']
    #allocation20 [shape = 'u8[16384]{0}', space=vmem, size = 0x4000, scoped, tag = 'input window, operand 11, single buffered']
    #allocation21 [shape = 's32[1]{0}', space=sflag, size = 0x4, scoped, tag = 'scoped memory for wav2vec2_forward.13']
    #allocation22 [shape = 'u8[512]{0}', space=vmem, size = 0x400, scoped, tag = 'input window, operand 12, single buffered']
    #allocation23 [shape = 'u8[8192]{0}', space=vmem, size = 0x2000, scoped, tag = 'output window, operand 0']
    %18 = vsyncpa [#allocation3], 0
    %s19 = scalar_lea.sflag [#allocation3], 1
    %20 = vsyncpa %s19, 0
    %21 = vsyncpa [#allocation6], 0
    %22 = vsyncpa [#allocation9], 0
    %23 = vsyncpa [#allocation12], 0
    %24 = vsyncpa [#allocation15], 0
    %25 = vsyncpa [#allocation18], 0
    %26 = vsyncpa [#allocation21], 0
    %27 = vsyncpa [#allocation4], 0
    %s28 = scalar_lea.sflag [#allocation4], 1
    %29 = vsyncpa %s28, 0
    loop: start=0, step=1, limit=4
    $region2: #{wav2vec2_forward.13} parent=1 // loop_pre_header
      _
    $region3: #{wav2vec2_forward.13} parent=1 // loop_header
      %s31 = sphi 0, %s35
      %p32 = scmp.ge.s32.totalorder %s31, 4
      %s41 = sphi 0, %s43
      %s44 = sphi 0, %s41
      %s45 = sphi 0, %s44
      %s61 = sphi 0, %s45
      %s65 = sphi 0, %s65
      %s67 = sphi 0, %s65
      %s68 = sphi 0, %s67
      %s82 = sphi 0, %s68
      %s86 = sphi 0, %s86
      %s88 = sphi 0, %s86
      %s89 = sphi 0, %s88
      %s103 = sphi 0, %s89
      %s107 = sphi 0, %s107
      %s109 = sphi 0, %s107
      %s110 = sphi 0, %s109
      %s124 = sphi 0, %s110
      %s128 = sphi 0, %s128
      %s130 = sphi 0, %s128
      %s131 = sphi 0, %s130
      %s145 = sphi 0, %s131
      %s149 = sphi 0, %s149
      %s151 = sphi 0, %s149
      %s152 = sphi 0, %s151
      %s166 = sphi 0, %s152
      %s170 = sphi 0, %s170
      %s172 = sphi 0, %s170
      %s173 = sphi 0, %s172
      %s187 = sphi 0, %s173
      %s191 = sphi 0, %s191
      %s193 = sphi 0, %s191
      %s194 = sphi 0, %s193
      %s208 = sphi 0, %s194
      %s212 = sphi 0, %s212
      %s214 = sphi 0, %s212
      %s215 = sphi 0, %s214
      %s229 = sphi 0, %s215
      %s233 = sphi 0, %s233
      %s235 = sphi 0, %s233
      %s236 = sphi 0, %s235
      %s250 = sphi 0, %s236
      %s254 = sphi 0, %s254
      %s256 = sphi 0, %s254
      %s257 = sphi 0, %s256
      %s271 = sphi 0, %s257
      %s275 = sphi 0, %s275
      %s277 = sphi 0, %s275
      %s278 = sphi 0, %s277
      %s292 = sphi 0, %s278
      %s296 = sphi 0, %s296
      %s298 = sphi 0, %s296
      %s299 = sphi 0, %s298
      %s313 = sphi 0, %s299
      %s319 = sphi 0, %s321
      %s322 = sphi 0, %s319
      %s323 = sphi 0, %s322
      %s339 = sphi 0, %s323
    $region4: #{wav2vec2_forward.13} parent=1 // loop_header_branch
      %34 = sbr.rel (%p32) target = $region8
    $region5: #{wav2vec2_forward.13} parent=1 // loop_body
      %s36 = ssub.s32 %s31, 1
      %s37 = ssub.s32 %s31, 2
      %s38 = sadd.s32 %s31, 1
      %s39 = ssub.s32 %s31, %s38
      %p40 = scmp.eq.s32.totalorder %s39, 0
      %s42 = sadd.s32 %s41, 1
      %s43 = scalar_select %p40, %s41, %s42
      %p46 = pneg %p40
      %p47 = scmp.eq.s32.totalorder %s31, 1
      %p48 = por %p46, %p47
      %p49 = scmp.ne.s32.totalorder %s41, %s44
      %p50 = scmp.eq.s32.totalorder %s31, 0
      %p51 = por %p49, %p50
      %p52 = scmp.ne.s32.totalorder %s41, %s44
      %p53 = scmp.eq.s32.totalorder %s36, 1
      %p54 = por %p52, %p53
      %p55 = scmp.ne.s32.totalorder %s44, %s45
      %p56 = scmp.eq.s32.totalorder %s36, 0
      %p57 = por %p55, %p56
      %p58 = scmp.ne.s32.totalorder %s44, %s45
      %p59 = scmp.eq.s32.totalorder %s37, 1
      %p60 = por %p58, %p59
      %p62 = scmp.ne.s32.totalorder %s45, %s61
      %p63 = scmp.eq.s32.totalorder %s37, 0
      %p64 = por %p62, %p63
      %s66 = sadd.s32 %s65, 1
      %p69 = scmp.eq.s32.totalorder %s31, 1
      %p70 = scmp.ne.s32.totalorder %s65, %s67
      %p71 = scmp.eq.s32.totalorder %s31, 0
      %p72 = por %p70, %p71
      %p73 = scmp.ne.s32.totalorder %s65, %s67
      %p74 = scmp.eq.s32.totalorder %s36, 1
      %p75 = por %p73, %p74
      %p76 = scmp.ne.s32.totalorder %s67, %s68
      %p77 = scmp.eq.s32.totalorder %s36, 0
      %p78 = por %p76, %p77
      %p79 = scmp.ne.s32.totalorder %s67, %s68
      %p80 = scmp.eq.s32.totalorder %s37, 1
      %p81 = por %p79, %p80
      %p83 = scmp.ne.s32.totalorder %s68, %s82
      %p84 = scmp.eq.s32.totalorder %s37, 0
      %p85 = por %p83, %p84
      %s87 = sadd.s32 %s86, 1
      %p90 = scmp.eq.s32.totalorder %s31, 1
      %p91 = scmp.ne.s32.totalorder %s86, %s88
      %p92 = scmp.eq.s32.totalorder %s31, 0
      %p93 = por %p91, %p92
      %p94 = scmp.ne.s32.totalorder %s86, %s88
      %p95 = scmp.eq.s32.totalorder %s36, 1
      %p96 = por %p94, %p95
      %p97 = scmp.ne.s32.totalorder %s88, %s89
      %p98 = scmp.eq.s32.totalorder %s36, 0
      %p99 = por %p97, %p98
      %p100 = scmp.ne.s32.totalorder %s88, %s89
      %p101 = scmp.eq.s32.totalorder %s37, 1
      %p102 = por %p100, %p101
      %p104 = scmp.ne.s32.totalorder %s89, %s103
      %p105 = scmp.eq.s32.totalorder %s37, 0
      %p106 = por %p104, %p105
      %s108 = sadd.s32 %s107, 1
      %p111 = scmp.eq.s32.totalorder %s31, 1
      %p112 = scmp.ne.s32.totalorder %s107, %s109
      %p113 = scmp.eq.s32.totalorder %s31, 0
      %p114 = por %p112, %p113
      %p115 = scmp.ne.s32.totalorder %s107, %s109
      %p116 = scmp.eq.s32.totalorder %s36, 1
      %p117 = por %p115, %p116
      %p118 = scmp.ne.s32.totalorder %s109, %s110
      %p119 = scmp.eq.s32.totalorder %s36, 0
      %p120 = por %p118, %p119
      %p121 = scmp.ne.s32.totalorder %s109, %s110
      %p122 = scmp.eq.s32.totalorder %s37, 1
      %p123 = por %p121, %p122
      %p125 = scmp.ne.s32.totalorder %s110, %s124
      %p126 = scmp.eq.s32.totalorder %s37, 0
      %p127 = por %p125, %p126
      %s129 = sadd.s32 %s128, 1
      %p132 = scmp.eq.s32.totalorder %s31, 1
      %p133 = scmp.ne.s32.totalorder %s128, %s130
      %p134 = scmp.eq.s32.totalorder %s31, 0
      %p135 = por %p133, %p134
      %p136 = scmp.ne.s32.totalorder %s128, %s130
      %p137 = scmp.eq.s32.totalorder %s36, 1
      %p138 = por %p136, %p137
      %p139 = scmp.ne.s32.totalorder %s130, %s131
      %p140 = scmp.eq.s32.totalorder %s36, 0
      %p141 = por %p139, %p140
      %p142 = scmp.ne.s32.totalorder %s130, %s131
      %p143 = scmp.eq.s32.totalorder %s37, 1
      %p144 = por %p142, %p143
      %p146 = scmp.ne.s32.totalorder %s131, %s145
      %p147 = scmp.eq.s32.totalorder %s37, 0
      %p148 = por %p146, %p147
      %s150 = sadd.s32 %s149, 1
      %p153 = scmp.eq.s32.totalorder %s31, 1
      %p154 = scmp.ne.s32.totalorder %s149, %s151
      %p155 = scmp.eq.s32.totalorder %s31, 0
      %p156 = por %p154, %p155
      %p157 = scmp.ne.s32.totalorder %s149, %s151
      %p158 = scmp.eq.s32.totalorder %s36, 1
      %p159 = por %p157, %p158
      %p160 = scmp.ne.s32.totalorder %s151, %s152
      %p161 = scmp.eq.s32.totalorder %s36, 0
      %p162 = por %p160, %p161
      %p163 = scmp.ne.s32.totalorder %s151, %s152
      %p164 = scmp.eq.s32.totalorder %s37, 1
      %p165 = por %p163, %p164
      %p167 = scmp.ne.s32.totalorder %s152, %s166
      %p168 = scmp.eq.s32.totalorder %s37, 0
      %p169 = por %p167, %p168
      %s171 = sadd.s32 %s170, 1
      %p174 = scmp.eq.s32.totalorder %s31, 1
      %p175 = scmp.ne.s32.totalorder %s170, %s172
      %p176 = scmp.eq.s32.totalorder %s31, 0
      %p177 = por %p175, %p176
      %p178 = scmp.ne.s32.totalorder %s170, %s172
      %p179 = scmp.eq.s32.totalorder %s36, 1
      %p180 = por %p178, %p179
      %p181 = scmp.ne.s32.totalorder %s172, %s173
      %p182 = scmp.eq.s32.totalorder %s36, 0
      %p183 = por %p181, %p182
      %p184 = scmp.ne.s32.totalorder %s172, %s173
      %p185 = scmp.eq.s32.totalorder %s37, 1
      %p186 = por %p184, %p185
      %p188 = scmp.ne.s32.totalorder %s173, %s187
      %p189 = scmp.eq.s32.totalorder %s37, 0
      %p190 = por %p188, %p189
      %s192 = sadd.s32 %s191, 1
      %p195 = scmp.eq.s32.totalorder %s31, 1
      %p196 = scmp.ne.s32.totalorder %s191, %s193
      %p197 = scmp.eq.s32.totalorder %s31, 0
      %p198 = por %p196, %p197
      %p199 = scmp.ne.s32.totalorder %s191, %s193
      %p200 = scmp.eq.s32.totalorder %s36, 1
      %p201 = por %p199, %p200
      %p202 = scmp.ne.s32.totalorder %s193, %s194
      %p203 = scmp.eq.s32.totalorder %s36, 0
      %p204 = por %p202, %p203
      %p205 = scmp.ne.s32.totalorder %s193, %s194
      %p206 = scmp.eq.s32.totalorder %s37, 1
      %p207 = por %p205, %p206
      %p209 = scmp.ne.s32.totalorder %s194, %s208
      %p210 = scmp.eq.s32.totalorder %s37, 0
      %p211 = por %p209, %p210
      %s213 = sadd.s32 %s212, 1
      %p216 = scmp.eq.s32.totalorder %s31, 1
      %p217 = scmp.ne.s32.totalorder %s212, %s214
      %p218 = scmp.eq.s32.totalorder %s31, 0
      %p219 = por %p217, %p218
      %p220 = scmp.ne.s32.totalorder %s212, %s214
      %p221 = scmp.eq.s32.totalorder %s36, 1
      %p222 = por %p220, %p221
      %p223 = scmp.ne.s32.totalorder %s214, %s215
      %p224 = scmp.eq.s32.totalorder %s36, 0
      %p225 = por %p223, %p224
      %p226 = scmp.ne.s32.totalorder %s214, %s215
      %p227 = scmp.eq.s32.totalorder %s37, 1
      %p228 = por %p226, %p227
      %p230 = scmp.ne.s32.totalorder %s215, %s229
      %p231 = scmp.eq.s32.totalorder %s37, 0
      %p232 = por %p230, %p231
      %s234 = sadd.s32 %s233, 1
      %p237 = scmp.eq.s32.totalorder %s31, 1
      %p238 = scmp.ne.s32.totalorder %s233, %s235
      %p239 = scmp.eq.s32.totalorder %s31, 0
      %p240 = por %p238, %p239
      %p241 = scmp.ne.s32.totalorder %s233, %s235
      %p242 = scmp.eq.s32.totalorder %s36, 1
      %p243 = por %p241, %p242
      %p244 = scmp.ne.s32.totalorder %s235, %s236
      %p245 = scmp.eq.s32.totalorder %s36, 0
      %p246 = por %p244, %p245
      %p247 = scmp.ne.s32.totalorder %s235, %s236
      %p248 = scmp.eq.s32.totalorder %s37, 1
      %p249 = por %p247, %p248
      %p251 = scmp.ne.s32.totalorder %s236, %s250
      %p252 = scmp.eq.s32.totalorder %s37, 0
      %p253 = por %p251, %p252
      %s255 = sadd.s32 %s254, 1
      %p258 = scmp.eq.s32.totalorder %s31, 1
      %p259 = scmp.ne.s32.totalorder %s254, %s256
      %p260 = scmp.eq.s32.totalorder %s31, 0
      %p261 = por %p259, %p260
      %p262 = scmp.ne.s32.totalorder %s254, %s256
      %p263 = scmp.eq.s32.totalorder %s36, 1
      %p264 = por %p262, %p263
      %p265 = scmp.ne.s32.totalorder %s256, %s257
      %p266 = scmp.eq.s32.totalorder %s36, 0
      %p267 = por %p265, %p266
      %p268 = scmp.ne.s32.totalorder %s256, %s257
      %p269 = scmp.eq.s32.totalorder %s37, 1
      %p270 = por %p268, %p269
      %p272 = scmp.ne.s32.totalorder %s257, %s271
      %p273 = scmp.eq.s32.totalorder %s37, 0
      %p274 = por %p272, %p273
      %s276 = sadd.s32 %s275, 1
      %p279 = scmp.eq.s32.totalorder %s31, 1
      %p280 = scmp.ne.s32.totalorder %s275, %s277
      %p281 = scmp.eq.s32.totalorder %s31, 0
      %p282 = por %p280, %p281
      %p283 = scmp.ne.s32.totalorder %s275, %s277
      %p284 = scmp.eq.s32.totalorder %s36, 1
      %p285 = por %p283, %p284
      %p286 = scmp.ne.s32.totalorder %s277, %s278
      %p287 = scmp.eq.s32.totalorder %s36, 0
      %p288 = por %p286, %p287
      %p289 = scmp.ne.s32.totalorder %s277, %s278
      %p290 = scmp.eq.s32.totalorder %s37, 1
      %p291 = por %p289, %p290
      %p293 = scmp.ne.s32.totalorder %s278, %s292
      %p294 = scmp.eq.s32.totalorder %s37, 0
      %p295 = por %p293, %p294
      %s297 = sadd.s32 %s296, 1
      %p300 = scmp.eq.s32.totalorder %s31, 1
      %p301 = scmp.ne.s32.totalorder %s296, %s298
      %p302 = scmp.eq.s32.totalorder %s31, 0
      %p303 = por %p301, %p302
      %p304 = scmp.ne.s32.totalorder %s296, %s298
      %p305 = scmp.eq.s32.totalorder %s36, 1
      %p306 = por %p304, %p305
      %p307 = scmp.ne.s32.totalorder %s298, %s299
      %p308 = scmp.eq.s32.totalorder %s36, 0
      %p309 = por %p307, %p308
      %p310 = scmp.ne.s32.totalorder %s298, %s299
      %p311 = scmp.eq.s32.totalorder %s37, 1
      %p312 = por %p310, %p311
      %p314 = scmp.ne.s32.totalorder %s299, %s313
      %p315 = scmp.eq.s32.totalorder %s37, 0
      %p316 = por %p314, %p315
      %s317 = ssub.s32 %s31, %s38
      %p318 = scmp.eq.s32.totalorder %s317, 0
      %s320 = sadd.s32 %s319, 1
      %s321 = scalar_select %p318, %s319, %s320
      %p324 = pneg %p318
      %p325 = scmp.eq.s32.totalorder %s31, 1
      %p326 = por %p324, %p325
      %p327 = scmp.ne.s32.totalorder %s319, %s322
      %p328 = scmp.eq.s32.totalorder %s31, 0
      %p329 = por %p327, %p328
      %p330 = scmp.ne.s32.totalorder %s319, %s322
      %p331 = scmp.eq.s32.totalorder %s36, 1
      %p332 = por %p330, %p331
      %p333 = scmp.ne.s32.totalorder %s322, %s323
      %p334 = scmp.eq.s32.totalorder %s36, 0
      %p335 = por %p333, %p334
      %p336 = scmp.ne.s32.totalorder %s322, %s323
      %p337 = scmp.eq.s32.totalorder %s37, 1
      %p338 = por %p336, %p337
      %p340 = scmp.ne.s32.totalorder %s323, %s339
      %p341 = scmp.eq.s32.totalorder %s37, 0
      %p342 = por %p340, %p341
      %p343 = scmp.le.s32.totalorder 1, %s31
      %p344 = scmp.lt.s32.totalorder %s31, 3
      %p345 = pnand %p343, %p344
      %p346 = pneg %p345
      // Predicated region
      $region9: #{wav2vec2_forward.13} parent=5 // pred_check
        _
      $region10: #{wav2vec2_forward.13} parent=5 // pred_check_branch
        %348 = sbr.rel (%p345) target = $region12
      $region11: #{wav2vec2_forward.13} parent=5 // pred_region
        %s349 = ssub.s32 %s31, 1
        // Predicated region
        $region13: #{wav2vec2_forward.13} parent=11 // pred_check
          %p350 = pneg %p78
        $region14: #{wav2vec2_forward.13} parent=11 // pred_check_branch
          %352 = sbr.rel (%p350) target = $region16
        $region15: #{wav2vec2_forward.13} parent=11 // pred_region
          %s354 = ssub.s32 16, 16
          %355 = vsyncadd [#allocation6], %s354
          %s357 = sshll.u32 [#allocation5], 4
          %s358 = int_to_ptr.vmem [resolvable:$true] %s357
          %360 = dma.hbm_to_vmem [thread:$0]  %s1, 16, %s358, [#allocation6]
        $region16: #{wav2vec2_forward.13} parent=11 // pred_fallthru
          _
        // Predicated region
        $region17: #{wav2vec2_forward.13} parent=11 // pred_check
          %p361 = pneg %p99
        $region18: #{wav2vec2_forward.13} parent=11 // pred_check_branch
          %363 = sbr.rel (%p361) target = $region20
        $region19: #{wav2vec2_forward.13} parent=11 // pred_region
          %s365 = ssub.s32 16, 16
          %366 = vsyncadd [#allocation6], %s365
          %s368 = sshll.u32 [#allocation7], 4
          %s369 = int_to_ptr.vmem [resolvable:$true] %s368
          %371 = dma.hbm_to_vmem [thread:$0]  %s2, 16, %s369, [#allocation6]
        $region20: #{wav2vec2_forward.13} parent=11 // pred_fallthru
          _
        // Predicated region
        $region21: #{wav2vec2_forward.13} parent=11 // pred_check
          %p372 = pneg %p120
        $region22: #{wav2vec2_forward.13} parent=11 // pred_check_branch
          %374 = sbr.rel (%p372) target = $region24
        $region23: #{wav2vec2_forward.13} parent=11 // pred_region
          %s376 = ssub.s32 256, 256
          %377 = vsyncadd [#allocation9], %s376
          %s378 = sshll.u32 [#allocation8], 4
          %s379 = int_to_ptr.vmem [resolvable:$true] %s378
          %384 = dma.hbm_to_vmem [thread:$0]  %s3, 256, %s379, [#allocation9], 64, 64, 4
        $region24: #{wav2vec2_forward.13} parent=11 // pred_fallthru
          _
        // Predicated region
        $region25: #{wav2vec2_forward.13} parent=11 // pred_check
          %p385 = pneg %p141
        $region26: #{wav2vec2_forward.13} parent=11 // pred_check_branch
          %387 = sbr.rel (%p385) target = $region28
        $region27: #{wav2vec2_forward.13} parent=11 // pred_region
          %s389 = ssub.s32 16, 16
          %390 = vsyncadd [#allocation9], %s389
          %s392 = sshll.u32 [#allocation10], 4
          %s393 = int_to_ptr.vmem [resolvable:$true] %s392
          %395 = dma.hbm_to_vmem [thread:$0]  %s4, 16, %s393, [#allocation9]
        $region28: #{wav2vec2_forward.13} parent=11 // pred_fallthru
          _
        // Predicated region
        $region29: #{wav2vec2_forward.13} parent=11 // pred_check
          %p396 = pneg %p162
        $region30: #{wav2vec2_forward.13} parent=11 // pred_check_branch
          %398 = sbr.rel (%p396) target = $region32
        $region31: #{wav2vec2_forward.13} parent=11 // pred_region
          %s400 = ssub.s32 256, 256
          %401 = vsyncadd [#allocation12], %s400
          %s402 = sshll.u32 [#allocation11], 4
          %s403 = int_to_ptr.vmem [resolvable:$true] %s402
          %408 = dma.hbm_to_vmem [thread:$0]  %s5, 256, %s403, [#allocation12], 64, 64, 4
        $region32: #{wav2vec2_forward.13} parent=11 // pred_fallthru
          _
        // Predicated region
        $region33: #{wav2vec2_forward.13} parent=11 // pred_check
          %p409 = pneg %p183
        $region34: #{wav2vec2_forward.13} parent=11 // pred_check_branch
          %411 = sbr.rel (%p409) target = $region36
        $region35: #{wav2vec2_forward.13} parent=11 // pred_region
          %s413 = ssub.s32 16, 16
          %414 = vsyncadd [#allocation12], %s413
          %s416 = sshll.u32 [#allocation13], 4
          %s417 = int_to_ptr.vmem [resolvable:$true] %s416
          %419 = dma.hbm_to_vmem [thread:$0]  %s6, 16, %s417, [#allocation12]
        $region36: #{wav2vec2_forward.13} parent=11 // pred_fallthru
          _
        // Predicated region
        $region37: #{wav2vec2_forward.13} parent=11 // pred_check
          %p420 = pneg %p204
        $region38: #{wav2vec2_forward.13} parent=11 // pred_check_branch
          %422 = sbr.rel (%p420) target = $region40
        $region39: #{wav2vec2_forward.13} parent=11 // pred_region
          %s424 = ssub.s32 16, 16
          %425 = vsyncadd [#allocation15], %s424
          %s427 = sshll.u32 [#allocation14], 4
          %s428 = int_to_ptr.vmem [resolvable:$true] %s427
          %430 = dma.hbm_to_vmem [thread:$0]  %s7, 16, %s428, [#allocation15]
        $region40: #{wav2vec2_forward.13} parent=11 // pred_fallthru
          _
        // Predicated region
        $region41: #{wav2vec2_forward.13} parent=11 // pred_check
          %p431 = pneg %p225
        $region42: #{wav2vec2_forward.13} parent=11 // pred_check_branch
          %433 = sbr.rel (%p431) target = $region44
        $region43: #{wav2vec2_forward.13} parent=11 // pred_region
          %s435 = ssub.s32 16, 16
          %436 = vsyncadd [#allocation15], %s435
          %s438 = sshll.u32 [#allocation16], 4
          %s439 = int_to_ptr.vmem [resolvable:$true] %s438
          %441 = dma.hbm_to_vmem [thread:$0]  %s8, 16, %s439, [#allocation15]
        $region44: #{wav2vec2_forward.13} parent=11 // pred_fallthru
          _
        // Predicated region
        $region45: #{wav2vec2_forward.13} parent=11 // pred_check
          %p442 = pneg %p246
        $region46: #{wav2vec2_forward.13} parent=11 // pred_check_branch
          %444 = sbr.rel (%p442) target = $region48
        $region47: #{wav2vec2_forward.13} parent=11 // pred_region
          %s446 = ssub.s32 256, 256
          %447 = vsyncadd [#allocation18], %s446
          %s448 = sshll.u32 [#allocation17], 4
          %s449 = int_to_ptr.vmem [resolvable:$true] %s448
          %454 = dma.hbm_to_vmem [thread:$0]  %s9, 256, %s449, [#allocation18], 64, 64, 4
        $region48: #{wav2vec2_forward.13} parent=11 // pred_fallthru
          _
        // Predicated region
        $region49: #{wav2vec2_forward.13} parent=11 // pred_check
          %p455 = pneg %p267
        $region50: #{wav2vec2_forward.13} parent=11 // pred_check_branch
          %457 = sbr.rel (%p455) target = $region52
        $region51: #{wav2vec2_forward.13} parent=11 // pred_region
          %s459 = ssub.s32 16, 16
          %460 = vsyncadd [#allocation18], %s459
          %s462 = sshll.u32 [#allocation19], 4
          %s463 = int_to_ptr.vmem [resolvable:$true] %s462
          %465 = dma.hbm_to_vmem [thread:$0]  %s10, 16, %s463, [#allocation18]
        $region52: #{wav2vec2_forward.13} parent=11 // pred_fallthru
          _
        // Predicated region
        $region53: #{wav2vec2_forward.13} parent=11 // pred_check
          %p466 = pneg %p288
        $region54: #{wav2vec2_forward.13} parent=11 // pred_check_branch
          %468 = sbr.rel (%p466) target = $region56
        $region55: #{wav2vec2_forward.13} parent=11 // pred_region
          %s470 = ssub.s32 512, 512
          %471 = vsyncadd [#allocation21], %s470
          %s472 = sshll.u32 [#allocation20], 4
          %s473 = int_to_ptr.vmem [resolvable:$true] %s472
          %478 = dma.hbm_to_vmem [thread:$0]  %s11, 512, %s473, [#allocation21], 64, 64, 4
        $region56: #{wav2vec2_forward.13} parent=11 // pred_fallthru
          _
        // Predicated region
        $region57: #{wav2vec2_forward.13} parent=11 // pred_check
          %p479 = pneg %p309
        $region58: #{wav2vec2_forward.13} parent=11 // pred_check_branch
          %481 = sbr.rel (%p479) target = $region60
        $region59: #{wav2vec2_forward.13} parent=11 // pred_region
          %s483 = ssub.s32 16, 16
          %484 = vsyncadd [#allocation21], %s483
          %s486 = sshll.u32 [#allocation22], 4
          %s487 = int_to_ptr.vmem [resolvable:$true] %s486
          %489 = dma.hbm_to_vmem [thread:$0]  %s12, 16, %s487, [#allocation21]
        $region60: #{wav2vec2_forward.13} parent=11 // pred_fallthru
          _
      $region12: #{wav2vec2_forward.13} parent=5 // pred_fallthru
        _
      %p490 = scmp.lt.s32.totalorder %s31, 2
      // Predicated region
      $region61: #{wav2vec2_forward.13} parent=5 // pred_check
        %p491 = pneg %p490
      $region62: #{wav2vec2_forward.13} parent=5 // pred_check_branch
        %493 = sbr.rel (%p491) target = $region64
      $region63: #{wav2vec2_forward.13} parent=5 // pred_region
        // Predicated region
        $region65: #{wav2vec2_forward.13} parent=63 // pred_check
          %p494 = pneg %p51
        $region66: #{wav2vec2_forward.13} parent=63 // pred_check_branch
          %496 = sbr.rel (%p494) target = $region68
        $region67: #{wav2vec2_forward.13} parent=63 // pred_region
          %s497 = sand.u32 %s41, 1
          %s498 = scalar_lea.sflag [#allocation3], %s497
          %s499 = sand.u32 %s41, 1
          %s500 = smul.addr %s499, 4
          %s501 = scalar_lea.vmem [#allocation2], %s500
          %s503 = ssub.s32 64, 64
          %504 = vsyncadd %s498, %s503
          %s505 = smul.addr %s31, 64
          %s506 = scalar_lea.hbm %s0, %s505
          %s508 = sshll.u32 %s501, 4
          %s509 = int_to_ptr.vmem [resolvable:$true] %s508
          %511 = dma.hbm_to_vmem [thread:$0]  %s506, 64, %s509, %s498
        $region68: #{wav2vec2_forward.13} parent=63 // pred_fallthru
          _
      $region64: #{wav2vec2_forward.13} parent=5 // pred_fallthru
        _
      %p512 = scmp.le.s32.totalorder 1, %s31
      %p513 = scmp.lt.s32.totalorder %s31, 3
      %p514 = pnand %p512, %p513
      %p515 = pneg %p514
      // Predicated region
      $region69: #{wav2vec2_forward.13} parent=5 // pred_check
        _
      $region70: #{wav2vec2_forward.13} parent=5 // pred_check_branch
        %517 = sbr.rel (%p514) target = $region72
      $region71: #{wav2vec2_forward.13} parent=5 // pred_region
        %s518 = ssub.s32 %s31, 1
        %s519 = sand.u32 %s44, 1
        %s520 = scalar_lea.sflag [#allocation3], %s519
        %s521 = sand.u32 %s44, 1
        %s522 = smul.addr %s521, 4
        %s523 = scalar_lea.vmem [#allocation2], %s522
        // Predicated region
        $region73: #{wav2vec2_forward.13} parent=71 // pred_check
          %p524 = pneg %p57
        $region74: #{wav2vec2_forward.13} parent=71 // pred_check_branch
          %526 = sbr.rel (%p524) target = $region76
        $region75: #{wav2vec2_forward.13} parent=71 // pred_region
          %527 = dma.done %s520, 64
        $region76: #{wav2vec2_forward.13} parent=71 // pred_fallthru
          _
        // Predicated region
        $region77: #{wav2vec2_forward.13} parent=71 // pred_check
          %p528 = pneg %p78
        $region78: #{wav2vec2_forward.13} parent=71 // pred_check_branch
          %530 = sbr.rel (%p528) target = $region80
        $region79: #{wav2vec2_forward.13} parent=71 // pred_region
          %531 = dma.done [#allocation6], 16
        $region80: #{wav2vec2_forward.13} parent=71 // pred_fallthru
          _
        // Predicated region
        $region81: #{wav2vec2_forward.13} parent=71 // pred_check
          %p532 = pneg %p99
        $region82: #{wav2vec2_forward.13} parent=71 // pred_check_branch
          %534 = sbr.rel (%p532) target = $region84
        $region83: #{wav2vec2_forward.13} parent=71 // pred_region
          %535 = dma.done [#allocation6], 16
        $region84: #{wav2vec2_forward.13} parent=71 // pred_fallthru
          _
        // Predicated region
        $region85: #{wav2vec2_forward.13} parent=71 // pred_check
          %p536 = pneg %p120
        $region86: #{wav2vec2_forward.13} parent=71 // pred_check_branch
          %538 = sbr.rel (%p536) target = $region88
        $region87: #{wav2vec2_forward.13} parent=71 // pred_region
          %539 = dma.done [#allocation9], 256
        $region88: #{wav2vec2_forward.13} parent=71 // pred_fallthru
          _
        // Predicated region
        $region89: #{wav2vec2_forward.13} parent=71 // pred_check
          %p540 = pneg %p141
        $region90: #{wav2vec2_forward.13} parent=71 // pred_check_branch
          %542 = sbr.rel (%p540) target = $region92
        $region91: #{wav2vec2_forward.13} parent=71 // pred_region
          %543 = dma.done [#allocation9], 16
        $region92: #{wav2vec2_forward.13} parent=71 // pred_fallthru
          _
        // Predicated region
        $region93: #{wav2vec2_forward.13} parent=71 // pred_check
          %p544 = pneg %p162
        $region94: #{wav2vec2_forward.13} parent=71 // pred_check_branch
          %546 = sbr.rel (%p544) target = $region96
        $region95: #{wav2vec2_forward.13} parent=71 // pred_region
          %547 = dma.done [#allocation12], 256
        $region96: #{wav2vec2_forward.13} parent=71 // pred_fallthru
          _
        // Predicated region
        $region97: #{wav2vec2_forward.13} parent=71 // pred_check
          %p548 = pneg %p183
        $region98: #{wav2vec2_forward.13} parent=71 // pred_check_branch
          %550 = sbr.rel (%p548) target = $region100
        $region99: #{wav2vec2_forward.13} parent=71 // pred_region
          %551 = dma.done [#allocation12], 16
        $region100: #{wav2vec2_forward.13} parent=71 // pred_fallthru
          _
        // Predicated region
        $region101: #{wav2vec2_forward.13} parent=71 // pred_check
          %p552 = pneg %p204
        $region102: #{wav2vec2_forward.13} parent=71 // pred_check_branch
          %554 = sbr.rel (%p552) target = $region104
        $region103: #{wav2vec2_forward.13} parent=71 // pred_region
          %555 = dma.done [#allocation15], 16
        $region104: #{wav2vec2_forward.13} parent=71 // pred_fallthru
          _
        // Predicated region
        $region105: #{wav2vec2_forward.13} parent=71 // pred_check
          %p556 = pneg %p225
        $region106: #{wav2vec2_forward.13} parent=71 // pred_check_branch
          %558 = sbr.rel (%p556) target = $region108
        $region107: #{wav2vec2_forward.13} parent=71 // pred_region
          %559 = dma.done [#allocation15], 16
        $region108: #{wav2vec2_forward.13} parent=71 // pred_fallthru
          _
        // Predicated region
        $region109: #{wav2vec2_forward.13} parent=71 // pred_check
          %p560 = pneg %p246
        $region110: #{wav2vec2_forward.13} parent=71 // pred_check_branch
          %562 = sbr.rel (%p560) target = $region112
        $region111: #{wav2vec2_forward.13} parent=71 // pred_region
          %563 = dma.done [#allocation18], 256
        $region112: #{wav2vec2_forward.13} parent=71 // pred_fallthru
          _
        // Predicated region
        $region113: #{wav2vec2_forward.13} parent=71 // pred_check
          %p564 = pneg %p267
        $region114: #{wav2vec2_forward.13} parent=71 // pred_check_branch
          %566 = sbr.rel (%p564) target = $region116
        $region115: #{wav2vec2_forward.13} parent=71 // pred_region
          %567 = dma.done [#allocation18], 16
        $region116: #{wav2vec2_forward.13} parent=71 // pred_fallthru
          _
        // Predicated region
        $region117: #{wav2vec2_forward.13} parent=71 // pred_check
          %p568 = pneg %p288
        $region118: #{wav2vec2_forward.13} parent=71 // pred_check_branch
          %570 = sbr.rel (%p568) target = $region120
        $region119: #{wav2vec2_forward.13} parent=71 // pred_region
          %571 = dma.done [#allocation21], 512
        $region120: #{wav2vec2_forward.13} parent=71 // pred_fallthru
          _
        // Predicated region
        $region121: #{wav2vec2_forward.13} parent=71 // pred_check
          %p572 = pneg %p309
        $region122: #{wav2vec2_forward.13} parent=71 // pred_check_branch
          %574 = sbr.rel (%p572) target = $region124
        $region123: #{wav2vec2_forward.13} parent=71 // pred_region
          %575 = dma.done [#allocation21], 16
        $region124: #{wav2vec2_forward.13} parent=71 // pred_fallthru
          _
        %s576 = sand.u32 %s44, 1
        %s577 = scalar_lea.sflag [#allocation3], %s576
        %s578 = sand.u32 %s44, 1
        %s579 = smul.addr %s578, 4
        %s580 = scalar_lea.vmem [#allocation2], %s579
        %p581 = pneg %p57
        %p582 = pneg %p54
        %p583 = pneg %p78
        %p584 = pneg %p75
        %p585 = pneg %p99
        %p586 = pneg %p96
        %p587 = pneg %p120
        %p588 = pneg %p117
        %p589 = pneg %p141
        %p590 = pneg %p138
        %p591 = pneg %p162
        %p592 = pneg %p159
        %p593 = pneg %p183
        %p594 = pneg %p180
        %p595 = pneg %p204
        %p596 = pneg %p201
        %p597 = pneg %p225
        %p598 = pneg %p222
        %p599 = pneg %p246
        %p600 = pneg %p243
        %p601 = pneg %p267
        %p602 = pneg %p264
        %p603 = pneg %p288
        %p604 = pneg %p285
        %p605 = pneg %p309
        %p606 = pneg %p306
        %p607 = pneg %p335
        %p608 = pneg %p332
        %s609 = sand.u32 %s322, 1
        %s610 = scalar_lea.sflag [#allocation4], %s609
        %s611 = sand.u32 %s322, 1
        %s612 = smul.addr %s611, 8
        %s613 = scalar_lea.vmem [#allocation23], %s612
        %v615 = vld [vmem:[%s523] sm:$0xf]
        %v616 = vunpack.c.l.bf16 %v615
        %v617 = vld [vmem:[#allocation5] sm:$0x1]
        %v618 = vld [vmem:[#allocation7] sm:$0x1]
        %vm619 = vcmask 261120
        %v620 = vsel %vm619, %v616, 0.0
        %621 = vadd.xlane.f32.xlu0 %v620
        %v622 = vpop.xlane.xlu0 %621
        %v623 = vrcp.pop 32.0
        %v624 = vmul.f32 %v622, %v623
        %v625 = vsub.f32 %v616, %v624
        %v626 = vmul.f32 %v625, %v625
        %v627 = vsel %vm619, %v626, 0.0
        %628 = vadd.xlane.f32.xlu0 %v627
        %v629 = vpop.xlane.xlu0 %628
        %v630 = vmul.f32 %v629, %v623
        %v631 = vadd.f32 %v630, 1e-05
        %v632 = vrsqrt.pop %v631
        %v633 = vmul.f32 %v625, %v632
        %v635 = vlaneseq
        %v636 = vshrl.u32 %v635, 7
        %v637 = vsub.s32 0, %v636
        %v638 = vrot.slane %v617, %v637
        %v640 = vmul.f32 %v633, %v638
        %v642 = vlaneseq
        %v643 = vshrl.u32 %v642, 7
        %v644 = vsub.s32 0, %v643
        %v645 = vrot.slane %v618, %v644
        %v647 = vadd.f32 %v640, %v645
        %v648 = vld [vmem:[#allocation8] sm:$0xf]
        %v649 = vld [vmem:[#allocation8 + $0x4] sm:$0xf]
        %v650 = vld [vmem:[#allocation8 + $0x8] sm:$0xf]
        %v651 = vld [vmem:[#allocation8 + $0xc] sm:$0xf]
        %v652 = vpack.c.bf16 %v647, %v647
        %v653 = vld [vmem:[#allocation10] sm:$0x1]
        %v655 = vlaneseq
        %v656 = vshrl.u32 %v655, 7
        %v657 = vsub.s32 0, %v656
        %v658 = vrot.slane %v653, %v657
        %v664 = vunpack.c.l.b16 %v648
        %v665 = vunpack.c.l.b16 %v649
        %v666 = vunpack.c.l.b16 %v650
        %v667 = vunpack.c.l.b16 %v651
        %v668 = vpack.c.b16 %v665, %v664
        %v669 = vpack.c.b16 %v667, %v666
        %v673 = vsel %vm619, %v652, 0
        %675 = vmatprep.subr.bf16.mxu0 0
        %676 = vmatpush1.bf16.msra.mxu0 %v668
        %677 = vmatprep.subr.bf16.mxu0 0
        %678 = vmatpush1.bf16.msra.mxu0 %v669
        %679 = vmatprep.subr.bf16.mxu0 0
        %680 = vmatpush1.bf16.msra.mxu0 0
        %681 = vmatprep.subr.bf16.mxu0 0
        %682 = vmatpush1.bf16.msra.mxu0 0
        %683 = vmatprep.subr.bf16.mxu0 0
        %684 = vmatpush1.bf16.msra.mxu0 0
        %685 = vmatprep.subr.bf16.mxu0 0
        %686 = vmatpush1.bf16.msra.mxu0 0
        %687 = vmatprep.subr.bf16.mxu0 0
        %688 = vmatpush1.bf16.msra.mxu0 0
        %689 = vmatprep.subr.bf16.mxu0 0
        %690 = vmatpush1.bf16.msra.mxu0 0
        %691 = vmatprep.subr.bf16.mxu0 0
        %692 = vmatpush1.bf16.msra.mxu0 0
        %693 = vmatprep.subr.bf16.mxu0 0
        %694 = vmatpush1.bf16.msra.mxu0 0
        %695 = vmatprep.subr.bf16.mxu0 0
        %696 = vmatpush1.bf16.msra.mxu0 0
        %697 = vmatprep.subr.bf16.mxu0 0
        %698 = vmatpush1.bf16.msra.mxu0 0
        %699 = vmatprep.subr.bf16.mxu0 0
        %700 = vmatpush1.bf16.msra.mxu0 0
        %701 = vmatprep.subr.bf16.mxu0 0
        %702 = vmatpush1.bf16.msra.mxu0 0
        %703 = vmatprep.subr.bf16.mxu0 0
        %704 = vmatpush1.bf16.msra.mxu0 0
        %705 = vmatprep.subr.bf16.mxu0 0
        %706 = vmatpush1.bf16.msra.mxu0 0
        %707 = vmatprep.mubr.bf16.mxu0 0
        %708 = vmatmul.mubr.bf16.gmra.mrb[0].mxu0 %v673
        %v709 = vpop.f32.mrb[0].mxu0
        %v710 = vadd.f32 %v658, %v709
        %v711 = vpop.f32.mrb[0].mxu0
        %v712 = vpop.f32.mrb[0].mxu0
        %v713 = vpop.f32.mrb[0].mxu0
        %714 = vdwg.mxu0
        %v715 = vmul.f32 %v710, 0.35355338
        %717 = vrot.lane.b32.xlu0 %v715, 120
        %v718 = vpop.permute.xlu0 %717
        %720 = vrot.lane.b32.xlu0 %v715, 112
        %v721 = vpop.permute.xlu0 %720
        %723 = vrot.lane.b32.xlu0 %v715, 104
        %v724 = vpop.permute.xlu0 %723
        %v726 = vcombine.low %v715, %v721
        %v727 = vcombine.high %v715, %v721
        %v729 = vunpack.c.l.s4 1983009808
        %v730 = vunpack.c.0.s8 %v729
        %v731 = vlaneseq
        %v732 = vshrl.u32 %v731, 7
        %v733 = vsub.s32 %v730, %v732
        %v734 = vrot.slane %v726, %v733
        %v736 = vunpack.c.l.s4 1983009808
        %v737 = vunpack.c.0.s8 %v736
        %v738 = vlaneseq
        %v739 = vshrl.u32 %v738, 7
        %v740 = vsub.s32 %v737, %v739
        %v741 = vrot.slane %v727, %v740
        %v742 = vcombine.low %v718, %v724
        %v743 = vcombine.high %v718, %v724
        %v745 = vunpack.c.l.s4 1983009808
        %v746 = vunpack.c.0.s8 %v745
        %v747 = vlaneseq
        %v748 = vshrl.u32 %v747, 7
        %v749 = vsub.s32 %v746, %v748
        %v750 = vrot.slane %v742, %v749
        %v752 = vunpack.c.l.s4 1983009808
        %v753 = vunpack.c.0.s8 %v752
        %v754 = vlaneseq
        %v755 = vshrl.u32 %v754, 7
        %v756 = vsub.s32 %v753, %v755
        %v757 = vrot.slane %v743, %v756
        %v758 = vcombine.low %v734, %v750
        %v759 = vcombine.high %v734, %v750
        %v761 = vunpack.c.l.s4 1934713408
        %v762 = vunpack.c.0.s8 %v761
        %v763 = vlaneseq
        %v764 = vshrl.u32 %v763, 7
        %v765 = vsub.s32 %v762, %v764
        %v766 = vrot.slane %v758, %v765
        %v768 = vunpack.c.l.s4 1934713408
        %v769 = vunpack.c.0.s8 %v768
        %v770 = vlaneseq
        %v771 = vshrl.u32 %v770, 7
        %v772 = vsub.s32 %v769, %v771
        %v773 = vrot.slane %v759, %v772
        %v774 = vcombine.low %v741, %v757
        %v775 = vcombine.high %v741, %v757
        %v777 = vunpack.c.l.s4 1934713408
        %v778 = vunpack.c.0.s8 %v777
        %v779 = vlaneseq
        %v780 = vshrl.u32 %v779, 7
        %v781 = vsub.s32 %v778, %v780
        %v782 = vrot.slane %v774, %v781
        %v784 = vunpack.c.l.s4 1934713408
        %v785 = vunpack.c.0.s8 %v784
        %v786 = vlaneseq
        %v787 = vshrl.u32 %v786, 7
        %v788 = vsub.s32 %v785, %v787
        %v789 = vrot.slane %v775, %v788
        %v790 = vcombine.high %v766, 0.0
        %v791 = vcombine.high %v773, 0.0
        %v792 = vcombine.high %v782, 0.0
        %v793 = vcombine.high %v789, 0.0
        %v794 = vpack.c.bf16 %v766, %v766
        %v795 = vpack.c.bf16 %v790, %v790
        %v796 = vpack.c.bf16 %v773, %v773
        %v797 = vpack.c.bf16 %v791, %v791
        %v798 = vpack.c.bf16 %v782, %v782
        %v799 = vpack.c.bf16 %v792, %v792
        %v800 = vpack.c.bf16 %v789, %v789
        %v801 = vpack.c.bf16 %v793, %v793
        %803 = vrot.lane.b32.xlu0 %v710, 120
        %v804 = vpop.permute.xlu0 %803
        %805 = vrot.lane.b32.xlu0 %v710, 112
        %v806 = vpop.permute.xlu0 %805
        %807 = vrot.lane.b32.xlu0 %v710, 104
        %v808 = vpop.permute.xlu0 %807
        %809 = vrot.lane.b32.xlu0 %v710, 96
        %v810 = vpop.permute.xlu0 %809
        %811 = vrot.lane.b32.xlu0 %v804, 96
        %v812 = vpop.permute.xlu0 %811
        %813 = vrot.lane.b32.xlu0 %v806, 96
        %v814 = vpop.permute.xlu0 %813
        %815 = vrot.lane.b32.xlu0 %v808, 96
        %v816 = vpop.permute.xlu0 %815
        %v821 = vcombine.low %v810, %v814
        %v822 = vcombine.high %v810, %v814
        %v824 = vunpack.c.l.s4 1983009808
        %v825 = vunpack.c.0.s8 %v824
        %v826 = vlaneseq
        %v827 = vshrl.u32 %v826, 7
        %v828 = vsub.s32 %v825, %v827
        %v829 = vrot.slane %v821, %v828
        %v831 = vunpack.c.l.s4 1983009808
        %v832 = vunpack.c.0.s8 %v831
        %v833 = vlaneseq
        %v834 = vshrl.u32 %v833, 7
        %v835 = vsub.s32 %v832, %v834
        %v836 = vrot.slane %v822, %v835
        %v837 = vcombine.low %v812, %v816
        %v838 = vcombine.high %v812, %v816
        %v840 = vunpack.c.l.s4 1983009808
        %v841 = vunpack.c.0.s8 %v840
        %v842 = vlaneseq
        %v843 = vshrl.u32 %v842, 7
        %v844 = vsub.s32 %v841, %v843
        %v845 = vrot.slane %v837, %v844
        %v847 = vunpack.c.l.s4 1983009808
        %v848 = vunpack.c.0.s8 %v847
        %v849 = vlaneseq
        %v850 = vshrl.u32 %v849, 7
        %v851 = vsub.s32 %v848, %v850
        %v852 = vrot.slane %v838, %v851
        %v853 = vcombine.low %v829, %v845
        %v854 = vcombine.high %v829, %v845
        %v856 = vunpack.c.l.s4 1934713408
        %v857 = vunpack.c.0.s8 %v856
        %v858 = vlaneseq
        %v859 = vshrl.u32 %v858, 7
        %v860 = vsub.s32 %v857, %v859
        %v861 = vrot.slane %v853, %v860
        %v863 = vunpack.c.l.s4 1934713408
        %v864 = vunpack.c.0.s8 %v863
        %v865 = vlaneseq
        %v866 = vshrl.u32 %v865, 7
        %v867 = vsub.s32 %v864, %v866
        %v868 = vrot.slane %v854, %v867
        %v869 = vcombine.low %v836, %v852
        %v870 = vcombine.high %v836, %v852
        %v872 = vunpack.c.l.s4 1934713408
        %v873 = vunpack.c.0.s8 %v872
        %v874 = vlaneseq
        %v875 = vshrl.u32 %v874, 7
        %v876 = vsub.s32 %v873, %v875
        %v877 = vrot.slane %v869, %v876
        %v879 = vunpack.c.l.s4 1934713408
        %v880 = vunpack.c.0.s8 %v879
        %v881 = vlaneseq
        %v882 = vshrl.u32 %v881, 7
        %v883 = vsub.s32 %v880, %v882
        %v884 = vrot.slane %v870, %v883
        %v885 = vcombine.high %v861, 0.0
        %v886 = vcombine.high %v868, 0.0
        %v887 = vcombine.high %v877, 0.0
        %v888 = vcombine.high %v884, 0.0
        %v889 = vpack.c.bf16 %v861, %v861
        %v890 = vpack.c.bf16 %v885, %v885
        %v891 = vpack.c.bf16 %v868, %v868
        %v892 = vpack.c.bf16 %v886, %v886
        %v893 = vpack.c.bf16 %v877, %v877
        %v894 = vpack.c.bf16 %v887, %v887
        %v895 = vpack.c.bf16 %v884, %v884
        %v896 = vpack.c.bf16 %v888, %v888
        %897 = vrot.lane.b32.xlu0 %v710, 64
        %v898 = vpop.permute.xlu0 %897
        %899 = vrot.lane.b32.xlu0 %v804, 64
        %v900 = vpop.permute.xlu0 %899
        %901 = vrot.lane.b32.xlu0 %v806, 64
        %v902 = vpop.permute.xlu0 %901
        %903 = vrot.lane.b32.xlu0 %v808, 64
        %v904 = vpop.permute.xlu0 %903
        %v909 = vcombine.low %v898, %v902
        %v910 = vcombine.high %v898, %v902
        %v912 = vunpack.c.l.s4 1983009808
        %v913 = vunpack.c.0.s8 %v912
        %v914 = vlaneseq
        %v915 = vshrl.u32 %v914, 7
        %v916 = vsub.s32 %v913, %v915
        %v917 = vrot.slane %v909, %v916
        %v919 = vunpack.c.l.s4 1983009808
        %v920 = vunpack.c.0.s8 %v919
        %v921 = vlaneseq
        %v922 = vshrl.u32 %v921, 7
        %v923 = vsub.s32 %v920, %v922
        %v924 = vrot.slane %v910, %v923
        %v925 = vcombine.low %v900, %v904
        %v926 = vcombine.high %v900, %v904
        %v928 = vunpack.c.l.s4 1983009808
        %v929 = vunpack.c.0.s8 %v928
        %v930 = vlaneseq
        %v931 = vshrl.u32 %v930, 7
        %v932 = vsub.s32 %v929, %v931
        %v933 = vrot.slane %v925, %v932
        %v935 = vunpack.c.l.s4 1983009808
        %v936 = vunpack.c.0.s8 %v935
        %v937 = vlaneseq
        %v938 = vshrl.u32 %v937, 7
        %v939 = vsub.s32 %v936, %v938
        %v940 = vrot.slane %v926, %v939
        %v941 = vcombine.low %v917, %v933
        %v942 = vcombine.high %v917, %v933
        %v944 = vunpack.c.l.s4 1934713408
        %v945 = vunpack.c.0.s8 %v944
        %v946 = vlaneseq
        %v947 = vshrl.u32 %v946, 7
        %v948 = vsub.s32 %v945, %v947
        %v949 = vrot.slane %v941, %v948
        %v951 = vunpack.c.l.s4 1934713408
        %v952 = vunpack.c.0.s8 %v951
        %v953 = vlaneseq
        %v954 = vshrl.u32 %v953, 7
        %v955 = vsub.s32 %v952, %v954
        %v956 = vrot.slane %v942, %v955
        %v957 = vcombine.low %v924, %v940
        %v958 = vcombine.high %v924, %v940
        %v960 = vunpack.c.l.s4 1934713408
        %v961 = vunpack.c.0.s8 %v960
        %v962 = vlaneseq
        %v963 = vshrl.u32 %v962, 7
        %v964 = vsub.s32 %v961, %v963
        %v965 = vrot.slane %v957, %v964
        %v967 = vunpack.c.l.s4 1934713408
        %v968 = vunpack.c.0.s8 %v967
        %v969 = vlaneseq
        %v970 = vshrl.u32 %v969, 7
        %v971 = vsub.s32 %v968, %v970
        %v972 = vrot.slane %v958, %v971
        %v973 = vcombine.high %v949, 0.0
        %v974 = vcombine.high %v956, 0.0
        %v975 = vcombine.high %v965, 0.0
        %v976 = vcombine.high %v972, 0.0
        %v977 = vpack.c.bf16 %v949, %v949
        %v978 = vpack.c.bf16 %v973, %v973
        %v979 = vpack.c.bf16 %v956, %v956
        %v980 = vpack.c.bf16 %v974, %v974
        %v981 = vpack.c.bf16 %v965, %v965
        %v982 = vpack.c.bf16 %v975, %v975
        %v983 = vpack.c.bf16 %v972, %v972
        %v984 = vpack.c.bf16 %v976, %v976
        %v985 = vcombine.low %v794, %v798
        %v987 = vunpack.c.l.s4 1983009808
        %v988 = vunpack.c.0.s8 %v987
        %v989 = vlaneseq
        %v990 = vshrl.u32 %v989, 7
        %v991 = vsub.s32 %v988, %v990
        %v992 = vrot.slane %v985, %v991
        %v993 = vcombine.low %v796, %v800
        %v995 = vunpack.c.l.s4 1983009808
        %v996 = vunpack.c.0.s8 %v995
        %v997 = vlaneseq
        %v998 = vshrl.u32 %v997, 7
        %v999 = vsub.s32 %v996, %v998
        %v1000 = vrot.slane %v993, %v999
        %v1001 = vcombine.low %v992, %v1000
        %v1003 = vunpack.c.l.s4 1934713408
        %v1004 = vunpack.c.0.s8 %v1003
        %v1005 = vlaneseq
        %v1006 = vshrl.u32 %v1005, 7
        %v1007 = vsub.s32 %v1004, %v1006
        %v1008 = vrot.slane %v1001, %v1007
        %v1009 = vcombine.high %v1008, 0
        %v1010 = vcombine.low %v795, %v799
        %v1012 = vunpack.c.l.s4 1983009808
        %v1013 = vunpack.c.0.s8 %v1012
        %v1014 = vlaneseq
        %v1015 = vshrl.u32 %v1014, 7
        %v1016 = vsub.s32 %v1013, %v1015
        %v1017 = vrot.slane %v1010, %v1016
        %v1018 = vcombine.low %v797, %v801
        %v1020 = vunpack.c.l.s4 1983009808
        %v1021 = vunpack.c.0.s8 %v1020
        %v1022 = vlaneseq
        %v1023 = vshrl.u32 %v1022, 7
        %v1024 = vsub.s32 %v1021, %v1023
        %v1025 = vrot.slane %v1018, %v1024
        %v1026 = vcombine.low %v1017, %v1025
        %v1028 = vunpack.c.l.s4 1934713408
        %v1029 = vunpack.c.0.s8 %v1028
        %v1030 = vlaneseq
        %v1031 = vshrl.u32 %v1030, 7
        %v1032 = vsub.s32 %v1029, %v1031
        %v1033 = vrot.slane %v1026, %v1032
        %v1034 = vcombine.high %v1033, 0
        %v1037 = vpack.i.b16 %v1033, %v1008
        %v1038 = vshrl.u32 %v1008, 16
        %v1039 = vshrl.u32 %v1033, 16
        %v1040 = vpack.i.b16 %v1039, %v1038
        %v1043 = vpack.i.b16 %v1034, %v1009
        %v1044 = vshrl.u32 %v1009, 16
        %v1045 = vshrl.u32 %v1034, 16
        %v1046 = vpack.i.b16 %v1045, %v1044
        %1047 = vxpose.xlu0.c.b16.start [1/8] %v889, 128
        %1048 = vxpose.xlu0.c.b16.cont [2/8] 0, 128
        %1049 = vxpose.xlu0.c.b16.cont [3/8] 0, 128
        %1050 = vxpose.xlu0.c.b16.cont [4/8] 0, 128
        %1051 = vxpose.xlu0.c.b16.cont [5/8] 0, 128
        %1052 = vxpose.xlu0.c.b16.cont [6/8] 0, 128
        %1053 = vxpose.xlu0.c.b16.cont [7/8] 0, 128
        %1054 = vxpose.xlu0.c.b16.end [8/8] 0, 128
        %v1055 = vpop.trf.xlu0
        %v1056 = vpop.trf.xlu0
        %v1057 = vpop.trf.xlu0
        %v1058 = vpop.trf.xlu0
        %v1059 = vpop.trf.xlu0
        %v1060 = vpop.trf.xlu0
        %v1061 = vpop.trf.xlu0
        %v1062 = vpop.trf.xlu0
        %1063 = vxpose.xlu0.c.b16.start [1/8] %v890, 128
        %1064 = vxpose.xlu0.c.b16.cont [2/8] 0, 128
        %1065 = vxpose.xlu0.c.b16.cont [3/8] 0, 128
        %1066 = vxpose.xlu0.c.b16.cont [4/8] 0, 128
        %1067 = vxpose.xlu0.c.b16.cont [5/8] 0, 128
        %1068 = vxpose.xlu0.c.b16.cont [6/8] 0, 128
        %1069 = vxpose.xlu0.c.b16.cont [7/8] 0, 128
        %1070 = vxpose.xlu0.c.b16.end [8/8] 0, 128
        %v1071 = vpop.trf.xlu0
        %v1072 = vpop.trf.xlu0
        %v1073 = vpop.trf.xlu0
        %v1074 = vpop.trf.xlu0
        %v1075 = vpop.trf.xlu0
        %v1076 = vpop.trf.xlu0
        %v1077 = vpop.trf.xlu0
        %v1078 = vpop.trf.xlu0
        %1079 = vxpose.xlu0.c.b16.start [1/8] %v891, 128
        %1080 = vxpose.xlu0.c.b16.cont [2/8] 0, 128
        %1081 = vxpose.xlu0.c.b16.cont [3/8] 0, 128
        %1082 = vxpose.xlu0.c.b16.cont [4/8] 0, 128
        %1083 = vxpose.xlu0.c.b16.cont [5/8] 0, 128
        %1084 = vxpose.xlu0.c.b16.cont [6/8] 0, 128
        %1085 = vxpose.xlu0.c.b16.cont [7/8] 0, 128
        %1086 = vxpose.xlu0.c.b16.end [8/8] 0, 128
        %v1087 = vpop.trf.xlu0
        %v1088 = vpop.trf.xlu0
        %v1089 = vpop.trf.xlu0
        %v1090 = vpop.trf.xlu0
        %v1091 = vpop.trf.xlu0
        %v1092 = vpop.trf.xlu0
        %v1093 = vpop.trf.xlu0
        %v1094 = vpop.trf.xlu0
        %1095 = vxpose.xlu0.c.b16.start [1/8] %v892, 128
        %1096 = vxpose.xlu0.c.b16.cont [2/8] 0, 128
        %1097 = vxpose.xlu0.c.b16.cont [3/8] 0, 128
        %1098 = vxpose.xlu0.c.b16.cont [4/8] 0, 128
        %1099 = vxpose.xlu0.c.b16.cont [5/8] 0, 128
        %1100 = vxpose.xlu0.c.b16.cont [6/8] 0, 128
        %1101 = vxpose.xlu0.c.b16.cont [7/8] 0, 128
        %1102 = vxpose.xlu0.c.b16.end [8/8] 0, 128
        %v1103 = vpop.trf.xlu0
        %v1104 = vpop.trf.xlu0
        %v1105 = vpop.trf.xlu0
        %v1106 = vpop.trf.xlu0
        %v1107 = vpop.trf.xlu0
        %v1108 = vpop.trf.xlu0
        %v1109 = vpop.trf.xlu0
        %v1110 = vpop.trf.xlu0
        %1111 = vxpose.xlu0.c.b16.start [1/8] %v893, 128
        %1112 = vxpose.xlu0.c.b16.cont [2/8] 0, 128
        %1113 = vxpose.xlu0.c.b16.cont [3/8] 0, 128
        %1114 = vxpose.xlu0.c.b16.cont [4/8] 0, 128
        %1115 = vxpose.xlu0.c.b16.cont [5/8] 0, 128
        %1116 = vxpose.xlu0.c.b16.cont [6/8] 0, 128
        %1117 = vxpose.xlu0.c.b16.cont [7/8] 0, 128
        %1118 = vxpose.xlu0.c.b16.end [8/8] 0, 128
        %v1119 = vpop.trf.xlu0
        %v1120 = vpop.trf.xlu0
        %v1121 = vpop.trf.xlu0
        %v1122 = vpop.trf.xlu0
        %v1123 = vpop.trf.xlu0
        %v1124 = vpop.trf.xlu0
        %v1125 = vpop.trf.xlu0
        %v1126 = vpop.trf.xlu0
        %1127 = vxpose.xlu0.c.b16.start [1/8] %v894, 128
        %1128 = vxpose.xlu0.c.b16.cont [2/8] 0, 128
        %1129 = vxpose.xlu0.c.b16.cont [3/8] 0, 128
        %1130 = vxpose.xlu0.c.b16.cont [4/8] 0, 128
        %1131 = vxpose.xlu0.c.b16.cont [5/8] 0, 128
        %1132 = vxpose.xlu0.c.b16.cont [6/8] 0, 128
        %1133 = vxpose.xlu0.c.b16.cont [7/8] 0, 128
        %1134 = vxpose.xlu0.c.b16.end [8/8] 0, 128
        %v1135 = vpop.trf.xlu0
        %v1136 = vpop.trf.xlu0
        %v1137 = vpop.trf.xlu0
        %v1138 = vpop.trf.xlu0
        %v1139 = vpop.trf.xlu0
        %v1140 = vpop.trf.xlu0
        %v1141 = vpop.trf.xlu0
        %v1142 = vpop.trf.xlu0
        %1143 = vxpose.xlu0.c.b16.start [1/8] %v895, 128
        %1144 = vxpose.xlu0.c.b16.cont [2/8] 0, 128
        %1145 = vxpose.xlu0.c.b16.cont [3/8] 0, 128
        %1146 = vxpose.xlu0.c.b16.cont [4/8] 0, 128
        %1147 = vxpose.xlu0.c.b16.cont [5/8] 0, 128
        %1148 = vxpose.xlu0.c.b16.cont [6/8] 0, 128
        %1149 = vxpose.xlu0.c.b16.cont [7/8] 0, 128
        %1150 = vxpose.xlu0.c.b16.end [8/8] 0, 128
        %v1151 = vpop.trf.xlu0
        %v1152 = vpop.trf.xlu0
        %v1153 = vpop.trf.xlu0
        %v1154 = vpop.trf.xlu0
        %v1155 = vpop.trf.xlu0
        %v1156 = vpop.trf.xlu0
        %v1157 = vpop.trf.xlu0
        %v1158 = vpop.trf.xlu0
        %1159 = vxpose.xlu0.c.b16.start [1/8] %v896, 128
        %1160 = vxpose.xlu0.c.b16.cont [2/8] 0, 128
        %1161 = vxpose.xlu0.c.b16.cont [3/8] 0, 128
        %1162 = vxpose.xlu0.c.b16.cont [4/8] 0, 128
        %1163 = vxpose.xlu0.c.b16.cont [5/8] 0, 128
        %1164 = vxpose.xlu0.c.b16.cont [6/8] 0, 128
        %1165 = vxpose.xlu0.c.b16.cont [7/8] 0, 128
        %1166 = vxpose.xlu0.c.b16.end [8/8] 0, 128
        %v1167 = vpop.trf.xlu0
        %v1168 = vpop.trf.xlu0
        %v1169 = vpop.trf.xlu0
        %v1170 = vpop.trf.xlu0
        %v1171 = vpop.trf.xlu0
        %v1172 = vpop.trf.xlu0
        %v1173 = vpop.trf.xlu0
        %v1174 = vpop.trf.xlu0
        %v1175 = vcombine.low %v1055, %v1119
        %v1177 = vunpack.c.l.s4 1983009808
        %v1178 = vunpack.c.0.s8 %v1177
        %v1179 = vlaneseq
        %v1180 = vshrl.u32 %v1179, 7
        %v1181 = vsub.s32 %v1178, %v1180
        %v1182 = vrot.slane %v1175, %v1181
        %v1183 = vcombine.low %v1087, %v1151
        %v1185 = vunpack.c.l.s4 1983009808
        %v1186 = vunpack.c.0.s8 %v1185
        %v1187 = vlaneseq
        %v1188 = vshrl.u32 %v1187, 7
        %v1189 = vsub.s32 %v1186, %v1188
        %v1190 = vrot.slane %v1183, %v1189
        %v1191 = vcombine.low %v1182, %v1190
        %v1192 = vcombine.high %v1182, %v1190
        %v1194 = vunpack.c.l.s4 1934713408
        %v1195 = vunpack.c.0.s8 %v1194
        %v1196 = vlaneseq
        %v1197 = vshrl.u32 %v1196, 7
        %v1198 = vsub.s32 %v1195, %v1197
        %v1199 = vrot.slane %v1191, %v1198
        %v1201 = vunpack.c.l.s4 1934713408
        %v1202 = vunpack.c.0.s8 %v1201
        %v1203 = vlaneseq
        %v1204 = vshrl.u32 %v1203, 7
        %v1205 = vsub.s32 %v1202, %v1204
        %v1206 = vrot.slane %v1192, %v1205
        %v1207 = vcombine.high %v1199, 0
        %v1208 = vcombine.high %v1206, 0
        %v1209 = vcombine.low %v1071, %v1135
        %v1211 = vunpack.c.l.s4 1983009808
        %v1212 = vunpack.c.0.s8 %v1211
        %v1213 = vlaneseq
        %v1214 = vshrl.u32 %v1213, 7
        %v1215 = vsub.s32 %v1212, %v1214
        %v1216 = vrot.slane %v1209, %v1215
        %v1217 = vcombine.low %v1103, %v1167
        %v1219 = vunpack.c.l.s4 1983009808
        %v1220 = vunpack.c.0.s8 %v1219
        %v1221 = vlaneseq
        %v1222 = vshrl.u32 %v1221, 7
        %v1223 = vsub.s32 %v1220, %v1222
        %v1224 = vrot.slane %v1217, %v1223
        %v1225 = vcombine.low %v1216, %v1224
        %v1226 = vcombine.high %v1216, %v1224
        %v1228 = vunpack.c.l.s4 1934713408
        %v1229 = vunpack.c.0.s8 %v1228
        %v1230 = vlaneseq
        %v1231 = vshrl.u32 %v1230, 7
        %v1232 = vsub.s32 %v1229, %v1231
        %v1233 = vrot.slane %v1225, %v1232
        %v1235 = vunpack.c.l.s4 1934713408
        %v1236 = vunpack.c.0.s8 %v1235
        %v1237 = vlaneseq
        %v1238 = vshrl.u32 %v1237, 7
        %v1239 = vsub.s32 %v1236, %v1238
        %v1240 = vrot.slane %v1226, %v1239
        %v1241 = vcombine.high %v1233, 0
        %v1242 = vcombine.high %v1240, 0
        %v1245 = vpack.i.b16 %v1233, %v1199
        %v1247 = vshrl.u32 %v1199, 16
        %v1248 = vshrl.u32 %v1233, 16
        %v1249 = vpack.i.b16 %v1248, %v1247
        %v1253 = vpack.i.b16 %v1241, %v1207
        %v1255 = vshrl.u32 %v1207, 16
        %v1256 = vshrl.u32 %v1241, 16
        %v1257 = vpack.i.b16 %v1256, %v1255
        %v1261 = vpack.i.b16 %v1240, %v1206
        %v1263 = vshrl.u32 %v1206, 16
        %v1264 = vshrl.u32 %v1240, 16
        %v1265 = vpack.i.b16 %v1264, %v1263
        %v1269 = vpack.i.b16 %v1242, %v1208
        %v1271 = vshrl.u32 %v1208, 16
        %v1272 = vshrl.u32 %v1242, 16
        %v1273 = vpack.i.b16 %v1272, %v1271
        %1275 = vxpose.xlu0.c.b16.start [1/8] %v1245, 128
        %1276 = vxpose.xlu0.c.b16.cont [2/8] 0, 128
        %1277 = vxpose.xlu0.c.b16.cont [3/8] 0, 128
        %1278 = vxpose.xlu0.c.b16.cont [4/8] 0, 128
        %1279 = vxpose.xlu0.c.b16.cont [5/8] 0, 128
        %1280 = vxpose.xlu0.c.b16.cont [6/8] 0, 128
        %1281 = vxpose.xlu0.c.b16.cont [7/8] 0, 128
        %1282 = vxpose.xlu0.c.b16.end [8/8] 0, 128
        %v1283 = vpop.trf.xlu0
        %v1284 = vpop.trf.xlu0
        %v1285 = vpop.trf.xlu0
        %v1286 = vpop.trf.xlu0
        %v1287 = vpop.trf.xlu0
        %v1288 = vpop.trf.xlu0
        %v1289 = vpop.trf.xlu0
        %v1290 = vpop.trf.xlu0
        %1291 = vxpose.xlu0.c.b16.start [1/8] %v1249, 128
        %1292 = vxpose.xlu0.c.b16.cont [2/8] 0, 128
        %1293 = vxpose.xlu0.c.b16.cont [3/8] 0, 128
        %1294 = vxpose.xlu0.c.b16.cont [4/8] 0, 128
        %1295 = vxpose.xlu0.c.b16.cont [5/8] 0, 128
        %1296 = vxpose.xlu0.c.b16.cont [6/8] 0, 128
        %1297 = vxpose.xlu0.c.b16.cont [7/8] 0, 128
        %1298 = vxpose.xlu0.c.b16.end [8/8] 0, 128
        %v1299 = vpop.trf.xlu0
        %v1300 = vpop.trf.xlu0
        %v1301 = vpop.trf.xlu0
        %v1302 = vpop.trf.xlu0
        %v1303 = vpop.trf.xlu0
        %v1304 = vpop.trf.xlu0
        %v1305 = vpop.trf.xlu0
        %v1306 = vpop.trf.xlu0
        %1307 = vxpose.xlu0.c.b16.start [1/8] %v1253, 128
        %1308 = vxpose.xlu0.c.b16.cont [2/8] 0, 128
        %1309 = vxpose.xlu0.c.b16.cont [3/8] 0, 128
        %1310 = vxpose.xlu0.c.b16.cont [4/8] 0, 128
        %1311 = vxpose.xlu0.c.b16.cont [5/8] 0, 128
        %1312 = vxpose.xlu0.c.b16.cont [6/8] 0, 128
        %1313 = vxpose.xlu0.c.b16.cont [7/8] 0, 128
        %1314 = vxpose.xlu0.c.b16.end [8/8] 0, 128
        %v1315 = vpop.trf.xlu0
        %v1316 = vpop.trf.xlu0
        %v1317 = vpop.trf.xlu0
        %v1318 = vpop.trf.xlu0
        %v1319 = vpop.trf.xlu0
        %v1320 = vpop.trf.xlu0
        %v1321 = vpop.trf.xlu0
        %v1322 = vpop.trf.xlu0
        %1323 = vxpose.xlu0.c.b16.start [1/8] %v1257, 128
        %1324 = vxpose.xlu0.c.b16.cont [2/8] 0, 128
        %1325 = vxpose.xlu0.c.b16.cont [3/8] 0, 128
        %1326 = vxpose.xlu0.c.b16.cont [4/8] 0, 128
        %1327 = vxpose.xlu0.c.b16.cont [5/8] 0, 128
        %1328 = vxpose.xlu0.c.b16.cont [6/8] 0, 128
        %1329 = vxpose.xlu0.c.b16.cont [7/8] 0, 128
        %1330 = vxpose.xlu0.c.b16.end [8/8] 0, 128
        %v1331 = vpop.trf.xlu0
        %v1332 = vpop.trf.xlu0
        %v1333 = vpop.trf.xlu0
        %v1334 = vpop.trf.xlu0
        %v1335 = vpop.trf.xlu0
        %v1336 = vpop.trf.xlu0
        %v1337 = vpop.trf.xlu0
        %v1338 = vpop.trf.xlu0
        %1339 = vxpose.xlu0.c.b16.start [1/8] %v1261, 128
        %1340 = vxpose.xlu0.c.b16.cont [2/8] 0, 128
        %1341 = vxpose.xlu0.c.b16.cont [3/8] 0, 128
        %1342 = vxpose.xlu0.c.b16.cont [4/8] 0, 128
        %1343 = vxpose.xlu0.c.b16.cont [5/8] 0, 128
        %1344 = vxpose.xlu0.c.b16.cont [6/8] 0, 128
        %1345 = vxpose.xlu0.c.b16.cont [7/8] 0, 128
        %1346 = vxpose.xlu0.c.b16.end [8/8] 0, 128
        %v1347 = vpop.trf.xlu0
        %v1348 = vpop.trf.xlu0
        %v1349 = vpop.trf.xlu0
        %v1350 = vpop.trf.xlu0
        %v1351 = vpop.trf.xlu0
        %v1352 = vpop.trf.xlu0
        %v1353 = vpop.trf.xlu0
        %v1354 = vpop.trf.xlu0
        %1355 = vxpose.xlu0.c.b16.start [1/8] %v1265, 128
        %1356 = vxpose.xlu0.c.b16.cont [2/8] 0, 128
        %1357 = vxpose.xlu0.c.b16.cont [3/8] 0, 128
        %1358 = vxpose.xlu0.c.b16.cont [4/8] 0, 128
        %1359 = vxpose.xlu0.c.b16.cont [5/8] 0, 128
        %1360 = vxpose.xlu0.c.b16.cont [6/8] 0, 128
        %1361 = vxpose.xlu0.c.b16.cont [7/8] 0, 128
        %1362 = vxpose.xlu0.c.b16.end [8/8] 0, 128
        %v1363 = vpop.trf.xlu0
        %v1364 = vpop.trf.xlu0
        %v1365 = vpop.trf.xlu0
        %v1366 = vpop.trf.xlu0
        %v1367 = vpop.trf.xlu0
        %v1368 = vpop.trf.xlu0
        %v1369 = vpop.trf.xlu0
        %v1370 = vpop.trf.xlu0
        %1371 = vxpose.xlu0.c.b16.start [1/8] %v1269, 128
        %1372 = vxpose.xlu0.c.b16.cont [2/8] 0, 128
        %1373 = vxpose.xlu0.c.b16.cont [3/8] 0, 128
        %1374 = vxpose.xlu0.c.b16.cont [4/8] 0, 128
        %1375 = vxpose.xlu0.c.b16.cont [5/8] 0, 128
        %1376 = vxpose.xlu0.c.b16.cont [6/8] 0, 128
        %1377 = vxpose.xlu0.c.b16.cont [7/8] 0, 128
        %1378 = vxpose.xlu0.c.b16.end [8/8] 0, 128
        %v1379 = vpop.trf.xlu0
        %v1380 = vpop.trf.xlu0
        %v1381 = vpop.trf.xlu0
        %v1382 = vpop.trf.xlu0
        %v1383 = vpop.trf.xlu0
        %v1384 = vpop.trf.xlu0
        %v1385 = vpop.trf.xlu0
        %v1386 = vpop.trf.xlu0
        %1387 = vxpose.xlu0.c.b16.start [1/8] %v1273, 128
        %1388 = vxpose.xlu0.c.b16.cont [2/8] 0, 128
        %1389 = vxpose.xlu0.c.b16.cont [3/8] 0, 128
        %1390 = vxpose.xlu0.c.b16.cont [4/8] 0, 128
        %1391 = vxpose.xlu0.c.b16.cont [5/8] 0, 128
        %1392 = vxpose.xlu0.c.b16.cont [6/8] 0, 128
        %1393 = vxpose.xlu0.c.b16.cont [7/8] 0, 128
        %1394 = vxpose.xlu0.c.b16.end [8/8] 0, 128
        %v1395 = vpop.trf.xlu0
        %v1396 = vpop.trf.xlu0
        %v1397 = vpop.trf.xlu0
        %v1398 = vpop.trf.xlu0
        %v1399 = vpop.trf.xlu0
        %v1400 = vpop.trf.xlu0
        %v1401 = vpop.trf.xlu0
        %v1402 = vpop.trf.xlu0
        %v1403 = vcombine.low %v1283, %v1347
        %v1405 = vunpack.c.l.s4 1983009808
        %v1406 = vunpack.c.0.s8 %v1405
        %v1407 = vlaneseq
        %v1408 = vshrl.u32 %v1407, 7
        %v1409 = vsub.s32 %v1406, %v1408
        %v1410 = vrot.slane %v1403, %v1409
        %v1411 = vcombine.low %v1315, %v1379
        %v1413 = vunpack.c.l.s4 1983009808
        %v1414 = vunpack.c.0.s8 %v1413
        %v1415 = vlaneseq
        %v1416 = vshrl.u32 %v1415, 7
        %v1417 = vsub.s32 %v1414, %v1416
        %v1418 = vrot.slane %v1411, %v1417
        %v1419 = vcombine.low %v1410, %v1418
        %v1421 = vunpack.c.l.s4 1934713408
        %v1422 = vunpack.c.0.s8 %v1421
        %v1423 = vlaneseq
        %v1424 = vshrl.u32 %v1423, 7
        %v1425 = vsub.s32 %v1422, %v1424
        %v1426 = vrot.slane %v1419, %v1425
        %v1427 = vcombine.high %v1426, 0
        %v1428 = vcombine.low %v1299, %v1363
        %v1430 = vunpack.c.l.s4 1983009808
        %v1431 = vunpack.c.0.s8 %v1430
        %v1432 = vlaneseq
        %v1433 = vshrl.u32 %v1432, 7
        %v1434 = vsub.s32 %v1431, %v1433
        %v1435 = vrot.slane %v1428, %v1434
        %v1436 = vcombine.low %v1331, %v1395
        %v1438 = vunpack.c.l.s4 1983009808
        %v1439 = vunpack.c.0.s8 %v1438
        %v1440 = vlaneseq
        %v1441 = vshrl.u32 %v1440, 7
        %v1442 = vsub.s32 %v1439, %v1441
        %v1443 = vrot.slane %v1436, %v1442
        %v1444 = vcombine.low %v1435, %v1443
        %v1446 = vunpack.c.l.s4 1934713408
        %v1447 = vunpack.c.0.s8 %v1446
        %v1448 = vlaneseq
        %v1449 = vshrl.u32 %v1448, 7
        %v1450 = vsub.s32 %v1447, %v1449
        %v1451 = vrot.slane %v1444, %v1450
        %v1452 = vcombine.high %v1451, 0
        %v1455 = vpack.i.b16 %v1451, %v1426
        %v1456 = vshrl.u32 %v1426, 16
        %v1457 = vshrl.u32 %v1451, 16
        %v1458 = vpack.i.b16 %v1457, %v1456
        %v1461 = vpack.i.b16 %v1452, %v1427
        %v1462 = vshrl.u32 %v1427, 16
        %v1463 = vshrl.u32 %v1452, 16
        %v1464 = vpack.i.b16 %v1463, %v1462
        %vm1465 = vcmask 64512
        %v1467 = vsel %vm1465, %v1037, 0
        %vm1469 = vcmask 1043456
        %v1471 = vsel %vm1469, %v1455, 0
        %1473 = vmatprep.subr.bf16.mxu0 0
        %1474 = vmatpush1.bf16.msra.mxu0 %v1471
        %1475 = vmatprep.subr.bf16.mxu0 0
        %1476 = vmatpush1.bf16.msra.mxu0 0
        %1477 = vmatprep.subr.bf16.mxu0 0
        %1478 = vmatpush1.bf16.msra.mxu0 0
        %1479 = vmatprep.subr.bf16.mxu0 0
        %1480 = vmatpush1.bf16.msra.mxu0 0
        %1481 = vmatprep.subr.bf16.mxu0 0
        %1482 = vmatpush1.bf16.msra.mxu0 0
        %1483 = vmatprep.subr.bf16.mxu0 0
        %1484 = vmatpush1.bf16.msra.mxu0 0
        %1485 = vmatprep.subr.bf16.mxu0 0
        %1486 = vmatpush1.bf16.msra.mxu0 0
        %1487 = vmatprep.subr.bf16.mxu0 0
        %1488 = vmatpush1.bf16.msra.mxu0 0
        %1489 = vmatprep.subr.bf16.mxu0 0
        %1490 = vmatpush1.bf16.msra.mxu0 0
        %1491 = vmatprep.subr.bf16.mxu0 0
        %1492 = vmatpush1.bf16.msra.mxu0 0
        %1493 = vmatprep.subr.bf16.mxu0 0
        %1494 = vmatpush1.bf16.msra.mxu0 0
        %1495 = vmatprep.subr.bf16.mxu0 0
        %1496 = vmatpush1.bf16.msra.mxu0 0
        %1497 = vmatprep.subr.bf16.mxu0 0
        %1498 = vmatpush1.bf16.msra.mxu0 0
        %1499 = vmatprep.subr.bf16.mxu0 0
        %1500 = vmatpush1.bf16.msra.mxu0 0
        %1501 = vmatprep.subr.bf16.mxu0 0
        %1502 = vmatpush1.bf16.msra.mxu0 0
        %1503 = vmatprep.subr.bf16.mxu0 0
        %1504 = vmatpush1.bf16.msra.mxu0 0
        %1505 = vmatprep.mubr.bf16.mxu0 0
        %1506 = vmatmul.mubr.bf16.gmra.mrb[0].mxu0 %v1467
        %v1507 = vpop.f32.mrb[0].mxu0
        %v1508 = vadd.f32 0.0, %v1507
        %v1509 = vpop.f32.mrb[0].mxu0
        %v1510 = vpop.f32.mrb[0].mxu0
        %v1511 = vpop.f32.mrb[0].mxu0
        %1512 = vdwg.mxu0
        %v1514 = vsel %vm1465, %v1040, 0
        %v1517 = vsel %vm1469, %v1458, 0
        %1519 = vmatprep.subr.bf16.mxu0 0
        %1520 = vmatpush1.bf16.msra.mxu0 %v1517
        %1521 = vmatprep.subr.bf16.mxu0 0
        %1522 = vmatpush1.bf16.msra.mxu0 0
        %1523 = vmatprep.subr.bf16.mxu0 0
        %1524 = vmatpush1.bf16.msra.mxu0 0
        %1525 = vmatprep.subr.bf16.mxu0 0
        %1526 = vmatpush1.bf16.msra.mxu0 0
        %1527 = vmatprep.subr.bf16.mxu0 0
        %1528 = vmatpush1.bf16.msra.mxu0 0
        %1529 = vmatprep.subr.bf16.mxu0 0
        %1530 = vmatpush1.bf16.msra.mxu0 0
        %1531 = vmatprep.subr.bf16.mxu0 0
        %1532 = vmatpush1.bf16.msra.mxu0 0
        %1533 = vmatprep.subr.bf16.mxu0 0
        %1534 = vmatpush1.bf16.msra.mxu0 0
        %1535 = vmatprep.subr.bf16.mxu0 0
        %1536 = vmatpush1.bf16.msra.mxu0 0
        %1537 = vmatprep.subr.bf16.mxu0 0
        %1538 = vmatpush1.bf16.msra.mxu0 0
        %1539 = vmatprep.subr.bf16.mxu0 0
        %1540 = vmatpush1.bf16.msra.mxu0 0
        %1541 = vmatprep.subr.bf16.mxu0 0
        %1542 = vmatpush1.bf16.msra.mxu0 0
        %1543 = vmatprep.subr.bf16.mxu0 0
        %1544 = vmatpush1.bf16.msra.mxu0 0
        %1545 = vmatprep.subr.bf16.mxu0 0
        %1546 = vmatpush1.bf16.msra.mxu0 0
        %1547 = vmatprep.subr.bf16.mxu0 0
        %1548 = vmatpush1.bf16.msra.mxu0 0
        %1549 = vmatprep.subr.bf16.mxu0 0
        %1550 = vmatpush1.bf16.msra.mxu0 0
        %1551 = vmatprep.mubr.bf16.mxu0 0
        %1552 = vmatmul.mubr.bf16.gmra.mrb[0].mxu0 %v1514
        %v1553 = vpop.f32.mrb[0].mxu0
        %v1554 = vadd.f32 0.0, %v1553
        %v1555 = vpop.f32.mrb[0].mxu0
        %v1556 = vpop.f32.mrb[0].mxu0
        %v1557 = vpop.f32.mrb[0].mxu0
        %1558 = vdwg.mxu0
        %v1560 = vsel %vm1465, %v1043, 0
        %v1563 = vsel %vm1469, %v1461, 0
        %1565 = vmatprep.subr.bf16.mxu0 0
        %1566 = vmatpush1.bf16.msra.mxu0 %v1563
        %1567 = vmatprep.subr.bf16.mxu0 0
        %1568 = vmatpush1.bf16.msra.mxu0 0
        %1569 = vmatprep.subr.bf16.mxu0 0
        %1570 = vmatpush1.bf16.msra.mxu0 0
        %1571 = vmatprep.subr.bf16.mxu0 0
        %1572 = vmatpush1.bf16.msra.mxu0 0
        %1573 = vmatprep.subr.bf16.mxu0 0
        %1574 = vmatpush1.bf16.msra.mxu0 0
        %1575 = vmatprep.subr.bf16.mxu0 0
        %1576 = vmatpush1.bf16.msra.mxu0 0
        %1577 = vmatprep.subr.bf16.mxu0 0
        %1578 = vmatpush1.bf16.msra.mxu0 0
        %1579 = vmatprep.subr.bf16.mxu0 0
        %1580 = vmatpush1.bf16.msra.mxu0 0
        %1581 = vmatprep.subr.bf16.mxu0 0
        %1582 = vmatpush1.bf16.msra.mxu0 0
        %1583 = vmatprep.subr.bf16.mxu0 0
        %1584 = vmatpush1.bf16.msra.mxu0 0
        %1585 = vmatprep.subr.bf16.mxu0 0
        %1586 = vmatpush1.bf16.msra.mxu0 0
        %1587 = vmatprep.subr.bf16.mxu0 0
        %1588 = vmatpush1.bf16.msra.mxu0 0
        %1589 = vmatprep.subr.bf16.mxu0 0
        %1590 = vmatpush1.bf16.msra.mxu0 0
        %1591 = vmatprep.subr.bf16.mxu0 0
        %1592 = vmatpush1.bf16.msra.mxu0 0
        %1593 = vmatprep.subr.bf16.mxu0 0
        %1594 = vmatpush1.bf16.msra.mxu0 0
        %1595 = vmatprep.subr.bf16.mxu0 0
        %1596 = vmatpush1.bf16.msra.mxu0 0
        %1597 = vmatprep.mubr.bf16.mxu0 0
        %1598 = vmatmul.mubr.bf16.gmra.mrb[0].mxu0 %v1560
        %v1599 = vpop.f32.mrb[0].mxu0
        %v1600 = vadd.f32 0.0, %v1599
        %v1601 = vpop.f32.mrb[0].mxu0
        %v1602 = vpop.f32.mrb[0].mxu0
        %v1603 = vpop.f32.mrb[0].mxu0
        %1604 = vdwg.mxu0
        %v1606 = vsel %vm1465, %v1046, 0
        %v1609 = vsel %vm1469, %v1464, 0
        %1611 = vmatprep.subr.bf16.mxu0 0
        %1612 = vmatpush1.bf16.msra.mxu0 %v1609
        %1613 = vmatprep.subr.bf16.mxu0 0
        %1614 = vmatpush1.bf16.msra.mxu0 0
        %1615 = vmatprep.subr.bf16.mxu0 0
        %1616 = vmatpush1.bf16.msra.mxu0 0
        %1617 = vmatprep.subr.bf16.mxu0 0
        %1618 = vmatpush1.bf16.msra.mxu0 0
        %1619 = vmatprep.subr.bf16.mxu0 0
        %1620 = vmatpush1.bf16.msra.mxu0 0
        %1621 = vmatprep.subr.bf16.mxu0 0
        %1622 = vmatpush1.bf16.msra.mxu0 0
        %1623 = vmatprep.subr.bf16.mxu0 0
        %1624 = vmatpush1.bf16.msra.mxu0 0
        %1625 = vmatprep.subr.bf16.mxu0 0
        %1626 = vmatpush1.bf16.msra.mxu0 0
        %1627 = vmatprep.subr.bf16.mxu0 0
        %1628 = vmatpush1.bf16.msra.mxu0 0
        %1629 = vmatprep.subr.bf16.mxu0 0
        %1630 = vmatpush1.bf16.msra.mxu0 0
        %1631 = vmatprep.subr.bf16.mxu0 0
        %1632 = vmatpush1.bf16.msra.mxu0 0
        %1633 = vmatprep.subr.bf16.mxu0 0
        %1634 = vmatpush1.bf16.msra.mxu0 0
        %1635 = vmatprep.subr.bf16.mxu0 0
        %1636 = vmatpush1.bf16.msra.mxu0 0
        %1637 = vmatprep.subr.bf16.mxu0 0
        %1638 = vmatpush1.bf16.msra.mxu0 0
        %1639 = vmatprep.subr.bf16.mxu0 0
        %1640 = vmatpush1.bf16.msra.mxu0 0
        %1641 = vmatprep.subr.bf16.mxu0 0
        %1642 = vmatpush1.bf16.msra.mxu0 0
        %1643 = vmatprep.mubr.bf16.mxu0 0
        %1644 = vmatmul.mubr.bf16.gmra.mrb[0].mxu0 %v1606
        %v1645 = vpop.f32.mrb[0].mxu0
        %v1646 = vadd.f32 0.0, %v1645
        %v1647 = vpop.f32.mrb[0].mxu0
        %v1648 = vpop.f32.mrb[0].mxu0
        %v1649 = vpop.f32.mrb[0].mxu0
        %1650 = vdwg.mxu0
        %v1651 = vsel %vm1465, %v1508, -inf
        %1652 = vmax.xlane.f32.xlu0 %v1651
        %v1653 = vpop.xlane.xlu0 %1652
        %v1654 = vsel %vm1465, %v1554, -inf
        %1655 = vmax.xlane.f32.xlu0 %v1654
        %v1656 = vpop.xlane.xlu0 %1655
        %v1657 = vsel %vm1465, %v1600, -inf
        %1658 = vmax.xlane.f32.xlu0 %v1657
        %v1659 = vpop.xlane.xlu0 %1658
        %v1660 = vsel %vm1465, %v1646, -inf
        %1661 = vmax.xlane.f32.xlu0 %v1660
        %v1662 = vpop.xlane.xlu0 %1661
        %v1663 = vsub.f32 %v1508, %v1653
        %v1664 = vsub.f32 %v1554, %v1656
        %v1665 = vsub.f32 %v1600, %v1659
        %v1666 = vsub.f32 %v1646, %v1662
        %v1667 = vmul.f32 %v1663, 1.442695
        %v1668 = vpow.pop %v1667
        %v1669 = vmul.f32 %v1664, 1.442695
        %v1670 = vpow.pop %v1669
        %v1671 = vmul.f32 %v1665, 1.442695
        %v1672 = vpow.pop %v1671
        %v1673 = vmul.f32 %v1666, 1.442695
        %v1674 = vpow.pop %v1673
        %v1675 = vsel %vm1465, %v1668, 0.0
        %1676 = vadd.xlane.f32.xlu0 %v1675
        %v1677 = vpop.xlane.xlu0 %1676
        %v1678 = vsel %vm1465, %v1670, 0.0
        %1679 = vadd.xlane.f32.xlu0 %v1678
        %v1680 = vpop.xlane.xlu0 %1679
        %v1681 = vsel %vm1465, %v1672, 0.0
        %1682 = vadd.xlane.f32.xlu0 %v1681
        %v1683 = vpop.xlane.xlu0 %1682
        %v1684 = vsel %vm1465, %v1674, 0.0
        %1685 = vadd.xlane.f32.xlu0 %v1684
        %v1686 = vpop.xlane.xlu0 %1685
        %v1687 = vrcp.pop %v1677
        %v1688 = vrcp.pop %v1680
        %v1689 = vrcp.pop %v1683
        %v1690 = vrcp.pop %v1686
        %v1691 = vmul.f32 %v1668, %v1687
        %v1692 = vmul.f32 %v1670, %v1688
        %v1693 = vmul.f32 %v1672, %v1689
        %v1694 = vmul.f32 %v1674, %v1690
        %v1695 = vpack.c.bf16 %v1691, %v1691
        %v1696 = vpack.c.bf16 %v1692, %v1692
        %v1697 = vpack.c.bf16 %v1693, %v1693
        %v1698 = vpack.c.bf16 %v1694, %v1694
        %1699 = vxpose.xlu0.c.b16.start [1/8] %v977, 128
        %1700 = vxpose.xlu0.c.b16.cont [2/8] 0, 128
        %1701 = vxpose.xlu0.c.b16.cont [3/8] 0, 128
        %1702 = vxpose.xlu0.c.b16.cont [4/8] 0, 128
        %1703 = vxpose.xlu0.c.b16.cont [5/8] 0, 128
        %1704 = vxpose.xlu0.c.b16.cont [6/8] 0, 128
        %1705 = vxpose.xlu0.c.b16.cont [7/8] 0, 128
        %1706 = vxpose.xlu0.c.b16.end [8/8] 0, 128
        %v1707 = vpop.trf.xlu0
        %v1708 = vpop.trf.xlu0
        %v1709 = vpop.trf.xlu0
        %v1710 = vpop.trf.xlu0
        %v1711 = vpop.trf.xlu0
        %v1712 = vpop.trf.xlu0
        %v1713 = vpop.trf.xlu0
        %v1714 = vpop.trf.xlu0
        %1715 = vxpose.xlu0.c.b16.start [1/8] %v978, 128
        %1716 = vxpose.xlu0.c.b16.cont [2/8] 0, 128
        %1717 = vxpose.xlu0.c.b16.cont [3/8] 0, 128
        %1718 = vxpose.xlu0.c.b16.cont [4/8] 0, 128
        %1719 = vxpose.xlu0.c.b16.cont [5/8] 0, 128
        %1720 = vxpose.xlu0.c.b16.cont [6/8] 0, 128
        %1721 = vxpose.xlu0.c.b16.cont [7/8] 0, 128
        %1722 = vxpose.xlu0.c.b16.end [8/8] 0, 128
        %v1723 = vpop.trf.xlu0
        %v1724 = vpop.trf.xlu0
        %v1725 = vpop.trf.xlu0
        %v1726 = vpop.trf.xlu0
        %v1727 = vpop.trf.xlu0
        %v1728 = vpop.trf.xlu0
        %v1729 = vpop.trf.xlu0
        %v1730 = vpop.trf.xlu0
        %1731 = vxpose.xlu0.c.b16.start [1/8] %v979, 128
        %1732 = vxpose.xlu0.c.b16.cont [2/8] 0, 128
        %1733 = vxpose.xlu0.c.b16.cont [3/8] 0, 128
        %1734 = vxpose.xlu0.c.b16.cont [4/8] 0, 128
        %1735 = vxpose.xlu0.c.b16.cont [5/8] 0, 128
        %1736 = vxpose.xlu0.c.b16.cont [6/8] 0, 128
        %1737 = vxpose.xlu0.c.b16.cont [7/8] 0, 128
        %1738 = vxpose.xlu0.c.b16.end [8/8] 0, 128
        %v1739 = vpop.trf.xlu0
        %v1740 = vpop.trf.xlu0
        %v1741 = vpop.trf.xlu0
        %v1742 = vpop.trf.xlu0
        %v1743 = vpop.trf.xlu0
        %v1744 = vpop.trf.xlu0
        %v1745 = vpop.trf.xlu0
        %v1746 = vpop.trf.xlu0
        %1747 = vxpose.xlu0.c.b16.start [1/8] %v980, 128
        %1748 = vxpose.xlu0.c.b16.cont [2/8] 0, 128
        %1749 = vxpose.xlu0.c.b16.cont [3/8] 0, 128
        %1750 = vxpose.xlu0.c.b16.cont [4/8] 0, 128
        %1751 = vxpose.xlu0.c.b16.cont [5/8] 0, 128
        %1752 = vxpose.xlu0.c.b16.cont [6/8] 0, 128
        %1753 = vxpose.xlu0.c.b16.cont [7/8] 0, 128
        %1754 = vxpose.xlu0.c.b16.end [8/8] 0, 128
        %v1755 = vpop.trf.xlu0
        %v1756 = vpop.trf.xlu0
        %v1757 = vpop.trf.xlu0
        %v1758 = vpop.trf.xlu0
        %v1759 = vpop.trf.xlu0
        %v1760 = vpop.trf.xlu0
        %v1761 = vpop.trf.xlu0
        %v1762 = vpop.trf.xlu0
        %1763 = vxpose.xlu0.c.b16.start [1/8] %v981, 128
        %1764 = vxpose.xlu0.c.b16.cont [2/8] 0, 128
        %1765 = vxpose.xlu0.c.b16.cont [3/8] 0, 128
        %1766 = vxpose.xlu0.c.b16.cont [4/8] 0, 128
        %1767 = vxpose.xlu0.c.b16.cont [5/8] 0, 128
        %1768 = vxpose.xlu0.c.b16.cont [6/8] 0, 128
        %1769 = vxpose.xlu0.c.b16.cont [7/8] 0, 128
        %1770 = vxpose.xlu0.c.b16.end [8/8] 0, 128
        %v1771 = vpop.trf.xlu0
        %v1772 = vpop.trf.xlu0
        %v1773 = vpop.trf.xlu0
        %v1774 = vpop.trf.xlu0
        %v1775 = vpop.trf.xlu0
        %v1776 = vpop.trf.xlu0
        %v1777 = vpop.trf.xlu0
        %v1778 = vpop.trf.xlu0
        %1779 = vxpose.xlu0.c.b16.start [1/8] %v982, 128
        %1780 = vxpose.xlu0.c.b16.cont [2/8] 0, 128
        %1781 = vxpose.xlu0.c.b16.cont [3/8] 0, 128
        %1782 = vxpose.xlu0.c.b16.cont [4/8] 0, 128
        %1783 = vxpose.xlu0.c.b16.cont [5/8] 0, 128
        %1784 = vxpose.xlu0.c.b16.cont [6/8] 0, 128
        %1785 = vxpose.xlu0.c.b16.cont [7/8] 0, 128
        %1786 = vxpose.xlu0.c.b16.end [8/8] 0, 128
        %v1787 = vpop.trf.xlu0
        %v1788 = vpop.trf.xlu0
        %v1789 = vpop.trf.xlu0
        %v1790 = vpop.trf.xlu0
        %v1791 = vpop.trf.xlu0
        %v1792 = vpop.trf.xlu0
        %v1793 = vpop.trf.xlu0
        %v1794 = vpop.trf.xlu0
        %1795 = vxpose.xlu0.c.b16.start [1/8] %v983, 128
        %1796 = vxpose.xlu0.c.b16.cont [2/8] 0, 128
        %1797 = vxpose.xlu0.c.b16.cont [3/8] 0, 128
        %1798 = vxpose.xlu0.c.b16.cont [4/8] 0, 128
        %1799 = vxpose.xlu0.c.b16.cont [5/8] 0, 128
        %1800 = vxpose.xlu0.c.b16.cont [6/8] 0, 128
        %1801 = vxpose.xlu0.c.b16.cont [7/8] 0, 128
        %1802 = vxpose.xlu0.c.b16.end [8/8] 0, 128
        %v1803 = vpop.trf.xlu0
        %v1804 = vpop.trf.xlu0
        %v1805 = vpop.trf.xlu0
        %v1806 = vpop.trf.xlu0
        %v1807 = vpop.trf.xlu0
        %v1808 = vpop.trf.xlu0
        %v1809 = vpop.trf.xlu0
        %v1810 = vpop.trf.xlu0
        %1811 = vxpose.xlu0.c.b16.start [1/8] %v984, 128
        %1812 = vxpose.xlu0.c.b16.cont [2/8] 0, 128
        %1813 = vxpose.xlu0.c.b16.cont [3/8] 0, 128
        %1814 = vxpose.xlu0.c.b16.cont [4/8] 0, 128
        %1815 = vxpose.xlu0.c.b16.cont [5/8] 0, 128
        %1816 = vxpose.xlu0.c.b16.cont [6/8] 0, 128
        %1817 = vxpose.xlu0.c.b16.cont [7/8] 0, 128
        %1818 = vxpose.xlu0.c.b16.end [8/8] 0, 128
        %v1819 = vpop.trf.xlu0
        %v1820 = vpop.trf.xlu0
        %v1821 = vpop.trf.xlu0
        %v1822 = vpop.trf.xlu0
        %v1823 = vpop.trf.xlu0
        %v1824 = vpop.trf.xlu0
        %v1825 = vpop.trf.xlu0
        %v1826 = vpop.trf.xlu0
        %v1827 = vcombine.low %v1707, %v1771
        %v1829 = vunpack.c.l.s4 1983009808
        %v1830 = vunpack.c.0.s8 %v1829
        %v1831 = vlaneseq
        %v1832 = vshrl.u32 %v1831, 7
        %v1833 = vsub.s32 %v1830, %v1832
        %v1834 = vrot.slane %v1827, %v1833
        %v1835 = vcombine.low %v1739, %v1803
        %v1837 = vunpack.c.l.s4 1983009808
        %v1838 = vunpack.c.0.s8 %v1837
        %v1839 = vlaneseq
        %v1840 = vshrl.u32 %v1839, 7
        %v1841 = vsub.s32 %v1838, %v1840
        %v1842 = vrot.slane %v1835, %v1841
        %v1843 = vcombine.low %v1834, %v1842
        %v1844 = vcombine.high %v1834, %v1842
        %v1846 = vunpack.c.l.s4 1934713408
        %v1847 = vunpack.c.0.s8 %v1846
        %v1848 = vlaneseq
        %v1849 = vshrl.u32 %v1848, 7
        %v1850 = vsub.s32 %v1847, %v1849
        %v1851 = vrot.slane %v1843, %v1850
        %v1853 = vunpack.c.l.s4 1934713408
        %v1854 = vunpack.c.0.s8 %v1853
        %v1855 = vlaneseq
        %v1856 = vshrl.u32 %v1855, 7
        %v1857 = vsub.s32 %v1854, %v1856
        %v1858 = vrot.slane %v1844, %v1857
        %v1859 = vcombine.high %v1851, 0
        %v1860 = vcombine.high %v1858, 0
        %v1861 = vcombine.low %v1723, %v1787
        %v1863 = vunpack.c.l.s4 1983009808
        %v1864 = vunpack.c.0.s8 %v1863
        %v1865 = vlaneseq
        %v1866 = vshrl.u32 %v1865, 7
        %v1867 = vsub.s32 %v1864, %v1866
        %v1868 = vrot.slane %v1861, %v1867
        %v1869 = vcombine.low %v1755, %v1819
        %v1871 = vunpack.c.l.s4 1983009808
        %v1872 = vunpack.c.0.s8 %v1871
        %v1873 = vlaneseq
        %v1874 = vshrl.u32 %v1873, 7
        %v1875 = vsub.s32 %v1872, %v1874
        %v1876 = vrot.slane %v1869, %v1875
        %v1877 = vcombine.low %v1868, %v1876
        %v1878 = vcombine.high %v1868, %v1876
        %v1880 = vunpack.c.l.s4 1934713408
        %v1881 = vunpack.c.0.s8 %v1880
        %v1882 = vlaneseq
        %v1883 = vshrl.u32 %v1882, 7
        %v1884 = vsub.s32 %v1881, %v1883
        %v1885 = vrot.slane %v1877, %v1884
        %v1887 = vunpack.c.l.s4 1934713408
        %v1888 = vunpack.c.0.s8 %v1887
        %v1889 = vlaneseq
        %v1890 = vshrl.u32 %v1889, 7
        %v1891 = vsub.s32 %v1888, %v1890
        %v1892 = vrot.slane %v1878, %v1891
        %v1893 = vcombine.high %v1885, 0
        %v1894 = vcombine.high %v1892, 0
        %v1897 = vpack.i.b16 %v1885, %v1851
        %v1899 = vshrl.u32 %v1851, 16
        %v1900 = vshrl.u32 %v1885, 16
        %v1901 = vpack.i.b16 %v1900, %v1899
        %v1905 = vpack.i.b16 %v1893, %v1859
        %v1907 = vshrl.u32 %v1859, 16
        %v1908 = vshrl.u32 %v1893, 16
        %v1909 = vpack.i.b16 %v1908, %v1907
        %v1913 = vpack.i.b16 %v1892, %v1858
        %v1915 = vshrl.u32 %v1858, 16
        %v1916 = vshrl.u32 %v1892, 16
        %v1917 = vpack.i.b16 %v1916, %v1915
        %v1921 = vpack.i.b16 %v1894, %v1860
        %v1923 = vshrl.u32 %v1860, 16
        %v1924 = vshrl.u32 %v1894, 16
        %v1925 = vpack.i.b16 %v1924, %v1923
        %1927 = vxpose.xlu0.c.b16.start [1/8] %v1897, 128
        %1928 = vxpose.xlu0.c.b16.cont [2/8] 0, 128
        %1929 = vxpose.xlu0.c.b16.cont [3/8] 0, 128
        %1930 = vxpose.xlu0.c.b16.cont [4/8] 0, 128
        %1931 = vxpose.xlu0.c.b16.cont [5/8] 0, 128
        %1932 = vxpose.xlu0.c.b16.cont [6/8] 0, 128
        %1933 = vxpose.xlu0.c.b16.cont [7/8] 0, 128
        %1934 = vxpose.xlu0.c.b16.end [8/8] 0, 128
        %v1935 = vpop.trf.xlu0
        %v1936 = vpop.trf.xlu0
        %v1937 = vpop.trf.xlu0
        %v1938 = vpop.trf.xlu0
        %v1939 = vpop.trf.xlu0
        %v1940 = vpop.trf.xlu0
        %v1941 = vpop.trf.xlu0
        %v1942 = vpop.trf.xlu0
        %1943 = vxpose.xlu0.c.b16.start [1/8] %v1901, 128
        %1944 = vxpose.xlu0.c.b16.cont [2/8] 0, 128
        %1945 = vxpose.xlu0.c.b16.cont [3/8] 0, 128
        %1946 = vxpose.xlu0.c.b16.cont [4/8] 0, 128
        %1947 = vxpose.xlu0.c.b16.cont [5/8] 0, 128
        %1948 = vxpose.xlu0.c.b16.cont [6/8] 0, 128
        %1949 = vxpose.xlu0.c.b16.cont [7/8] 0, 128
        %1950 = vxpose.xlu0.c.b16.end [8/8] 0, 128
        %v1951 = vpop.trf.xlu0
        %v1952 = vpop.trf.xlu0
        %v1953 = vpop.trf.xlu0
        %v1954 = vpop.trf.xlu0
        %v1955 = vpop.trf.xlu0
        %v1956 = vpop.trf.xlu0
        %v1957 = vpop.trf.xlu0
        %v1958 = vpop.trf.xlu0
        %1959 = vxpose.xlu0.c.b16.start [1/8] %v1905, 128
        %1960 = vxpose.xlu0.c.b16.cont [2/8] 0, 128
        %1961 = vxpose.xlu0.c.b16.cont [3/8] 0, 128
        %1962 = vxpose.xlu0.c.b16.cont [4/8] 0, 128
        %1963 = vxpose.xlu0.c.b16.cont [5/8] 0, 128
        %1964 = vxpose.xlu0.c.b16.cont [6/8] 0, 128
        %1965 = vxpose.xlu0.c.b16.cont [7/8] 0, 128
        %1966 = vxpose.xlu0.c.b16.end [8/8] 0, 128
        %v1967 = vpop.trf.xlu0
        %v1968 = vpop.trf.xlu0
        %v1969 = vpop.trf.xlu0
        %v1970 = vpop.trf.xlu0
        %v1971 = vpop.trf.xlu0
        %v1972 = vpop.trf.xlu0
        %v1973 = vpop.trf.xlu0
        %v1974 = vpop.trf.xlu0
        %1975 = vxpose.xlu0.c.b16.start [1/8] %v1909, 128
        %1976 = vxpose.xlu0.c.b16.cont [2/8] 0, 128
        %1977 = vxpose.xlu0.c.b16.cont [3/8] 0, 128
        %1978 = vxpose.xlu0.c.b16.cont [4/8] 0, 128
        %1979 = vxpose.xlu0.c.b16.cont [5/8] 0, 128
        %1980 = vxpose.xlu0.c.b16.cont [6/8] 0, 128
        %1981 = vxpose.xlu0.c.b16.cont [7/8] 0, 128
        %1982 = vxpose.xlu0.c.b16.end [8/8] 0, 128
        %v1983 = vpop.trf.xlu0
        %v1984 = vpop.trf.xlu0
        %v1985 = vpop.trf.xlu0
        %v1986 = vpop.trf.xlu0
        %v1987 = vpop.trf.xlu0
        %v1988 = vpop.trf.xlu0
        %v1989 = vpop.trf.xlu0
        %v1990 = vpop.trf.xlu0
        %1991 = vxpose.xlu0.c.b16.start [1/8] %v1913, 128
        %1992 = vxpose.xlu0.c.b16.cont [2/8] 0, 128
        %1993 = vxpose.xlu0.c.b16.cont [3/8] 0, 128
        %1994 = vxpose.xlu0.c.b16.cont [4/8] 0, 128
        %1995 = vxpose.xlu0.c.b16.cont [5/8] 0, 128
        %1996 = vxpose.xlu0.c.b16.cont [6/8] 0, 128
        %1997 = vxpose.xlu0.c.b16.cont [7/8] 0, 128
        %1998 = vxpose.xlu0.c.b16.end [8/8] 0, 128
        %v1999 = vpop.trf.xlu0
        %v2000 = vpop.trf.xlu0
        %v2001 = vpop.trf.xlu0
        %v2002 = vpop.trf.xlu0
        %v2003 = vpop.trf.xlu0
        %v2004 = vpop.trf.xlu0
        %v2005 = vpop.trf.xlu0
        %v2006 = vpop.trf.xlu0
        %2007 = vxpose.xlu0.c.b16.start [1/8] %v1917, 128
        %2008 = vxpose.xlu0.c.b16.cont [2/8] 0, 128
        %2009 = vxpose.xlu0.c.b16.cont [3/8] 0, 128
        %2010 = vxpose.xlu0.c.b16.cont [4/8] 0, 128
        %2011 = vxpose.xlu0.c.b16.cont [5/8] 0, 128
        %2012 = vxpose.xlu0.c.b16.cont [6/8] 0, 128
        %2013 = vxpose.xlu0.c.b16.cont [7/8] 0, 128
        %2014 = vxpose.xlu0.c.b16.end [8/8] 0, 128
        %v2015 = vpop.trf.xlu0
        %v2016 = vpop.trf.xlu0
        %v2017 = vpop.trf.xlu0
        %v2018 = vpop.trf.xlu0
        %v2019 = vpop.trf.xlu0
        %v2020 = vpop.trf.xlu0
        %v2021 = vpop.trf.xlu0
        %v2022 = vpop.trf.xlu0
        %2023 = vxpose.xlu0.c.b16.start [1/8] %v1921, 128
        %2024 = vxpose.xlu0.c.b16.cont [2/8] 0, 128
        %2025 = vxpose.xlu0.c.b16.cont [3/8] 0, 128
        %2026 = vxpose.xlu0.c.b16.cont [4/8] 0, 128
        %2027 = vxpose.xlu0.c.b16.cont [5/8] 0, 128
        %2028 = vxpose.xlu0.c.b16.cont [6/8] 0, 128
        %2029 = vxpose.xlu0.c.b16.cont [7/8] 0, 128
        %2030 = vxpose.xlu0.c.b16.end [8/8] 0, 128
        %v2031 = vpop.trf.xlu0
        %v2032 = vpop.trf.xlu0
        %v2033 = vpop.trf.xlu0
        %v2034 = vpop.trf.xlu0
        %v2035 = vpop.trf.xlu0
        %v2036 = vpop.trf.xlu0
        %v2037 = vpop.trf.xlu0
        %v2038 = vpop.trf.xlu0
        %2039 = vxpose.xlu0.c.b16.start [1/8] %v1925, 128
        %2040 = vxpose.xlu0.c.b16.cont [2/8] 0, 128
        %2041 = vxpose.xlu0.c.b16.cont [3/8] 0, 128
        %2042 = vxpose.xlu0.c.b16.cont [4/8] 0, 128
        %2043 = vxpose.xlu0.c.b16.cont [5/8] 0, 128
        %2044 = vxpose.xlu0.c.b16.cont [6/8] 0, 128
        %2045 = vxpose.xlu0.c.b16.cont [7/8] 0, 128
        %2046 = vxpose.xlu0.c.b16.end [8/8] 0, 128
        %v2047 = vpop.trf.xlu0
        %v2048 = vpop.trf.xlu0
        %v2049 = vpop.trf.xlu0
        %v2050 = vpop.trf.xlu0
        %v2051 = vpop.trf.xlu0
        %v2052 = vpop.trf.xlu0
        %v2053 = vpop.trf.xlu0
        %v2054 = vpop.trf.xlu0
        %v2055 = vcombine.low %v1935, %v1999
        %v2057 = vunpack.c.l.s4 1983009808
        %v2058 = vunpack.c.0.s8 %v2057
        %v2059 = vlaneseq
        %v2060 = vshrl.u32 %v2059, 7
        %v2061 = vsub.s32 %v2058, %v2060
        %v2062 = vrot.slane %v2055, %v2061
        %v2063 = vcombine.low %v1967, %v2031
        %v2065 = vunpack.c.l.s4 1983009808
        %v2066 = vunpack.c.0.s8 %v2065
        %v2067 = vlaneseq
        %v2068 = vshrl.u32 %v2067, 7
        %v2069 = vsub.s32 %v2066, %v2068
        %v2070 = vrot.slane %v2063, %v2069
        %v2071 = vcombine.low %v2062, %v2070
        %v2073 = vunpack.c.l.s4 1934713408
        %v2074 = vunpack.c.0.s8 %v2073
        %v2075 = vlaneseq
        %v2076 = vshrl.u32 %v2075, 7
        %v2077 = vsub.s32 %v2074, %v2076
        %v2078 = vrot.slane %v2071, %v2077
        %v2079 = vcombine.high %v2078, 0
        %v2080 = vcombine.low %v1951, %v2015
        %v2082 = vunpack.c.l.s4 1983009808
        %v2083 = vunpack.c.0.s8 %v2082
        %v2084 = vlaneseq
        %v2085 = vshrl.u32 %v2084, 7
        %v2086 = vsub.s32 %v2083, %v2085
        %v2087 = vrot.slane %v2080, %v2086
        %v2088 = vcombine.low %v1983, %v2047
        %v2090 = vunpack.c.l.s4 1983009808
        %v2091 = vunpack.c.0.s8 %v2090
        %v2092 = vlaneseq
        %v2093 = vshrl.u32 %v2092, 7
        %v2094 = vsub.s32 %v2091, %v2093
        %v2095 = vrot.slane %v2088, %v2094
        %v2096 = vcombine.low %v2087, %v2095
        %v2098 = vunpack.c.l.s4 1934713408
        %v2099 = vunpack.c.0.s8 %v2098
        %v2100 = vlaneseq
        %v2101 = vshrl.u32 %v2100, 7
        %v2102 = vsub.s32 %v2099, %v2101
        %v2103 = vrot.slane %v2096, %v2102
        %v2104 = vcombine.high %v2103, 0
        %v2107 = vpack.i.b16 %v2103, %v2078
        %v2108 = vshrl.u32 %v2078, 16
        %v2109 = vshrl.u32 %v2103, 16
        %v2110 = vpack.i.b16 %v2109, %v2108
        %v2113 = vpack.i.b16 %v2104, %v2079
        %v2114 = vshrl.u32 %v2079, 16
        %v2115 = vshrl.u32 %v2104, 16
        %v2116 = vpack.i.b16 %v2115, %v2114
        %v2118 = vsel %vm1465, %v2107, 0
        %v2121 = vsel %vm1465, %v1695, 0
        %2123 = vmatprep.subr.bf16.mxu0 0
        %2124 = vmatpush1.bf16.xpose.msra.mxu0 %v2121
        %2125 = vmatprep.subr.bf16.mxu0 0
        %2126 = vmatpush1.bf16.xpose.msra.mxu0 0
        %2127 = vmatprep.subr.bf16.mxu0 0
        %2128 = vmatpush1.bf16.xpose.msra.mxu0 0
        %2129 = vmatprep.subr.bf16.mxu0 0
        %2130 = vmatpush1.bf16.xpose.msra.mxu0 0
        %2131 = vmatprep.subr.bf16.mxu0 0
        %2132 = vmatpush1.bf16.xpose.msra.mxu0 0
        %2133 = vmatprep.subr.bf16.mxu0 0
        %2134 = vmatpush1.bf16.xpose.msra.mxu0 0
        %2135 = vmatprep.subr.bf16.mxu0 0
        %2136 = vmatpush1.bf16.xpose.msra.mxu0 0
        %2137 = vmatprep.subr.bf16.mxu0 0
        %2138 = vmatpush1.bf16.xpose.msra.mxu0 0
        %2139 = vmatprep.subr.bf16.mxu0 0
        %2140 = vmatpush1.bf16.xpose.msra.mxu0 0
        %2141 = vmatprep.subr.bf16.mxu0 0
        %2142 = vmatpush1.bf16.xpose.msra.mxu0 0
        %2143 = vmatprep.subr.bf16.mxu0 0
        %2144 = vmatpush1.bf16.xpose.msra.mxu0 0
        %2145 = vmatprep.subr.bf16.mxu0 0
        %2146 = vmatpush1.bf16.xpose.msra.mxu0 0
        %2147 = vmatprep.subr.bf16.mxu0 0
        %2148 = vmatpush1.bf16.xpose.msra.mxu0 0
        %2149 = vmatprep.subr.bf16.mxu0 0
        %2150 = vmatpush1.bf16.xpose.msra.mxu0 0
        %2151 = vmatprep.subr.bf16.mxu0 0
        %2152 = vmatpush1.bf16.xpose.msra.mxu0 0
        %2153 = vmatprep.subr.bf16.mxu0 0
        %2154 = vmatpush1.bf16.xpose.msra.mxu0 0
        %2155 = vmatprep.mubr.bf16.mxu0 0
        %2156 = vmatmul.mubr.bf16.gmra.mrb[0].mxu0 %v2118
        %v2157 = vpop.f32.mrb[0].mxu0
        %v2158 = vadd.f32 0.0, %v2157
        %v2159 = vpop.f32.mrb[0].mxu0
        %v2160 = vpop.f32.mrb[0].mxu0
        %v2161 = vpop.f32.mrb[0].mxu0
        %2162 = vdwg.mxu0
        %v2164 = vsel %vm1465, %v2110, 0
        %v2167 = vsel %vm1465, %v1696, 0
        %2169 = vmatprep.subr.bf16.mxu0 0
        %2170 = vmatpush1.bf16.xpose.msra.mxu0 %v2167
        %2171 = vmatprep.subr.bf16.mxu0 0
        %2172 = vmatpush1.bf16.xpose.msra.mxu0 0
        %2173 = vmatprep.subr.bf16.mxu0 0
        %2174 = vmatpush1.bf16.xpose.msra.mxu0 0
        %2175 = vmatprep.subr.bf16.mxu0 0
        %2176 = vmatpush1.bf16.xpose.msra.mxu0 0
        %2177 = vmatprep.subr.bf16.mxu0 0
        %2178 = vmatpush1.bf16.xpose.msra.mxu0 0
        %2179 = vmatprep.subr.bf16.mxu0 0
        %2180 = vmatpush1.bf16.xpose.msra.mxu0 0
        %2181 = vmatprep.subr.bf16.mxu0 0
        %2182 = vmatpush1.bf16.xpose.msra.mxu0 0
        %2183 = vmatprep.subr.bf16.mxu0 0
        %2184 = vmatpush1.bf16.xpose.msra.mxu0 0
        %2185 = vmatprep.subr.bf16.mxu0 0
        %2186 = vmatpush1.bf16.xpose.msra.mxu0 0
        %2187 = vmatprep.subr.bf16.mxu0 0
        %2188 = vmatpush1.bf16.xpose.msra.mxu0 0
        %2189 = vmatprep.subr.bf16.mxu0 0
        %2190 = vmatpush1.bf16.xpose.msra.mxu0 0
        %2191 = vmatprep.subr.bf16.mxu0 0
        %2192 = vmatpush1.bf16.xpose.msra.mxu0 0
        %2193 = vmatprep.subr.bf16.mxu0 0
        %2194 = vmatpush1.bf16.xpose.msra.mxu0 0
        %2195 = vmatprep.subr.bf16.mxu0 0
        %2196 = vmatpush1.bf16.xpose.msra.mxu0 0
        %2197 = vmatprep.subr.bf16.mxu0 0
        %2198 = vmatpush1.bf16.xpose.msra.mxu0 0
        %2199 = vmatprep.subr.bf16.mxu0 0
        %2200 = vmatpush1.bf16.xpose.msra.mxu0 0
        %2201 = vmatprep.mubr.bf16.mxu0 0
        %2202 = vmatmul.mubr.bf16.gmra.mrb[0].mxu0 %v2164
        %v2203 = vpop.f32.mrb[0].mxu0
        %v2204 = vadd.f32 0.0, %v2203
        %v2205 = vpop.f32.mrb[0].mxu0
        %v2206 = vpop.f32.mrb[0].mxu0
        %v2207 = vpop.f32.mrb[0].mxu0
        %2208 = vdwg.mxu0
        %v2210 = vsel %vm1465, %v2113, 0
        %v2213 = vsel %vm1465, %v1697, 0
        %2215 = vmatprep.subr.bf16.mxu0 0
        %2216 = vmatpush1.bf16.xpose.msra.mxu0 %v2213
        %2217 = vmatprep.subr.bf16.mxu0 0
        %2218 = vmatpush1.bf16.xpose.msra.mxu0 0
        %2219 = vmatprep.subr.bf16.mxu0 0
        %2220 = vmatpush1.bf16.xpose.msra.mxu0 0
        %2221 = vmatprep.subr.bf16.mxu0 0
        %2222 = vmatpush1.bf16.xpose.msra.mxu0 0
        %2223 = vmatprep.subr.bf16.mxu0 0
        %2224 = vmatpush1.bf16.xpose.msra.mxu0 0
        %2225 = vmatprep.subr.bf16.mxu0 0
        %2226 = vmatpush1.bf16.xpose.msra.mxu0 0
        %2227 = vmatprep.subr.bf16.mxu0 0
        %2228 = vmatpush1.bf16.xpose.msra.mxu0 0
        %2229 = vmatprep.subr.bf16.mxu0 0
        %2230 = vmatpush1.bf16.xpose.msra.mxu0 0
        %2231 = vmatprep.subr.bf16.mxu0 0
        %2232 = vmatpush1.bf16.xpose.msra.mxu0 0
        %2233 = vmatprep.subr.bf16.mxu0 0
        %2234 = vmatpush1.bf16.xpose.msra.mxu0 0
        %2235 = vmatprep.subr.bf16.mxu0 0
        %2236 = vmatpush1.bf16.xpose.msra.mxu0 0
        %2237 = vmatprep.subr.bf16.mxu0 0
        %2238 = vmatpush1.bf16.xpose.msra.mxu0 0
        %2239 = vmatprep.subr.bf16.mxu0 0
        %2240 = vmatpush1.bf16.xpose.msra.mxu0 0
        %2241 = vmatprep.subr.bf16.mxu0 0
        %2242 = vmatpush1.bf16.xpose.msra.mxu0 0
        %2243 = vmatprep.subr.bf16.mxu0 0
        %2244 = vmatpush1.bf16.xpose.msra.mxu0 0
        %2245 = vmatprep.subr.bf16.mxu0 0
        %2246 = vmatpush1.bf16.xpose.msra.mxu0 0
        %2247 = vmatprep.mubr.bf16.mxu0 0
        %2248 = vmatmul.mubr.bf16.gmra.mrb[0].mxu0 %v2210
        %v2249 = vpop.f32.mrb[0].mxu0
        %v2250 = vadd.f32 0.0, %v2249
        %v2251 = vpop.f32.mrb[0].mxu0
        %v2252 = vpop.f32.mrb[0].mxu0
        %v2253 = vpop.f32.mrb[0].mxu0
        %2254 = vdwg.mxu0
        %v2256 = vsel %vm1465, %v2116, 0
        %v2259 = vsel %vm1465, %v1698, 0
        %2261 = vmatprep.subr.bf16.mxu0 0
        %2262 = vmatpush1.bf16.xpose.msra.mxu0 %v2259
        %2263 = vmatprep.subr.bf16.mxu0 0
        %2264 = vmatpush1.bf16.xpose.msra.mxu0 0
        %2265 = vmatprep.subr.bf16.mxu0 0
        %2266 = vmatpush1.bf16.xpose.msra.mxu0 0
        %2267 = vmatprep.subr.bf16.mxu0 0
        %2268 = vmatpush1.bf16.xpose.msra.mxu0 0
        %2269 = vmatprep.subr.bf16.mxu0 0
        %2270 = vmatpush1.bf16.xpose.msra.mxu0 0
        %2271 = vmatprep.subr.bf16.mxu0 0
        %2272 = vmatpush1.bf16.xpose.msra.mxu0 0
        %2273 = vmatprep.subr.bf16.mxu0 0
        %2274 = vmatpush1.bf16.xpose.msra.mxu0 0
        %2275 = vmatprep.subr.bf16.mxu0 0
        %2276 = vmatpush1.bf16.xpose.msra.mxu0 0
        %2277 = vmatprep.subr.bf16.mxu0 0
        %2278 = vmatpush1.bf16.xpose.msra.mxu0 0
        %2279 = vmatprep.subr.bf16.mxu0 0
        %2280 = vmatpush1.bf16.xpose.msra.mxu0 0
        %2281 = vmatprep.subr.bf16.mxu0 0
        %2282 = vmatpush1.bf16.xpose.msra.mxu0 0
        %2283 = vmatprep.subr.bf16.mxu0 0
        %2284 = vmatpush1.bf16.xpose.msra.mxu0 0
        %2285 = vmatprep.subr.bf16.mxu0 0
        %2286 = vmatpush1.bf16.xpose.msra.mxu0 0
        %2287 = vmatprep.subr.bf16.mxu0 0
        %2288 = vmatpush1.bf16.xpose.msra.mxu0 0
        %2289 = vmatprep.subr.bf16.mxu0 0
        %2290 = vmatpush1.bf16.xpose.msra.mxu0 0
        %2291 = vmatprep.subr.bf16.mxu0 0
        %2292 = vmatpush1.bf16.xpose.msra.mxu0 0
        %2293 = vmatprep.mubr.bf16.mxu0 0
        %2294 = vmatmul.mubr.bf16.gmra.mrb[0].mxu0 %v2256
        %v2295 = vpop.f32.mrb[0].mxu0
        %v2296 = vadd.f32 0.0, %v2295
        %v2297 = vpop.f32.mrb[0].mxu0
        %v2298 = vpop.f32.mrb[0].mxu0
        %v2299 = vpop.f32.mrb[0].mxu0
        %2300 = vdwg.mxu0
        %2301 = vxpose.xlu0.b32.start [1/16] %v2158, 128
        %2302 = vxpose.xlu0.b32.cont [2/16] 0.0, 128
        %2303 = vxpose.xlu0.b32.cont [3/16] 0.0, 128
        %2304 = vxpose.xlu0.b32.cont [4/16] 0.0, 128
        %2305 = vxpose.xlu0.b32.cont [5/16] 0.0, 128
        %2306 = vxpose.xlu0.b32.cont [6/16] 0.0, 128
        %2307 = vxpose.xlu0.b32.cont [7/16] 0.0, 128
        %2308 = vxpose.xlu0.b32.cont [8/16] 0.0, 128
        %2309 = vxpose.xlu0.b32.cont [9/16] 0.0, 128
        %2310 = vxpose.xlu0.b32.cont [10/16] 0.0, 128
        %2311 = vxpose.xlu0.b32.cont [11/16] 0.0, 128
        %2312 = vxpose.xlu0.b32.cont [12/16] 0.0, 128
        %2313 = vxpose.xlu0.b32.cont [13/16] 0.0, 128
        %2314 = vxpose.xlu0.b32.cont [14/16] 0.0, 128
        %2315 = vxpose.xlu0.b32.cont [15/16] 0.0, 128
        %2316 = vxpose.xlu0.b32.end [16/16] 0.0, 128
        %v2317 = vpop.trf.xlu0
        %v2318 = vpop.trf.xlu0
        %v2319 = vpop.trf.xlu0
        %v2320 = vpop.trf.xlu0
        %v2321 = vpop.trf.xlu0
        %v2322 = vpop.trf.xlu0
        %v2323 = vpop.trf.xlu0
        %v2324 = vpop.trf.xlu0
        %v2325 = vpop.trf.xlu0
        %v2326 = vpop.trf.xlu0
        %v2327 = vpop.trf.xlu0
        %v2328 = vpop.trf.xlu0
        %v2329 = vpop.trf.xlu0
        %v2330 = vpop.trf.xlu0
        %v2331 = vpop.trf.xlu0
        %v2332 = vpop.trf.xlu0
        %2333 = vxpose.xlu0.b32.start [1/16] %v2204, 128
        %2334 = vxpose.xlu0.b32.cont [2/16] 0.0, 128
        %2335 = vxpose.xlu0.b32.cont [3/16] 0.0, 128
        %2336 = vxpose.xlu0.b32.cont [4/16] 0.0, 128
        %2337 = vxpose.xlu0.b32.cont [5/16] 0.0, 128
        %2338 = vxpose.xlu0.b32.cont [6/16] 0.0, 128
        %2339 = vxpose.xlu0.b32.cont [7/16] 0.0, 128
        %2340 = vxpose.xlu0.b32.cont [8/16] 0.0, 128
        %2341 = vxpose.xlu0.b32.cont [9/16] 0.0, 128
        %2342 = vxpose.xlu0.b32.cont [10/16] 0.0, 128
        %2343 = vxpose.xlu0.b32.cont [11/16] 0.0, 128
        %2344 = vxpose.xlu0.b32.cont [12/16] 0.0, 128
        %2345 = vxpose.xlu0.b32.cont [13/16] 0.0, 128
        %2346 = vxpose.xlu0.b32.cont [14/16] 0.0, 128
        %2347 = vxpose.xlu0.b32.cont [15/16] 0.0, 128
        %2348 = vxpose.xlu0.b32.end [16/16] 0.0, 128
        %v2349 = vpop.trf.xlu0
        %v2350 = vpop.trf.xlu0
        %v2351 = vpop.trf.xlu0
        %v2352 = vpop.trf.xlu0
        %v2353 = vpop.trf.xlu0
        %v2354 = vpop.trf.xlu0
        %v2355 = vpop.trf.xlu0
        %v2356 = vpop.trf.xlu0
        %v2357 = vpop.trf.xlu0
        %v2358 = vpop.trf.xlu0
        %v2359 = vpop.trf.xlu0
        %v2360 = vpop.trf.xlu0
        %v2361 = vpop.trf.xlu0
        %v2362 = vpop.trf.xlu0
        %v2363 = vpop.trf.xlu0
        %v2364 = vpop.trf.xlu0
        %2365 = vxpose.xlu0.b32.start [1/16] %v2250, 128
        %2366 = vxpose.xlu0.b32.cont [2/16] 0.0, 128
        %2367 = vxpose.xlu0.b32.cont [3/16] 0.0, 128
        %2368 = vxpose.xlu0.b32.cont [4/16] 0.0, 128
        %2369 = vxpose.xlu0.b32.cont [5/16] 0.0, 128
        %2370 = vxpose.xlu0.b32.cont [6/16] 0.0, 128
        %2371 = vxpose.xlu0.b32.cont [7/16] 0.0, 128
        %2372 = vxpose.xlu0.b32.cont [8/16] 0.0, 128
        %2373 = vxpose.xlu0.b32.cont [9/16] 0.0, 128
        %2374 = vxpose.xlu0.b32.cont [10/16] 0.0, 128
        %2375 = vxpose.xlu0.b32.cont [11/16] 0.0, 128
        %2376 = vxpose.xlu0.b32.cont [12/16] 0.0, 128
        %2377 = vxpose.xlu0.b32.cont [13/16] 0.0, 128
        %2378 = vxpose.xlu0.b32.cont [14/16] 0.0, 128
        %2379 = vxpose.xlu0.b32.cont [15/16] 0.0, 128
        %2380 = vxpose.xlu0.b32.end [16/16] 0.0, 128
        %v2381 = vpop.trf.xlu0
        %v2382 = vpop.trf.xlu0
        %v2383 = vpop.trf.xlu0
        %v2384 = vpop.trf.xlu0
        %v2385 = vpop.trf.xlu0
        %v2386 = vpop.trf.xlu0
        %v2387 = vpop.trf.xlu0
        %v2388 = vpop.trf.xlu0
        %v2389 = vpop.trf.xlu0
        %v2390 = vpop.trf.xlu0
        %v2391 = vpop.trf.xlu0
        %v2392 = vpop.trf.xlu0
        %v2393 = vpop.trf.xlu0
        %v2394 = vpop.trf.xlu0
        %v2395 = vpop.trf.xlu0
        %v2396 = vpop.trf.xlu0
        %2397 = vxpose.xlu0.b32.start [1/16] %v2296, 128
        %2398 = vxpose.xlu0.b32.cont [2/16] 0.0, 128
        %2399 = vxpose.xlu0.b32.cont [3/16] 0.0, 128
        %2400 = vxpose.xlu0.b32.cont [4/16] 0.0, 128
        %2401 = vxpose.xlu0.b32.cont [5/16] 0.0, 128
        %2402 = vxpose.xlu0.b32.cont [6/16] 0.0, 128
        %2403 = vxpose.xlu0.b32.cont [7/16] 0.0, 128
        %2404 = vxpose.xlu0.b32.cont [8/16] 0.0, 128
        %2405 = vxpose.xlu0.b32.cont [9/16] 0.0, 128
        %2406 = vxpose.xlu0.b32.cont [10/16] 0.0, 128
        %2407 = vxpose.xlu0.b32.cont [11/16] 0.0, 128
        %2408 = vxpose.xlu0.b32.cont [12/16] 0.0, 128
        %2409 = vxpose.xlu0.b32.cont [13/16] 0.0, 128
        %2410 = vxpose.xlu0.b32.cont [14/16] 0.0, 128
        %2411 = vxpose.xlu0.b32.cont [15/16] 0.0, 128
        %2412 = vxpose.xlu0.b32.end [16/16] 0.0, 128
        %v2413 = vpop.trf.xlu0
        %v2414 = vpop.trf.xlu0
        %v2415 = vpop.trf.xlu0
        %v2416 = vpop.trf.xlu0
        %v2417 = vpop.trf.xlu0
        %v2418 = vpop.trf.xlu0
        %v2419 = vpop.trf.xlu0
        %v2420 = vpop.trf.xlu0
        %v2421 = vpop.trf.xlu0
        %v2422 = vpop.trf.xlu0
        %v2423 = vpop.trf.xlu0
        %v2424 = vpop.trf.xlu0
        %v2425 = vpop.trf.xlu0
        %v2426 = vpop.trf.xlu0
        %v2427 = vpop.trf.xlu0
        %v2428 = vpop.trf.xlu0
        %v2429 = vcombine.low %v2317, %v2381
        %v2430 = vcombine.high %v2317, %v2381
        %v2432 = vunpack.c.l.s4 1983009808
        %v2433 = vunpack.c.0.s8 %v2432
        %v2434 = vlaneseq
        %v2435 = vshrl.u32 %v2434, 7
        %v2436 = vsub.s32 %v2433, %v2435
        %v2437 = vrot.slane %v2429, %v2436
        %v2439 = vunpack.c.l.s4 1983009808
        %v2440 = vunpack.c.0.s8 %v2439
        %v2441 = vlaneseq
        %v2442 = vshrl.u32 %v2441, 7
        %v2443 = vsub.s32 %v2440, %v2442
        %v2444 = vrot.slane %v2430, %v2443
        %v2445 = vcombine.low %v2349, %v2413
        %v2446 = vcombine.high %v2349, %v2413
        %v2448 = vunpack.c.l.s4 1983009808
        %v2449 = vunpack.c.0.s8 %v2448
        %v2450 = vlaneseq
        %v2451 = vshrl.u32 %v2450, 7
        %v2452 = vsub.s32 %v2449, %v2451
        %v2453 = vrot.slane %v2445, %v2452
        %v2455 = vunpack.c.l.s4 1983009808
        %v2456 = vunpack.c.0.s8 %v2455
        %v2457 = vlaneseq
        %v2458 = vshrl.u32 %v2457, 7
        %v2459 = vsub.s32 %v2456, %v2458
        %v2460 = vrot.slane %v2446, %v2459
        %v2461 = vcombine.low %v2437, %v2453
        %v2462 = vcombine.high %v2437, %v2453
        %v2464 = vunpack.c.l.s4 1934713408
        %v2465 = vunpack.c.0.s8 %v2464
        %v2466 = vlaneseq
        %v2467 = vshrl.u32 %v2466, 7
        %v2468 = vsub.s32 %v2465, %v2467
        %v2469 = vrot.slane %v2461, %v2468
        %v2471 = vunpack.c.l.s4 1934713408
        %v2472 = vunpack.c.0.s8 %v2471
        %v2473 = vlaneseq
        %v2474 = vshrl.u32 %v2473, 7
        %v2475 = vsub.s32 %v2472, %v2474
        %v2476 = vrot.slane %v2462, %v2475
        %v2477 = vcombine.low %v2444, %v2460
        %v2478 = vcombine.high %v2444, %v2460
        %v2480 = vunpack.c.l.s4 1934713408
        %v2481 = vunpack.c.0.s8 %v2480
        %v2482 = vlaneseq
        %v2483 = vshrl.u32 %v2482, 7
        %v2484 = vsub.s32 %v2481, %v2483
        %v2485 = vrot.slane %v2477, %v2484
        %v2487 = vunpack.c.l.s4 1934713408
        %v2488 = vunpack.c.0.s8 %v2487
        %v2489 = vlaneseq
        %v2490 = vshrl.u32 %v2489, 7
        %v2491 = vsub.s32 %v2488, %v2490
        %v2492 = vrot.slane %v2478, %v2491
        %v2493 = vcombine.high %v2469, 0.0
        %v2494 = vcombine.high %v2476, 0.0
        %v2495 = vcombine.high %v2485, 0.0
        %v2496 = vcombine.high %v2492, 0.0
        %v2497 = vcombine.low %v2469, %v2476
        %v2499 = vunpack.c.l.s4 1983009808
        %v2500 = vunpack.c.0.s8 %v2499
        %v2501 = vlaneseq
        %v2502 = vshrl.u32 %v2501, 7
        %v2503 = vsub.s32 %v2500, %v2502
        %v2504 = vrot.slane %v2497, %v2503
        %v2505 = vcombine.low %v2493, %v2494
        %v2507 = vunpack.c.l.s4 1983009808
        %v2508 = vunpack.c.0.s8 %v2507
        %v2509 = vlaneseq
        %v2510 = vshrl.u32 %v2509, 7
        %v2511 = vsub.s32 %v2508, %v2510
        %v2512 = vrot.slane %v2505, %v2511
        %v2513 = vcombine.low %v2485, %v2492
        %v2515 = vunpack.c.l.s4 1983009808
        %v2516 = vunpack.c.0.s8 %v2515
        %v2517 = vlaneseq
        %v2518 = vshrl.u32 %v2517, 7
        %v2519 = vsub.s32 %v2516, %v2518
        %v2520 = vrot.slane %v2513, %v2519
        %v2521 = vcombine.low %v2495, %v2496
        %v2523 = vunpack.c.l.s4 1983009808
        %v2524 = vunpack.c.0.s8 %v2523
        %v2525 = vlaneseq
        %v2526 = vshrl.u32 %v2525, 7
        %v2527 = vsub.s32 %v2524, %v2526
        %v2528 = vrot.slane %v2521, %v2527
        %v2529 = vcombine.low %v2504, %v2512
        %v2530 = vcombine.high %v2504, %v2512
        %v2532 = vunpack.c.l.s4 1934713408
        %v2533 = vunpack.c.0.s8 %v2532
        %v2534 = vlaneseq
        %v2535 = vshrl.u32 %v2534, 7
        %v2536 = vsub.s32 %v2533, %v2535
        %v2537 = vrot.slane %v2529, %v2536
        %v2539 = vunpack.c.l.s4 1934713408
        %v2540 = vunpack.c.0.s8 %v2539
        %v2541 = vlaneseq
        %v2542 = vshrl.u32 %v2541, 7
        %v2543 = vsub.s32 %v2540, %v2542
        %v2544 = vrot.slane %v2530, %v2543
        %v2545 = vcombine.low %v2520, %v2528
        %v2546 = vcombine.high %v2520, %v2528
        %v2548 = vunpack.c.l.s4 1934713408
        %v2549 = vunpack.c.0.s8 %v2548
        %v2550 = vlaneseq
        %v2551 = vshrl.u32 %v2550, 7
        %v2552 = vsub.s32 %v2549, %v2551
        %v2553 = vrot.slane %v2545, %v2552
        %v2555 = vunpack.c.l.s4 1934713408
        %v2556 = vunpack.c.0.s8 %v2555
        %v2557 = vlaneseq
        %v2558 = vshrl.u32 %v2557, 7
        %v2559 = vsub.s32 %v2556, %v2558
        %v2560 = vrot.slane %v2546, %v2559
        %v2561 = vcombine.low %v2537, %v2553
        %v2562 = vcombine.high %v2537, %v2553
        %v2563 = vcombine.low %v2544, %v2560
        %v2564 = vcombine.high %v2544, %v2560
        %2566 = vrot.lane.b32.xlu0 %v2562, 8
        %v2567 = vpop.permute.xlu0 %2566
        %2570 = vrot.lane.b32.xlu0 %v2563, 16
        %v2571 = vpop.permute.xlu0 %2570
        %2574 = vrot.lane.b32.xlu0 %v2564, 24
        %v2575 = vpop.permute.xlu0 %2574
        %v2577 = vsel %vm1465, %v2561, %v2567
        %vm2578 = vcmask 130048
        %v2579 = vsel %vm2578, %v2577, %v2571
        %vm2580 = vcmask 195584
        %v2581 = vsel %vm2580, %v2579, %v2575
        %v2582 = vld [vmem:[#allocation11] sm:$0xf]
        %v2583 = vld [vmem:[#allocation11 + $0x4] sm:$0xf]
        %v2584 = vld [vmem:[#allocation11 + $0x8] sm:$0xf]
        %v2585 = vld [vmem:[#allocation11 + $0xc] sm:$0xf]
        %v2586 = vpack.c.bf16 %v2581, %v2581
        %v2591 = vunpack.c.l.b16 %v2582
        %v2592 = vunpack.c.l.b16 %v2583
        %v2593 = vunpack.c.l.b16 %v2584
        %v2594 = vunpack.c.l.b16 %v2585
        %v2595 = vpack.c.b16 %v2592, %v2591
        %v2596 = vpack.c.b16 %v2594, %v2593
        %v2600 = vsel %vm619, %v2586, 0
        %2602 = vmatprep.subr.bf16.mxu0 0
        %2603 = vmatpush1.bf16.msra.mxu0 %v2595
        %2604 = vmatprep.subr.bf16.mxu0 0
        %2605 = vmatpush1.bf16.msra.mxu0 %v2596
        %2606 = vmatprep.subr.bf16.mxu0 0
        %2607 = vmatpush1.bf16.msra.mxu0 0
        %2608 = vmatprep.subr.bf16.mxu0 0
        %2609 = vmatpush1.bf16.msra.mxu0 0
        %2610 = vmatprep.subr.bf16.mxu0 0
        %2611 = vmatpush1.bf16.msra.mxu0 0
        %2612 = vmatprep.subr.bf16.mxu0 0
        %2613 = vmatpush1.bf16.msra.mxu0 0
        %2614 = vmatprep.subr.bf16.mxu0 0
        %2615 = vmatpush1.bf16.msra.mxu0 0
        %2616 = vmatprep.subr.bf16.mxu0 0
        %2617 = vmatpush1.bf16.msra.mxu0 0
        %2618 = vmatprep.subr.bf16.mxu0 0
        %2619 = vmatpush1.bf16.msra.mxu0 0
        %2620 = vmatprep.subr.bf16.mxu0 0
        %2621 = vmatpush1.bf16.msra.mxu0 0
        %2622 = vmatprep.subr.bf16.mxu0 0
        %2623 = vmatpush1.bf16.msra.mxu0 0
        %2624 = vmatprep.subr.bf16.mxu0 0
        %2625 = vmatpush1.bf16.msra.mxu0 0
        %2626 = vmatprep.subr.bf16.mxu0 0
        %2627 = vmatpush1.bf16.msra.mxu0 0
        %2628 = vmatprep.subr.bf16.mxu0 0
        %2629 = vmatpush1.bf16.msra.mxu0 0
        %2630 = vmatprep.subr.bf16.mxu0 0
        %2631 = vmatpush1.bf16.msra.mxu0 0
        %2632 = vmatprep.subr.bf16.mxu0 0
        %2633 = vmatpush1.bf16.msra.mxu0 0
        %2634 = vmatprep.mubr.bf16.mxu0 0
        %2635 = vmatmul.mubr.bf16.gmra.mrb[0].mxu0 %v2600
        %v2636 = vpop.f32.mrb[0].mxu0
        %v2637 = vadd.f32 0.0, %v2636
        %v2638 = vpop.f32.mrb[0].mxu0
        %v2639 = vpop.f32.mrb[0].mxu0
        %v2640 = vpop.f32.mrb[0].mxu0
        %2641 = vdwg.mxu0
        %v2642 = vadd.f32 %v616, %v2637
        %v2643 = vld [vmem:[#allocation13] sm:$0x1]
        %v2645 = vlaneseq
        %v2646 = vshrl.u32 %v2645, 7
        %v2647 = vsub.s32 0, %v2646
        %v2648 = vrot.slane %v2643, %v2647
        %v2650 = vadd.f32 %v2642, %v2648
        %v2651 = vld [vmem:[#allocation14] sm:$0x1]
        %v2652 = vld [vmem:[#allocation16] sm:$0x1]
        %v2653 = vsel %vm619, %v2650, 0.0
        %2654 = vadd.xlane.f32.xlu0 %v2653
        %v2655 = vpop.xlane.xlu0 %2654
        %v2656 = vmul.f32 %v2655, %v623
        %v2657 = vsub.f32 %v2650, %v2656
        %v2658 = vmul.f32 %v2657, %v2657
        %v2659 = vsel %vm619, %v2658, 0.0
        %2660 = vadd.xlane.f32.xlu0 %v2659
        %v2661 = vpop.xlane.xlu0 %2660
        %v2662 = vmul.f32 %v2661, %v623
        %v2663 = vadd.f32 %v2662, 1e-05
        %v2664 = vrsqrt.pop %v2663
        %v2665 = vmul.f32 %v2657, %v2664
        %v2667 = vlaneseq
        %v2668 = vshrl.u32 %v2667, 7
        %v2669 = vsub.s32 0, %v2668
        %v2670 = vrot.slane %v2651, %v2669
        %v2672 = vmul.f32 %v2665, %v2670
        %v2674 = vlaneseq
        %v2675 = vshrl.u32 %v2674, 7
        %v2676 = vsub.s32 0, %v2675
        %v2677 = vrot.slane %v2652, %v2676
        %v2679 = vadd.f32 %v2672, %v2677
        %v2680 = vld [vmem:[#allocation17] sm:$0xf]
        %v2681 = vld [vmem:[#allocation17 + $0x4] sm:$0xf]
        %v2682 = vld [vmem:[#allocation17 + $0x8] sm:$0xf]
        %v2683 = vld [vmem:[#allocation17 + $0xc] sm:$0xf]
        %v2684 = vpack.c.bf16 %v2679, %v2679
        %v2685 = vld [vmem:[#allocation19] sm:$0x1]
        %v2687 = vlaneseq
        %v2688 = vshrl.u32 %v2687, 7
        %v2689 = vsub.s32 0, %v2688
        %v2690 = vrot.slane %v2685, %v2689
        %v2696 = vunpack.c.l.b16 %v2680
        %v2697 = vunpack.c.l.b16 %v2681
        %v2698 = vunpack.c.l.b16 %v2682
        %v2699 = vunpack.c.l.b16 %v2683
        %v2700 = vpack.c.b16 %v2697, %v2696
        %v2701 = vpack.c.b16 %v2699, %v2698
        %v2705 = vsel %vm619, %v2684, 0
        %2707 = vmatprep.subr.bf16.mxu0 0
        %2708 = vmatpush1.bf16.msra.mxu0 %v2700
        %2709 = vmatprep.subr.bf16.mxu0 0
        %2710 = vmatpush1.bf16.msra.mxu0 %v2701
        %2711 = vmatprep.subr.bf16.mxu0 0
        %2712 = vmatpush1.bf16.msra.mxu0 0
        %2713 = vmatprep.subr.bf16.mxu0 0
        %2714 = vmatpush1.bf16.msra.mxu0 0
        %2715 = vmatprep.subr.bf16.mxu0 0
        %2716 = vmatpush1.bf16.msra.mxu0 0
        %2717 = vmatprep.subr.bf16.mxu0 0
        %2718 = vmatpush1.bf16.msra.mxu0 0
        %2719 = vmatprep.subr.bf16.mxu0 0
        %2720 = vmatpush1.bf16.msra.mxu0 0
        %2721 = vmatprep.subr.bf16.mxu0 0
        %2722 = vmatpush1.bf16.msra.mxu0 0
        %2723 = vmatprep.subr.bf16.mxu0 0
        %2724 = vmatpush1.bf16.msra.mxu0 0
        %2725 = vmatprep.subr.bf16.mxu0 0
        %2726 = vmatpush1.bf16.msra.mxu0 0
        %2727 = vmatprep.subr.bf16.mxu0 0
        %2728 = vmatpush1.bf16.msra.mxu0 0
        %2729 = vmatprep.subr.bf16.mxu0 0
        %2730 = vmatpush1.bf16.msra.mxu0 0
        %2731 = vmatprep.subr.bf16.mxu0 0
        %2732 = vmatpush1.bf16.msra.mxu0 0
        %2733 = vmatprep.subr.bf16.mxu0 0
        %2734 = vmatpush1.bf16.msra.mxu0 0
        %2735 = vmatprep.subr.bf16.mxu0 0
        %2736 = vmatpush1.bf16.msra.mxu0 0
        %2737 = vmatprep.subr.bf16.mxu0 0
        %2738 = vmatpush1.bf16.msra.mxu0 0
        %2739 = vmatprep.mubr.bf16.mxu0 0
        %2740 = vmatmul.mubr.bf16.gmra.mrb[0].mxu0 %v2705
        %v2741 = vpop.f32.mrb[0].mxu0
        %v2742 = vadd.f32 %v2690, %v2741
        %v2743 = vpop.f32.mrb[0].mxu0
        %v2744 = vpop.f32.mrb[0].mxu0
        %v2745 = vpop.f32.mrb[0].mxu0
        %2746 = vdwg.mxu0
        %v2747 = vmul.f32 %v2742, 0.5
        %v2748 = vmul.f32 %v2742, 0.044715
        %v2749 = vmul.f32 %v2748, %v2742
        %v2750 = vmul.f32 %v2749, %v2742
        %v2751 = vadd.f32 %v2742, %v2750
        %v2752 = vmul.f32 %v2751, 0.7978846
        %v2753 = vtanh.pop %v2752
        %v2754 = vadd.f32 %v2753, 1.0
        %v2755 = vmul.f32 %v2747, %v2754
        %v2756 = vld [vmem:[#allocation20] sm:$0xf]
        %v2757 = vld [vmem:[#allocation20 + $0x4] sm:$0xf]
        %v2758 = vld [vmem:[#allocation20 + $0x8] sm:$0xf]
        %v2759 = vld [vmem:[#allocation20 + $0xc] sm:$0xf]
        %v2760 = vld [vmem:[#allocation20 + $0x10] sm:$0xf]
        %v2761 = vld [vmem:[#allocation20 + $0x14] sm:$0xf]
        %v2762 = vld [vmem:[#allocation20 + $0x18] sm:$0xf]
        %v2763 = vld [vmem:[#allocation20 + $0x1c] sm:$0xf]
        %v2764 = vpack.c.bf16 %v2755, %v2755
        %v2765 = vld [vmem:[#allocation22] sm:$0x1]
        %v2767 = vlaneseq
        %v2768 = vshrl.u32 %v2767, 7
        %v2769 = vsub.s32 0, %v2768
        %v2770 = vrot.slane %v2765, %v2769
        %v2780 = vunpack.c.l.b16 %v2756
        %v2781 = vunpack.c.l.b16 %v2757
        %v2782 = vunpack.c.l.b16 %v2758
        %v2783 = vunpack.c.l.b16 %v2759
        %v2784 = vunpack.c.l.b16 %v2760
        %v2785 = vunpack.c.l.b16 %v2761
        %v2786 = vunpack.c.l.b16 %v2762
        %v2787 = vunpack.c.l.b16 %v2763
        %v2788 = vpack.c.b16 %v2781, %v2780
        %v2789 = vpack.c.b16 %v2783, %v2782
        %v2790 = vpack.c.b16 %v2785, %v2784
        %v2791 = vpack.c.b16 %v2787, %v2786
        %vm2796 = vcmask 523264
        %v2798 = vsel %vm2796, %v2764, 0
        %2800 = vmatprep.subr.bf16.mxu0 0
        %2801 = vmatpush1.bf16.msra.mxu0 %v2788
        %2802 = vmatprep.subr.bf16.mxu0 0
        %2803 = vmatpush1.bf16.msra.mxu0 %v2789
        %2804 = vmatprep.subr.bf16.mxu0 0
        %2805 = vmatpush1.bf16.msra.mxu0 %v2790
        %2806 = vmatprep.subr.bf16.mxu0 0
        %2807 = vmatpush1.bf16.msra.mxu0 %v2791
        %2808 = vmatprep.subr.bf16.mxu0 0
        %2809 = vmatpush1.bf16.msra.mxu0 0
        %2810 = vmatprep.subr.bf16.mxu0 0
        %2811 = vmatpush1.bf16.msra.mxu0 0
        %2812 = vmatprep.subr.bf16.mxu0 0
        %2813 = vmatpush1.bf16.msra.mxu0 0
        %2814 = vmatprep.subr.bf16.mxu0 0
        %2815 = vmatpush1.bf16.msra.mxu0 0
        %2816 = vmatprep.subr.bf16.mxu0 0
        %2817 = vmatpush1.bf16.msra.mxu0 0
        %2818 = vmatprep.subr.bf16.mxu0 0
        %2819 = vmatpush1.bf16.msra.mxu0 0
        %2820 = vmatprep.subr.bf16.mxu0 0
        %2821 = vmatpush1.bf16.msra.mxu0 0
        %2822 = vmatprep.subr.bf16.mxu0 0
        %2823 = vmatpush1.bf16.msra.mxu0 0
        %2824 = vmatprep.subr.bf16.mxu0 0
        %2825 = vmatpush1.bf16.msra.mxu0 0
        %2826 = vmatprep.subr.bf16.mxu0 0
        %2827 = vmatpush1.bf16.msra.mxu0 0
        %2828 = vmatprep.subr.bf16.mxu0 0
        %2829 = vmatpush1.bf16.msra.mxu0 0
        %2830 = vmatprep.subr.bf16.mxu0 0
        %2831 = vmatpush1.bf16.msra.mxu0 0
        %2832 = vmatprep.mubr.bf16.mxu0 0
        %2833 = vmatmul.mubr.bf16.gmra.mrb[0].mxu0 %v2798
        %v2834 = vpop.f32.mrb[0].mxu0
        %v2835 = vadd.f32 %v2770, %v2834
        %v2836 = vpop.f32.mrb[0].mxu0
        %v2837 = vpop.f32.mrb[0].mxu0
        %v2838 = vpop.f32.mrb[0].mxu0
        %2839 = vdwg.mxu0
        %v2840 = vadd.f32 %v2650, %v2835
        %2841 = vst.msk [vmem:[%s613] sm:$0xff] %vm619, %v2840
        %s2842 = sand.u32 %s322, 1
        %s2843 = scalar_lea.sflag [#allocation4], %s2842
        %s2844 = sand.u32 %s322, 1
        %s2845 = smul.addr %s2844, 8
        %s2846 = scalar_lea.vmem [#allocation23], %s2845
        // Predicated region
        $region125: #{wav2vec2_forward.13} parent=71 // pred_check
          %p2847 = pneg %p332
        $region126: #{wav2vec2_forward.13} parent=71 // pred_check_branch
          %2849 = sbr.rel (%p2847) target = $region128
        $region127: #{wav2vec2_forward.13} parent=71 // pred_region
          %s2851 = ssub.s32 128, 128
          %2852 = vsyncadd %s2843, %s2851
          %s2853 = smul.addr %s36, 128
          %s2854 = scalar_lea.hbm %s13, %s2853
          %s2856 = sshll.u32 %s2846, 4
          %s2857 = int_to_ptr.vmem [resolvable:$true] %s2856
          %2859 = dma.vmem_to_hbm [thread:$0]  %s2857, 128, %s2854, %s2843
        $region128: #{wav2vec2_forward.13} parent=71 // pred_fallthru
          _
      $region72: #{wav2vec2_forward.13} parent=5 // pred_fallthru
        _
      %p2860 = scmp.le.s32.totalorder 2, %s31
      // Predicated region
      $region129: #{wav2vec2_forward.13} parent=5 // pred_check
        %p2861 = pneg %p2860
      $region130: #{wav2vec2_forward.13} parent=5 // pred_check_branch
        %2863 = sbr.rel (%p2861) target = $region132
      $region131: #{wav2vec2_forward.13} parent=5 // pred_region
        %s2864 = ssub.s32 %s31, 2
        // Predicated region
        $region133: #{wav2vec2_forward.13} parent=131 // pred_check
          %p2865 = pneg %p338
        $region134: #{wav2vec2_forward.13} parent=131 // pred_check_branch
          %2867 = sbr.rel (%p2865) target = $region136
        $region135: #{wav2vec2_forward.13} parent=131 // pred_region
          %s2868 = sand.u32 %s323, 1
          %s2869 = scalar_lea.sflag [#allocation4], %s2868
          %s2870 = sand.u32 %s323, 1
          %s2871 = smul.addr %s2870, 8
          %s2872 = scalar_lea.vmem [#allocation23], %s2871
          %2873 = dma.done %s2869, 128
        $region136: #{wav2vec2_forward.13} parent=131 // pred_fallthru
          _
      $region132: #{wav2vec2_forward.13} parent=5 // pred_fallthru
        _
    $region6: #{wav2vec2_forward.13} parent=1 // loop_footer
      %s35 = sadd.s32 1, %s31
    $region7: #{wav2vec2_forward.13} parent=1 // loop_footer_branch
      %30 = sbr.rel target = $region3
    $region8: #{wav2vec2_forward.13} parent=1 // loop_exit
      _
    %2874 = vsyncpa [#allocation3], 1
    %s2875 = scalar_lea.sflag [#allocation3], 1
    %2876 = vsyncpa %s2875, 1
    %2877 = vsyncpa [#allocation6], 1
    %2878 = vsyncpa [#allocation9], 1
    %2879 = vsyncpa [#allocation12], 1
    %2880 = vsyncpa [#allocation15], 1
    %2881 = vsyncpa [#allocation18], 1
    %2882 = vsyncpa [#allocation21], 1
    %2883 = vsyncpa [#allocation4], 1
    %s2884 = scalar_lea.sflag [#allocation4], 1
    %2885 = vsyncpa %s2884, 1

</llo_original>
